<compile_context>
chip_gen: v7x
topology: tpu7x:2x2x1
jax: 0.10.0
libtpu: 0.0.40
codegen_flags: <defaults>
</compile_context>

<pallas_src>
import functools

import jax
import jax.numpy as jnp
from jax import lax
from jax.experimental import pallas as pl
from jax.experimental.pallas import tpu as pltpu

EPS = 1e-5            # nn.BatchNorm2d default eps
W_OFF = 16            # column offset of the image interior inside the pad scratch
                      # (multiple of 16 keeps the bf16 interior store tile-aligned)
VMEM_LIMIT = 32 * 1024 * 1024   # explicit scoped-VMEM budget (safe on v5e/v6e/v7x)


# ------------------------------- kernels ------------------------------------

def _conv1x1_kernel(x_ref, w_ref, b_ref, out_ref):
    """1x1 conv = pure channel matmul. bf16 MXU operands, f32 accumulate + bias."""
    _, H, W, Cin = x_ref.shape
    Cout = w_ref.shape[1]
    x2d = x_ref[0].reshape(H * W, Cin).astype(jnp.bfloat16)
    y = jnp.dot(x2d, w_ref[...], preferred_element_type=jnp.float32) + b_ref[...]
    out_ref[...] = y.reshape(1, H, W, Cout)


def _conv3x3_stage_kernel(x_ref, w_ref, conv_ref, stats_ref, pad_ref):
    """Per-batch-tile 3x3 conv (pad=1, bias dropped) + per-tile BN partial stats.

    Emits the raw (un-normalized) conv output for this tile plus the tile's
    per-channel mean and centered sum-of-squares (M2).  The cross-tile combine and
    the scale/shift/ReLU sweep happen later, so this call's batch axis stays
    "parallel" (two-phase BatchNorm).
    """
    _, H, W, C = x_ref.shape
    Hp, Wp, _ = pad_ref.shape

    # Zero only the border strips of the pad scratch; the interior is fully
    # rewritten below and the unused left columns [0, W_OFF-1) are never read.
    zrow = jnp.zeros((1, Wp, C), pad_ref.dtype)
    pad_ref[0:1, :, :] = zrow                        # top padding row
    pad_ref[H + 1:H + 2, :, :] = zrow                # bottom padding row
    zcol = jnp.zeros((Hp, 1, C), pad_ref.dtype)
    pad_ref[:, W_OFF - 1:W_OFF, :] = zcol            # left padding column
    pad_ref[:, W_OFF + W:W_OFF + W + 1, :] = zcol    # right padding column

    # Interior store in bf16 (halves store bytes; feeds the MXU directly).
    pad_ref[1:H + 1, W_OFF:W_OFF + W, :] = x_ref[0].astype(jnp.bfloat16)

    # 9 accumulating bf16 matmuls on the shifted windows; f32 accumulator.
    # (No im2col buffer: nothing but the pad scratch goes through the store port.)
    acc = jnp.zeros((H * W, C), jnp.float32)
    for k in range(9):
        dh, dw = k // 3, k % 3
        win = pad_ref[dh:dh + H, W_OFF - 1 + dw:W_OFF - 1 + dw + W, :]
        acc = acc + jnp.dot(win.reshape(H * W, C), w_ref[k],
                            preferred_element_type=jnp.float32)

    conv_ref[...] = acc.reshape(1, H, W, C)

    # Per-tile BatchNorm partial statistics (centered -> numerically safe).
    inv_m = 1.0 / float(H * W)
    tile_mean = jnp.sum(acc, axis=0, keepdims=True) * inv_m            # (1, C)
    centered = acc - tile_mean
    tile_m2 = jnp.sum(centered * centered, axis=0, keepdims=True)      # (1, C)
    stats_ref[:, 0:1, :] = tile_mean.reshape(1, 1, C)
    stats_ref[:, 1:2, :] = tile_m2.reshape(1, 1, C)


def _bn_relu_kernel(y_ref, scale_ref, shift_ref, out_ref):
    """Lane-dense fused BatchNorm scale/shift + ReLU on a (1, H, W*C) tile."""
    out_ref[...] = jnp.maximum(y_ref[...] * scale_ref[...] + shift_ref[...], 0.0)


def _bn_relu_add_kernel(y_ref, scale_ref, shift_ref, base_ref, out_ref):
    """Same, fused with the recurrent / residual add: out = base + relu(bn(y))."""
    out_ref[...] = base_ref[...] + jnp.maximum(
        y_ref[...] * scale_ref[...] + shift_ref[...], 0.0)


# --------------------------- pallas_call wrappers ----------------------------

def _conv1x1(x, w_bf16, b):
    N, H, W, Cin = x.shape
    Cout = w_bf16.shape[1]
    return pl.pallas_call(
        _conv1x1_kernel,
        out_shape=jax.ShapeDtypeStruct((N, H, W, Cout), jnp.float32),
        grid=(N,),
        in_specs=[
            pl.BlockSpec((1, H, W, Cin), lambda n: (n, 0, 0, 0)),
            pl.BlockSpec((Cin, Cout), lambda n: (0, 0)),
            pl.BlockSpec((1, Cout), lambda n: (0, 0)),
        ],
        out_specs=pl.BlockSpec((1, H, W, Cout), lambda n: (n, 0, 0, 0)),
        compiler_params=pltpu.CompilerParams(
            dimension_semantics=("parallel",), vmem_limit_bytes=VMEM_LIMIT),
    )(x, w_bf16, b)


def _conv3x3_stage(x, w_taps_bf16):
    N, H, W, C = x.shape
    return pl.pallas_call(
        _conv3x3_stage_kernel,
        out_shape=(jax.ShapeDtypeStruct((N, H, W, C), jnp.float32),
                   jax.ShapeDtypeStruct((N, 2, C), jnp.float32)),
        grid=(N,),
        in_specs=[
            pl.BlockSpec((1, H, W, C), lambda n: (n, 0, 0, 0)),
            pl.BlockSpec((9, C, C), lambda n: (0, 0, 0)),
        ],
        out_specs=(pl.BlockSpec((1, H, W, C), lambda n: (n, 0, 0, 0)),
                   pl.BlockSpec((1, 2, C), lambda n: (n, 0, 0))),
        scratch_shapes=[
            # zero-bordered pad scratch (bf16): 1 row top/bottom, aligned W offset
            pltpu.VMEM((H + 2, W_OFF + W + 1, C), jnp.bfloat16),
        ],
        compiler_params=pltpu.CompilerParams(
            dimension_semantics=("parallel",), vmem_limit_bytes=VMEM_LIMIT),
    )(x, w_taps_bf16)


def _bn_scale_shift(stats, gamma, beta, count_per_tile):
    """Chan parallel combine of per-tile (mean, M2) -> BN scale/shift (tiny, JAX)."""
    means = stats[:, 0, :]                              # (T, C)
    m2s = stats[:, 1, :]                                # (T, C)
    mean = jnp.mean(means, axis=0)                      # equal tile counts
    m2 = jnp.sum(m2s, axis=0) + count_per_tile * jnp.sum((means - mean) ** 2, axis=0)
    var = m2 / (count_per_tile * stats.shape[0])        # biased var (PyTorch BN)
    scale = gamma * lax.rsqrt(var + EPS)
    shift = beta - mean * scale
    return scale, shift


def _bn_relu(conv_out, scale, shift, base=None):
    """Lane-dense scale/shift/ReLU sweep (+ optional fused add) over (N, H, W*C)."""
    N, H, W, C = conv_out.shape
    wc = W * C
    y = conv_out.reshape(N, H, wc)                 # free reshape on HBM layout
    scale_wc = jnp.tile(scale, W).reshape(1, wc)   # per-lane scale (c fast, w slow)
    shift_wc = jnp.tile(shift, W).reshape(1, wc)

    args = [y, scale_wc, shift_wc]
    in_specs = [
        pl.BlockSpec((1, H, wc), lambda n: (n, 0, 0)),
        pl.BlockSpec((1, wc), lambda n: (0, 0)),
        pl.BlockSpec((1, wc), lambda n: (0, 0)),
    ]
    kernel = _bn_relu_kernel
    if base is not None:
        args.append(base.reshape(N, H, wc))
        in_specs.append(pl.BlockSpec((1, H, wc), lambda n: (n, 0, 0)))
        kernel = _bn_relu_add_kernel

    out = pl.pallas_call(
        kernel,
        out_shape=jax.ShapeDtypeStruct((N, H, wc), jnp.float32),
        grid=(N,),
        in_specs=in_specs,
        out_specs=pl.BlockSpec((1, H, wc), lambda n: (n, 0, 0)),
        compiler_params=pltpu.CompilerParams(
            dimension_semantics=("parallel",), vmem_limit_bytes=VMEM_LIMIT),
    )(*args)
    return out.reshape(N, H, W, C)


def _conv_bn_relu(x, w_taps_bf16, gamma, beta, add_base=None):
    """relu(batchnorm(conv3x3(x)))  [+ add_base], two-phase BatchNorm."""
    _, H, W, _ = x.shape
    conv_out, stats = _conv3x3_stage(x, w_taps_bf16)
    scale, shift = _bn_scale_shift(stats, gamma, beta, float(H * W))
    return _bn_relu(conv_out, scale, shift, base=add_base)


def rrcnn_block(x_nchw, params, *, t=2):
    """RRCNN_block forward. NCHW in / NCHW out (kernels run in NHWC)."""
    N, Cin, H, W = x_nchw.shape
    assert W % 8 == 0, "W must be a multiple of 8 (sublane-aligned interior store)"

    x = jnp.transpose(x_nchw, (0, 2, 3, 1)).astype(jnp.float32)      # NHWC, f32

    # Only MXU operands are bf16; all elementwise / BN math stays f32.
    w1x1 = params["w1x1"].astype(jnp.bfloat16)
    w_rb1 = params["w_rb1"].astype(jnp.bfloat16)     # (9, Cout, Cout), tap-major
    w_rb2 = params["w_rb2"].astype(jnp.bfloat16)
    # Conv3x3 biases are NOT passed: a per-channel constant cancels exactly under
    # the batch-statistics BatchNorm that follows (training-mode forward only).

    x0 = _conv1x1(x, w1x1, params["b1x1"])

    def recurrent_block(xin, w, g, b, final_base=None):
        # PyTorch loop: x1 = f(x); then t times x1 = f(x + x1).
        # The recurrent add is fused into the previous stage's BN/ReLU sweep.
        cur = xin
        for _ in range(t):
            cur = _conv_bn_relu(cur, w, g, b, add_base=xin)       # = xin + f(cur)
        return _conv_bn_relu(cur, w, g, b, add_base=final_base)   # = f(cur) [+ base]

    r1 = recurrent_block(x0, w_rb1, params["g_rb1"], params["be_rb1"])
    # Final residual (x0 + RCNN(x0)) is fused into the last stage of block 2.
    out = recurrent_block(r1, w_rb2, params["g_rb2"], params["be_rb2"],
                          final_base=x0)

    return jnp.transpose(out, (0, 3, 1, 2))  # back to NCHW


# -------------------- pure-JAX reference (for verification) ------------------
# mm_dtype=float32  -> exact PyTorch math (conv bias kept, f32 matmuls)
# mm_dtype=bfloat16 -> numerics-matched reference (same MXU-operand rounding)
def _ref_conv_bn_relu(x, w_taps, b, g, be, mm_dtype):
    N, H, W, C = x.shape
    xp = jnp.pad(x, ((0, 0), (1, 1), (1, 1), (0, 0)))
    acc = jnp.zeros((N, H, W, C), jnp.float32) + b.reshape(1, 1, 1, C)
    k = 0
    for dh in range(3):
        for dw in range(3):
            acc = acc + jnp.einsum(
                "nhwc,cd->nhwd",
                xp[:, dh:dh + H, dw:dw + W, :].astype(mm_dtype),
                w_taps[k].astype(mm_dtype),
                preferred_element_type=jnp.float32)
            k += 1
    mean = jnp.mean(acc, axis=(0, 1, 2), keepdims=True)
    var = jnp.mean((acc - mean) ** 2, axis=(0, 1, 2), keepdims=True)
    y = (acc - mean) * lax.rsqrt(var + EPS)
    y = y * g.reshape(1, 1, 1, C) + be.reshape(1, 1, 1, C)
    return jnp.maximum(y, 0.0)


def rrcnn_reference(x_nchw, params, *, t=2, mm_dtype=jnp.float32):
    x = jnp.transpose(x_nchw, (0, 2, 3, 1)).astype(jnp.float32)
    Cout = params["w1x1"].shape[1]
    x0 = jnp.einsum("nhwc,cd->nhwd", x.astype(mm_dtype),
                    params["w1x1"].astype(mm_dtype),
                    preferred_element_type=jnp.float32) \
        + params["b1x1"].reshape(1, 1, 1, Cout)

    def rb(xin, w, b, g, be):
        x1 = xin
        for i in range(t):
            if i == 0:
                x1 = _ref_conv_bn_relu(xin, w, b, g, be, mm_dtype)
            x1 = _ref_conv_bn_relu(xin + x1, w, b, g, be, mm_dtype)
        return x1

    r = rb(x0, params["w_rb1"], params["b_rb1"], params["g_rb1"], params["be_rb1"])
    r = rb(r, params["w_rb2"], params["b_rb2"], params["g_rb2"], params["be_rb2"])
    return jnp.transpose(x0 + r, (0, 3, 1, 2))


# -------------------- deterministic parameter construction -------------------
def make_params(key, ch_in, ch_out):
    ks = jax.random.split(key, 4)

    def recurrent_params(k):
        k1, k2, k3, k4 = jax.random.split(k, 4)
        # conv3x3 taps as [9, C_in(=ch_out), C_out]; tap k = (dh, dw) row-major
        w = jax.random.normal(k1, (9, ch_out, ch_out), jnp.float32) / jnp.sqrt(9.0 * ch_out)
        b = 0.1 * jax.random.normal(k2, (ch_out,), jnp.float32)          # conv bias
        g = 1.0 + 0.1 * jax.random.normal(k3, (ch_out,), jnp.float32)    # BN gamma
        be = 0.1 * jax.random.normal(k4, (ch_out,), jnp.float32)         # BN beta
        return w, b, g, be

    w1, b1, g1, be1 = recurrent_params(ks[2])
    w2, b2, g2, be2 = recurrent_params(ks[3])
    return {
        "w1x1": jax.random.normal(ks[0], (ch_in, ch_out), jnp.float32) / jnp.sqrt(ch_in),
        "b1x1": 0.1 * jax.random.normal(ks[1], (1, ch_out), jnp.float32),
        "w_rb1": w1, "b_rb1": b1, "g_rb1": g1, "be_rb1": be1,
        "w_rb2": w2, "b_rb2": b2, "g_rb2": g2, "be_rb2": be2,
    }


if __name__ == "__main__":
    N, CH_IN, CH_OUT, H, W, T = 2, 4, 8, 16, 16, 2

    key = jax.random.PRNGKey(0)
    kx, kp = jax.random.split(key)
    x = jax.random.normal(kx, (N, CH_IN, H, W), jnp.float32)   # NCHW like PyTorch
    params = make_params(kp, CH_IN, CH_OUT)

    fwd = jax.jit(functools.partial(rrcnn_block, t=T))
    out = jax.block_until_ready(fwd(x, params))

    assert out.shape == (N, CH_OUT, H, W), out.shape
    assert bool(jnp.all(jnp.isfinite(out))), "non-finite values in kernel output"

    # Numerics-matched reference (same bf16 MXU-operand rounding): tight check.
    ref_bf16 = jax.block_until_ready(
        rrcnn_reference(x, params, t=T, mm_dtype=jnp.bfloat16))
    err_bf16 = float(jnp.max(jnp.abs(out - ref_bf16)))
    assert err_bf16 < 5e-3, f"mismatch vs bf16-matched reference: {err_bf16}"

    # Exact PyTorch math (f32 matmuls, conv bias kept): loose sanity bound on the
    # bf16 MXU-operand cast + in-kernel bias elimination.
    ref_f32 = jax.block_until_ready(
        rrcnn_reference(x, params, t=T, mm_dtype=jnp.float32))
    err_f32 = float(jnp.max(jnp.abs(out - ref_f32)))
    assert err_f32 < 1.5e-1, f"mismatch vs f32 reference: {err_f32}"

    print("KERNEL_OK")
</pallas_src>

<mosaic_0001>
module attributes {stable_mosaic.version = 11 : i64} {
  func.func @_conv1x1_kernel(%arg0: i32, %arg1: memref<1x16x16x4xf32, #tpu.memory_space<vmem>>, %arg2: memref<4x8xbf16, #tpu.memory_space<vmem>>, %arg3: memref<1x8xf32, #tpu.memory_space<vmem>>, %arg4: memref<1x16x16x8xf32, #tpu.memory_space<vmem>>) attributes {dimension_semantics = [#tpu.dimension_semantics<parallel>], iteration_bounds = array<i64: 2>, scalar_prefetch = 0 : i64, scratch_operands = 0 : i64, tpu.core_type = #tpu.core_type<tc>, window_params = [{transform_indices = @transform_0, window_bounds = array<i64: 1, 16, 16, 4>}, {pipeline_mode = #tpu.pipeline_mode<synchronous>, transform_indices = @transform_1, window_bounds = array<i64: 4, 8>}, {pipeline_mode = #tpu.pipeline_mode<synchronous>, transform_indices = @transform_2, window_bounds = array<i64: 1, 8>}, {transform_indices = @transform_3, window_bounds = array<i64: 1, 16, 16, 8>}]} {
    %c0 = arith.constant 0 : index
    %c0_0 = arith.constant 0 : index
    %c0_1 = arith.constant 0 : index
    %c0_2 = arith.constant 0 : index
    %0 = vector.load %arg1[%c0, %c0_0, %c0_1, %c0_2] : memref<1x16x16x4xf32, #tpu.memory_space<vmem>>, vector<1x16x16x4xf32>
    %1 = vector.shape_cast %0 : vector<1x16x16x4xf32> to vector<16x16x4xf32>
    %2 = vector.shape_cast %1 : vector<16x16x4xf32> to vector<256x4xf32>
    %3 = arith.truncf %2 : vector<256x4xf32> to vector<256x4xbf16>
    %c0_3 = arith.constant 0 : index
    %c0_4 = arith.constant 0 : index
    %4 = vector.load %arg2[%c0_3, %c0_4] : memref<4x8xbf16, #tpu.memory_space<vmem>>, vector<4x8xbf16>
    %cst = arith.constant dense<0.000000e+00> : vector<256x8xf32>
    %5 = tpu.matmul %3, %4, %cst {dimension_numbers = #tpu.dot_dimension_numbers<[1], [0], [0], [1], [0, 0, 1, 1], [], []>} : vector<256x4xbf16>, vector<4x8xbf16>, vector<256x8xf32> -> vector<256x8xf32>
    %c0_5 = arith.constant 0 : index
    %c0_6 = arith.constant 0 : index
    %6 = vector.load %arg3[%c0_5, %c0_6] : memref<1x8xf32, #tpu.memory_space<vmem>>, vector<1x8xf32>
    %7 = vector.broadcast %6 : vector<1x8xf32> to vector<256x8xf32>
    %8 = arith.addf %5, %7 : vector<256x8xf32>
    %9 = vector.shape_cast %8 : vector<256x8xf32> to vector<1x16x16x8xf32>
    %c0_7 = arith.constant 0 : index
    %c0_8 = arith.constant 0 : index
    %c0_9 = arith.constant 0 : index
    %c0_10 = arith.constant 0 : index
    %10 = vector.load %arg4[%c0_7, %c0_8, %c0_9, %c0_10] : memref<1x16x16x8xf32, #tpu.memory_space<vmem>>, vector<1x16x16x8xf32>
    tpu.vector_store %arg4[%c0_7, %c0_8, %c0_9, %c0_10], %9 {strides = array<i32>} : memref<1x16x16x8xf32, #tpu.memory_space<vmem>>, vector<1x16x16x8xf32>,
    return
  }
  func.func @transform_0(%arg0: i32) -> (i32, i32, i32, i32) {
    %c0_i32 = arith.constant 0 : i32
    %c0_i32_0 = arith.constant 0 : i32
    %c0_i32_1 = arith.constant 0 : i32
    %c0_i32_2 = arith.constant 0 : i32
    return %arg0, %c0_i32, %c0_i32_0, %c0_i32_1 : i32, i32, i32, i32
  }
  func.func @transform_1(%arg0: i32) -> (i32, i32) {
    %c0_i32 = arith.constant 0 : i32
    %c0_i32_0 = arith.constant 0 : i32
    %c0_i32_1 = arith.constant 0 : i32
    return %c0_i32, %c0_i32_0 : i32, i32
  }
  func.func @transform_2(%arg0: i32) -> (i32, i32) {
    %c0_i32 = arith.constant 0 : i32
    %c0_i32_0 = arith.constant 0 : i32
    %c0_i32_1 = arith.constant 0 : i32
    return %c0_i32, %c0_i32_0 : i32, i32
  }
  func.func @transform_3(%arg0: i32) -> (i32, i32, i32, i32) {
    %c0_i32 = arith.constant 0 : i32
    %c0_i32_0 = arith.constant 0 : i32
    %c0_i32_1 = arith.constant 0 : i32
    %c0_i32_2 = arith.constant 0 : i32
    return %arg0, %c0_i32, %c0_i32_0, %c0_i32_1 : i32, i32, i32, i32
  }
}

module attributes {stable_mosaic.version = 11 : i64} {
  func.func @_conv3x3_stage_kernel(%arg0: i32, %arg1: memref<1x16x16x8xf32, #tpu.memory_space<vmem>>, %arg2: memref<9x8x8xbf16, #tpu.memory_space<vmem>>, %arg3: memref<1x16x16x8xf32, #tpu.memory_space<vmem>>, %arg4: memref<1x2x8xf32, #tpu.memory_space<vmem>>, %arg5: memref<18x33x8xbf16, #tpu.memory_space<vmem>>) attributes {dimension_semantics = [#tpu.dimension_semantics<parallel>], iteration_bounds = array<i64: 2>, scalar_prefetch = 0 : i64, scratch_operands = 1 : i64, tpu.core_type = #tpu.core_type<tc>, window_params = [{transform_indices = @transform_0, window_bounds = array<i64: 1, 16, 16, 8>}, {pipeline_mode = #tpu.pipeline_mode<synchronous>, transform_indices = @transform_1, window_bounds = array<i64: 9, 8, 8>}, {transform_indices = @transform_2, window_bounds = array<i64: 1, 16, 16, 8>}, {transform_indices = @transform_3, window_bounds = array<i64: 1, 2, 8>}]} {
    %cst = arith.constant 0.000000e+00 : bf16
    %0 = vector.broadcast %cst : bf16 to vector<1x33x8xbf16>
    %c0 = arith.constant 0 : index
    %c0_0 = arith.constant 0 : index
    %c0_1 = arith.constant 0 : index
    %1 = vector.load %arg5[%c0, %c0_0, %c0_1] : memref<18x33x8xbf16, #tpu.memory_space<vmem>>, vector<1x33x8xbf16>
    tpu.vector_store %arg5[%c0, %c0_0, %c0_1], %0 {strides = array<i32>} : memref<18x33x8xbf16, #tpu.memory_space<vmem>>, vector<1x33x8xbf16>,
    %c17 = arith.constant 17 : index
    %c0_2 = arith.constant 0 : index
    %c0_3 = arith.constant 0 : index
    %2 = vector.load %arg5[%c17, %c0_2, %c0_3] : memref<18x33x8xbf16, #tpu.memory_space<vmem>>, vector<1x33x8xbf16>
    tpu.vector_store %arg5[%c17, %c0_2, %c0_3], %0 {strides = array<i32>} : memref<18x33x8xbf16, #tpu.memory_space<vmem>>, vector<1x33x8xbf16>,
    %cst_4 = arith.constant 0.000000e+00 : bf16
    %3 = vector.broadcast %cst_4 : bf16 to vector<18x1x8xbf16>
    %c0_5 = arith.constant 0 : index
    %c15 = arith.constant 15 : index
    %c0_6 = arith.constant 0 : index
    %4 = vector.load %arg5[%c0_5, %c15, %c0_6] : memref<18x33x8xbf16, #tpu.memory_space<vmem>>, vector<18x1x8xbf16>
    tpu.vector_store %arg5[%c0_5, %c15, %c0_6], %3 {strides = array<i32>} : memref<18x33x8xbf16, #tpu.memory_space<vmem>>, vector<18x1x8xbf16>,
    %c0_7 = arith.constant 0 : index
    %c32 = arith.constant 32 : index
    %c0_8 = arith.constant 0 : index
    %5 = vector.load %arg5[%c0_7, %c32, %c0_8] : memref<18x33x8xbf16, #tpu.memory_space<vmem>>, vector<18x1x8xbf16>
    tpu.vector_store %arg5[%c0_7, %c32, %c0_8], %3 {strides = array<i32>} : memref<18x33x8xbf16, #tpu.memory_space<vmem>>, vector<18x1x8xbf16>,
    %c0_9 = arith.constant 0 : index
    %c0_10 = arith.constant 0 : index
    %c0_11 = arith.constant 0 : index
    %c0_12 = arith.constant 0 : index
    %6 = vector.load %arg1[%c0_9, %c0_10, %c0_11, %c0_12] : memref<1x16x16x8xf32, #tpu.memory_space<vmem>>, vector<1x16x16x8xf32>
    %7 = vector.shape_cast %6 : vector<1x16x16x8xf32> to vector<16x16x8xf32>
    %8 = arith.truncf %7 : vector<16x16x8xf32> to vector<16x16x8xbf16>
    %c1 = arith.constant 1 : index
    %c16 = arith.constant 16 : index
    %c0_13 = arith.constant 0 : index
    %9 = vector.load %arg5[%c1, %c16, %c0_13] : memref<18x33x8xbf16, #tpu.memory_space<vmem>>, vector<16x16x8xbf16>
    tpu.vector_store %arg5[%c1, %c16, %c0_13], %8 {strides = array<i32>} : memref<18x33x8xbf16, #tpu.memory_space<vmem>>, vector<16x16x8xbf16>,
    %cst_14 = arith.constant 0.000000e+00 : f32
    %10 = vector.broadcast %cst_14 : f32 to vector<256x8xf32>
    %c0_15 = arith.constant 0 : index
    %c15_16 = arith.constant 15 : index
    %c0_17 = arith.constant 0 : index
    %11 = vector.load %arg5[%c0_15, %c15_16, %c0_17] : memref<18x33x8xbf16, #tpu.memory_space<vmem>>, vector<16x16x8xbf16>
    %12 = vector.shape_cast %11 : vector<16x16x8xbf16> to vector<256x8xbf16>
    %c0_18 = arith.constant 0 : index
    %c0_19 = arith.constant 0 : index
    %c0_20 = arith.constant 0 : index
    %13 = vector.load %arg2[%c0_18, %c0_19, %c0_20] : memref<9x8x8xbf16, #tpu.memory_space<vmem>>, vector<1x8x8xbf16>
    %14 = vector.shape_cast %13 : vector<1x8x8xbf16> to vector<8x8xbf16>
    %cst_21 = arith.constant dense<0.000000e+00> : vector<256x8xf32>
    %15 = tpu.matmul %12, %14, %cst_21 {dimension_numbers = #tpu.dot_dimension_numbers<[1], [0], [0], [1], [0, 0, 1, 1], [], []>} : vector<256x8xbf16>, vector<8x8xbf16>, vector<256x8xf32> -> vector<256x8xf32>
    %16 = arith.addf %10, %15 : vector<256x8xf32>
    %c0_22 = arith.constant 0 : index
    %c16_23 = arith.constant 16 : index
    %c0_24 = arith.constant 0 : index
    %17 = vector.load %arg5[%c0_22, %c16_23, %c0_24] : memref<18x33x8xbf16, #tpu.memory_space<vmem>>, vector<16x16x8xbf16>
    %18 = vector.shape_cast %17 : vector<16x16x8xbf16> to vector<256x8xbf16>
    %c1_25 = arith.constant 1 : index
    %c0_26 = arith.constant 0 : index
    %c0_27 = arith.constant 0 : index
    %19 = vector.load %arg2[%c1_25, %c0_26, %c0_27] : memref<9x8x8xbf16, #tpu.memory_space<vmem>>, vector<1x8x8xbf16>
    %20 = vector.shape_cast %19 : vector<1x8x8xbf16> to vector<8x8xbf16>
    %cst_28 = arith.constant dense<0.000000e+00> : vector<256x8xf32>
    %21 = tpu.matmul %18, %20, %cst_28 {dimension_numbers = #tpu.dot_dimension_numbers<[1], [0], [0], [1], [0, 0, 1, 1], [], []>} : vector<256x8xbf16>, vector<8x8xbf16>, vector<256x8xf32> -> vector<256x8xf32>
    %22 = arith.addf %16, %21 : vector<256x8xf32>
    %c0_29 = arith.constant 0 : index
    %c17_30 = arith.constant 17 : index
    %c0_31 = arith.constant 0 : index
    %23 = vector.load %arg5[%c0_29, %c17_30, %c0_31] : memref<18x33x8xbf16, #tpu.memory_space<vmem>>, vector<16x16x8xbf16>
    %24 = vector.shape_cast %23 : vector<16x16x8xbf16> to vector<256x8xbf16>
    %c2 = arith.constant 2 : index
    %c0_32 = arith.constant 0 : index
    %c0_33 = arith.constant 0 : index
    %25 = vector.load %arg2[%c2, %c0_32, %c0_33] : memref<9x8x8xbf16, #tpu.memory_space<vmem>>, vector<1x8x8xbf16>
    %26 = vector.shape_cast %25 : vector<1x8x8xbf16> to vector<8x8xbf16>
    %cst_34 = arith.constant dense<0.000000e+00> : vector<256x8xf32>
    %27 = tpu.matmul %24, %26, %cst_34 {dimension_numbers = #tpu.dot_dimension_numbers<[1], [0], [0], [1], [0, 0, 1, 1], [], []>} : vector<256x8xbf16>, vector<8x8xbf16>, vector<256x8xf32> -> vector<256x8xf32>
    %28 = arith.addf %22, %27 : vector<256x8xf32>
    %c1_35 = arith.constant 1 : index
    %c15_36 = arith.constant 15 : index
    %c0_37 = arith.constant 0 : index
    %29 = vector.load %arg5[%c1_35, %c15_36, %c0_37] : memref<18x33x8xbf16, #tpu.memory_space<vmem>>, vector<16x16x8xbf16>
    %30 = vector.shape_cast %29 : vector<16x16x8xbf16> to vector<256x8xbf16>
    %c3 = arith.constant 3 : index
    %c0_38 = arith.constant 0 : index
    %c0_39 = arith.constant 0 : index
    %31 = vector.load %arg2[%c3, %c0_38, %c0_39] : memref<9x8x8xbf16, #tpu.memory_space<vmem>>, vector<1x8x8xbf16>
    %32 = vector.shape_cast %31 : vector<1x8x8xbf16> to vector<8x8xbf16>
    %cst_40 = arith.constant dense<0.000000e+00> : vector<256x8xf32>
    %33 = tpu.matmul %30, %32, %cst_40 {dimension_numbers = #tpu.dot_dimension_numbers<[1], [0], [0], [1], [0, 0, 1, 1], [], []>} : vector<256x8xbf16>, vector<8x8xbf16>, vector<256x8xf32> -> vector<256x8xf32>
    %34 = arith.addf %28, %33 : vector<256x8xf32>
    %c1_41 = arith.constant 1 : index
    %c16_42 = arith.constant 16 : index
    %c0_43 = arith.constant 0 : index
    %35 = vector.load %arg5[%c1_41, %c16_42, %c0_43] : memref<18x33x8xbf16, #tpu.memory_space<vmem>>, vector<16x16x8xbf16>
    %36 = vector.shape_cast %35 : vector<16x16x8xbf16> to vector<256x8xbf16>
    %c4 = arith.constant 4 : index
    %c0_44 = arith.constant 0 : index
    %c0_45 = arith.constant 0 : index
    %37 = vector.load %arg2[%c4, %c0_44, %c0_45] : memref<9x8x8xbf16, #tpu.memory_space<vmem>>, vector<1x8x8xbf16>
    %38 = vector.shape_cast %37 : vector<1x8x8xbf16> to vector<8x8xbf16>
    %cst_46 = arith.constant dense<0.000000e+00> : vector<256x8xf32>
    %39 = tpu.matmul %36, %38, %cst_46 {dimension_numbers = #tpu.dot_dimension_numbers<[1], [0], [0], [1], [0, 0, 1, 1], [], []>} : vector<256x8xbf16>, vector<8x8xbf16>, vector<256x8xf32> -> vector<256x8xf32>
    %40 = arith.addf %34, %39 : vector<256x8xf32>
    %c1_47 = arith.constant 1 : index
    %c17_48 = arith.constant 17 : index
    %c0_49 = arith.constant 0 : index
    %41 = vector.load %arg5[%c1_47, %c17_48, %c0_49] : memref<18x33x8xbf16, #tpu.memory_space<vmem>>, vector<16x16x8xbf16>
    %42 = vector.shape_cast %41 : vector<16x16x8xbf16> to vector<256x8xbf16>
    %c5 = arith.constant 5 : index
    %c0_50 = arith.constant 0 : index
    %c0_51 = arith.constant 0 : index
    %43 = vector.load %arg2[%c5, %c0_50, %c0_51] : memref<9x8x8xbf16, #tpu.memory_space<vmem>>, vector<1x8x8xbf16>
    %44 = vector.shape_cast %43 : vector<1x8x8xbf16> to vector<8x8xbf16>
    %cst_52 = arith.constant dense<0.000000e+00> : vector<256x8xf32>
    %45 = tpu.matmul %42, %44, %cst_52 {dimension_numbers = #tpu.dot_dimension_numbers<[1], [0], [0], [1], [0, 0, 1, 1], [], []>} : vector<256x8xbf16>, vector<8x8xbf16>, vector<256x8xf32> -> vector<256x8xf32>
    %46 = arith.addf %40, %45 : vector<256x8xf32>
    %c2_53 = arith.constant 2 : index
    %c15_54 = arith.constant 15 : index
    %c0_55 = arith.constant 0 : index
    %47 = vector.load %arg5[%c2_53, %c15_54, %c0_55] : memref<18x33x8xbf16, #tpu.memory_space<vmem>>, vector<16x16x8xbf16>
    %48 = vector.shape_cast %47 : vector<16x16x8xbf16> to vector<256x8xbf16>
    %c6 = arith.constant 6 : index
    %c0_56 = arith.constant 0 : index
    %c0_57 = arith.constant 0 : index
    %49 = vector.load %arg2[%c6, %c0_56, %c0_57] : memref<9x8x8xbf16, #tpu.memory_space<vmem>>, vector<1x8x8xbf16>
    %50 = vector.shape_cast %49 : vector<1x8x8xbf16> to vector<8x8xbf16>
    %cst_58 = arith.constant dense<0.000000e+00> : vector<256x8xf32>
    %51 = tpu.matmul %48, %50, %cst_58 {dimension_numbers = #tpu.dot_dimension_numbers<[1], [0], [0], [1], [0, 0, 1, 1], [], []>} : vector<256x8xbf16>, vector<8x8xbf16>, vector<256x8xf32> -> vector<256x8xf32>
    %52 = arith.addf %46, %51 : vector<256x8xf32>
    %c2_59 = arith.constant 2 : index
    %c16_60 = arith.constant 16 : index
    %c0_61 = arith.constant 0 : index
    %53 = vector.load %arg5[%c2_59, %c16_60, %c0_61] : memref<18x33x8xbf16, #tpu.memory_space<vmem>>, vector<16x16x8xbf16>
    %54 = vector.shape_cast %53 : vector<16x16x8xbf16> to vector<256x8xbf16>
    %c7 = arith.constant 7 : index
    %c0_62 = arith.constant 0 : index
    %c0_63 = arith.constant 0 : index
    %55 = vector.load %arg2[%c7, %c0_62, %c0_63] : memref<9x8x8xbf16, #tpu.memory_space<vmem>>, vector<1x8x8xbf16>
    %56 = vector.shape_cast %55 : vector<1x8x8xbf16> to vector<8x8xbf16>
    %cst_64 = arith.constant dense<0.000000e+00> : vector<256x8xf32>
    %57 = tpu.matmul %54, %56, %cst_64 {dimension_numbers = #tpu.dot_dimension_numbers<[1], [0], [0], [1], [0, 0, 1, 1], [], []>} : vector<256x8xbf16>, vector<8x8xbf16>, vector<256x8xf32> -> vector<256x8xf32>
    %58 = arith.addf %52, %57 : vector<256x8xf32>
    %c2_65 = arith.constant 2 : index
    %c17_66 = arith.constant 17 : index
    %c0_67 = arith.constant 0 : index
    %59 = vector.load %arg5[%c2_65, %c17_66, %c0_67] : memref<18x33x8xbf16, #tpu.memory_space<vmem>>, vector<16x16x8xbf16>
    %60 = vector.shape_cast %59 : vector<16x16x8xbf16> to vector<256x8xbf16>
    %c8 = arith.constant 8 : index
    %c0_68 = arith.constant 0 : index
    %c0_69 = arith.constant 0 : index
    %61 = vector.load %arg2[%c8, %c0_68, %c0_69] : memref<9x8x8xbf16, #tpu.memory_space<vmem>>, vector<1x8x8xbf16>
    %62 = vector.shape_cast %61 : vector<1x8x8xbf16> to vector<8x8xbf16>
    %cst_70 = arith.constant dense<0.000000e+00> : vector<256x8xf32>
    %63 = tpu.matmul %60, %62, %cst_70 {dimension_numbers = #tpu.dot_dimension_numbers<[1], [0], [0], [1], [0, 0, 1, 1], [], []>} : vector<256x8xbf16>, vector<8x8xbf16>, vector<256x8xf32> -> vector<256x8xf32>
    %64 = arith.addf %58, %63 : vector<256x8xf32>
    %65 = vector.shape_cast %64 : vector<256x8xf32> to vector<1x16x16x8xf32>
    %c0_71 = arith.constant 0 : index
    %c0_72 = arith.constant 0 : index
    %c0_73 = arith.constant 0 : index
    %c0_74 = arith.constant 0 : index
    %66 = vector.load %arg3[%c0_71, %c0_72, %c0_73, %c0_74] : memref<1x16x16x8xf32, #tpu.memory_space<vmem>>, vector<1x16x16x8xf32>
    tpu.vector_store %arg3[%c0_71, %c0_72, %c0_73, %c0_74], %65 {strides = array<i32>} : memref<1x16x16x8xf32, #tpu.memory_space<vmem>>, vector<1x16x16x8xf32>,
    %cst_75 = arith.constant dense<0.000000e+00> : vector<8xf32>
    %67 = vector.multi_reduction <add>, %64, %cst_75 [0] : vector<256x8xf32> to vector<8xf32>
    %68 = vector.shape_cast %67 : vector<8xf32> to vector<1x8xf32>
    %cst_76 = arith.constant 3.906250e-03 : f32
    %69 = vector.broadcast %cst_76 : f32 to vector<1x8xf32>
    %70 = arith.mulf %68, %69 : vector<1x8xf32>
    %71 = vector.broadcast %70 : vector<1x8xf32> to vector<256x8xf32>
    %72 = arith.subf %64, %71 : vector<256x8xf32>
    %73 = arith.mulf %72, %72 : vector<256x8xf32>
    %cst_77 = arith.constant dense<0.000000e+00> : vector<8xf32>
    %74 = vector.multi_reduction <add>, %73, %cst_77 [0] : vector<256x8xf32> to vector<8xf32>
    %75 = vector.shape_cast %74 : vector<8xf32> to vector<1x8xf32>
    %76 = vector.shape_cast %70 : vector<1x8xf32> to vector<1x1x8xf32>
    %c0_78 = arith.constant 0 : index
    %c0_79 = arith.constant 0 : index
    %c0_80 = arith.constant 0 : index
    %77 = vector.load %arg4[%c0_78, %c0_79, %c0_80] : memref<1x2x8xf32, #tpu.memory_space<vmem>>, vector<1x1x8xf32>
    tpu.vector_store %arg4[%c0_78, %c0_79, %c0_80], %76 {strides = array<i32>} : memref<1x2x8xf32, #tpu.memory_space<vmem>>, vector<1x1x8xf32>,
    %78 = vector.shape_cast %75 : vector<1x8xf32> to vector<1x1x8xf32>
    %c0_81 = arith.constant 0 : index
    %c1_82 = arith.constant 1 : index
    %c0_83 = arith.constant 0 : index
    %79 = vector.load %arg4[%c0_81, %c1_82, %c0_83] : memref<1x2x8xf32, #tpu.memory_space<vmem>>, vector<1x1x8xf32>
    tpu.vector_store %arg4[%c0_81, %c1_82, %c0_83], %78 {strides = array<i32>} : memref<1x2x8xf32, #tpu.memory_space<vmem>>, vector<1x1x8xf32>,
    return
  }
  func.func @transform_0(%arg0: i32) -> (i32, i32, i32, i32) {
    %c0_i32 = arith.constant 0 : i32
    %c0_i32_0 = arith.constant 0 : i32
    %c0_i32_1 = arith.constant 0 : i32
    %c0_i32_2 = arith.constant 0 : i32
    return %arg0, %c0_i32, %c0_i32_0, %c0_i32_1 : i32, i32, i32, i32
  }
  func.func @transform_1(%arg0: i32) -> (i32, i32, i32) {
    %c0_i32 = arith.constant 0 : i32
    %c0_i32_0 = arith.constant 0 : i32
    %c0_i32_1 = arith.constant 0 : i32
    %c0_i32_2 = arith.constant 0 : i32
    return %c0_i32, %c0_i32_0, %c0_i32_1 : i32, i32, i32
  }
  func.func @transform_2(%arg0: i32) -> (i32, i32, i32, i32) {
    %c0_i32 = arith.constant 0 : i32
    %c0_i32_0 = arith.constant 0 : i32
    %c0_i32_1 = arith.constant 0 : i32
    %c0_i32_2 = arith.constant 0 : i32
    return %arg0, %c0_i32, %c0_i32_0, %c0_i32_1 : i32, i32, i32, i32
  }
  func.func @transform_3(%arg0: i32) -> (i32, i32, i32) {
    %c0_i32 = arith.constant 0 : i32
    %c0_i32_0 = arith.constant 0 : i32
    %c0_i32_1 = arith.constant 0 : i32
    return %arg0, %c0_i32, %c0_i32_0 : i32, i32, i32
  }
}

module attributes {stable_mosaic.version = 11 : i64} {
  func.func @_bn_relu_add_kernel(%arg0: i32, %arg1: memref<1x16x128xf32, #tpu.memory_space<vmem>>, %arg2: memref<1x128xf32, #tpu.memory_space<vmem>>, %arg3: memref<1x128xf32, #tpu.memory_space<vmem>>, %arg4: memref<1x16x128xf32, #tpu.memory_space<vmem>>, %arg5: memref<1x16x128xf32, #tpu.memory_space<vmem>>) attributes {dimension_semantics = [#tpu.dimension_semantics<parallel>], iteration_bounds = array<i64: 2>, scalar_prefetch = 0 : i64, scratch_operands = 0 : i64, tpu.core_type = #tpu.core_type<tc>, window_params = [{transform_indices = @transform_0, window_bounds = array<i64: 1, 16, 128>}, {pipeline_mode = #tpu.pipeline_mode<synchronous>, transform_indices = @transform_1, window_bounds = array<i64: 1, 128>}, {pipeline_mode = #tpu.pipeline_mode<synchronous>, transform_indices = @transform_2, window_bounds = array<i64: 1, 128>}, {transform_indices = @transform_3, window_bounds = array<i64: 1, 16, 128>}, {transform_indices = @transform_4, window_bounds = array<i64: 1, 16, 128>}]} {
    %c0 = arith.constant 0 : index
    %c0_0 = arith.constant 0 : index
    %c0_1 = arith.constant 0 : index
    %0 = vector.load %arg4[%c0, %c0_0, %c0_1] : memref<1x16x128xf32, #tpu.memory_space<vmem>>, vector<1x16x128xf32>
    %c0_2 = arith.constant 0 : index
    %c0_3 = arith.constant 0 : index
    %c0_4 = arith.constant 0 : index
    %1 = vector.load %arg1[%c0_2, %c0_3, %c0_4] : memref<1x16x128xf32, #tpu.memory_space<vmem>>, vector<1x16x128xf32>
    %c0_5 = arith.constant 0 : index
    %c0_6 = arith.constant 0 : index
    %2 = vector.load %arg2[%c0_5, %c0_6] : memref<1x128xf32, #tpu.memory_space<vmem>>, vector<1x128xf32>
    %3 = vector.shape_cast %2 : vector<1x128xf32> to vector<1x1x128xf32>
    %4 = vector.broadcast %3 : vector<1x1x128xf32> to vector<1x16x128xf32>
    %5 = arith.mulf %1, %4 : vector<1x16x128xf32>
    %c0_7 = arith.constant 0 : index
    %c0_8 = arith.constant 0 : index
    %6 = vector.load %arg3[%c0_7, %c0_8] : memref<1x128xf32, #tpu.memory_space<vmem>>, vector<1x128xf32>
    %7 = vector.shape_cast %6 : vector<1x128xf32> to vector<1x1x128xf32>
    %8 = vector.broadcast %7 : vector<1x1x128xf32> to vector<1x16x128xf32>
    %9 = arith.addf %5, %8 : vector<1x16x128xf32>
    %cst = arith.constant 0.000000e+00 : f32
    %10 = vector.broadcast %cst : f32 to vector<1x16x128xf32>
    %11 = arith.maximumf %9, %10 : vector<1x16x128xf32>
    %12 = arith.addf %0, %11 : vector<1x16x128xf32>
    %c0_9 = arith.constant 0 : index
    %c0_10 = arith.constant 0 : index
    %c0_11 = arith.constant 0 : index
    %13 = vector.load %arg5[%c0_9, %c0_10, %c0_11] : memref<1x16x128xf32, #tpu.memory_space<vmem>>, vector<1x16x128xf32>
    tpu.vector_store %arg5[%c0_9, %c0_10, %c0_11], %12 {strides = array<i32>} : memref<1x16x128xf32, #tpu.memory_space<vmem>>, vector<1x16x128xf32>,
    return
  }
  func.func @transform_0(%arg0: i32) -> (i32, i32, i32) {
    %c0_i32 = arith.constant 0 : i32
    %c0_i32_0 = arith.constant 0 : i32
    %c0_i32_1 = arith.constant 0 : i32
    return %arg0, %c0_i32, %c0_i32_0 : i32, i32, i32
  }
  func.func @transform_1(%arg0: i32) -> (i32, i32) {
    %c0_i32 = arith.constant 0 : i32
    %c0_i32_0 = arith.constant 0 : i32
    %c0_i32_1 = arith.constant 0 : i32
    return %c0_i32, %c0_i32_0 : i32, i32
  }
  func.func @transform_2(%arg0: i32) -> (i32, i32) {
    %c0_i32 = arith.constant 0 : i32
    %c0_i32_0 = arith.constant 0 : i32
    %c0_i32_1 = arith.constant 0 : i32
    return %c0_i32, %c0_i32_0 : i32, i32
  }
  func.func @transform_3(%arg0: i32) -> (i32, i32, i32) {
    %c0_i32 = arith.constant 0 : i32
    %c0_i32_0 = arith.constant 0 : i32
    %c0_i32_1 = arith.constant 0 : i32
    return %arg0, %c0_i32, %c0_i32_0 : i32, i32, i32
  }
  func.func @transform_4(%arg0: i32) -> (i32, i32, i32) {
    %c0_i32 = arith.constant 0 : i32
    %c0_i32_0 = arith.constant 0 : i32
    %c0_i32_1 = arith.constant 0 : i32
    return %arg0, %c0_i32, %c0_i32_0 : i32, i32, i32
  }
}

module attributes {stable_mosaic.version = 11 : i64} {
  func.func @_bn_relu_kernel(%arg0: i32, %arg1: memref<1x16x128xf32, #tpu.memory_space<vmem>>, %arg2: memref<1x128xf32, #tpu.memory_space<vmem>>, %arg3: memref<1x128xf32, #tpu.memory_space<vmem>>, %arg4: memref<1x16x128xf32, #tpu.memory_space<vmem>>) attributes {dimension_semantics = [#tpu.dimension_semantics<parallel>], iteration_bounds = array<i64: 2>, scalar_prefetch = 0 : i64, scratch_operands = 0 : i64, tpu.core_type = #tpu.core_type<tc>, window_params = [{transform_indices = @transform_0, window_bounds = array<i64: 1, 16, 128>}, {pipeline_mode = #tpu.pipeline_mode<synchronous>, transform_indices = @transform_1, window_bounds = array<i64: 1, 128>}, {pipeline_mode = #tpu.pipeline_mode<synchronous>, transform_indices = @transform_2, window_bounds = array<i64: 1, 128>}, {transform_indices = @transform_3, window_bounds = array<i64: 1, 16, 128>}]} {
    %c0 = arith.constant 0 : index
    %c0_0 = arith.constant 0 : index
    %c0_1 = arith.constant 0 : index
    %0 = vector.load %arg1[%c0, %c0_0, %c0_1] : memref<1x16x128xf32, #tpu.memory_space<vmem>>, vector<1x16x128xf32>
    %c0_2 = arith.constant 0 : index
    %c0_3 = arith.constant 0 : index
    %1 = vector.load %arg2[%c0_2, %c0_3] : memref<1x128xf32, #tpu.memory_space<vmem>>, vector<1x128xf32>
    %2 = vector.shape_cast %1 : vector<1x128xf32> to vector<1x1x128xf32>
    %3 = vector.broadcast %2 : vector<1x1x128xf32> to vector<1x16x128xf32>
    %4 = arith.mulf %0, %3 : vector<1x16x128xf32>
    %c0_4 = arith.constant 0 : index
    %c0_5 = arith.constant 0 : index
    %5 = vector.load %arg3[%c0_4, %c0_5] : memref<1x128xf32, #tpu.memory_space<vmem>>, vector<1x128xf32>
    %6 = vector.shape_cast %5 : vector<1x128xf32> to vector<1x1x128xf32>
    %7 = vector.broadcast %6 : vector<1x1x128xf32> to vector<1x16x128xf32>
    %8 = arith.addf %4, %7 : vector<1x16x128xf32>
    %cst = arith.constant 0.000000e+00 : f32
    %9 = vector.broadcast %cst : f32 to vector<1x16x128xf32>
    %10 = arith.maximumf %8, %9 : vector<1x16x128xf32>
    %c0_6 = arith.constant 0 : index
    %c0_7 = arith.constant 0 : index
    %c0_8 = arith.constant 0 : index
    %11 = vector.load %arg4[%c0_6, %c0_7, %c0_8] : memref<1x16x128xf32, #tpu.memory_space<vmem>>, vector<1x16x128xf32>
    tpu.vector_store %arg4[%c0_6, %c0_7, %c0_8], %10 {strides = array<i32>} : memref<1x16x128xf32, #tpu.memory_space<vmem>>, vector<1x16x128xf32>,
    return
  }
  func.func @transform_0(%arg0: i32) -> (i32, i32, i32) {
    %c0_i32 = arith.constant 0 : i32
    %c0_i32_0 = arith.constant 0 : i32
    %c0_i32_1 = arith.constant 0 : i32
    return %arg0, %c0_i32, %c0_i32_0 : i32, i32, i32
  }
  func.func @transform_1(%arg0: i32) -> (i32, i32) {
    %c0_i32 = arith.constant 0 : i32
    %c0_i32_0 = arith.constant 0 : i32
    %c0_i32_1 = arith.constant 0 : i32
    return %c0_i32, %c0_i32_0 : i32, i32
  }
  func.func @transform_2(%arg0: i32) -> (i32, i32) {
    %c0_i32 = arith.constant 0 : i32
    %c0_i32_0 = arith.constant 0 : i32
    %c0_i32_1 = arith.constant 0 : i32
    return %c0_i32, %c0_i32_0 : i32, i32
  }
  func.func @transform_3(%arg0: i32) -> (i32, i32, i32) {
    %c0_i32 = arith.constant 0 : i32
    %c0_i32_0 = arith.constant 0 : i32
    %c0_i32_1 = arith.constant 0 : i32
    return %arg0, %c0_i32, %c0_i32_0 : i32, i32, i32
  }
}

</mosaic_0001>

<llo_original>
// kernel: tile.68
$region0: #{tile.68}
  #allocation0 [shape = 's32[1]{0}', space=sflag, size = 0x4, scoped, tag = 'scoped memory for tile.68']
  %s0 = inlined_call_operand.vmem [shape: f32[8], index: 0, kind: input, shape index: {}]
  %s1 = inlined_call_operand.vmem [shape: f32[16,8], index: 1, kind: output, shape index: {}]
  // Predicated region
  $region2: #{tile.68} parent=0 // pred_check
    _
  $region3: #{tile.68} parent=0 // pred_check_branch
    %3 = sbr.rel (0) target = $region5
  $region4: #{tile.68} parent=0 // pred_region
    _
  $region5: #{tile.68} parent=0 // pred_fallthru
    _
  %v4 = vld [vmem:[%s0] ss:$0 sm:$0xff]
  %5 = vst [vmem:[%s1] sm:$0xff] %v4
  %s6 = scalar_lea.vmem %s1, 8
  %7 = vst [vmem:[%s6] sm:$0xff] %v4

// kernel: tile.69
$region0: #{tile.69}
  %s0 = inlined_call_operand.vmem [shape: f32[16,8], index: 0, kind: input, shape index: {}]
  %s1 = inlined_call_operand.vmem [shape: f32[1,128], index: 1, kind: output, shape index: {}]
  $region1: #{tile.69} parent=0
    #allocation0 [shape = 'u8[4096]{0}', space=vmem, size = 0x1000, scoped, tag = 'scoped mem for output reshape']
    %v2 = vld [vmem:[%s0] sm:$0x1]
    %vm3 = vcmask 64512
    %4 = vst.msk [vmem:[#allocation0] sm:$0x1] %vm3, %v2
    %s5 = scalar_lea.vmem %s0, 15
    %v6 = vld [vmem:[%s5] sm:$0x1]
    %7 = vrot.lane.b32.xlu0 %v6, 120
    %v8 = vpop.permute.xlu0 %7
    %vm9 = vcmask 1048512
    %10 = vst.msk [vmem:[#allocation0] sm:$0x1] %vm9, %v8
    %s11 = scalar_lea.vmem %s0, 14
    %v12 = vld [vmem:[%s11] sm:$0x1]
    %13 = vrot.lane.b32.xlu0 %v12, 112
    %v14 = vpop.permute.xlu0 %13
    %vm15 = vcmask 982912
    %16 = vst.msk [vmem:[#allocation0] sm:$0x1] %vm15, %v14
    %s17 = scalar_lea.vmem %s0, 13
    %v18 = vld [vmem:[%s17] sm:$0x1]
    %19 = vrot.lane.b32.xlu0 %v18, 104
    %v20 = vpop.permute.xlu0 %19
    %vm21 = vcmask 917312
    %22 = vst.msk [vmem:[#allocation0] sm:$0x1] %vm21, %v20
    %s23 = scalar_lea.vmem %s0, 12
    %v24 = vld [vmem:[%s23] sm:$0x1]
    %25 = vrot.lane.b32.xlu0 %v24, 96
    %v26 = vpop.permute.xlu0 %25
    %vm27 = vcmask 851712
    %28 = vst.msk [vmem:[#allocation0] sm:$0x1] %vm27, %v26
    %s29 = scalar_lea.vmem %s0, 11
    %v30 = vld [vmem:[%s29] sm:$0x1]
    %31 = vrot.lane.b32.xlu0 %v30, 88
    %v32 = vpop.permute.xlu0 %31
    %vm33 = vcmask 786112
    %34 = vst.msk [vmem:[#allocation0] sm:$0x1] %vm33, %v32
    %s35 = scalar_lea.vmem %s0, 10
    %v36 = vld [vmem:[%s35] sm:$0x1]
    %37 = vrot.lane.b32.xlu0 %v36, 80
    %v38 = vpop.permute.xlu0 %37
    %vm39 = vcmask 720512
    %40 = vst.msk [vmem:[#allocation0] sm:$0x1] %vm39, %v38
    %s41 = scalar_lea.vmem %s0, 9
    %v42 = vld [vmem:[%s41] sm:$0x1]
    %43 = vrot.lane.b32.xlu0 %v42, 72
    %v44 = vpop.permute.xlu0 %43
    %vm45 = vcmask 654912
    %46 = vst.msk [vmem:[#allocation0] sm:$0x1] %vm45, %v44
    %s47 = scalar_lea.vmem %s0, 8
    %v48 = vld [vmem:[%s47] sm:$0x1]
    %49 = vrot.lane.b32.xlu0 %v48, 64
    %v50 = vpop.permute.xlu0 %49
    %vm51 = vcmask 589312
    %52 = vst.msk [vmem:[#allocation0] sm:$0x1] %vm51, %v50
    %s53 = scalar_lea.vmem %s0, 7
    %v54 = vld [vmem:[%s53] sm:$0x1]
    %55 = vrot.lane.b32.xlu0 %v54, 56
    %v56 = vpop.permute.xlu0 %55
    %vm57 = vcmask 523712
    %58 = vst.msk [vmem:[#allocation0] sm:$0x1] %vm57, %v56
    %s59 = scalar_lea.vmem %s0, 6
    %v60 = vld [vmem:[%s59] sm:$0x1]
    %61 = vrot.lane.b32.xlu0 %v60, 48
    %v62 = vpop.permute.xlu0 %61
    %vm63 = vcmask 458112
    %64 = vst.msk [vmem:[#allocation0] sm:$0x1] %vm63, %v62
    %s65 = scalar_lea.vmem %s0, 5
    %v66 = vld [vmem:[%s65] sm:$0x1]
    %67 = vrot.lane.b32.xlu0 %v66, 40
    %v68 = vpop.permute.xlu0 %67
    %vm69 = vcmask 392512
    %70 = vst.msk [vmem:[#allocation0] sm:$0x1] %vm69, %v68
    %s71 = scalar_lea.vmem %s0, 4
    %v72 = vld [vmem:[%s71] sm:$0x1]
    %73 = vrot.lane.b32.xlu0 %v72, 32
    %v74 = vpop.permute.xlu0 %73
    %vm75 = vcmask 326912
    %76 = vst.msk [vmem:[#allocation0] sm:$0x1] %vm75, %v74
    %s77 = scalar_lea.vmem %s0, 3
    %v78 = vld [vmem:[%s77] sm:$0x1]
    %79 = vrot.lane.b32.xlu0 %v78, 24
    %v80 = vpop.permute.xlu0 %79
    %vm81 = vcmask 261312
    %82 = vst.msk [vmem:[#allocation0] sm:$0x1] %vm81, %v80
    %s83 = scalar_lea.vmem %s0, 2
    %v84 = vld [vmem:[%s83] sm:$0x1]
    %85 = vrot.lane.b32.xlu0 %v84, 16
    %v86 = vpop.permute.xlu0 %85
    %vm87 = vcmask 195712
    %88 = vst.msk [vmem:[#allocation0] sm:$0x1] %vm87, %v86
    %s89 = scalar_lea.vmem %s0, 1
    %v90 = vld [vmem:[%s89] sm:$0x1]
    %91 = vrot.lane.b32.xlu0 %v90, 8
    %v92 = vpop.permute.xlu0 %91
    %vm93 = vcmask 130112
    %94 = vst.msk [vmem:[#allocation0] sm:$0x1] %vm93, %v92
    %s96 = sshllo.u32 0, 1
    %v98 = vld [vmem:[#allocation0] sm:%s96]
    %s99 = sshllo.u32 0, 1
    %100 = vst [vmem:[%s1] sm:%s99] %v98

// kernel: rrcnn_block.13
$region0: #{rrcnn_block.13}
  #allocation0 [shape = 'u32[]', space=smem, size = 0x4, offset = 0x4, fixed_abs, tag = 'smem constant byte address 0x4 - core index']
  #allocation1 [shape = 'u32[144,128]{1,0:T(1,128)}', space=vmem, size = 0x12000, scoped, tag = 'internal scratch']
  %s0 = inlined_call_operand.vmem [shape: f32[2,16,16,4], index: 0, kind: input, shape index: {}]
  %s1 = inlined_call_operand.vmem [shape: bf16[4,8], index: 1, kind: input, shape index: {}]
  %s2 = inlined_call_operand.vmem [shape: f32[1,8], index: 2, kind: input, shape index: {}]
  %s3 = inlined_call_operand.vmem [shape: f32[2,16,16,8], index: 3, kind: output, shape index: {}]
  %s4 = sld [smem:[#allocation0]]
  $region45: #{rrcnn_block.13} parent=0
    _
  %s6 = ssub.s32 1, %s4
  %s7 = scalar_select 0, %s6, %s4
  loop: start=0, step=1, limit=4
  $region2: #{rrcnn_block.13} parent=0 // loop_pre_header
    _
  $region3: #{rrcnn_block.13} parent=0 // loop_header
    %s9 = sphi 0, %s13
    %p10 = scmp.ge.s32.totalorder %s9, 4
    %s19 = sphi 0, %s21
    %s22 = sphi 0, %s19
    %s23 = sphi 0, %s22
    %s39 = sphi 0, %s23
    %s43 = sphi 0, %s43
    %s45 = sphi 0, %s43
    %s46 = sphi 0, %s45
    %s60 = sphi 0, %s46
    %s64 = sphi 0, %s64
    %s66 = sphi 0, %s64
    %s67 = sphi 0, %s66
    %s81 = sphi 0, %s67
    %s87 = sphi 0, %s89
    %s90 = sphi 0, %s87
    %s91 = sphi 0, %s90
    %s107 = sphi 0, %s91
  $region4: #{rrcnn_block.13} parent=0 // loop_header_branch
    %12 = sbr.rel (%p10) target = $region8
  $region5: #{rrcnn_block.13} parent=0 // loop_body
    %s14 = ssub.s32 %s9, 1
    %s15 = ssub.s32 %s9, 2
    %s16 = sadd.s32 %s9, 1
    %s17 = ssub.s32 %s9, %s16
    %p18 = scmp.eq.s32.totalorder %s17, 0
    %s20 = sadd.s32 %s19, 1
    %s21 = scalar_select %p18, %s19, %s20
    %p24 = pneg %p18
    %p25 = scmp.eq.s32.totalorder %s9, 1
    %p26 = por %p24, %p25
    %p27 = scmp.ne.s32.totalorder %s19, %s22
    %p28 = scmp.eq.s32.totalorder %s9, 0
    %p29 = por %p27, %p28
    %p30 = scmp.ne.s32.totalorder %s19, %s22
    %p31 = scmp.eq.s32.totalorder %s14, 1
    %p32 = por %p30, %p31
    %p33 = scmp.ne.s32.totalorder %s22, %s23
    %p34 = scmp.eq.s32.totalorder %s14, 0
    %p35 = por %p33, %p34
    %p36 = scmp.ne.s32.totalorder %s22, %s23
    %p37 = scmp.eq.s32.totalorder %s15, 1
    %p38 = por %p36, %p37
    %p40 = scmp.ne.s32.totalorder %s23, %s39
    %p41 = scmp.eq.s32.totalorder %s15, 0
    %p42 = por %p40, %p41
    %s44 = sadd.s32 %s43, 1
    %p47 = scmp.eq.s32.totalorder %s9, 1
    %p48 = scmp.ne.s32.totalorder %s43, %s45
    %p49 = scmp.eq.s32.totalorder %s9, 0
    %p50 = por %p48, %p49
    %p51 = scmp.ne.s32.totalorder %s43, %s45
    %p52 = scmp.eq.s32.totalorder %s14, 1
    %p53 = por %p51, %p52
    %p54 = scmp.ne.s32.totalorder %s45, %s46
    %p55 = scmp.eq.s32.totalorder %s14, 0
    %p56 = por %p54, %p55
    %p57 = scmp.ne.s32.totalorder %s45, %s46
    %p58 = scmp.eq.s32.totalorder %s15, 1
    %p59 = por %p57, %p58
    %p61 = scmp.ne.s32.totalorder %s46, %s60
    %p62 = scmp.eq.s32.totalorder %s15, 0
    %p63 = por %p61, %p62
    %s65 = sadd.s32 %s64, 1
    %p68 = scmp.eq.s32.totalorder %s9, 1
    %p69 = scmp.ne.s32.totalorder %s64, %s66
    %p70 = scmp.eq.s32.totalorder %s9, 0
    %p71 = por %p69, %p70
    %p72 = scmp.ne.s32.totalorder %s64, %s66
    %p73 = scmp.eq.s32.totalorder %s14, 1
    %p74 = por %p72, %p73
    %p75 = scmp.ne.s32.totalorder %s66, %s67
    %p76 = scmp.eq.s32.totalorder %s14, 0
    %p77 = por %p75, %p76
    %p78 = scmp.ne.s32.totalorder %s66, %s67
    %p79 = scmp.eq.s32.totalorder %s15, 1
    %p80 = por %p78, %p79
    %p82 = scmp.ne.s32.totalorder %s67, %s81
    %p83 = scmp.eq.s32.totalorder %s15, 0
    %p84 = por %p82, %p83
    %s85 = ssub.s32 %s9, %s16
    %p86 = scmp.eq.s32.totalorder %s85, 0
    %s88 = sadd.s32 %s87, 1
    %s89 = scalar_select %p86, %s87, %s88
    %p92 = pneg %p86
    %p93 = scmp.eq.s32.totalorder %s9, 1
    %p94 = por %p92, %p93
    %p95 = scmp.ne.s32.totalorder %s87, %s90
    %p96 = scmp.eq.s32.totalorder %s9, 0
    %p97 = por %p95, %p96
    %p98 = scmp.ne.s32.totalorder %s87, %s90
    %p99 = scmp.eq.s32.totalorder %s14, 1
    %p100 = por %p98, %p99
    %p101 = scmp.ne.s32.totalorder %s90, %s91
    %p102 = scmp.eq.s32.totalorder %s14, 0
    %p103 = por %p101, %p102
    %p104 = scmp.ne.s32.totalorder %s90, %s91
    %p105 = scmp.eq.s32.totalorder %s15, 1
    %p106 = por %p104, %p105
    %p108 = scmp.ne.s32.totalorder %s91, %s107
    %p109 = scmp.eq.s32.totalorder %s15, 0
    %p110 = por %p108, %p109
    %p111 = scmp.le.s32.totalorder 1, %s9
    %p112 = scmp.lt.s32.totalorder %s9, 3
    %p113 = pnand %p111, %p112
    %p114 = pneg %p113
    // Predicated region
    $region9: #{rrcnn_block.13} parent=5 // pred_check
      _
    $region10: #{rrcnn_block.13} parent=5 // pred_check_branch
      %116 = sbr.rel (%p113) target = $region12
    $region11: #{rrcnn_block.13} parent=5 // pred_region
      %s117 = ssub.s32 %s9, 1
      // Predicated region
      $region13: #{rrcnn_block.13} parent=11 // pred_check
        %p118 = pneg %p56
      $region14: #{rrcnn_block.13} parent=11 // pred_check_branch
        %120 = sbr.rel (%p118) target = $region16
      $region15: #{rrcnn_block.13} parent=11 // pred_region
        _
      $region16: #{rrcnn_block.13} parent=11 // pred_fallthru
        _
      // Predicated region
      $region17: #{rrcnn_block.13} parent=11 // pred_check
        %p121 = pneg %p77
      $region18: #{rrcnn_block.13} parent=11 // pred_check_branch
        %123 = sbr.rel (%p121) target = $region20
      $region19: #{rrcnn_block.13} parent=11 // pred_region
        _
      $region20: #{rrcnn_block.13} parent=11 // pred_fallthru
        _
    $region12: #{rrcnn_block.13} parent=5 // pred_fallthru
      _
    %p124 = scmp.lt.s32.totalorder %s9, 2
    // Predicated region
    $region21: #{rrcnn_block.13} parent=5 // pred_check
      %p125 = pneg %p124
    $region22: #{rrcnn_block.13} parent=5 // pred_check_branch
      %127 = sbr.rel (%p125) target = $region24
    $region23: #{rrcnn_block.13} parent=5 // pred_region
      // Predicated region
      $region25: #{rrcnn_block.13} parent=23 // pred_check
        %p128 = pneg %p29
      $region26: #{rrcnn_block.13} parent=23 // pred_check_branch
        %130 = sbr.rel (%p128) target = $region28
      $region27: #{rrcnn_block.13} parent=23 // pred_region
        %p131 = scmp.lt.s32.totalorder %s9, 1
        %s132 = scalar_select %p131, %s9, 1
        %s133 = smul.addr %s132, 32
        %s134 = smul.addr %s133, 8
        %s135 = scalar_lea.vmem %s0, %s134
      $region28: #{rrcnn_block.13} parent=23 // pred_fallthru
        _
    $region24: #{rrcnn_block.13} parent=5 // pred_fallthru
      _
    %p136 = scmp.le.s32.totalorder 1, %s9
    %p137 = scmp.lt.s32.totalorder %s9, 3
    %p138 = pnand %p136, %p137
    %p139 = pneg %p138
    // Predicated region
    $region29: #{rrcnn_block.13} parent=5 // pred_check
      _
    $region30: #{rrcnn_block.13} parent=5 // pred_check_branch
      %141 = sbr.rel (%p138) target = $region32
    $region31: #{rrcnn_block.13} parent=5 // pred_region
      %s142 = ssub.s32 %s9, 1
      %p143 = scmp.lt.s32.totalorder %s14, 1
      %s144 = scalar_select %p143, %s14, 1
      %s145 = smul.addr %s144, 32
      %s146 = smul.addr %s145, 8
      %s147 = scalar_lea.vmem %s0, %s146
      %p148 = pneg %p35
      %p149 = pneg %p32
      %p150 = pneg %p56
      %p151 = pneg %p53
      %p152 = pneg %p77
      %p153 = pneg %p74
      %p154 = pneg %p103
      %p155 = pneg %p100
      %p156 = scmp.lt.s32.totalorder %s14, 1
      %s157 = scalar_select %p156, %s14, 1
      %s158 = smul.addr %s157, 32
      %s159 = smul.addr %s158, 8
      %s160 = scalar_lea.vmem %s3, %s159
      %p161 = scmp.lt.s32.totalorder %s14, 1
      %s162 = scalar_select %p161, %s14, 1
      %s163 = smul.addr %s162, 32
      %s164 = smul.addr %s163, 8
      %s165 = scalar_lea.vmem %s0, %s164
      %p166 = scmp.lt.s32.totalorder %s14, 1
      %s167 = scalar_select %p166, %s14, 1
      %s168 = smul.addr %s167, 32
      %s169 = smul.addr %s168, 8
      %s170 = scalar_lea.vmem %s3, %s169
      %v172 = vld [vmem:[%s165] sm:$0xff]
      %v173 = vld [vmem:[%s165 + $0x8] sm:$0xff]
      %v174 = vld [vmem:[%s165 + $0x10] sm:$0xff]
      %v175 = vld [vmem:[%s165 + $0x18] sm:$0xff]
      %v176 = vld [vmem:[%s165 + $0x20] sm:$0xff]
      %v177 = vld [vmem:[%s165 + $0x28] sm:$0xff]
      %v178 = vld [vmem:[%s165 + $0x30] sm:$0xff]
      %v179 = vld [vmem:[%s165 + $0x38] sm:$0xff]
      %v180 = vld [vmem:[%s165 + $0x40] sm:$0xff]
      %v181 = vld [vmem:[%s165 + $0x48] sm:$0xff]
      %v182 = vld [vmem:[%s165 + $0x50] sm:$0xff]
      %v183 = vld [vmem:[%s165 + $0x58] sm:$0xff]
      %v184 = vld [vmem:[%s165 + $0x60] sm:$0xff]
      %v185 = vld [vmem:[%s165 + $0x68] sm:$0xff]
      %v186 = vld [vmem:[%s165 + $0x70] sm:$0xff]
      %v187 = vld [vmem:[%s165 + $0x78] sm:$0xff]
      %v188 = vld [vmem:[%s165 + $0x80] sm:$0xff]
      %v189 = vld [vmem:[%s165 + $0x88] sm:$0xff]
      %v190 = vld [vmem:[%s165 + $0x90] sm:$0xff]
      %v191 = vld [vmem:[%s165 + $0x98] sm:$0xff]
      %v192 = vld [vmem:[%s165 + $0xa0] sm:$0xff]
      %v193 = vld [vmem:[%s165 + $0xa8] sm:$0xff]
      %v194 = vld [vmem:[%s165 + $0xb0] sm:$0xff]
      %v195 = vld [vmem:[%s165 + $0xb8] sm:$0xff]
      %v196 = vld [vmem:[%s165 + $0xc0] sm:$0xff]
      %v197 = vld [vmem:[%s165 + $0xc8] sm:$0xff]
      %v198 = vld [vmem:[%s165 + $0xd0] sm:$0xff]
      %v199 = vld [vmem:[%s165 + $0xd8] sm:$0xff]
      %v200 = vld [vmem:[%s165 + $0xe0] sm:$0xff]
      %v201 = vld [vmem:[%s165 + $0xe8] sm:$0xff]
      %v202 = vld [vmem:[%s165 + $0xf0] sm:$0xff]
      %v203 = vld [vmem:[%s165 + $0xf8] sm:$0xff]
      %v204 = vpack.c.bf16 %v173, %v172
      %v205 = vpack.c.bf16 %v175, %v174
      %v206 = vpack.c.bf16 %v177, %v176
      %v207 = vpack.c.bf16 %v179, %v178
      %v208 = vpack.c.bf16 %v181, %v180
      %v209 = vpack.c.bf16 %v183, %v182
      %v210 = vpack.c.bf16 %v185, %v184
      %v211 = vpack.c.bf16 %v187, %v186
      %v212 = vpack.c.bf16 %v189, %v188
      %v213 = vpack.c.bf16 %v191, %v190
      %v214 = vpack.c.bf16 %v193, %v192
      %v215 = vpack.c.bf16 %v195, %v194
      %v216 = vpack.c.bf16 %v197, %v196
      %v217 = vpack.c.bf16 %v199, %v198
      %v218 = vpack.c.bf16 %v201, %v200
      %v219 = vpack.c.bf16 %v203, %v202
      %v220 = vld [vmem:[%s1] sm:$0x3]
      %v221 = vld [vmem:[%s2] sm:$0x1]
      %v223 = vlaneseq
      %v224 = vshrl.u32 %v223, 7
      %v225 = vsub.s32 0, %v224
      %v226 = vrot.slane %v221, %v225
      %vm228 = vcmask 31744
      %v230 = vsel %vm228, %v204, 0
      %v233 = vsel %vm228, %v205, 0
      %v236 = vsel %vm228, %v206, 0
      %v239 = vsel %vm228, %v207, 0
      %v242 = vsel %vm228, %v208, 0
      %v245 = vsel %vm228, %v209, 0
      %v248 = vsel %vm228, %v210, 0
      %v251 = vsel %vm228, %v211, 0
      %v254 = vsel %vm228, %v212, 0
      %v257 = vsel %vm228, %v213, 0
      %v260 = vsel %vm228, %v214, 0
      %v263 = vsel %vm228, %v215, 0
      %v266 = vsel %vm228, %v216, 0
      %v269 = vsel %vm228, %v217, 0
      %v272 = vsel %vm228, %v218, 0
      %v275 = vsel %vm228, %v219, 0
      %vm277 = vcmask 1041408
      %v279 = vsel %vm277, %v220, 0
      %281 = vmatprep.subr.bf16.mxu0 0
      %282 = vmatpush1.bf16.msra.mxu0 %v279
      %283 = vmatprep.subr.bf16.mxu0 0
      %284 = vmatpush1.bf16.msra.mxu0 0
      %285 = vmatprep.subr.bf16.mxu0 0
      %286 = vmatpush1.bf16.msra.mxu0 0
      %287 = vmatprep.subr.bf16.mxu0 0
      %288 = vmatpush1.bf16.msra.mxu0 0
      %289 = vmatprep.subr.bf16.mxu0 0
      %290 = vmatpush1.bf16.msra.mxu0 0
      %291 = vmatprep.subr.bf16.mxu0 0
      %292 = vmatpush1.bf16.msra.mxu0 0
      %293 = vmatprep.subr.bf16.mxu0 0
      %294 = vmatpush1.bf16.msra.mxu0 0
      %295 = vmatprep.subr.bf16.mxu0 0
      %296 = vmatpush1.bf16.msra.mxu0 0
      %297 = vmatprep.subr.bf16.mxu0 0
      %298 = vmatpush1.bf16.msra.mxu0 0
      %299 = vmatprep.subr.bf16.mxu0 0
      %300 = vmatpush1.bf16.msra.mxu0 0
      %301 = vmatprep.subr.bf16.mxu0 0
      %302 = vmatpush1.bf16.msra.mxu0 0
      %303 = vmatprep.subr.bf16.mxu0 0
      %304 = vmatpush1.bf16.msra.mxu0 0
      %305 = vmatprep.subr.bf16.mxu0 0
      %306 = vmatpush1.bf16.msra.mxu0 0
      %307 = vmatprep.subr.bf16.mxu0 0
      %308 = vmatpush1.bf16.msra.mxu0 0
      %309 = vmatprep.subr.bf16.mxu0 0
      %310 = vmatpush1.bf16.msra.mxu0 0
      %311 = vmatprep.subr.bf16.mxu0 0
      %312 = vmatpush1.bf16.msra.mxu0 0
      %313 = vmatprep.mubr.bf16.mxu0 0
      %314 = vmatmul.mubr.bf16.gmra.mrb[0].mxu0 %v230
      %v315 = vpop.f32.mrb[0].mxu0
      %v316 = vadd.f32 %v226, %v315
      %v317 = vpop.f32.mrb[0].mxu0
      %v318 = vpop.f32.mrb[0].mxu0
      %v319 = vadd.f32 %v226, %v318
      %v320 = vpop.f32.mrb[0].mxu0
      %321 = vmatprep.mubr.bf16.mxu0 0
      %322 = vmatmul.mubr.bf16.gmra.mrb[0].mxu0 %v233
      %v323 = vpop.f32.mrb[0].mxu0
      %v324 = vadd.f32 %v226, %v323
      %v325 = vpop.f32.mrb[0].mxu0
      %v326 = vpop.f32.mrb[0].mxu0
      %v327 = vadd.f32 %v226, %v326
      %v328 = vpop.f32.mrb[0].mxu0
      %329 = vmatprep.mubr.bf16.mxu0 0
      %330 = vmatmul.mubr.bf16.gmra.mrb[0].mxu0 %v236
      %v331 = vpop.f32.mrb[0].mxu0
      %v332 = vadd.f32 %v226, %v331
      %v333 = vpop.f32.mrb[0].mxu0
      %v334 = vpop.f32.mrb[0].mxu0
      %v335 = vadd.f32 %v226, %v334
      %v336 = vpop.f32.mrb[0].mxu0
      %337 = vmatprep.mubr.bf16.mxu0 0
      %338 = vmatmul.mubr.bf16.gmra.mrb[0].mxu0 %v239
      %v339 = vpop.f32.mrb[0].mxu0
      %v340 = vadd.f32 %v226, %v339
      %v341 = vpop.f32.mrb[0].mxu0
      %v342 = vpop.f32.mrb[0].mxu0
      %v343 = vadd.f32 %v226, %v342
      %v344 = vpop.f32.mrb[0].mxu0
      %345 = vmatprep.mubr.bf16.mxu0 0
      %346 = vmatmul.mubr.bf16.gmra.mrb[0].mxu0 %v242
      %v347 = vpop.f32.mrb[0].mxu0
      %v348 = vadd.f32 %v226, %v347
      %v349 = vpop.f32.mrb[0].mxu0
      %v350 = vpop.f32.mrb[0].mxu0
      %v351 = vadd.f32 %v226, %v350
      %v352 = vpop.f32.mrb[0].mxu0
      %353 = vmatprep.mubr.bf16.mxu0 0
      %354 = vmatmul.mubr.bf16.gmra.mrb[0].mxu0 %v245
      %v355 = vpop.f32.mrb[0].mxu0
      %v356 = vadd.f32 %v226, %v355
      %v357 = vpop.f32.mrb[0].mxu0
      %v358 = vpop.f32.mrb[0].mxu0
      %v359 = vadd.f32 %v226, %v358
      %v360 = vpop.f32.mrb[0].mxu0
      %361 = vmatprep.mubr.bf16.mxu0 0
      %362 = vmatmul.mubr.bf16.gmra.mrb[0].mxu0 %v248
      %v363 = vpop.f32.mrb[0].mxu0
      %v364 = vadd.f32 %v226, %v363
      %v365 = vpop.f32.mrb[0].mxu0
      %v366 = vpop.f32.mrb[0].mxu0
      %v367 = vadd.f32 %v226, %v366
      %v368 = vpop.f32.mrb[0].mxu0
      %369 = vmatprep.mubr.bf16.mxu0 0
      %370 = vmatmul.mubr.bf16.gmra.mrb[0].mxu0 %v251
      %v371 = vpop.f32.mrb[0].mxu0
      %v372 = vadd.f32 %v226, %v371
      %v373 = vpop.f32.mrb[0].mxu0
      %v374 = vpop.f32.mrb[0].mxu0
      %v375 = vadd.f32 %v226, %v374
      %v376 = vpop.f32.mrb[0].mxu0
      %377 = vmatprep.mubr.bf16.mxu0 0
      %378 = vmatmul.mubr.bf16.gmra.mrb[0].mxu0 %v254
      %v379 = vpop.f32.mrb[0].mxu0
      %v380 = vadd.f32 %v226, %v379
      %v381 = vpop.f32.mrb[0].mxu0
      %v382 = vpop.f32.mrb[0].mxu0
      %v383 = vadd.f32 %v226, %v382
      %v384 = vpop.f32.mrb[0].mxu0
      %385 = vmatprep.mubr.bf16.mxu0 0
      %386 = vmatmul.mubr.bf16.gmra.mrb[0].mxu0 %v257
      %v387 = vpop.f32.mrb[0].mxu0
      %v388 = vadd.f32 %v226, %v387
      %v389 = vpop.f32.mrb[0].mxu0
      %v390 = vpop.f32.mrb[0].mxu0
      %v391 = vadd.f32 %v226, %v390
      %v392 = vpop.f32.mrb[0].mxu0
      %393 = vmatprep.mubr.bf16.mxu0 0
      %394 = vmatmul.mubr.bf16.gmra.mrb[0].mxu0 %v260
      %v395 = vpop.f32.mrb[0].mxu0
      %v396 = vadd.f32 %v226, %v395
      %v397 = vpop.f32.mrb[0].mxu0
      %v398 = vpop.f32.mrb[0].mxu0
      %v399 = vadd.f32 %v226, %v398
      %v400 = vpop.f32.mrb[0].mxu0
      %401 = vmatprep.mubr.bf16.mxu0 0
      %402 = vmatmul.mubr.bf16.gmra.mrb[0].mxu0 %v263
      %v403 = vpop.f32.mrb[0].mxu0
      %v404 = vadd.f32 %v226, %v403
      %v405 = vpop.f32.mrb[0].mxu0
      %v406 = vpop.f32.mrb[0].mxu0
      %v407 = vadd.f32 %v226, %v406
      %v408 = vpop.f32.mrb[0].mxu0
      %409 = vmatprep.mubr.bf16.mxu0 0
      %410 = vmatmul.mubr.bf16.gmra.mrb[0].mxu0 %v266
      %v411 = vpop.f32.mrb[0].mxu0
      %v412 = vadd.f32 %v226, %v411
      %v413 = vpop.f32.mrb[0].mxu0
      %v414 = vpop.f32.mrb[0].mxu0
      %v415 = vadd.f32 %v226, %v414
      %v416 = vpop.f32.mrb[0].mxu0
      %417 = vmatprep.mubr.bf16.mxu0 0
      %418 = vmatmul.mubr.bf16.gmra.mrb[0].mxu0 %v269
      %v419 = vpop.f32.mrb[0].mxu0
      %v420 = vadd.f32 %v226, %v419
      %v421 = vpop.f32.mrb[0].mxu0
      %v422 = vpop.f32.mrb[0].mxu0
      %v423 = vadd.f32 %v226, %v422
      %v424 = vpop.f32.mrb[0].mxu0
      %425 = vmatprep.mubr.bf16.mxu0 0
      %426 = vmatmul.mubr.bf16.gmra.mrb[0].mxu0 %v272
      %v427 = vpop.f32.mrb[0].mxu0
      %v428 = vadd.f32 %v226, %v427
      %v429 = vpop.f32.mrb[0].mxu0
      %v430 = vpop.f32.mrb[0].mxu0
      %v431 = vadd.f32 %v226, %v430
      %v432 = vpop.f32.mrb[0].mxu0
      %433 = vmatprep.mubr.bf16.mxu0 0
      %434 = vmatmul.mubr.bf16.gmra.mrb[0].mxu0 %v275
      %v435 = vpop.f32.mrb[0].mxu0
      %v436 = vadd.f32 %v226, %v435
      %v437 = vpop.f32.mrb[0].mxu0
      %v438 = vpop.f32.mrb[0].mxu0
      %v439 = vadd.f32 %v226, %v438
      %v440 = vpop.f32.mrb[0].mxu0
      %441 = vdwg.mxu0
      %vm442 = vcmask 64512
      %443 = vst.msk [vmem:[%s170] sm:$0xff] %vm442, %v316
      %444 = vst.msk [vmem:[%s170 + $0x8] sm:$0xff] %vm442, %v319
      %445 = vst.msk [vmem:[%s170 + $0x10] sm:$0xff] %vm442, %v324
      %446 = vst.msk [vmem:[%s170 + $0x18] sm:$0xff] %vm442, %v327
      %447 = vst.msk [vmem:[%s170 + $0x20] sm:$0xff] %vm442, %v332
      %448 = vst.msk [vmem:[%s170 + $0x28] sm:$0xff] %vm442, %v335
      %449 = vst.msk [vmem:[%s170 + $0x30] sm:$0xff] %vm442, %v340
      %450 = vst.msk [vmem:[%s170 + $0x38] sm:$0xff] %vm442, %v343
      %451 = vst.msk [vmem:[%s170 + $0x40] sm:$0xff] %vm442, %v348
      %452 = vst.msk [vmem:[%s170 + $0x48] sm:$0xff] %vm442, %v351
      %453 = vst.msk [vmem:[%s170 + $0x50] sm:$0xff] %vm442, %v356
      %454 = vst.msk [vmem:[%s170 + $0x58] sm:$0xff] %vm442, %v359
      %455 = vst.msk [vmem:[%s170 + $0x60] sm:$0xff] %vm442, %v364
      %456 = vst.msk [vmem:[%s170 + $0x68] sm:$0xff] %vm442, %v367
      %457 = vst.msk [vmem:[%s170 + $0x70] sm:$0xff] %vm442, %v372
      %458 = vst.msk [vmem:[%s170 + $0x78] sm:$0xff] %vm442, %v375
      %459 = vst.msk [vmem:[%s170 + $0x80] sm:$0xff] %vm442, %v380
      %460 = vst.msk [vmem:[%s170 + $0x88] sm:$0xff] %vm442, %v383
      %461 = vst.msk [vmem:[%s170 + $0x90] sm:$0xff] %vm442, %v388
      %462 = vst.msk [vmem:[%s170 + $0x98] sm:$0xff] %vm442, %v391
      %463 = vst.msk [vmem:[%s170 + $0xa0] sm:$0xff] %vm442, %v396
      %464 = vst.msk [vmem:[%s170 + $0xa8] sm:$0xff] %vm442, %v399
      %465 = vst.msk [vmem:[%s170 + $0xb0] sm:$0xff] %vm442, %v404
      %466 = vst.msk [vmem:[%s170 + $0xb8] sm:$0xff] %vm442, %v407
      %467 = vst.msk [vmem:[%s170 + $0xc0] sm:$0xff] %vm442, %v412
      %468 = vst.msk [vmem:[%s170 + $0xc8] sm:$0xff] %vm442, %v415
      %469 = vst.msk [vmem:[%s170 + $0xd0] sm:$0xff] %vm442, %v420
      %470 = vst.msk [vmem:[%s170 + $0xd8] sm:$0xff] %vm442, %v423
      %471 = vst.msk [vmem:[%s170 + $0xe0] sm:$0xff] %vm442, %v428
      %472 = vst.msk [vmem:[%s170 + $0xe8] sm:$0xff] %vm442, %v431
      %473 = vst.msk [vmem:[%s170 + $0xf0] sm:$0xff] %vm442, %v436
      %474 = vst.msk [vmem:[%s170 + $0xf8] sm:$0xff] %vm442, %v439
      %p475 = scmp.lt.s32.totalorder %s14, 1
      %s476 = scalar_select %p475, %s14, 1
      %s477 = smul.addr %s476, 32
      %s478 = smul.addr %s477, 8
      %s479 = scalar_lea.vmem %s3, %s478
      // Predicated region
      $region33: #{rrcnn_block.13} parent=31 // pred_check
        %p480 = pneg %p100
      $region34: #{rrcnn_block.13} parent=31 // pred_check_branch
        %482 = sbr.rel (%p480) target = $region36
      $region35: #{rrcnn_block.13} parent=31 // pred_region
        _
      $region36: #{rrcnn_block.13} parent=31 // pred_fallthru
        _
    $region32: #{rrcnn_block.13} parent=5 // pred_fallthru
      _
    %p483 = scmp.le.s32.totalorder 2, %s9
    // Predicated region
    $region37: #{rrcnn_block.13} parent=5 // pred_check
      %p484 = pneg %p483
    $region38: #{rrcnn_block.13} parent=5 // pred_check_branch
      %486 = sbr.rel (%p484) target = $region40
    $region39: #{rrcnn_block.13} parent=5 // pred_region
      %s487 = ssub.s32 %s9, 2
      // Predicated region
      $region41: #{rrcnn_block.13} parent=39 // pred_check
        %p488 = pneg %p106
      $region42: #{rrcnn_block.13} parent=39 // pred_check_branch
        %490 = sbr.rel (%p488) target = $region44
      $region43: #{rrcnn_block.13} parent=39 // pred_region
        %p491 = scmp.lt.s32.totalorder %s15, 1
        %s492 = scalar_select %p491, %s15, 1
        %s493 = smul.addr %s492, 32
        %s494 = smul.addr %s493, 8
        %s495 = scalar_lea.vmem %s3, %s494
      $region44: #{rrcnn_block.13} parent=39 // pred_fallthru
        _
    $region40: #{rrcnn_block.13} parent=5 // pred_fallthru
      _
  $region6: #{rrcnn_block.13} parent=0 // loop_footer
    %s13 = sadd.s32 1, %s9
  $region7: #{rrcnn_block.13} parent=0 // loop_footer_branch
    %8 = sbr.rel target = $region3
  $region8: #{rrcnn_block.13} parent=0 // loop_exit
    _

// kernel: rrcnn_block.15
$region0: #{rrcnn_block.15}
  #allocation0 [shape = 'u32[]', space=smem, size = 0x4, offset = 0x4, fixed_abs, tag = 'smem constant byte address 0x4 - core index']
  #allocation1 [shape = 'u32[144,128]{1,0:T(1,128)}', space=vmem, size = 0x12000, scoped, tag = 'internal scratch']
  %s0 = inlined_call_operand.vmem [shape: f32[2,16,128], index: 0, kind: input, shape index: {}]
  %s1 = inlined_call_operand.vmem [shape: f32[1,128], index: 1, kind: input, shape index: {}]
  %s2 = inlined_call_operand.vmem [shape: f32[1,128], index: 2, kind: input, shape index: {}]
  %s3 = inlined_call_operand.vmem [shape: f32[2,16,128], index: 3, kind: input, shape index: {}]
  %s4 = inlined_call_operand.vmem [shape: f32[2,16,128], index: 4, kind: output, shape index: {}]
  %s5 = sld [smem:[#allocation0]]
  $region49: #{rrcnn_block.15} parent=0
    _
  %s7 = ssub.s32 1, %s5
  %s8 = scalar_select 0, %s7, %s5
  loop: start=0, step=1, limit=4
  $region2: #{rrcnn_block.15} parent=0 // loop_pre_header
    _
  $region3: #{rrcnn_block.15} parent=0 // loop_header
    %s10 = sphi 0, %s14
    %p11 = scmp.ge.s32.totalorder %s10, 4
    %s20 = sphi 0, %s22
    %s23 = sphi 0, %s20
    %s24 = sphi 0, %s23
    %s40 = sphi 0, %s24
    %s44 = sphi 0, %s44
    %s46 = sphi 0, %s44
    %s47 = sphi 0, %s46
    %s61 = sphi 0, %s47
    %s65 = sphi 0, %s65
    %s67 = sphi 0, %s65
    %s68 = sphi 0, %s67
    %s82 = sphi 0, %s68
    %s88 = sphi 0, %s90
    %s91 = sphi 0, %s88
    %s92 = sphi 0, %s91
    %s108 = sphi 0, %s92
    %s114 = sphi 0, %s116
    %s117 = sphi 0, %s114
    %s118 = sphi 0, %s117
    %s134 = sphi 0, %s118
  $region4: #{rrcnn_block.15} parent=0 // loop_header_branch
    %13 = sbr.rel (%p11) target = $region8
  $region5: #{rrcnn_block.15} parent=0 // loop_body
    %s15 = ssub.s32 %s10, 1
    %s16 = ssub.s32 %s10, 2
    %s17 = sadd.s32 %s10, 1
    %s18 = ssub.s32 %s10, %s17
    %p19 = scmp.eq.s32.totalorder %s18, 0
    %s21 = sadd.s32 %s20, 1
    %s22 = scalar_select %p19, %s20, %s21
    %p25 = pneg %p19
    %p26 = scmp.eq.s32.totalorder %s10, 1
    %p27 = por %p25, %p26
    %p28 = scmp.ne.s32.totalorder %s20, %s23
    %p29 = scmp.eq.s32.totalorder %s10, 0
    %p30 = por %p28, %p29
    %p31 = scmp.ne.s32.totalorder %s20, %s23
    %p32 = scmp.eq.s32.totalorder %s15, 1
    %p33 = por %p31, %p32
    %p34 = scmp.ne.s32.totalorder %s23, %s24
    %p35 = scmp.eq.s32.totalorder %s15, 0
    %p36 = por %p34, %p35
    %p37 = scmp.ne.s32.totalorder %s23, %s24
    %p38 = scmp.eq.s32.totalorder %s16, 1
    %p39 = por %p37, %p38
    %p41 = scmp.ne.s32.totalorder %s24, %s40
    %p42 = scmp.eq.s32.totalorder %s16, 0
    %p43 = por %p41, %p42
    %s45 = sadd.s32 %s44, 1
    %p48 = scmp.eq.s32.totalorder %s10, 1
    %p49 = scmp.ne.s32.totalorder %s44, %s46
    %p50 = scmp.eq.s32.totalorder %s10, 0
    %p51 = por %p49, %p50
    %p52 = scmp.ne.s32.totalorder %s44, %s46
    %p53 = scmp.eq.s32.totalorder %s15, 1
    %p54 = por %p52, %p53
    %p55 = scmp.ne.s32.totalorder %s46, %s47
    %p56 = scmp.eq.s32.totalorder %s15, 0
    %p57 = por %p55, %p56
    %p58 = scmp.ne.s32.totalorder %s46, %s47
    %p59 = scmp.eq.s32.totalorder %s16, 1
    %p60 = por %p58, %p59
    %p62 = scmp.ne.s32.totalorder %s47, %s61
    %p63 = scmp.eq.s32.totalorder %s16, 0
    %p64 = por %p62, %p63
    %s66 = sadd.s32 %s65, 1
    %p69 = scmp.eq.s32.totalorder %s10, 1
    %p70 = scmp.ne.s32.totalorder %s65, %s67
    %p71 = scmp.eq.s32.totalorder %s10, 0
    %p72 = por %p70, %p71
    %p73 = scmp.ne.s32.totalorder %s65, %s67
    %p74 = scmp.eq.s32.totalorder %s15, 1
    %p75 = por %p73, %p74
    %p76 = scmp.ne.s32.totalorder %s67, %s68
    %p77 = scmp.eq.s32.totalorder %s15, 0
    %p78 = por %p76, %p77
    %p79 = scmp.ne.s32.totalorder %s67, %s68
    %p80 = scmp.eq.s32.totalorder %s16, 1
    %p81 = por %p79, %p80
    %p83 = scmp.ne.s32.totalorder %s68, %s82
    %p84 = scmp.eq.s32.totalorder %s16, 0
    %p85 = por %p83, %p84
    %s86 = ssub.s32 %s10, %s17
    %p87 = scmp.eq.s32.totalorder %s86, 0
    %s89 = sadd.s32 %s88, 1
    %s90 = scalar_select %p87, %s88, %s89
    %p93 = pneg %p87
    %p94 = scmp.eq.s32.totalorder %s10, 1
    %p95 = por %p93, %p94
    %p96 = scmp.ne.s32.totalorder %s88, %s91
    %p97 = scmp.eq.s32.totalorder %s10, 0
    %p98 = por %p96, %p97
    %p99 = scmp.ne.s32.totalorder %s88, %s91
    %p100 = scmp.eq.s32.totalorder %s15, 1
    %p101 = por %p99, %p100
    %p102 = scmp.ne.s32.totalorder %s91, %s92
    %p103 = scmp.eq.s32.totalorder %s15, 0
    %p104 = por %p102, %p103
    %p105 = scmp.ne.s32.totalorder %s91, %s92
    %p106 = scmp.eq.s32.totalorder %s16, 1
    %p107 = por %p105, %p106
    %p109 = scmp.ne.s32.totalorder %s92, %s108
    %p110 = scmp.eq.s32.totalorder %s16, 0
    %p111 = por %p109, %p110
    %s112 = ssub.s32 %s10, %s17
    %p113 = scmp.eq.s32.totalorder %s112, 0
    %s115 = sadd.s32 %s114, 1
    %s116 = scalar_select %p113, %s114, %s115
    %p119 = pneg %p113
    %p120 = scmp.eq.s32.totalorder %s10, 1
    %p121 = por %p119, %p120
    %p122 = scmp.ne.s32.totalorder %s114, %s117
    %p123 = scmp.eq.s32.totalorder %s10, 0
    %p124 = por %p122, %p123
    %p125 = scmp.ne.s32.totalorder %s114, %s117
    %p126 = scmp.eq.s32.totalorder %s15, 1
    %p127 = por %p125, %p126
    %p128 = scmp.ne.s32.totalorder %s117, %s118
    %p129 = scmp.eq.s32.totalorder %s15, 0
    %p130 = por %p128, %p129
    %p131 = scmp.ne.s32.totalorder %s117, %s118
    %p132 = scmp.eq.s32.totalorder %s16, 1
    %p133 = por %p131, %p132
    %p135 = scmp.ne.s32.totalorder %s118, %s134
    %p136 = scmp.eq.s32.totalorder %s16, 0
    %p137 = por %p135, %p136
    %p138 = scmp.le.s32.totalorder 1, %s10
    %p139 = scmp.lt.s32.totalorder %s10, 3
    %p140 = pnand %p138, %p139
    %p141 = pneg %p140
    // Predicated region
    $region9: #{rrcnn_block.15} parent=5 // pred_check
      _
    $region10: #{rrcnn_block.15} parent=5 // pred_check_branch
      %143 = sbr.rel (%p140) target = $region12
    $region11: #{rrcnn_block.15} parent=5 // pred_region
      %s144 = ssub.s32 %s10, 1
      // Predicated region
      $region13: #{rrcnn_block.15} parent=11 // pred_check
        %p145 = pneg %p57
      $region14: #{rrcnn_block.15} parent=11 // pred_check_branch
        %147 = sbr.rel (%p145) target = $region16
      $region15: #{rrcnn_block.15} parent=11 // pred_region
        _
      $region16: #{rrcnn_block.15} parent=11 // pred_fallthru
        _
      // Predicated region
      $region17: #{rrcnn_block.15} parent=11 // pred_check
        %p148 = pneg %p78
      $region18: #{rrcnn_block.15} parent=11 // pred_check_branch
        %150 = sbr.rel (%p148) target = $region20
      $region19: #{rrcnn_block.15} parent=11 // pred_region
        _
      $region20: #{rrcnn_block.15} parent=11 // pred_fallthru
        _
    $region12: #{rrcnn_block.15} parent=5 // pred_fallthru
      _
    %p151 = scmp.lt.s32.totalorder %s10, 2
    // Predicated region
    $region21: #{rrcnn_block.15} parent=5 // pred_check
      %p152 = pneg %p151
    $region22: #{rrcnn_block.15} parent=5 // pred_check_branch
      %154 = sbr.rel (%p152) target = $region24
    $region23: #{rrcnn_block.15} parent=5 // pred_region
      // Predicated region
      $region25: #{rrcnn_block.15} parent=23 // pred_check
        %p155 = pneg %p30
      $region26: #{rrcnn_block.15} parent=23 // pred_check_branch
        %157 = sbr.rel (%p155) target = $region28
      $region27: #{rrcnn_block.15} parent=23 // pred_region
        %p158 = scmp.lt.s32.totalorder %s10, 1
        %s159 = scalar_select %p158, %s10, 1
        %s160 = smul.addr %s159, 2
        %s161 = smul.addr %s160, 8
        %s162 = scalar_lea.vmem %s0, %s161
      $region28: #{rrcnn_block.15} parent=23 // pred_fallthru
        _
      // Predicated region
      $region29: #{rrcnn_block.15} parent=23 // pred_check
        %p163 = pneg %p98
      $region30: #{rrcnn_block.15} parent=23 // pred_check_branch
        %165 = sbr.rel (%p163) target = $region32
      $region31: #{rrcnn_block.15} parent=23 // pred_region
        %p166 = scmp.lt.s32.totalorder %s10, 1
        %s167 = scalar_select %p166, %s10, 1
        %s168 = smul.addr %s167, 2
        %s169 = smul.addr %s168, 8
        %s170 = scalar_lea.vmem %s3, %s169
      $region32: #{rrcnn_block.15} parent=23 // pred_fallthru
        _
    $region24: #{rrcnn_block.15} parent=5 // pred_fallthru
      _
    %p171 = scmp.le.s32.totalorder 1, %s10
    %p172 = scmp.lt.s32.totalorder %s10, 3
    %p173 = pnand %p171, %p172
    %p174 = pneg %p173
    // Predicated region
    $region33: #{rrcnn_block.15} parent=5 // pred_check
      _
    $region34: #{rrcnn_block.15} parent=5 // pred_check_branch
      %176 = sbr.rel (%p173) target = $region36
    $region35: #{rrcnn_block.15} parent=5 // pred_region
      %s177 = ssub.s32 %s10, 1
      %p178 = scmp.lt.s32.totalorder %s15, 1
      %s179 = scalar_select %p178, %s15, 1
      %s180 = smul.addr %s179, 2
      %s181 = smul.addr %s180, 8
      %s182 = scalar_lea.vmem %s0, %s181
      %p183 = pneg %p36
      %p184 = pneg %p33
      %p185 = pneg %p57
      %p186 = pneg %p54
      %p187 = pneg %p78
      %p188 = pneg %p75
      %p189 = scmp.lt.s32.totalorder %s15, 1
      %s190 = scalar_select %p189, %s15, 1
      %s191 = smul.addr %s190, 2
      %s192 = smul.addr %s191, 8
      %s193 = scalar_lea.vmem %s3, %s192
      %p194 = pneg %p104
      %p195 = pneg %p101
      %p196 = pneg %p130
      %p197 = pneg %p127
      %p198 = scmp.lt.s32.totalorder %s15, 1
      %s199 = scalar_select %p198, %s15, 1
      %s200 = smul.addr %s199, 2
      %s201 = smul.addr %s200, 8
      %s202 = scalar_lea.vmem %s4, %s201
      %p203 = scmp.lt.s32.totalorder %s15, 1
      %s204 = scalar_select %p203, %s15, 1
      %s205 = smul.addr %s204, 2
      %s206 = smul.addr %s205, 8
      %s207 = scalar_lea.vmem %s0, %s206
      %p208 = scmp.lt.s32.totalorder %s15, 1
      %s209 = scalar_select %p208, %s15, 1
      %s210 = smul.addr %s209, 2
      %s211 = smul.addr %s210, 8
      %s212 = scalar_lea.vmem %s3, %s211
      %p213 = scmp.lt.s32.totalorder %s15, 1
      %s214 = scalar_select %p213, %s15, 1
      %s215 = smul.addr %s214, 2
      %s216 = smul.addr %s215, 8
      %s217 = scalar_lea.vmem %s4, %s216
      %v218 = vld [vmem:[%s212] sm:$0xff]
      %v219 = vld [vmem:[%s212 + $0x8] sm:$0xff]
      %v220 = vld [vmem:[%s207] sm:$0xff]
      %v221 = vld [vmem:[%s207 + $0x8] sm:$0xff]
      %v222 = vld [vmem:[%s1] sm:$0x1]
      %v224 = vlaneseq
      %v225 = vshrl.u32 %v224, 7
      %v226 = vsub.s32 0, %v225
      %v227 = vrot.slane %v222, %v226
      %v229 = vmul.f32 %v220, %v227
      %v230 = vmul.f32 %v221, %v227
      %v231 = vld [vmem:[%s2] sm:$0x1]
      %v233 = vlaneseq
      %v234 = vshrl.u32 %v233, 7
      %v235 = vsub.s32 0, %v234
      %v236 = vrot.slane %v231, %v235
      %v238 = vadd.f32 %v229, %v236
      %v239 = vadd.f32 %v230, %v236
      %v240 = vmax.f32 %v238, 0.0
      %v241 = vmax.f32 %v239, 0.0
      %v242 = vadd.f32 %v218, %v240
      %v243 = vadd.f32 %v219, %v241
      %244 = vst [vmem:[%s217] sm:$0xff] %v242
      %245 = vst [vmem:[%s217 + $0x8] sm:$0xff] %v243
      %p246 = scmp.lt.s32.totalorder %s15, 1
      %s247 = scalar_select %p246, %s15, 1
      %s248 = smul.addr %s247, 2
      %s249 = smul.addr %s248, 8
      %s250 = scalar_lea.vmem %s4, %s249
      // Predicated region
      $region37: #{rrcnn_block.15} parent=35 // pred_check
        %p251 = pneg %p127
      $region38: #{rrcnn_block.15} parent=35 // pred_check_branch
        %253 = sbr.rel (%p251) target = $region40
      $region39: #{rrcnn_block.15} parent=35 // pred_region
        _
      $region40: #{rrcnn_block.15} parent=35 // pred_fallthru
        _
    $region36: #{rrcnn_block.15} parent=5 // pred_fallthru
      _
    %p254 = scmp.le.s32.totalorder 2, %s10
    // Predicated region
    $region41: #{rrcnn_block.15} parent=5 // pred_check
      %p255 = pneg %p254
    $region42: #{rrcnn_block.15} parent=5 // pred_check_branch
      %257 = sbr.rel (%p255) target = $region44
    $region43: #{rrcnn_block.15} parent=5 // pred_region
      %s258 = ssub.s32 %s10, 2
      // Predicated region
      $region45: #{rrcnn_block.15} parent=43 // pred_check
        %p259 = pneg %p133
      $region46: #{rrcnn_block.15} parent=43 // pred_check_branch
        %261 = sbr.rel (%p259) target = $region48
      $region47: #{rrcnn_block.15} parent=43 // pred_region
        %p262 = scmp.lt.s32.totalorder %s16, 1
        %s263 = scalar_select %p262, %s16, 1
        %s264 = smul.addr %s263, 2
        %s265 = smul.addr %s264, 8
        %s266 = scalar_lea.vmem %s4, %s265
      $region48: #{rrcnn_block.15} parent=43 // pred_fallthru
        _
    $region44: #{rrcnn_block.15} parent=5 // pred_fallthru
      _
  $region6: #{rrcnn_block.15} parent=0 // loop_footer
    %s14 = sadd.s32 1, %s10
  $region7: #{rrcnn_block.15} parent=0 // loop_footer_branch
    %9 = sbr.rel target = $region3
  $region8: #{rrcnn_block.15} parent=0 // loop_exit
    _

// kernel: rrcnn_block.19
$region0: #{rrcnn_block.19}
  #allocation0 [shape = 'u32[]', space=smem, size = 0x4, offset = 0x4, fixed_abs, tag = 'smem constant byte address 0x4 - core index']
  #allocation1 [shape = 'u32[144,128]{1,0:T(1,128)}', space=vmem, size = 0x12000, scoped, tag = 'internal scratch']
  %s0 = inlined_call_operand.vmem [shape: f32[2,16,128], index: 0, kind: input, shape index: {}]
  %s1 = inlined_call_operand.vmem [shape: f32[1,128], index: 1, kind: input, shape index: {}]
  %s2 = inlined_call_operand.vmem [shape: f32[1,128], index: 2, kind: input, shape index: {}]
  %s3 = inlined_call_operand.vmem [shape: f32[2,16,128], index: 3, kind: output, shape index: {}]
  %s4 = sld [smem:[#allocation0]]
  $region45: #{rrcnn_block.19} parent=0
    _
  %s6 = ssub.s32 1, %s4
  %s7 = scalar_select 0, %s6, %s4
  loop: start=0, step=1, limit=4
  $region2: #{rrcnn_block.19} parent=0 // loop_pre_header
    _
  $region3: #{rrcnn_block.19} parent=0 // loop_header
    %s9 = sphi 0, %s13
    %p10 = scmp.ge.s32.totalorder %s9, 4
    %s19 = sphi 0, %s21
    %s22 = sphi 0, %s19
    %s23 = sphi 0, %s22
    %s39 = sphi 0, %s23
    %s43 = sphi 0, %s43
    %s45 = sphi 0, %s43
    %s46 = sphi 0, %s45
    %s60 = sphi 0, %s46
    %s64 = sphi 0, %s64
    %s66 = sphi 0, %s64
    %s67 = sphi 0, %s66
    %s81 = sphi 0, %s67
    %s87 = sphi 0, %s89
    %s90 = sphi 0, %s87
    %s91 = sphi 0, %s90
    %s107 = sphi 0, %s91
  $region4: #{rrcnn_block.19} parent=0 // loop_header_branch
    %12 = sbr.rel (%p10) target = $region8
  $region5: #{rrcnn_block.19} parent=0 // loop_body
    %s14 = ssub.s32 %s9, 1
    %s15 = ssub.s32 %s9, 2
    %s16 = sadd.s32 %s9, 1
    %s17 = ssub.s32 %s9, %s16
    %p18 = scmp.eq.s32.totalorder %s17, 0
    %s20 = sadd.s32 %s19, 1
    %s21 = scalar_select %p18, %s19, %s20
    %p24 = pneg %p18
    %p25 = scmp.eq.s32.totalorder %s9, 1
    %p26 = por %p24, %p25
    %p27 = scmp.ne.s32.totalorder %s19, %s22
    %p28 = scmp.eq.s32.totalorder %s9, 0
    %p29 = por %p27, %p28
    %p30 = scmp.ne.s32.totalorder %s19, %s22
    %p31 = scmp.eq.s32.totalorder %s14, 1
    %p32 = por %p30, %p31
    %p33 = scmp.ne.s32.totalorder %s22, %s23
    %p34 = scmp.eq.s32.totalorder %s14, 0
    %p35 = por %p33, %p34
    %p36 = scmp.ne.s32.totalorder %s22, %s23
    %p37 = scmp.eq.s32.totalorder %s15, 1
    %p38 = por %p36, %p37
    %p40 = scmp.ne.s32.totalorder %s23, %s39
    %p41 = scmp.eq.s32.totalorder %s15, 0
    %p42 = por %p40, %p41
    %s44 = sadd.s32 %s43, 1
    %p47 = scmp.eq.s32.totalorder %s9, 1
    %p48 = scmp.ne.s32.totalorder %s43, %s45
    %p49 = scmp.eq.s32.totalorder %s9, 0
    %p50 = por %p48, %p49
    %p51 = scmp.ne.s32.totalorder %s43, %s45
    %p52 = scmp.eq.s32.totalorder %s14, 1
    %p53 = por %p51, %p52
    %p54 = scmp.ne.s32.totalorder %s45, %s46
    %p55 = scmp.eq.s32.totalorder %s14, 0
    %p56 = por %p54, %p55
    %p57 = scmp.ne.s32.totalorder %s45, %s46
    %p58 = scmp.eq.s32.totalorder %s15, 1
    %p59 = por %p57, %p58
    %p61 = scmp.ne.s32.totalorder %s46, %s60
    %p62 = scmp.eq.s32.totalorder %s15, 0
    %p63 = por %p61, %p62
    %s65 = sadd.s32 %s64, 1
    %p68 = scmp.eq.s32.totalorder %s9, 1
    %p69 = scmp.ne.s32.totalorder %s64, %s66
    %p70 = scmp.eq.s32.totalorder %s9, 0
    %p71 = por %p69, %p70
    %p72 = scmp.ne.s32.totalorder %s64, %s66
    %p73 = scmp.eq.s32.totalorder %s14, 1
    %p74 = por %p72, %p73
    %p75 = scmp.ne.s32.totalorder %s66, %s67
    %p76 = scmp.eq.s32.totalorder %s14, 0
    %p77 = por %p75, %p76
    %p78 = scmp.ne.s32.totalorder %s66, %s67
    %p79 = scmp.eq.s32.totalorder %s15, 1
    %p80 = por %p78, %p79
    %p82 = scmp.ne.s32.totalorder %s67, %s81
    %p83 = scmp.eq.s32.totalorder %s15, 0
    %p84 = por %p82, %p83
    %s85 = ssub.s32 %s9, %s16
    %p86 = scmp.eq.s32.totalorder %s85, 0
    %s88 = sadd.s32 %s87, 1
    %s89 = scalar_select %p86, %s87, %s88
    %p92 = pneg %p86
    %p93 = scmp.eq.s32.totalorder %s9, 1
    %p94 = por %p92, %p93
    %p95 = scmp.ne.s32.totalorder %s87, %s90
    %p96 = scmp.eq.s32.totalorder %s9, 0
    %p97 = por %p95, %p96
    %p98 = scmp.ne.s32.totalorder %s87, %s90
    %p99 = scmp.eq.s32.totalorder %s14, 1
    %p100 = por %p98, %p99
    %p101 = scmp.ne.s32.totalorder %s90, %s91
    %p102 = scmp.eq.s32.totalorder %s14, 0
    %p103 = por %p101, %p102
    %p104 = scmp.ne.s32.totalorder %s90, %s91
    %p105 = scmp.eq.s32.totalorder %s15, 1
    %p106 = por %p104, %p105
    %p108 = scmp.ne.s32.totalorder %s91, %s107
    %p109 = scmp.eq.s32.totalorder %s15, 0
    %p110 = por %p108, %p109
    %p111 = scmp.le.s32.totalorder 1, %s9
    %p112 = scmp.lt.s32.totalorder %s9, 3
    %p113 = pnand %p111, %p112
    %p114 = pneg %p113
    // Predicated region
    $region9: #{rrcnn_block.19} parent=5 // pred_check
      _
    $region10: #{rrcnn_block.19} parent=5 // pred_check_branch
      %116 = sbr.rel (%p113) target = $region12
    $region11: #{rrcnn_block.19} parent=5 // pred_region
      %s117 = ssub.s32 %s9, 1
      // Predicated region
      $region13: #{rrcnn_block.19} parent=11 // pred_check
        %p118 = pneg %p56
      $region14: #{rrcnn_block.19} parent=11 // pred_check_branch
        %120 = sbr.rel (%p118) target = $region16
      $region15: #{rrcnn_block.19} parent=11 // pred_region
        _
      $region16: #{rrcnn_block.19} parent=11 // pred_fallthru
        _
      // Predicated region
      $region17: #{rrcnn_block.19} parent=11 // pred_check
        %p121 = pneg %p77
      $region18: #{rrcnn_block.19} parent=11 // pred_check_branch
        %123 = sbr.rel (%p121) target = $region20
      $region19: #{rrcnn_block.19} parent=11 // pred_region
        _
      $region20: #{rrcnn_block.19} parent=11 // pred_fallthru
        _
    $region12: #{rrcnn_block.19} parent=5 // pred_fallthru
      _
    %p124 = scmp.lt.s32.totalorder %s9, 2
    // Predicated region
    $region21: #{rrcnn_block.19} parent=5 // pred_check
      %p125 = pneg %p124
    $region22: #{rrcnn_block.19} parent=5 // pred_check_branch
      %127 = sbr.rel (%p125) target = $region24
    $region23: #{rrcnn_block.19} parent=5 // pred_region
      // Predicated region
      $region25: #{rrcnn_block.19} parent=23 // pred_check
        %p128 = pneg %p29
      $region26: #{rrcnn_block.19} parent=23 // pred_check_branch
        %130 = sbr.rel (%p128) target = $region28
      $region27: #{rrcnn_block.19} parent=23 // pred_region
        %p131 = scmp.lt.s32.totalorder %s9, 1
        %s132 = scalar_select %p131, %s9, 1
        %s133 = smul.addr %s132, 2
        %s134 = smul.addr %s133, 8
        %s135 = scalar_lea.vmem %s0, %s134
      $region28: #{rrcnn_block.19} parent=23 // pred_fallthru
        _
    $region24: #{rrcnn_block.19} parent=5 // pred_fallthru
      _
    %p136 = scmp.le.s32.totalorder 1, %s9
    %p137 = scmp.lt.s32.totalorder %s9, 3
    %p138 = pnand %p136, %p137
    %p139 = pneg %p138
    // Predicated region
    $region29: #{rrcnn_block.19} parent=5 // pred_check
      _
    $region30: #{rrcnn_block.19} parent=5 // pred_check_branch
      %141 = sbr.rel (%p138) target = $region32
    $region31: #{rrcnn_block.19} parent=5 // pred_region
      %s142 = ssub.s32 %s9, 1
      %p143 = scmp.lt.s32.totalorder %s14, 1
      %s144 = scalar_select %p143, %s14, 1
      %s145 = smul.addr %s144, 2
      %s146 = smul.addr %s145, 8
      %s147 = scalar_lea.vmem %s0, %s146
      %p148 = pneg %p35
      %p149 = pneg %p32
      %p150 = pneg %p56
      %p151 = pneg %p53
      %p152 = pneg %p77
      %p153 = pneg %p74
      %p154 = pneg %p103
      %p155 = pneg %p100
      %p156 = scmp.lt.s32.totalorder %s14, 1
      %s157 = scalar_select %p156, %s14, 1
      %s158 = smul.addr %s157, 2
      %s159 = smul.addr %s158, 8
      %s160 = scalar_lea.vmem %s3, %s159
      %p161 = scmp.lt.s32.totalorder %s14, 1
      %s162 = scalar_select %p161, %s14, 1
      %s163 = smul.addr %s162, 2
      %s164 = smul.addr %s163, 8
      %s165 = scalar_lea.vmem %s0, %s164
      %p166 = scmp.lt.s32.totalorder %s14, 1
      %s167 = scalar_select %p166, %s14, 1
      %s168 = smul.addr %s167, 2
      %s169 = smul.addr %s168, 8
      %s170 = scalar_lea.vmem %s3, %s169
      %v171 = vld [vmem:[%s165] sm:$0xff]
      %v172 = vld [vmem:[%s165 + $0x8] sm:$0xff]
      %v173 = vld [vmem:[%s1] sm:$0x1]
      %v175 = vlaneseq
      %v176 = vshrl.u32 %v175, 7
      %v177 = vsub.s32 0, %v176
      %v178 = vrot.slane %v173, %v177
      %v180 = vmul.f32 %v171, %v178
      %v181 = vmul.f32 %v172, %v178
      %v182 = vld [vmem:[%s2] sm:$0x1]
      %v184 = vlaneseq
      %v185 = vshrl.u32 %v184, 7
      %v186 = vsub.s32 0, %v185
      %v187 = vrot.slane %v182, %v186
      %v189 = vadd.f32 %v180, %v187
      %v190 = vadd.f32 %v181, %v187
      %v191 = vmax.f32 %v189, 0.0
      %v192 = vmax.f32 %v190, 0.0
      %193 = vst [vmem:[%s170] sm:$0xff] %v191
      %194 = vst [vmem:[%s170 + $0x8] sm:$0xff] %v192
      %p195 = scmp.lt.s32.totalorder %s14, 1
      %s196 = scalar_select %p195, %s14, 1
      %s197 = smul.addr %s196, 2
      %s198 = smul.addr %s197, 8
      %s199 = scalar_lea.vmem %s3, %s198
      // Predicated region
      $region33: #{rrcnn_block.19} parent=31 // pred_check
        %p200 = pneg %p100
      $region34: #{rrcnn_block.19} parent=31 // pred_check_branch
        %202 = sbr.rel (%p200) target = $region36
      $region35: #{rrcnn_block.19} parent=31 // pred_region
        _
      $region36: #{rrcnn_block.19} parent=31 // pred_fallthru
        _
    $region32: #{rrcnn_block.19} parent=5 // pred_fallthru
      _
    %p203 = scmp.le.s32.totalorder 2, %s9
    // Predicated region
    $region37: #{rrcnn_block.19} parent=5 // pred_check
      %p204 = pneg %p203
    $region38: #{rrcnn_block.19} parent=5 // pred_check_branch
      %206 = sbr.rel (%p204) target = $region40
    $region39: #{rrcnn_block.19} parent=5 // pred_region
      %s207 = ssub.s32 %s9, 2
      // Predicated region
      $region41: #{rrcnn_block.19} parent=39 // pred_check
        %p208 = pneg %p106
      $region42: #{rrcnn_block.19} parent=39 // pred_check_branch
        %210 = sbr.rel (%p208) target = $region44
      $region43: #{rrcnn_block.19} parent=39 // pred_region
        %p211 = scmp.lt.s32.totalorder %s15, 1
        %s212 = scalar_select %p211, %s15, 1
        %s213 = smul.addr %s212, 2
        %s214 = smul.addr %s213, 8
        %s215 = scalar_lea.vmem %s3, %s214
      $region44: #{rrcnn_block.19} parent=39 // pred_fallthru
        _
    $region40: #{rrcnn_block.19} parent=5 // pred_fallthru
      _
  $region6: #{rrcnn_block.19} parent=0 // loop_footer
    %s13 = sadd.s32 1, %s9
  $region7: #{rrcnn_block.19} parent=0 // loop_footer_branch
    %8 = sbr.rel target = $region3
  $region8: #{rrcnn_block.19} parent=0 // loop_exit
    _

// kernel: rrcnn_block.14
$region0: #{rrcnn_block.14}
  #allocation0 [shape = 'u32[]', space=smem, size = 0x4, offset = 0x4, fixed_abs, tag = 'smem constant byte address 0x4 - core index']
  #allocation1 [shape = 'u32[144,128]{1,0:T(1,128)}', space=vmem, size = 0x12000, scoped, tag = 'internal scratch']
  #allocation2 [shape = 'bf16[18,33,8]{2,1,0:T(8,128)(2,1)}', space=vmem, size = 0x2d000, scoped, tag = 'scratch operand']
  %s0 = inlined_call_operand.vmem [shape: f32[2,16,16,8], index: 0, kind: input, shape index: {}]
  %s1 = inlined_call_operand.vmem [shape: bf16[9,8,8], index: 1, kind: input, shape index: {}]
  %s2 = inlined_call_operand.vmem [shape: f32[2,16,16,8], index: 2, kind: output, shape index: {0}]
  %s3 = inlined_call_operand.vmem [shape: f32[2,2,8], index: 3, kind: output, shape index: {1}]
  %4 = xla_tuple %s2, %s3
  %s5 = sld [smem:[#allocation0]]
  $region49: #{rrcnn_block.14} parent=0
    _
  %s7 = ssub.s32 1, %s5
  %s8 = scalar_select 0, %s7, %s5
  loop: start=0, step=1, limit=4
  $region2: #{rrcnn_block.14} parent=0 // loop_pre_header
    _
  $region3: #{rrcnn_block.14} parent=0 // loop_header
    %s10 = sphi 0, %s14
    %p11 = scmp.ge.s32.totalorder %s10, 4
    %s20 = sphi 0, %s22
    %s23 = sphi 0, %s20
    %s24 = sphi 0, %s23
    %s40 = sphi 0, %s24
    %s44 = sphi 0, %s44
    %s46 = sphi 0, %s44
    %s47 = sphi 0, %s46
    %s61 = sphi 0, %s47
    %s67 = sphi 0, %s69
    %s70 = sphi 0, %s67
    %s71 = sphi 0, %s70
    %s87 = sphi 0, %s71
    %s93 = sphi 0, %s95
    %s96 = sphi 0, %s93
    %s97 = sphi 0, %s96
    %s113 = sphi 0, %s97
  $region4: #{rrcnn_block.14} parent=0 // loop_header_branch
    %13 = sbr.rel (%p11) target = $region8
  $region5: #{rrcnn_block.14} parent=0 // loop_body
    %s15 = ssub.s32 %s10, 1
    %s16 = ssub.s32 %s10, 2
    %s17 = sadd.s32 %s10, 1
    %s18 = ssub.s32 %s10, %s17
    %p19 = scmp.eq.s32.totalorder %s18, 0
    %s21 = sadd.s32 %s20, 1
    %s22 = scalar_select %p19, %s20, %s21
    %p25 = pneg %p19
    %p26 = scmp.eq.s32.totalorder %s10, 1
    %p27 = por %p25, %p26
    %p28 = scmp.ne.s32.totalorder %s20, %s23
    %p29 = scmp.eq.s32.totalorder %s10, 0
    %p30 = por %p28, %p29
    %p31 = scmp.ne.s32.totalorder %s20, %s23
    %p32 = scmp.eq.s32.totalorder %s15, 1
    %p33 = por %p31, %p32
    %p34 = scmp.ne.s32.totalorder %s23, %s24
    %p35 = scmp.eq.s32.totalorder %s15, 0
    %p36 = por %p34, %p35
    %p37 = scmp.ne.s32.totalorder %s23, %s24
    %p38 = scmp.eq.s32.totalorder %s16, 1
    %p39 = por %p37, %p38
    %p41 = scmp.ne.s32.totalorder %s24, %s40
    %p42 = scmp.eq.s32.totalorder %s16, 0
    %p43 = por %p41, %p42
    %s45 = sadd.s32 %s44, 1
    %p48 = scmp.eq.s32.totalorder %s10, 1
    %p49 = scmp.ne.s32.totalorder %s44, %s46
    %p50 = scmp.eq.s32.totalorder %s10, 0
    %p51 = por %p49, %p50
    %p52 = scmp.ne.s32.totalorder %s44, %s46
    %p53 = scmp.eq.s32.totalorder %s15, 1
    %p54 = por %p52, %p53
    %p55 = scmp.ne.s32.totalorder %s46, %s47
    %p56 = scmp.eq.s32.totalorder %s15, 0
    %p57 = por %p55, %p56
    %p58 = scmp.ne.s32.totalorder %s46, %s47
    %p59 = scmp.eq.s32.totalorder %s16, 1
    %p60 = por %p58, %p59
    %p62 = scmp.ne.s32.totalorder %s47, %s61
    %p63 = scmp.eq.s32.totalorder %s16, 0
    %p64 = por %p62, %p63
    %s65 = ssub.s32 %s10, %s17
    %p66 = scmp.eq.s32.totalorder %s65, 0
    %s68 = sadd.s32 %s67, 1
    %s69 = scalar_select %p66, %s67, %s68
    %p72 = pneg %p66
    %p73 = scmp.eq.s32.totalorder %s10, 1
    %p74 = por %p72, %p73
    %p75 = scmp.ne.s32.totalorder %s67, %s70
    %p76 = scmp.eq.s32.totalorder %s10, 0
    %p77 = por %p75, %p76
    %p78 = scmp.ne.s32.totalorder %s67, %s70
    %p79 = scmp.eq.s32.totalorder %s15, 1
    %p80 = por %p78, %p79
    %p81 = scmp.ne.s32.totalorder %s70, %s71
    %p82 = scmp.eq.s32.totalorder %s15, 0
    %p83 = por %p81, %p82
    %p84 = scmp.ne.s32.totalorder %s70, %s71
    %p85 = scmp.eq.s32.totalorder %s16, 1
    %p86 = por %p84, %p85
    %p88 = scmp.ne.s32.totalorder %s71, %s87
    %p89 = scmp.eq.s32.totalorder %s16, 0
    %p90 = por %p88, %p89
    %s91 = ssub.s32 %s10, %s17
    %p92 = scmp.eq.s32.totalorder %s91, 0
    %s94 = sadd.s32 %s93, 1
    %s95 = scalar_select %p92, %s93, %s94
    %p98 = pneg %p92
    %p99 = scmp.eq.s32.totalorder %s10, 1
    %p100 = por %p98, %p99
    %p101 = scmp.ne.s32.totalorder %s93, %s96
    %p102 = scmp.eq.s32.totalorder %s10, 0
    %p103 = por %p101, %p102
    %p104 = scmp.ne.s32.totalorder %s93, %s96
    %p105 = scmp.eq.s32.totalorder %s15, 1
    %p106 = por %p104, %p105
    %p107 = scmp.ne.s32.totalorder %s96, %s97
    %p108 = scmp.eq.s32.totalorder %s15, 0
    %p109 = por %p107, %p108
    %p110 = scmp.ne.s32.totalorder %s96, %s97
    %p111 = scmp.eq.s32.totalorder %s16, 1
    %p112 = por %p110, %p111
    %p114 = scmp.ne.s32.totalorder %s97, %s113
    %p115 = scmp.eq.s32.totalorder %s16, 0
    %p116 = por %p114, %p115
    %p117 = scmp.le.s32.totalorder 1, %s10
    %p118 = scmp.lt.s32.totalorder %s10, 3
    %p119 = pnand %p117, %p118
    %p120 = pneg %p119
    // Predicated region
    $region9: #{rrcnn_block.14} parent=5 // pred_check
      _
    $region10: #{rrcnn_block.14} parent=5 // pred_check_branch
      %122 = sbr.rel (%p119) target = $region12
    $region11: #{rrcnn_block.14} parent=5 // pred_region
      %s123 = ssub.s32 %s10, 1
      // Predicated region
      $region13: #{rrcnn_block.14} parent=11 // pred_check
        %p124 = pneg %p57
      $region14: #{rrcnn_block.14} parent=11 // pred_check_branch
        %126 = sbr.rel (%p124) target = $region16
      $region15: #{rrcnn_block.14} parent=11 // pred_region
        _
      $region16: #{rrcnn_block.14} parent=11 // pred_fallthru
        _
    $region12: #{rrcnn_block.14} parent=5 // pred_fallthru
      _
    %p127 = scmp.lt.s32.totalorder %s10, 2
    // Predicated region
    $region17: #{rrcnn_block.14} parent=5 // pred_check
      %p128 = pneg %p127
    $region18: #{rrcnn_block.14} parent=5 // pred_check_branch
      %130 = sbr.rel (%p128) target = $region20
    $region19: #{rrcnn_block.14} parent=5 // pred_region
      // Predicated region
      $region21: #{rrcnn_block.14} parent=19 // pred_check
        %p131 = pneg %p30
      $region22: #{rrcnn_block.14} parent=19 // pred_check_branch
        %133 = sbr.rel (%p131) target = $region24
      $region23: #{rrcnn_block.14} parent=19 // pred_region
        %p134 = scmp.lt.s32.totalorder %s10, 1
        %s135 = scalar_select %p134, %s10, 1
        %s136 = smul.addr %s135, 32
        %s137 = smul.addr %s136, 8
        %s138 = scalar_lea.vmem %s0, %s137
      $region24: #{rrcnn_block.14} parent=19 // pred_fallthru
        _
    $region20: #{rrcnn_block.14} parent=5 // pred_fallthru
      _
    %p139 = scmp.le.s32.totalorder 1, %s10
    %p140 = scmp.lt.s32.totalorder %s10, 3
    %p141 = pnand %p139, %p140
    %p142 = pneg %p141
    // Predicated region
    $region25: #{rrcnn_block.14} parent=5 // pred_check
      _
    $region26: #{rrcnn_block.14} parent=5 // pred_check_branch
      %144 = sbr.rel (%p141) target = $region28
    $region27: #{rrcnn_block.14} parent=5 // pred_region
      %s145 = ssub.s32 %s10, 1
      %p146 = scmp.lt.s32.totalorder %s15, 1
      %s147 = scalar_select %p146, %s15, 1
      %s148 = smul.addr %s147, 32
      %s149 = smul.addr %s148, 8
      %s150 = scalar_lea.vmem %s0, %s149
      %p151 = pneg %p36
      %p152 = pneg %p33
      %p153 = pneg %p57
      %p154 = pneg %p54
      %p155 = pneg %p83
      %p156 = pneg %p80
      %p157 = scmp.lt.s32.totalorder %s15, 1
      %s158 = scalar_select %p157, %s15, 1
      %s159 = smul.addr %s158, 32
      %s160 = smul.addr %s159, 8
      %s161 = scalar_lea.vmem %s2, %s160
      %p162 = pneg %p109
      %p163 = pneg %p106
      %p164 = scmp.lt.s32.totalorder %s15, 1
      %s165 = scalar_select %p164, %s15, 1
      %s166 = smul.addr %s165, 2
      %s167 = scalar_lea.vmem %s3, %s166
      %p168 = scmp.lt.s32.totalorder %s15, 1
      %s169 = scalar_select %p168, %s15, 1
      %s170 = smul.addr %s169, 32
      %s171 = smul.addr %s170, 8
      %s172 = scalar_lea.vmem %s0, %s171
      %p173 = scmp.lt.s32.totalorder %s15, 1
      %s174 = scalar_select %p173, %s15, 1
      %s175 = smul.addr %s174, 32
      %s176 = smul.addr %s175, 8
      %s177 = scalar_lea.vmem %s2, %s176
      %p178 = scmp.lt.s32.totalorder %s15, 1
      %s179 = scalar_select %p178, %s15, 1
      %s180 = smul.addr %s179, 2
      %s181 = scalar_lea.vmem %s3, %s180
      %vm183 = vcmask 60416
      %184 = vst.msk [vmem:[#allocation2] sm:$0xf] %vm183, 0
      %185 = vst.msk [vmem:[#allocation2 + $0x4] sm:$0xf] %vm183, 0
      %186 = vst.msk [vmem:[#allocation2 + $0x8] sm:$0xf] %vm183, 0
      %187 = vst.msk [vmem:[#allocation2 + $0xc] sm:$0xf] %vm183, 0
      %vm188 = vcmask 57344
      %vm189 = vsmask.f32 256
      %vm190 = vmand %vm188, %vm189
      %v191 = vld [vmem:[#allocation2 + $0x10] sm:$0x1]
      %v192 = vsel %vm190, 0, %v191
      %193 = vst [vmem:[#allocation2 + $0x10] sm:$0x1] %v192
      %s194 = scalar_lea.vmem [#allocation2], 340
      %195 = vst.msk [vmem:[%s194] sm:$0xf] %vm183, 0
      %196 = vst.msk [vmem:[%s194 + $0x4] sm:$0xf] %vm183, 0
      %197 = vst.msk [vmem:[%s194 + $0x8] sm:$0xf] %vm183, 0
      %198 = vst.msk [vmem:[%s194 + $0xc] sm:$0xf] %vm183, 0
      %v199 = vld [vmem:[%s194 + $0x10] sm:$0x1]
      %v200 = vsel %vm190, 0, %v199
      %201 = vst [vmem:[%s194 + $0x10] sm:$0x1] %v200
      %vm202 = vcmask 60419
      %vm203 = vsmask.f32 7950
      %vm204 = vmand %vm202, %vm203
      %v205 = vld [vmem:[#allocation2 + $0x4] sm:$0x8]
      %v206 = vsel %vm204, 0, %v205
      %207 = vst [vmem:[#allocation2 + $0x4] sm:$0x8] %v206
      %v208 = vld [vmem:[#allocation2 + $0x18] sm:$0x8]
      %v209 = vsel %vm204, 0, %v208
      %210 = vst [vmem:[#allocation2 + $0x18] sm:$0x8] %v209
      %v211 = vld [vmem:[#allocation2 + $0x2c] sm:$0x8]
      %v212 = vsel %vm204, 0, %v211
      %213 = vst [vmem:[#allocation2 + $0x2c] sm:$0x8] %v212
      %v214 = vld [vmem:[#allocation2 + $0x40] sm:$0x8]
      %v215 = vsel %vm204, 0, %v214
      %216 = vst [vmem:[#allocation2 + $0x40] sm:$0x8] %v215
      %v217 = vld [vmem:[#allocation2 + $0x54] sm:$0x8]
      %v218 = vsel %vm204, 0, %v217
      %219 = vst [vmem:[#allocation2 + $0x54] sm:$0x8] %v218
      %v220 = vld [vmem:[#allocation2 + $0x68] sm:$0x8]
      %v221 = vsel %vm204, 0, %v220
      %222 = vst [vmem:[#allocation2 + $0x68] sm:$0x8] %v221
      %v223 = vld [vmem:[#allocation2 + $0x7c] sm:$0x8]
      %v224 = vsel %vm204, 0, %v223
      %225 = vst [vmem:[#allocation2 + $0x7c] sm:$0x8] %v224
      %v226 = vld [vmem:[#allocation2 + $0x90] sm:$0x8]
      %v227 = vsel %vm204, 0, %v226
      %228 = vst [vmem:[#allocation2 + $0x90] sm:$0x8] %v227
      %v229 = vld [vmem:[#allocation2 + $0xa4] sm:$0x8]
      %v230 = vsel %vm204, 0, %v229
      %231 = vst [vmem:[#allocation2 + $0xa4] sm:$0x8] %v230
      %v232 = vld [vmem:[#allocation2 + $0xb8] sm:$0x8]
      %v233 = vsel %vm204, 0, %v232
      %234 = vst [vmem:[#allocation2 + $0xb8] sm:$0x8] %v233
      %v235 = vld [vmem:[#allocation2 + $0xcc] sm:$0x8]
      %v236 = vsel %vm204, 0, %v235
      %237 = vst [vmem:[#allocation2 + $0xcc] sm:$0x8] %v236
      %v238 = vld [vmem:[#allocation2 + $0xe0] sm:$0x8]
      %v239 = vsel %vm204, 0, %v238
      %240 = vst [vmem:[#allocation2 + $0xe0] sm:$0x8] %v239
      %v241 = vld [vmem:[#allocation2 + $0xf4] sm:$0x8]
      %v242 = vsel %vm204, 0, %v241
      %243 = vst [vmem:[#allocation2 + $0xf4] sm:$0x8] %v242
      %v244 = vld [vmem:[#allocation2 + $0x108] sm:$0x8]
      %v245 = vsel %vm204, 0, %v244
      %246 = vst [vmem:[#allocation2 + $0x108] sm:$0x8] %v245
      %v247 = vld [vmem:[#allocation2 + $0x11c] sm:$0x8]
      %v248 = vsel %vm204, 0, %v247
      %249 = vst [vmem:[#allocation2 + $0x11c] sm:$0x8] %v248
      %v250 = vld [vmem:[#allocation2 + $0x130] sm:$0x8]
      %v251 = vsel %vm204, 0, %v250
      %252 = vst [vmem:[#allocation2 + $0x130] sm:$0x8] %v251
      %v253 = vld [vmem:[#allocation2 + $0x144] sm:$0x8]
      %v254 = vsel %vm204, 0, %v253
      %255 = vst [vmem:[#allocation2 + $0x144] sm:$0x8] %v254
      %v256 = vld [vmem:[#allocation2 + $0x158] sm:$0x8]
      %v257 = vsel %vm204, 0, %v256
      %258 = vst [vmem:[#allocation2 + $0x158] sm:$0x8] %v257
      %v259 = vld [vmem:[#allocation2 + $0x10] sm:$0x1]
      %v260 = vsel %vm190, 0, %v259
      %261 = vst [vmem:[#allocation2 + $0x10] sm:$0x1] %v260
      %v262 = vld [vmem:[#allocation2 + $0x24] sm:$0x1]
      %v263 = vsel %vm190, 0, %v262
      %264 = vst [vmem:[#allocation2 + $0x24] sm:$0x1] %v263
      %v265 = vld [vmem:[#allocation2 + $0x38] sm:$0x1]
      %v266 = vsel %vm190, 0, %v265
      %267 = vst [vmem:[#allocation2 + $0x38] sm:$0x1] %v266
      %v268 = vld [vmem:[#allocation2 + $0x4c] sm:$0x1]
      %v269 = vsel %vm190, 0, %v268
      %270 = vst [vmem:[#allocation2 + $0x4c] sm:$0x1] %v269
      %v271 = vld [vmem:[#allocation2 + $0x60] sm:$0x1]
      %v272 = vsel %vm190, 0, %v271
      %273 = vst [vmem:[#allocation2 + $0x60] sm:$0x1] %v272
      %v274 = vld [vmem:[#allocation2 + $0x74] sm:$0x1]
      %v275 = vsel %vm190, 0, %v274
      %276 = vst [vmem:[#allocation2 + $0x74] sm:$0x1] %v275
      %v277 = vld [vmem:[#allocation2 + $0x88] sm:$0x1]
      %v278 = vsel %vm190, 0, %v277
      %279 = vst [vmem:[#allocation2 + $0x88] sm:$0x1] %v278
      %v280 = vld [vmem:[#allocation2 + $0x9c] sm:$0x1]
      %v281 = vsel %vm190, 0, %v280
      %282 = vst [vmem:[#allocation2 + $0x9c] sm:$0x1] %v281
      %v283 = vld [vmem:[#allocation2 + $0xb0] sm:$0x1]
      %v284 = vsel %vm190, 0, %v283
      %285 = vst [vmem:[#allocation2 + $0xb0] sm:$0x1] %v284
      %v286 = vld [vmem:[#allocation2 + $0xc4] sm:$0x1]
      %v287 = vsel %vm190, 0, %v286
      %288 = vst [vmem:[#allocation2 + $0xc4] sm:$0x1] %v287
      %v289 = vld [vmem:[#allocation2 + $0xd8] sm:$0x1]
      %v290 = vsel %vm190, 0, %v289
      %291 = vst [vmem:[#allocation2 + $0xd8] sm:$0x1] %v290
      %v292 = vld [vmem:[#allocation2 + $0xec] sm:$0x1]
      %v293 = vsel %vm190, 0, %v292
      %294 = vst [vmem:[#allocation2 + $0xec] sm:$0x1] %v293
      %v295 = vld [vmem:[#allocation2 + $0x100] sm:$0x1]
      %v296 = vsel %vm190, 0, %v295
      %297 = vst [vmem:[#allocation2 + $0x100] sm:$0x1] %v296
      %v298 = vld [vmem:[#allocation2 + $0x114] sm:$0x1]
      %v299 = vsel %vm190, 0, %v298
      %300 = vst [vmem:[#allocation2 + $0x114] sm:$0x1] %v299
      %v301 = vld [vmem:[#allocation2 + $0x128] sm:$0x1]
      %v302 = vsel %vm190, 0, %v301
      %303 = vst [vmem:[#allocation2 + $0x128] sm:$0x1] %v302
      %v304 = vld [vmem:[#allocation2 + $0x13c] sm:$0x1]
      %v305 = vsel %vm190, 0, %v304
      %306 = vst [vmem:[#allocation2 + $0x13c] sm:$0x1] %v305
      %v307 = vld [vmem:[#allocation2 + $0x150] sm:$0x1]
      %v308 = vsel %vm190, 0, %v307
      %309 = vst [vmem:[#allocation2 + $0x150] sm:$0x1] %v308
      %v310 = vld [vmem:[#allocation2 + $0x164] sm:$0x1]
      %v311 = vsel %vm190, 0, %v310
      %312 = vst [vmem:[#allocation2 + $0x164] sm:$0x1] %v311
      %v313 = vld [vmem:[%s172] sm:$0xff]
      %v314 = vld [vmem:[%s172 + $0x8] sm:$0xff]
      %v315 = vld [vmem:[%s172 + $0x10] sm:$0xff]
      %v316 = vld [vmem:[%s172 + $0x18] sm:$0xff]
      %v317 = vld [vmem:[%s172 + $0x20] sm:$0xff]
      %v318 = vld [vmem:[%s172 + $0x28] sm:$0xff]
      %v319 = vld [vmem:[%s172 + $0x30] sm:$0xff]
      %v320 = vld [vmem:[%s172 + $0x38] sm:$0xff]
      %v321 = vld [vmem:[%s172 + $0x40] sm:$0xff]
      %v322 = vld [vmem:[%s172 + $0x48] sm:$0xff]
      %v323 = vld [vmem:[%s172 + $0x50] sm:$0xff]
      %v324 = vld [vmem:[%s172 + $0x58] sm:$0xff]
      %v325 = vld [vmem:[%s172 + $0x60] sm:$0xff]
      %v326 = vld [vmem:[%s172 + $0x68] sm:$0xff]
      %v327 = vld [vmem:[%s172 + $0x70] sm:$0xff]
      %v328 = vld [vmem:[%s172 + $0x78] sm:$0xff]
      %v329 = vld [vmem:[%s172 + $0x80] sm:$0xff]
      %v330 = vld [vmem:[%s172 + $0x88] sm:$0xff]
      %v331 = vld [vmem:[%s172 + $0x90] sm:$0xff]
      %v332 = vld [vmem:[%s172 + $0x98] sm:$0xff]
      %v333 = vld [vmem:[%s172 + $0xa0] sm:$0xff]
      %v334 = vld [vmem:[%s172 + $0xa8] sm:$0xff]
      %v335 = vld [vmem:[%s172 + $0xb0] sm:$0xff]
      %v336 = vld [vmem:[%s172 + $0xb8] sm:$0xff]
      %v337 = vld [vmem:[%s172 + $0xc0] sm:$0xff]
      %v338 = vld [vmem:[%s172 + $0xc8] sm:$0xff]
      %v339 = vld [vmem:[%s172 + $0xd0] sm:$0xff]
      %v340 = vld [vmem:[%s172 + $0xd8] sm:$0xff]
      %v341 = vld [vmem:[%s172 + $0xe0] sm:$0xff]
      %v342 = vld [vmem:[%s172 + $0xe8] sm:$0xff]
      %v343 = vld [vmem:[%s172 + $0xf0] sm:$0xff]
      %v344 = vld [vmem:[%s172 + $0xf8] sm:$0xff]
      %v345 = vpack.c.bf16 %v314, %v313
      %v346 = vpack.c.bf16 %v316, %v315
      %v347 = vpack.c.bf16 %v318, %v317
      %v348 = vpack.c.bf16 %v320, %v319
      %v349 = vpack.c.bf16 %v322, %v321
      %v350 = vpack.c.bf16 %v324, %v323
      %v351 = vpack.c.bf16 %v326, %v325
      %v352 = vpack.c.bf16 %v328, %v327
      %v353 = vpack.c.bf16 %v330, %v329
      %v354 = vpack.c.bf16 %v332, %v331
      %v355 = vpack.c.bf16 %v334, %v333
      %v356 = vpack.c.bf16 %v336, %v335
      %v357 = vpack.c.bf16 %v338, %v337
      %v358 = vpack.c.bf16 %v340, %v339
      %v359 = vpack.c.bf16 %v342, %v341
      %v360 = vpack.c.bf16 %v344, %v343
      %v377 = vunpack.c.l.b16 %v345
      %v378 = vunpack.c.h.b16 %v345
      %v379 = vunpack.c.l.b16 %v346
      %v380 = vunpack.c.h.b16 %v346
      %v381 = vunpack.c.l.b16 %v347
      %v382 = vunpack.c.h.b16 %v347
      %v383 = vunpack.c.l.b16 %v348
      %v384 = vunpack.c.h.b16 %v348
      %v385 = vunpack.c.l.b16 %v349
      %v386 = vunpack.c.h.b16 %v349
      %v387 = vunpack.c.l.b16 %v350
      %v388 = vunpack.c.h.b16 %v350
      %v389 = vunpack.c.l.b16 %v351
      %v390 = vunpack.c.h.b16 %v351
      %v391 = vunpack.c.l.b16 %v352
      %v392 = vunpack.c.h.b16 %v352
      %v393 = vunpack.c.l.b16 %v353
      %v394 = vunpack.c.h.b16 %v353
      %v395 = vunpack.c.l.b16 %v354
      %v396 = vunpack.c.h.b16 %v354
      %v397 = vunpack.c.l.b16 %v355
      %v398 = vunpack.c.h.b16 %v355
      %v399 = vunpack.c.l.b16 %v356
      %v400 = vunpack.c.h.b16 %v356
      %v401 = vunpack.c.l.b16 %v357
      %v402 = vunpack.c.h.b16 %v357
      %v403 = vunpack.c.l.b16 %v358
      %v404 = vunpack.c.h.b16 %v358
      %v405 = vunpack.c.l.b16 %v359
      %v406 = vunpack.c.h.b16 %v359
      %v407 = vunpack.c.l.b16 %v360
      %v408 = vunpack.c.h.b16 %v360
      %v409 = vpack.c.b16 %v377, %v377
      %v410 = vpack.c.b16 %v378, %v378
      %v411 = vpack.c.b16 %v379, %v379
      %v412 = vpack.c.b16 %v380, %v380
      %v413 = vpack.c.b16 %v381, %v381
      %v414 = vpack.c.b16 %v382, %v382
      %v415 = vpack.c.b16 %v383, %v383
      %v416 = vpack.c.b16 %v384, %v384
      %v417 = vpack.c.b16 %v385, %v385
      %v418 = vpack.c.b16 %v386, %v386
      %v419 = vpack.c.b16 %v387, %v387
      %v420 = vpack.c.b16 %v388, %v388
      %v421 = vpack.c.b16 %v389, %v389
      %v422 = vpack.c.b16 %v390, %v390
      %v423 = vpack.c.b16 %v391, %v391
      %v424 = vpack.c.b16 %v392, %v392
      %v425 = vpack.c.b16 %v393, %v393
      %v426 = vpack.c.b16 %v394, %v394
      %v427 = vpack.c.b16 %v395, %v395
      %v428 = vpack.c.b16 %v396, %v396
      %v429 = vpack.c.b16 %v397, %v397
      %v430 = vpack.c.b16 %v398, %v398
      %v431 = vpack.c.b16 %v399, %v399
      %v432 = vpack.c.b16 %v400, %v400
      %v433 = vpack.c.b16 %v401, %v401
      %v434 = vpack.c.b16 %v402, %v402
      %v435 = vpack.c.b16 %v403, %v403
      %v436 = vpack.c.b16 %v404, %v404
      %v437 = vpack.c.b16 %v405, %v405
      %v438 = vpack.c.b16 %v406, %v406
      %v439 = vpack.c.b16 %v407, %v407
      %v440 = vpack.c.b16 %v408, %v408
      %s473 = scalar_lea.vmem [#allocation2], 20
      %474 = vst.msk [vmem:[%s473 + $0x8] sm:$0xf] %vm183, %v409
      %475 = vst.msk [vmem:[%s473 + $0xc] sm:$0xf] %vm183, %v410
      %476 = vst.msk [vmem:[%s473 + $0x1c] sm:$0xf] %vm183, %v411
      %477 = vst.msk [vmem:[%s473 + $0x20] sm:$0xf] %vm183, %v412
      %478 = vst.msk [vmem:[%s473 + $0x30] sm:$0xf] %vm183, %v413
      %479 = vst.msk [vmem:[%s473 + $0x34] sm:$0xf] %vm183, %v414
      %480 = vst.msk [vmem:[%s473 + $0x44] sm:$0xf] %vm183, %v415
      %481 = vst.msk [vmem:[%s473 + $0x48] sm:$0xf] %vm183, %v416
      %482 = vst.msk [vmem:[%s473 + $0x58] sm:$0xf] %vm183, %v417
      %483 = vst.msk [vmem:[%s473 + $0x5c] sm:$0xf] %vm183, %v418
      %484 = vst.msk [vmem:[%s473 + $0x6c] sm:$0xf] %vm183, %v419
      %485 = vst.msk [vmem:[%s473 + $0x70] sm:$0xf] %vm183, %v420
      %486 = vst.msk [vmem:[%s473 + $0x80] sm:$0xf] %vm183, %v421
      %487 = vst.msk [vmem:[%s473 + $0x84] sm:$0xf] %vm183, %v422
      %488 = vst.msk [vmem:[%s473 + $0x94] sm:$0xf] %vm183, %v423
      %489 = vst.msk [vmem:[%s473 + $0x98] sm:$0xf] %vm183, %v424
      %490 = vst.msk [vmem:[%s473 + $0xa8] sm:$0xf] %vm183, %v425
      %491 = vst.msk [vmem:[%s473 + $0xac] sm:$0xf] %vm183, %v426
      %492 = vst.msk [vmem:[%s473 + $0xbc] sm:$0xf] %vm183, %v427
      %493 = vst.msk [vmem:[%s473 + $0xc0] sm:$0xf] %vm183, %v428
      %494 = vst.msk [vmem:[%s473 + $0xd0] sm:$0xf] %vm183, %v429
      %495 = vst.msk [vmem:[%s473 + $0xd4] sm:$0xf] %vm183, %v430
      %496 = vst.msk [vmem:[%s473 + $0xe4] sm:$0xf] %vm183, %v431
      %497 = vst.msk [vmem:[%s473 + $0xe8] sm:$0xf] %vm183, %v432
      %498 = vst.msk [vmem:[%s473 + $0xf8] sm:$0xf] %vm183, %v433
      %499 = vst.msk [vmem:[%s473 + $0xfc] sm:$0xf] %vm183, %v434
      %500 = vst.msk [vmem:[%s473 + $0x10c] sm:$0xf] %vm183, %v435
      %501 = vst.msk [vmem:[%s473 + $0x110] sm:$0xf] %vm183, %v436
      %502 = vst.msk [vmem:[%s473 + $0x120] sm:$0xf] %vm183, %v437
      %503 = vst.msk [vmem:[%s473 + $0x124] sm:$0xf] %vm183, %v438
      %504 = vst.msk [vmem:[%s473 + $0x134] sm:$0xf] %vm183, %v439
      %505 = vst.msk [vmem:[%s473 + $0x138] sm:$0xf] %vm183, %v440
      %v506 = vld [vmem:[#allocation2 + $0x4] sm:$0x8]
      %v507 = vld [vmem:[#allocation2 + $0x8] sm:$0xf]
      %v508 = vld [vmem:[#allocation2 + $0xc] sm:$0xf]
      %v509 = vld [vmem:[#allocation2 + $0x18] sm:$0x8]
      %v510 = vld [vmem:[#allocation2 + $0x1c] sm:$0xf]
      %v511 = vld [vmem:[#allocation2 + $0x20] sm:$0xf]
      %v512 = vld [vmem:[#allocation2 + $0x2c] sm:$0x8]
      %v513 = vld [vmem:[#allocation2 + $0x30] sm:$0xf]
      %v514 = vld [vmem:[#allocation2 + $0x34] sm:$0xf]
      %v515 = vld [vmem:[#allocation2 + $0x40] sm:$0x8]
      %v516 = vld [vmem:[#allocation2 + $0x44] sm:$0xf]
      %v517 = vld [vmem:[#allocation2 + $0x48] sm:$0xf]
      %v518 = vld [vmem:[#allocation2 + $0x54] sm:$0x8]
      %v519 = vld [vmem:[#allocation2 + $0x58] sm:$0xf]
      %v520 = vld [vmem:[#allocation2 + $0x5c] sm:$0xf]
      %v521 = vld [vmem:[#allocation2 + $0x68] sm:$0x8]
      %v522 = vld [vmem:[#allocation2 + $0x6c] sm:$0xf]
      %v523 = vld [vmem:[#allocation2 + $0x70] sm:$0xf]
      %v524 = vld [vmem:[#allocation2 + $0x7c] sm:$0x8]
      %v525 = vld [vmem:[#allocation2 + $0x80] sm:$0xf]
      %v526 = vld [vmem:[#allocation2 + $0x84] sm:$0xf]
      %v527 = vld [vmem:[#allocation2 + $0x90] sm:$0x8]
      %v528 = vld [vmem:[#allocation2 + $0x94] sm:$0xf]
      %v529 = vld [vmem:[#allocation2 + $0x98] sm:$0xf]
      %v530 = vld [vmem:[#allocation2 + $0xa4] sm:$0x8]
      %v531 = vld [vmem:[#allocation2 + $0xa8] sm:$0xf]
      %v532 = vld [vmem:[#allocation2 + $0xac] sm:$0xf]
      %v533 = vld [vmem:[#allocation2 + $0xb8] sm:$0x8]
      %v534 = vld [vmem:[#allocation2 + $0xbc] sm:$0xf]
      %v535 = vld [vmem:[#allocation2 + $0xc0] sm:$0xf]
      %v536 = vld [vmem:[#allocation2 + $0xcc] sm:$0x8]
      %v537 = vld [vmem:[#allocation2 + $0xd0] sm:$0xf]
      %v538 = vld [vmem:[#allocation2 + $0xd4] sm:$0xf]
      %v539 = vld [vmem:[#allocation2 + $0xe0] sm:$0x8]
      %v540 = vld [vmem:[#allocation2 + $0xe4] sm:$0xf]
      %v541 = vld [vmem:[#allocation2 + $0xe8] sm:$0xf]
      %v542 = vld [vmem:[#allocation2 + $0xf4] sm:$0x8]
      %v543 = vld [vmem:[#allocation2 + $0xf8] sm:$0xf]
      %v544 = vld [vmem:[#allocation2 + $0xfc] sm:$0xf]
      %v545 = vld [vmem:[#allocation2 + $0x108] sm:$0x8]
      %v546 = vld [vmem:[#allocation2 + $0x10c] sm:$0xf]
      %v547 = vld [vmem:[#allocation2 + $0x110] sm:$0xf]
      %v548 = vld [vmem:[#allocation2 + $0x11c] sm:$0x8]
      %v549 = vld [vmem:[#allocation2 + $0x120] sm:$0xf]
      %v550 = vld [vmem:[#allocation2 + $0x124] sm:$0xf]
      %v551 = vld [vmem:[#allocation2 + $0x130] sm:$0x8]
      %v552 = vld [vmem:[#allocation2 + $0x134] sm:$0xf]
      %v553 = vld [vmem:[#allocation2 + $0x138] sm:$0xf]
      %vm554 = vsmask.f32 4368
      %vm555 = vmor %vm189, %vm554
      %v557 = vshrl.u32 %v506, 16
      %v559 = vrot.slane %v557, 7
      %v560 = vrot.slane %v559, 4
      %v562 = vshrl.u32 %v507, 16
      %v564 = vrot.slane %v562, 7
      %v565 = vshll.u32 %v507, 16
      %v567 = vor.u32 %v564, %v565
      %v568 = vsel %vm555, %v560, %v567
      %v569 = vrot.slane %v564, 4
      %v571 = vshrl.u32 %v508, 16
      %v573 = vrot.slane %v571, 7
      %v574 = vshll.u32 %v508, 16
      %v576 = vor.u32 %v573, %v574
      %v577 = vsel %vm555, %v569, %v576
      %v579 = vshrl.u32 %v509, 16
      %v581 = vrot.slane %v579, 7
      %v582 = vrot.slane %v581, 4
      %v584 = vshrl.u32 %v510, 16
      %v586 = vrot.slane %v584, 7
      %v587 = vshll.u32 %v510, 16
      %v589 = vor.u32 %v586, %v587
      %v590 = vsel %vm555, %v582, %v589
      %v591 = vrot.slane %v586, 4
      %v593 = vshrl.u32 %v511, 16
      %v595 = vrot.slane %v593, 7
      %v596 = vshll.u32 %v511, 16
      %v598 = vor.u32 %v595, %v596
      %v599 = vsel %vm555, %v591, %v598
      %v601 = vshrl.u32 %v512, 16
      %v603 = vrot.slane %v601, 7
      %v604 = vrot.slane %v603, 4
      %v606 = vshrl.u32 %v513, 16
      %v608 = vrot.slane %v606, 7
      %v609 = vshll.u32 %v513, 16
      %v611 = vor.u32 %v608, %v609
      %v612 = vsel %vm555, %v604, %v611
      %v613 = vrot.slane %v608, 4
      %v615 = vshrl.u32 %v514, 16
      %v617 = vrot.slane %v615, 7
      %v618 = vshll.u32 %v514, 16
      %v620 = vor.u32 %v617, %v618
      %v621 = vsel %vm555, %v613, %v620
      %v623 = vshrl.u32 %v515, 16
      %v625 = vrot.slane %v623, 7
      %v626 = vrot.slane %v625, 4
      %v628 = vshrl.u32 %v516, 16
      %v630 = vrot.slane %v628, 7
      %v631 = vshll.u32 %v516, 16
      %v633 = vor.u32 %v630, %v631
      %v634 = vsel %vm555, %v626, %v633
      %v635 = vrot.slane %v630, 4
      %v637 = vshrl.u32 %v517, 16
      %v639 = vrot.slane %v637, 7
      %v640 = vshll.u32 %v517, 16
      %v642 = vor.u32 %v639, %v640
      %v643 = vsel %vm555, %v635, %v642
      %v645 = vshrl.u32 %v518, 16
      %v647 = vrot.slane %v645, 7
      %v648 = vrot.slane %v647, 4
      %v650 = vshrl.u32 %v519, 16
      %v652 = vrot.slane %v650, 7
      %v653 = vshll.u32 %v519, 16
      %v655 = vor.u32 %v652, %v653
      %v656 = vsel %vm555, %v648, %v655
      %v657 = vrot.slane %v652, 4
      %v659 = vshrl.u32 %v520, 16
      %v661 = vrot.slane %v659, 7
      %v662 = vshll.u32 %v520, 16
      %v664 = vor.u32 %v661, %v662
      %v665 = vsel %vm555, %v657, %v664
      %v667 = vshrl.u32 %v521, 16
      %v669 = vrot.slane %v667, 7
      %v670 = vrot.slane %v669, 4
      %v672 = vshrl.u32 %v522, 16
      %v674 = vrot.slane %v672, 7
      %v675 = vshll.u32 %v522, 16
      %v677 = vor.u32 %v674, %v675
      %v678 = vsel %vm555, %v670, %v677
      %v679 = vrot.slane %v674, 4
      %v681 = vshrl.u32 %v523, 16
      %v683 = vrot.slane %v681, 7
      %v684 = vshll.u32 %v523, 16
      %v686 = vor.u32 %v683, %v684
      %v687 = vsel %vm555, %v679, %v686
      %v689 = vshrl.u32 %v524, 16
      %v691 = vrot.slane %v689, 7
      %v692 = vrot.slane %v691, 4
      %v694 = vshrl.u32 %v525, 16
      %v696 = vrot.slane %v694, 7
      %v697 = vshll.u32 %v525, 16
      %v699 = vor.u32 %v696, %v697
      %v700 = vsel %vm555, %v692, %v699
      %v701 = vrot.slane %v696, 4
      %v703 = vshrl.u32 %v526, 16
      %v705 = vrot.slane %v703, 7
      %v706 = vshll.u32 %v526, 16
      %v708 = vor.u32 %v705, %v706
      %v709 = vsel %vm555, %v701, %v708
      %v711 = vshrl.u32 %v527, 16
      %v713 = vrot.slane %v711, 7
      %v714 = vrot.slane %v713, 4
      %v716 = vshrl.u32 %v528, 16
      %v718 = vrot.slane %v716, 7
      %v719 = vshll.u32 %v528, 16
      %v721 = vor.u32 %v718, %v719
      %v722 = vsel %vm555, %v714, %v721
      %v723 = vrot.slane %v718, 4
      %v725 = vshrl.u32 %v529, 16
      %v727 = vrot.slane %v725, 7
      %v728 = vshll.u32 %v529, 16
      %v730 = vor.u32 %v727, %v728
      %v731 = vsel %vm555, %v723, %v730
      %v733 = vshrl.u32 %v530, 16
      %v735 = vrot.slane %v733, 7
      %v736 = vrot.slane %v735, 4
      %v738 = vshrl.u32 %v531, 16
      %v740 = vrot.slane %v738, 7
      %v741 = vshll.u32 %v531, 16
      %v743 = vor.u32 %v740, %v741
      %v744 = vsel %vm555, %v736, %v743
      %v745 = vrot.slane %v740, 4
      %v747 = vshrl.u32 %v532, 16
      %v749 = vrot.slane %v747, 7
      %v750 = vshll.u32 %v532, 16
      %v752 = vor.u32 %v749, %v750
      %v753 = vsel %vm555, %v745, %v752
      %v755 = vshrl.u32 %v533, 16
      %v757 = vrot.slane %v755, 7
      %v758 = vrot.slane %v757, 4
      %v760 = vshrl.u32 %v534, 16
      %v762 = vrot.slane %v760, 7
      %v763 = vshll.u32 %v534, 16
      %v765 = vor.u32 %v762, %v763
      %v766 = vsel %vm555, %v758, %v765
      %v767 = vrot.slane %v762, 4
      %v769 = vshrl.u32 %v535, 16
      %v771 = vrot.slane %v769, 7
      %v772 = vshll.u32 %v535, 16
      %v774 = vor.u32 %v771, %v772
      %v775 = vsel %vm555, %v767, %v774
      %v777 = vshrl.u32 %v536, 16
      %v779 = vrot.slane %v777, 7
      %v780 = vrot.slane %v779, 4
      %v782 = vshrl.u32 %v537, 16
      %v784 = vrot.slane %v782, 7
      %v785 = vshll.u32 %v537, 16
      %v787 = vor.u32 %v784, %v785
      %v788 = vsel %vm555, %v780, %v787
      %v789 = vrot.slane %v784, 4
      %v791 = vshrl.u32 %v538, 16
      %v793 = vrot.slane %v791, 7
      %v794 = vshll.u32 %v538, 16
      %v796 = vor.u32 %v793, %v794
      %v797 = vsel %vm555, %v789, %v796
      %v799 = vshrl.u32 %v539, 16
      %v801 = vrot.slane %v799, 7
      %v802 = vrot.slane %v801, 4
      %v804 = vshrl.u32 %v540, 16
      %v806 = vrot.slane %v804, 7
      %v807 = vshll.u32 %v540, 16
      %v809 = vor.u32 %v806, %v807
      %v810 = vsel %vm555, %v802, %v809
      %v811 = vrot.slane %v806, 4
      %v813 = vshrl.u32 %v541, 16
      %v815 = vrot.slane %v813, 7
      %v816 = vshll.u32 %v541, 16
      %v818 = vor.u32 %v815, %v816
      %v819 = vsel %vm555, %v811, %v818
      %v821 = vshrl.u32 %v542, 16
      %v823 = vrot.slane %v821, 7
      %v824 = vrot.slane %v823, 4
      %v826 = vshrl.u32 %v543, 16
      %v828 = vrot.slane %v826, 7
      %v829 = vshll.u32 %v543, 16
      %v831 = vor.u32 %v828, %v829
      %v832 = vsel %vm555, %v824, %v831
      %v833 = vrot.slane %v828, 4
      %v835 = vshrl.u32 %v544, 16
      %v837 = vrot.slane %v835, 7
      %v838 = vshll.u32 %v544, 16
      %v840 = vor.u32 %v837, %v838
      %v841 = vsel %vm555, %v833, %v840
      %v843 = vshrl.u32 %v545, 16
      %v845 = vrot.slane %v843, 7
      %v846 = vrot.slane %v845, 4
      %v848 = vshrl.u32 %v546, 16
      %v850 = vrot.slane %v848, 7
      %v851 = vshll.u32 %v546, 16
      %v853 = vor.u32 %v850, %v851
      %v854 = vsel %vm555, %v846, %v853
      %v855 = vrot.slane %v850, 4
      %v857 = vshrl.u32 %v547, 16
      %v859 = vrot.slane %v857, 7
      %v860 = vshll.u32 %v547, 16
      %v862 = vor.u32 %v859, %v860
      %v863 = vsel %vm555, %v855, %v862
      %v865 = vshrl.u32 %v548, 16
      %v867 = vrot.slane %v865, 7
      %v868 = vrot.slane %v867, 4
      %v870 = vshrl.u32 %v549, 16
      %v872 = vrot.slane %v870, 7
      %v873 = vshll.u32 %v549, 16
      %v875 = vor.u32 %v872, %v873
      %v876 = vsel %vm555, %v868, %v875
      %v877 = vrot.slane %v872, 4
      %v879 = vshrl.u32 %v550, 16
      %v881 = vrot.slane %v879, 7
      %v882 = vshll.u32 %v550, 16
      %v884 = vor.u32 %v881, %v882
      %v885 = vsel %vm555, %v877, %v884
      %v887 = vshrl.u32 %v551, 16
      %v889 = vrot.slane %v887, 7
      %v890 = vrot.slane %v889, 4
      %v892 = vshrl.u32 %v552, 16
      %v894 = vrot.slane %v892, 7
      %v895 = vshll.u32 %v552, 16
      %v897 = vor.u32 %v894, %v895
      %v898 = vsel %vm555, %v890, %v897
      %v899 = vrot.slane %v894, 4
      %v901 = vshrl.u32 %v553, 16
      %v903 = vrot.slane %v901, 7
      %v904 = vshll.u32 %v553, 16
      %v906 = vor.u32 %v903, %v904
      %v907 = vsel %vm555, %v899, %v906
      %v908 = vld [vmem:[%s1] sm:$0xf]
      %s909 = scalar_lea.vmem %s1, 4
      %v910 = vld [vmem:[%s909] sm:$0xf]
      %v943 = vunpack.c.l.b16 %v507
      %v944 = vunpack.c.l.b16 %v508
      %v945 = vunpack.c.l.b16 %v510
      %v946 = vunpack.c.l.b16 %v511
      %v947 = vunpack.c.l.b16 %v513
      %v948 = vunpack.c.l.b16 %v514
      %v949 = vunpack.c.l.b16 %v516
      %v950 = vunpack.c.l.b16 %v517
      %v951 = vunpack.c.l.b16 %v519
      %v952 = vunpack.c.l.b16 %v520
      %v953 = vunpack.c.l.b16 %v522
      %v954 = vunpack.c.l.b16 %v523
      %v955 = vunpack.c.l.b16 %v525
      %v956 = vunpack.c.l.b16 %v526
      %v957 = vunpack.c.l.b16 %v528
      %v958 = vunpack.c.l.b16 %v529
      %v959 = vunpack.c.l.b16 %v531
      %v960 = vunpack.c.l.b16 %v532
      %v961 = vunpack.c.l.b16 %v534
      %v962 = vunpack.c.l.b16 %v535
      %v963 = vunpack.c.l.b16 %v537
      %v964 = vunpack.c.l.b16 %v538
      %v965 = vunpack.c.l.b16 %v540
      %v966 = vunpack.c.l.b16 %v541
      %v967 = vunpack.c.l.b16 %v543
      %v968 = vunpack.c.l.b16 %v544
      %v969 = vunpack.c.l.b16 %v546
      %v970 = vunpack.c.l.b16 %v547
      %v971 = vunpack.c.l.b16 %v549
      %v972 = vunpack.c.l.b16 %v550
      %v973 = vunpack.c.l.b16 %v552
      %v974 = vunpack.c.l.b16 %v553
      %v975 = vpack.c.b16 %v944, %v943
      %v976 = vpack.c.b16 %v946, %v945
      %v977 = vpack.c.b16 %v948, %v947
      %v978 = vpack.c.b16 %v950, %v949
      %v979 = vpack.c.b16 %v952, %v951
      %v980 = vpack.c.b16 %v954, %v953
      %v981 = vpack.c.b16 %v956, %v955
      %v982 = vpack.c.b16 %v958, %v957
      %v983 = vpack.c.b16 %v960, %v959
      %v984 = vpack.c.b16 %v962, %v961
      %v985 = vpack.c.b16 %v964, %v963
      %v986 = vpack.c.b16 %v966, %v965
      %v987 = vpack.c.b16 %v968, %v967
      %v988 = vpack.c.b16 %v970, %v969
      %v989 = vpack.c.b16 %v972, %v971
      %v990 = vpack.c.b16 %v974, %v973
      %vm991 = vcmask 64512
      %v993 = vsel %vm991, %v975, 0
      %v996 = vsel %vm991, %v976, 0
      %v999 = vsel %vm991, %v977, 0
      %v1002 = vsel %vm991, %v978, 0
      %v1005 = vsel %vm991, %v979, 0
      %v1008 = vsel %vm991, %v980, 0
      %v1011 = vsel %vm991, %v981, 0
      %v1014 = vsel %vm991, %v982, 0
      %v1017 = vsel %vm991, %v983, 0
      %v1020 = vsel %vm991, %v984, 0
      %v1023 = vsel %vm991, %v985, 0
      %v1026 = vsel %vm991, %v986, 0
      %v1029 = vsel %vm991, %v987, 0
      %v1032 = vsel %vm991, %v988, 0
      %v1035 = vsel %vm991, %v989, 0
      %v1038 = vsel %vm991, %v990, 0
      %vm1040 = vcmask 1043456
      %v1042 = vsel %vm1040, %v910, 0
      %1044 = vmatprep.subr.bf16.mxu0 0
      %1045 = vmatpush1.bf16.msra.mxu0 %v1042
      %1046 = vmatprep.subr.bf16.mxu0 0
      %1047 = vmatpush1.bf16.msra.mxu0 0
      %1048 = vmatprep.subr.bf16.mxu0 0
      %1049 = vmatpush1.bf16.msra.mxu0 0
      %1050 = vmatprep.subr.bf16.mxu0 0
      %1051 = vmatpush1.bf16.msra.mxu0 0
      %1052 = vmatprep.subr.bf16.mxu0 0
      %1053 = vmatpush1.bf16.msra.mxu0 0
      %1054 = vmatprep.subr.bf16.mxu0 0
      %1055 = vmatpush1.bf16.msra.mxu0 0
      %1056 = vmatprep.subr.bf16.mxu0 0
      %1057 = vmatpush1.bf16.msra.mxu0 0
      %1058 = vmatprep.subr.bf16.mxu0 0
      %1059 = vmatpush1.bf16.msra.mxu0 0
      %1060 = vmatprep.subr.bf16.mxu0 0
      %1061 = vmatpush1.bf16.msra.mxu0 0
      %1062 = vmatprep.subr.bf16.mxu0 0
      %1063 = vmatpush1.bf16.msra.mxu0 0
      %1064 = vmatprep.subr.bf16.mxu0 0
      %1065 = vmatpush1.bf16.msra.mxu0 0
      %1066 = vmatprep.subr.bf16.mxu0 0
      %1067 = vmatpush1.bf16.msra.mxu0 0
      %1068 = vmatprep.subr.bf16.mxu0 0
      %1069 = vmatpush1.bf16.msra.mxu0 0
      %1070 = vmatprep.subr.bf16.mxu0 0
      %1071 = vmatpush1.bf16.msra.mxu0 0
      %1072 = vmatprep.subr.bf16.mxu0 0
      %1073 = vmatpush1.bf16.msra.mxu0 0
      %1074 = vmatprep.subr.bf16.mxu0 0
      %1075 = vmatpush1.bf16.msra.mxu0 0
      %1076 = vmatprep.mubr.bf16.mxu0 0
      %1077 = vmatmul.mubr.bf16.gmra.mrb[0].mxu0 %v993
      %v1078 = vpop.f32.mrb[0].mxu0
      %v1079 = vadd.f32 0.0, %v1078
      %v1080 = vpop.f32.mrb[0].mxu0
      %v1081 = vpop.f32.mrb[0].mxu0
      %v1082 = vadd.f32 0.0, %v1081
      %v1083 = vpop.f32.mrb[0].mxu0
      %1084 = vmatprep.mubr.bf16.mxu0 0
      %1085 = vmatmul.mubr.bf16.gmra.mrb[0].mxu0 %v996
      %v1086 = vpop.f32.mrb[0].mxu0
      %v1087 = vadd.f32 0.0, %v1086
      %v1088 = vpop.f32.mrb[0].mxu0
      %v1089 = vpop.f32.mrb[0].mxu0
      %v1090 = vadd.f32 0.0, %v1089
      %v1091 = vpop.f32.mrb[0].mxu0
      %1092 = vmatprep.mubr.bf16.mxu0 0
      %1093 = vmatmul.mubr.bf16.gmra.mrb[0].mxu0 %v999
      %v1094 = vpop.f32.mrb[0].mxu0
      %v1095 = vadd.f32 0.0, %v1094
      %v1096 = vpop.f32.mrb[0].mxu0
      %v1097 = vpop.f32.mrb[0].mxu0
      %v1098 = vadd.f32 0.0, %v1097
      %v1099 = vpop.f32.mrb[0].mxu0
      %1100 = vmatprep.mubr.bf16.mxu0 0
      %1101 = vmatmul.mubr.bf16.gmra.mrb[0].mxu0 %v1002
      %v1102 = vpop.f32.mrb[0].mxu0
      %v1103 = vadd.f32 0.0, %v1102
      %v1104 = vpop.f32.mrb[0].mxu0
      %v1105 = vpop.f32.mrb[0].mxu0
      %v1106 = vadd.f32 0.0, %v1105
      %v1107 = vpop.f32.mrb[0].mxu0
      %1108 = vmatprep.mubr.bf16.mxu0 0
      %1109 = vmatmul.mubr.bf16.gmra.mrb[0].mxu0 %v1005
      %v1110 = vpop.f32.mrb[0].mxu0
      %v1111 = vadd.f32 0.0, %v1110
      %v1112 = vpop.f32.mrb[0].mxu0
      %v1113 = vpop.f32.mrb[0].mxu0
      %v1114 = vadd.f32 0.0, %v1113
      %v1115 = vpop.f32.mrb[0].mxu0
      %1116 = vmatprep.mubr.bf16.mxu0 0
      %1117 = vmatmul.mubr.bf16.gmra.mrb[0].mxu0 %v1008
      %v1118 = vpop.f32.mrb[0].mxu0
      %v1119 = vadd.f32 0.0, %v1118
      %v1120 = vpop.f32.mrb[0].mxu0
      %v1121 = vpop.f32.mrb[0].mxu0
      %v1122 = vadd.f32 0.0, %v1121
      %v1123 = vpop.f32.mrb[0].mxu0
      %1124 = vmatprep.mubr.bf16.mxu0 0
      %1125 = vmatmul.mubr.bf16.gmra.mrb[0].mxu0 %v1011
      %v1126 = vpop.f32.mrb[0].mxu0
      %v1127 = vadd.f32 0.0, %v1126
      %v1128 = vpop.f32.mrb[0].mxu0
      %v1129 = vpop.f32.mrb[0].mxu0
      %v1130 = vadd.f32 0.0, %v1129
      %v1131 = vpop.f32.mrb[0].mxu0
      %1132 = vmatprep.mubr.bf16.mxu0 0
      %1133 = vmatmul.mubr.bf16.gmra.mrb[0].mxu0 %v1014
      %v1134 = vpop.f32.mrb[0].mxu0
      %v1135 = vadd.f32 0.0, %v1134
      %v1136 = vpop.f32.mrb[0].mxu0
      %v1137 = vpop.f32.mrb[0].mxu0
      %v1138 = vadd.f32 0.0, %v1137
      %v1139 = vpop.f32.mrb[0].mxu0
      %1140 = vmatprep.mubr.bf16.mxu0 0
      %1141 = vmatmul.mubr.bf16.gmra.mrb[0].mxu0 %v1017
      %v1142 = vpop.f32.mrb[0].mxu0
      %v1143 = vadd.f32 0.0, %v1142
      %v1144 = vpop.f32.mrb[0].mxu0
      %v1145 = vpop.f32.mrb[0].mxu0
      %v1146 = vadd.f32 0.0, %v1145
      %v1147 = vpop.f32.mrb[0].mxu0
      %1148 = vmatprep.mubr.bf16.mxu0 0
      %1149 = vmatmul.mubr.bf16.gmra.mrb[0].mxu0 %v1020
      %v1150 = vpop.f32.mrb[0].mxu0
      %v1151 = vadd.f32 0.0, %v1150
      %v1152 = vpop.f32.mrb[0].mxu0
      %v1153 = vpop.f32.mrb[0].mxu0
      %v1154 = vadd.f32 0.0, %v1153
      %v1155 = vpop.f32.mrb[0].mxu0
      %1156 = vmatprep.mubr.bf16.mxu0 0
      %1157 = vmatmul.mubr.bf16.gmra.mrb[0].mxu0 %v1023
      %v1158 = vpop.f32.mrb[0].mxu0
      %v1159 = vadd.f32 0.0, %v1158
      %v1160 = vpop.f32.mrb[0].mxu0
      %v1161 = vpop.f32.mrb[0].mxu0
      %v1162 = vadd.f32 0.0, %v1161
      %v1163 = vpop.f32.mrb[0].mxu0
      %1164 = vmatprep.mubr.bf16.mxu0 0
      %1165 = vmatmul.mubr.bf16.gmra.mrb[0].mxu0 %v1026
      %v1166 = vpop.f32.mrb[0].mxu0
      %v1167 = vadd.f32 0.0, %v1166
      %v1168 = vpop.f32.mrb[0].mxu0
      %v1169 = vpop.f32.mrb[0].mxu0
      %v1170 = vadd.f32 0.0, %v1169
      %v1171 = vpop.f32.mrb[0].mxu0
      %1172 = vmatprep.mubr.bf16.mxu0 0
      %1173 = vmatmul.mubr.bf16.gmra.mrb[0].mxu0 %v1029
      %v1174 = vpop.f32.mrb[0].mxu0
      %v1175 = vadd.f32 0.0, %v1174
      %v1176 = vpop.f32.mrb[0].mxu0
      %v1177 = vpop.f32.mrb[0].mxu0
      %v1178 = vadd.f32 0.0, %v1177
      %v1179 = vpop.f32.mrb[0].mxu0
      %1180 = vmatprep.mubr.bf16.mxu0 0
      %1181 = vmatmul.mubr.bf16.gmra.mrb[0].mxu0 %v1032
      %v1182 = vpop.f32.mrb[0].mxu0
      %v1183 = vadd.f32 0.0, %v1182
      %v1184 = vpop.f32.mrb[0].mxu0
      %v1185 = vpop.f32.mrb[0].mxu0
      %v1186 = vadd.f32 0.0, %v1185
      %v1187 = vpop.f32.mrb[0].mxu0
      %1188 = vmatprep.mubr.bf16.mxu0 0
      %1189 = vmatmul.mubr.bf16.gmra.mrb[0].mxu0 %v1035
      %v1190 = vpop.f32.mrb[0].mxu0
      %v1191 = vadd.f32 0.0, %v1190
      %v1192 = vpop.f32.mrb[0].mxu0
      %v1193 = vpop.f32.mrb[0].mxu0
      %v1194 = vadd.f32 0.0, %v1193
      %v1195 = vpop.f32.mrb[0].mxu0
      %1196 = vmatprep.mubr.bf16.mxu0 0
      %1197 = vmatmul.mubr.bf16.gmra.mrb[0].mxu0 %v1038
      %v1198 = vpop.f32.mrb[0].mxu0
      %v1199 = vadd.f32 0.0, %v1198
      %v1200 = vpop.f32.mrb[0].mxu0
      %v1201 = vpop.f32.mrb[0].mxu0
      %v1202 = vadd.f32 0.0, %v1201
      %v1203 = vpop.f32.mrb[0].mxu0
      %1204 = vdwg.mxu0
      %v1205 = vunpack.c.l.b16 %v568
      %v1206 = vunpack.c.l.b16 %v577
      %v1207 = vunpack.c.l.b16 %v590
      %v1208 = vunpack.c.l.b16 %v599
      %v1209 = vunpack.c.l.b16 %v612
      %v1210 = vunpack.c.l.b16 %v621
      %v1211 = vunpack.c.l.b16 %v634
      %v1212 = vunpack.c.l.b16 %v643
      %v1213 = vunpack.c.l.b16 %v656
      %v1214 = vunpack.c.l.b16 %v665
      %v1215 = vunpack.c.l.b16 %v678
      %v1216 = vunpack.c.l.b16 %v687
      %v1217 = vunpack.c.l.b16 %v700
      %v1218 = vunpack.c.l.b16 %v709
      %v1219 = vunpack.c.l.b16 %v722
      %v1220 = vunpack.c.l.b16 %v731
      %v1221 = vunpack.c.l.b16 %v744
      %v1222 = vunpack.c.l.b16 %v753
      %v1223 = vunpack.c.l.b16 %v766
      %v1224 = vunpack.c.l.b16 %v775
      %v1225 = vunpack.c.l.b16 %v788
      %v1226 = vunpack.c.l.b16 %v797
      %v1227 = vunpack.c.l.b16 %v810
      %v1228 = vunpack.c.l.b16 %v819
      %v1229 = vunpack.c.l.b16 %v832
      %v1230 = vunpack.c.l.b16 %v841
      %v1231 = vunpack.c.l.b16 %v854
      %v1232 = vunpack.c.l.b16 %v863
      %v1233 = vunpack.c.l.b16 %v876
      %v1234 = vunpack.c.l.b16 %v885
      %v1235 = vunpack.c.l.b16 %v898
      %v1236 = vunpack.c.l.b16 %v907
      %v1237 = vpack.c.b16 %v1206, %v1205
      %v1238 = vpack.c.b16 %v1208, %v1207
      %v1239 = vpack.c.b16 %v1210, %v1209
      %v1240 = vpack.c.b16 %v1212, %v1211
      %v1241 = vpack.c.b16 %v1214, %v1213
      %v1242 = vpack.c.b16 %v1216, %v1215
      %v1243 = vpack.c.b16 %v1218, %v1217
      %v1244 = vpack.c.b16 %v1220, %v1219
      %v1245 = vpack.c.b16 %v1222, %v1221
      %v1246 = vpack.c.b16 %v1224, %v1223
      %v1247 = vpack.c.b16 %v1226, %v1225
      %v1248 = vpack.c.b16 %v1228, %v1227
      %v1249 = vpack.c.b16 %v1230, %v1229
      %v1250 = vpack.c.b16 %v1232, %v1231
      %v1251 = vpack.c.b16 %v1234, %v1233
      %v1252 = vpack.c.b16 %v1236, %v1235
      %v1254 = vsel %vm991, %v1237, 0
      %v1257 = vsel %vm991, %v1238, 0
      %v1260 = vsel %vm991, %v1239, 0
      %v1263 = vsel %vm991, %v1240, 0
      %v1266 = vsel %vm991, %v1241, 0
      %v1269 = vsel %vm991, %v1242, 0
      %v1272 = vsel %vm991, %v1243, 0
      %v1275 = vsel %vm991, %v1244, 0
      %v1278 = vsel %vm991, %v1245, 0
      %v1281 = vsel %vm991, %v1246, 0
      %v1284 = vsel %vm991, %v1247, 0
      %v1287 = vsel %vm991, %v1248, 0
      %v1290 = vsel %vm991, %v1249, 0
      %v1293 = vsel %vm991, %v1250, 0
      %v1296 = vsel %vm991, %v1251, 0
      %v1299 = vsel %vm991, %v1252, 0
      %v1302 = vsel %vm1040, %v908, 0
      %1304 = vmatprep.subr.bf16.mxu0 0
      %1305 = vmatpush1.bf16.msra.mxu0 %v1302
      %1306 = vmatprep.subr.bf16.mxu0 0
      %1307 = vmatpush1.bf16.msra.mxu0 0
      %1308 = vmatprep.subr.bf16.mxu0 0
      %1309 = vmatpush1.bf16.msra.mxu0 0
      %1310 = vmatprep.subr.bf16.mxu0 0
      %1311 = vmatpush1.bf16.msra.mxu0 0
      %1312 = vmatprep.subr.bf16.mxu0 0
      %1313 = vmatpush1.bf16.msra.mxu0 0
      %1314 = vmatprep.subr.bf16.mxu0 0
      %1315 = vmatpush1.bf16.msra.mxu0 0
      %1316 = vmatprep.subr.bf16.mxu0 0
      %1317 = vmatpush1.bf16.msra.mxu0 0
      %1318 = vmatprep.subr.bf16.mxu0 0
      %1319 = vmatpush1.bf16.msra.mxu0 0
      %1320 = vmatprep.subr.bf16.mxu0 0
      %1321 = vmatpush1.bf16.msra.mxu0 0
      %1322 = vmatprep.subr.bf16.mxu0 0
      %1323 = vmatpush1.bf16.msra.mxu0 0
      %1324 = vmatprep.subr.bf16.mxu0 0
      %1325 = vmatpush1.bf16.msra.mxu0 0
      %1326 = vmatprep.subr.bf16.mxu0 0
      %1327 = vmatpush1.bf16.msra.mxu0 0
      %1328 = vmatprep.subr.bf16.mxu0 0
      %1329 = vmatpush1.bf16.msra.mxu0 0
      %1330 = vmatprep.subr.bf16.mxu0 0
      %1331 = vmatpush1.bf16.msra.mxu0 0
      %1332 = vmatprep.subr.bf16.mxu0 0
      %1333 = vmatpush1.bf16.msra.mxu0 0
      %1334 = vmatprep.subr.bf16.mxu0 0
      %1335 = vmatpush1.bf16.msra.mxu0 0
      %1336 = vmatprep.mubr.bf16.mxu0 0
      %1337 = vmatmul.mubr.bf16.gmra.mrb[0].mxu0 %v1254
      %v1338 = vpop.f32.mrb[0].mxu0
      %v1339 = vadd.f32 %v1079, %v1338
      %v1340 = vpop.f32.mrb[0].mxu0
      %v1341 = vpop.f32.mrb[0].mxu0
      %v1342 = vadd.f32 %v1082, %v1341
      %v1343 = vpop.f32.mrb[0].mxu0
      %1344 = vmatprep.mubr.bf16.mxu0 0
      %1345 = vmatmul.mubr.bf16.gmra.mrb[0].mxu0 %v1257
      %v1346 = vpop.f32.mrb[0].mxu0
      %v1347 = vadd.f32 %v1087, %v1346
      %v1348 = vpop.f32.mrb[0].mxu0
      %v1349 = vpop.f32.mrb[0].mxu0
      %v1350 = vadd.f32 %v1090, %v1349
      %v1351 = vpop.f32.mrb[0].mxu0
      %1352 = vmatprep.mubr.bf16.mxu0 0
      %1353 = vmatmul.mubr.bf16.gmra.mrb[0].mxu0 %v1260
      %v1354 = vpop.f32.mrb[0].mxu0
      %v1355 = vadd.f32 %v1095, %v1354
      %v1356 = vpop.f32.mrb[0].mxu0
      %v1357 = vpop.f32.mrb[0].mxu0
      %v1358 = vadd.f32 %v1098, %v1357
      %v1359 = vpop.f32.mrb[0].mxu0
      %1360 = vmatprep.mubr.bf16.mxu0 0
      %1361 = vmatmul.mubr.bf16.gmra.mrb[0].mxu0 %v1263
      %v1362 = vpop.f32.mrb[0].mxu0
      %v1363 = vadd.f32 %v1103, %v1362
      %v1364 = vpop.f32.mrb[0].mxu0
      %v1365 = vpop.f32.mrb[0].mxu0
      %v1366 = vadd.f32 %v1106, %v1365
      %v1367 = vpop.f32.mrb[0].mxu0
      %1368 = vmatprep.mubr.bf16.mxu0 0
      %1369 = vmatmul.mubr.bf16.gmra.mrb[0].mxu0 %v1266
      %v1370 = vpop.f32.mrb[0].mxu0
      %v1371 = vadd.f32 %v1111, %v1370
      %v1372 = vpop.f32.mrb[0].mxu0
      %v1373 = vpop.f32.mrb[0].mxu0
      %v1374 = vadd.f32 %v1114, %v1373
      %v1375 = vpop.f32.mrb[0].mxu0
      %1376 = vmatprep.mubr.bf16.mxu0 0
      %1377 = vmatmul.mubr.bf16.gmra.mrb[0].mxu0 %v1269
      %v1378 = vpop.f32.mrb[0].mxu0
      %v1379 = vadd.f32 %v1119, %v1378
      %v1380 = vpop.f32.mrb[0].mxu0
      %v1381 = vpop.f32.mrb[0].mxu0
      %v1382 = vadd.f32 %v1122, %v1381
      %v1383 = vpop.f32.mrb[0].mxu0
      %1384 = vmatprep.mubr.bf16.mxu0 0
      %1385 = vmatmul.mubr.bf16.gmra.mrb[0].mxu0 %v1272
      %v1386 = vpop.f32.mrb[0].mxu0
      %v1387 = vadd.f32 %v1127, %v1386
      %v1388 = vpop.f32.mrb[0].mxu0
      %v1389 = vpop.f32.mrb[0].mxu0
      %v1390 = vadd.f32 %v1130, %v1389
      %v1391 = vpop.f32.mrb[0].mxu0
      %1392 = vmatprep.mubr.bf16.mxu0 0
      %1393 = vmatmul.mubr.bf16.gmra.mrb[0].mxu0 %v1275
      %v1394 = vpop.f32.mrb[0].mxu0
      %v1395 = vadd.f32 %v1135, %v1394
      %v1396 = vpop.f32.mrb[0].mxu0
      %v1397 = vpop.f32.mrb[0].mxu0
      %v1398 = vadd.f32 %v1138, %v1397
      %v1399 = vpop.f32.mrb[0].mxu0
      %1400 = vmatprep.mubr.bf16.mxu0 0
      %1401 = vmatmul.mubr.bf16.gmra.mrb[0].mxu0 %v1278
      %v1402 = vpop.f32.mrb[0].mxu0
      %v1403 = vadd.f32 %v1143, %v1402
      %v1404 = vpop.f32.mrb[0].mxu0
      %v1405 = vpop.f32.mrb[0].mxu0
      %v1406 = vadd.f32 %v1146, %v1405
      %v1407 = vpop.f32.mrb[0].mxu0
      %1408 = vmatprep.mubr.bf16.mxu0 0
      %1409 = vmatmul.mubr.bf16.gmra.mrb[0].mxu0 %v1281
      %v1410 = vpop.f32.mrb[0].mxu0
      %v1411 = vadd.f32 %v1151, %v1410
      %v1412 = vpop.f32.mrb[0].mxu0
      %v1413 = vpop.f32.mrb[0].mxu0
      %v1414 = vadd.f32 %v1154, %v1413
      %v1415 = vpop.f32.mrb[0].mxu0
      %1416 = vmatprep.mubr.bf16.mxu0 0
      %1417 = vmatmul.mubr.bf16.gmra.mrb[0].mxu0 %v1284
      %v1418 = vpop.f32.mrb[0].mxu0
      %v1419 = vadd.f32 %v1159, %v1418
      %v1420 = vpop.f32.mrb[0].mxu0
      %v1421 = vpop.f32.mrb[0].mxu0
      %v1422 = vadd.f32 %v1162, %v1421
      %v1423 = vpop.f32.mrb[0].mxu0
      %1424 = vmatprep.mubr.bf16.mxu0 0
      %1425 = vmatmul.mubr.bf16.gmra.mrb[0].mxu0 %v1287
      %v1426 = vpop.f32.mrb[0].mxu0
      %v1427 = vadd.f32 %v1167, %v1426
      %v1428 = vpop.f32.mrb[0].mxu0
      %v1429 = vpop.f32.mrb[0].mxu0
      %v1430 = vadd.f32 %v1170, %v1429
      %v1431 = vpop.f32.mrb[0].mxu0
      %1432 = vmatprep.mubr.bf16.mxu0 0
      %1433 = vmatmul.mubr.bf16.gmra.mrb[0].mxu0 %v1290
      %v1434 = vpop.f32.mrb[0].mxu0
      %v1435 = vadd.f32 %v1175, %v1434
      %v1436 = vpop.f32.mrb[0].mxu0
      %v1437 = vpop.f32.mrb[0].mxu0
      %v1438 = vadd.f32 %v1178, %v1437
      %v1439 = vpop.f32.mrb[0].mxu0
      %1440 = vmatprep.mubr.bf16.mxu0 0
      %1441 = vmatmul.mubr.bf16.gmra.mrb[0].mxu0 %v1293
      %v1442 = vpop.f32.mrb[0].mxu0
      %v1443 = vadd.f32 %v1183, %v1442
      %v1444 = vpop.f32.mrb[0].mxu0
      %v1445 = vpop.f32.mrb[0].mxu0
      %v1446 = vadd.f32 %v1186, %v1445
      %v1447 = vpop.f32.mrb[0].mxu0
      %1448 = vmatprep.mubr.bf16.mxu0 0
      %1449 = vmatmul.mubr.bf16.gmra.mrb[0].mxu0 %v1296
      %v1450 = vpop.f32.mrb[0].mxu0
      %v1451 = vadd.f32 %v1191, %v1450
      %v1452 = vpop.f32.mrb[0].mxu0
      %v1453 = vpop.f32.mrb[0].mxu0
      %v1454 = vadd.f32 %v1194, %v1453
      %v1455 = vpop.f32.mrb[0].mxu0
      %1456 = vmatprep.mubr.bf16.mxu0 0
      %1457 = vmatmul.mubr.bf16.gmra.mrb[0].mxu0 %v1299
      %v1458 = vpop.f32.mrb[0].mxu0
      %v1459 = vadd.f32 %v1199, %v1458
      %v1460 = vpop.f32.mrb[0].mxu0
      %v1461 = vpop.f32.mrb[0].mxu0
      %v1462 = vadd.f32 %v1202, %v1461
      %v1463 = vpop.f32.mrb[0].mxu0
      %1464 = vdwg.mxu0
      %v1465 = vld [vmem:[#allocation2 + $0x8] sm:$0xf]
      %v1466 = vld [vmem:[#allocation2 + $0xc] sm:$0xf]
      %v1467 = vld [vmem:[#allocation2 + $0x10] sm:$0x1]
      %v1468 = vld [vmem:[#allocation2 + $0x1c] sm:$0xf]
      %v1469 = vld [vmem:[#allocation2 + $0x20] sm:$0xf]
      %v1470 = vld [vmem:[#allocation2 + $0x24] sm:$0x1]
      %v1471 = vld [vmem:[#allocation2 + $0x30] sm:$0xf]
      %v1472 = vld [vmem:[#allocation2 + $0x34] sm:$0xf]
      %v1473 = vld [vmem:[#allocation2 + $0x38] sm:$0x1]
      %v1474 = vld [vmem:[#allocation2 + $0x44] sm:$0xf]
      %v1475 = vld [vmem:[#allocation2 + $0x48] sm:$0xf]
      %v1476 = vld [vmem:[#allocation2 + $0x4c] sm:$0x1]
      %v1477 = vld [vmem:[#allocation2 + $0x58] sm:$0xf]
      %v1478 = vld [vmem:[#allocation2 + $0x5c] sm:$0xf]
      %v1479 = vld [vmem:[#allocation2 + $0x60] sm:$0x1]
      %v1480 = vld [vmem:[#allocation2 + $0x6c] sm:$0xf]
      %v1481 = vld [vmem:[#allocation2 + $0x70] sm:$0xf]
      %v1482 = vld [vmem:[#allocation2 + $0x74] sm:$0x1]
      %v1483 = vld [vmem:[#allocation2 + $0x80] sm:$0xf]
      %v1484 = vld [vmem:[#allocation2 + $0x84] sm:$0xf]
      %v1485 = vld [vmem:[#allocation2 + $0x88] sm:$0x1]
      %v1486 = vld [vmem:[#allocation2 + $0x94] sm:$0xf]
      %v1487 = vld [vmem:[#allocation2 + $0x98] sm:$0xf]
      %v1488 = vld [vmem:[#allocation2 + $0x9c] sm:$0x1]
      %v1489 = vld [vmem:[#allocation2 + $0xa8] sm:$0xf]
      %v1490 = vld [vmem:[#allocation2 + $0xac] sm:$0xf]
      %v1491 = vld [vmem:[#allocation2 + $0xb0] sm:$0x1]
      %v1492 = vld [vmem:[#allocation2 + $0xbc] sm:$0xf]
      %v1493 = vld [vmem:[#allocation2 + $0xc0] sm:$0xf]
      %v1494 = vld [vmem:[#allocation2 + $0xc4] sm:$0x1]
      %v1495 = vld [vmem:[#allocation2 + $0xd0] sm:$0xf]
      %v1496 = vld [vmem:[#allocation2 + $0xd4] sm:$0xf]
      %v1497 = vld [vmem:[#allocation2 + $0xd8] sm:$0x1]
      %v1498 = vld [vmem:[#allocation2 + $0xe4] sm:$0xf]
      %v1499 = vld [vmem:[#allocation2 + $0xe8] sm:$0xf]
      %v1500 = vld [vmem:[#allocation2 + $0xec] sm:$0x1]
      %v1501 = vld [vmem:[#allocation2 + $0xf8] sm:$0xf]
      %v1502 = vld [vmem:[#allocation2 + $0xfc] sm:$0xf]
      %v1503 = vld [vmem:[#allocation2 + $0x100] sm:$0x1]
      %v1504 = vld [vmem:[#allocation2 + $0x10c] sm:$0xf]
      %v1505 = vld [vmem:[#allocation2 + $0x110] sm:$0xf]
      %v1506 = vld [vmem:[#allocation2 + $0x114] sm:$0x1]
      %v1507 = vld [vmem:[#allocation2 + $0x120] sm:$0xf]
      %v1508 = vld [vmem:[#allocation2 + $0x124] sm:$0xf]
      %v1509 = vld [vmem:[#allocation2 + $0x128] sm:$0x1]
      %v1510 = vld [vmem:[#allocation2 + $0x134] sm:$0xf]
      %v1511 = vld [vmem:[#allocation2 + $0x138] sm:$0xf]
      %v1512 = vld [vmem:[#allocation2 + $0x13c] sm:$0x1]
      %vm1513 = vsmask.f32 3328
      %vm1514 = vsmask.f32 7440
      %vm1515 = vmor %vm1513, %vm1514
      %v1517 = vshrl.u32 %v1465, 16
      %v1519 = vrot.slane %v1517, 4
      %v1520 = vshll.u32 %v1465, 16
      %v1522 = vrot.slane %v1520, 5
      %v1523 = vor.u32 %v1519, %v1522
      %v1524 = vrot.slane %v1523, 4
      %v1526 = vshll.u32 %v1466, 16
      %v1528 = vrot.slane %v1526, 5
      %v1529 = vsel %vm1515, %v1524, %v1528
      %v1530 = vshrl.u32 %v1466, 16
      %v1532 = vrot.slane %v1530, 4
      %v1533 = vor.u32 %v1532, %v1528
      %v1534 = vrot.slane %v1533, 4
      %v1536 = vshll.u32 %v1467, 16
      %v1538 = vrot.slane %v1536, 5
      %v1539 = vsel %vm1515, %v1534, %v1538
      %v1541 = vshrl.u32 %v1468, 16
      %v1543 = vrot.slane %v1541, 4
      %v1544 = vshll.u32 %v1468, 16
      %v1546 = vrot.slane %v1544, 5
      %v1547 = vor.u32 %v1543, %v1546
      %v1548 = vrot.slane %v1547, 4
      %v1550 = vshll.u32 %v1469, 16
      %v1552 = vrot.slane %v1550, 5
      %v1553 = vsel %vm1515, %v1548, %v1552
      %v1554 = vshrl.u32 %v1469, 16
      %v1556 = vrot.slane %v1554, 4
      %v1557 = vor.u32 %v1556, %v1552
      %v1558 = vrot.slane %v1557, 4
      %v1560 = vshll.u32 %v1470, 16
      %v1562 = vrot.slane %v1560, 5
      %v1563 = vsel %vm1515, %v1558, %v1562
      %v1565 = vshrl.u32 %v1471, 16
      %v1567 = vrot.slane %v1565, 4
      %v1568 = vshll.u32 %v1471, 16
      %v1570 = vrot.slane %v1568, 5
      %v1571 = vor.u32 %v1567, %v1570
      %v1572 = vrot.slane %v1571, 4
      %v1574 = vshll.u32 %v1472, 16
      %v1576 = vrot.slane %v1574, 5
      %v1577 = vsel %vm1515, %v1572, %v1576
      %v1578 = vshrl.u32 %v1472, 16
      %v1580 = vrot.slane %v1578, 4
      %v1581 = vor.u32 %v1580, %v1576
      %v1582 = vrot.slane %v1581, 4
      %v1584 = vshll.u32 %v1473, 16
      %v1586 = vrot.slane %v1584, 5
      %v1587 = vsel %vm1515, %v1582, %v1586
      %v1589 = vshrl.u32 %v1474, 16
      %v1591 = vrot.slane %v1589, 4
      %v1592 = vshll.u32 %v1474, 16
      %v1594 = vrot.slane %v1592, 5
      %v1595 = vor.u32 %v1591, %v1594
      %v1596 = vrot.slane %v1595, 4
      %v1598 = vshll.u32 %v1475, 16
      %v1600 = vrot.slane %v1598, 5
      %v1601 = vsel %vm1515, %v1596, %v1600
      %v1602 = vshrl.u32 %v1475, 16
      %v1604 = vrot.slane %v1602, 4
      %v1605 = vor.u32 %v1604, %v1600
      %v1606 = vrot.slane %v1605, 4
      %v1608 = vshll.u32 %v1476, 16
      %v1610 = vrot.slane %v1608, 5
      %v1611 = vsel %vm1515, %v1606, %v1610
      %v1613 = vshrl.u32 %v1477, 16
      %v1615 = vrot.slane %v1613, 4
      %v1616 = vshll.u32 %v1477, 16
      %v1618 = vrot.slane %v1616, 5
      %v1619 = vor.u32 %v1615, %v1618
      %v1620 = vrot.slane %v1619, 4
      %v1622 = vshll.u32 %v1478, 16
      %v1624 = vrot.slane %v1622, 5
      %v1625 = vsel %vm1515, %v1620, %v1624
      %v1626 = vshrl.u32 %v1478, 16
      %v1628 = vrot.slane %v1626, 4
      %v1629 = vor.u32 %v1628, %v1624
      %v1630 = vrot.slane %v1629, 4
      %v1632 = vshll.u32 %v1479, 16
      %v1634 = vrot.slane %v1632, 5
      %v1635 = vsel %vm1515, %v1630, %v1634
      %v1637 = vshrl.u32 %v1480, 16
      %v1639 = vrot.slane %v1637, 4
      %v1640 = vshll.u32 %v1480, 16
      %v1642 = vrot.slane %v1640, 5
      %v1643 = vor.u32 %v1639, %v1642
      %v1644 = vrot.slane %v1643, 4
      %v1646 = vshll.u32 %v1481, 16
      %v1648 = vrot.slane %v1646, 5
      %v1649 = vsel %vm1515, %v1644, %v1648
      %v1650 = vshrl.u32 %v1481, 16
      %v1652 = vrot.slane %v1650, 4
      %v1653 = vor.u32 %v1652, %v1648
      %v1654 = vrot.slane %v1653, 4
      %v1656 = vshll.u32 %v1482, 16
      %v1658 = vrot.slane %v1656, 5
      %v1659 = vsel %vm1515, %v1654, %v1658
      %v1661 = vshrl.u32 %v1483, 16
      %v1663 = vrot.slane %v1661, 4
      %v1664 = vshll.u32 %v1483, 16
      %v1666 = vrot.slane %v1664, 5
      %v1667 = vor.u32 %v1663, %v1666
      %v1668 = vrot.slane %v1667, 4
      %v1670 = vshll.u32 %v1484, 16
      %v1672 = vrot.slane %v1670, 5
      %v1673 = vsel %vm1515, %v1668, %v1672
      %v1674 = vshrl.u32 %v1484, 16
      %v1676 = vrot.slane %v1674, 4
      %v1677 = vor.u32 %v1676, %v1672
      %v1678 = vrot.slane %v1677, 4
      %v1680 = vshll.u32 %v1485, 16
      %v1682 = vrot.slane %v1680, 5
      %v1683 = vsel %vm1515, %v1678, %v1682
      %v1685 = vshrl.u32 %v1486, 16
      %v1687 = vrot.slane %v1685, 4
      %v1688 = vshll.u32 %v1486, 16
      %v1690 = vrot.slane %v1688, 5
      %v1691 = vor.u32 %v1687, %v1690
      %v1692 = vrot.slane %v1691, 4
      %v1694 = vshll.u32 %v1487, 16
      %v1696 = vrot.slane %v1694, 5
      %v1697 = vsel %vm1515, %v1692, %v1696
      %v1698 = vshrl.u32 %v1487, 16
      %v1700 = vrot.slane %v1698, 4
      %v1701 = vor.u32 %v1700, %v1696
      %v1702 = vrot.slane %v1701, 4
      %v1704 = vshll.u32 %v1488, 16
      %v1706 = vrot.slane %v1704, 5
      %v1707 = vsel %vm1515, %v1702, %v1706
      %v1709 = vshrl.u32 %v1489, 16
      %v1711 = vrot.slane %v1709, 4
      %v1712 = vshll.u32 %v1489, 16
      %v1714 = vrot.slane %v1712, 5
      %v1715 = vor.u32 %v1711, %v1714
      %v1716 = vrot.slane %v1715, 4
      %v1718 = vshll.u32 %v1490, 16
      %v1720 = vrot.slane %v1718, 5
      %v1721 = vsel %vm1515, %v1716, %v1720
      %v1722 = vshrl.u32 %v1490, 16
      %v1724 = vrot.slane %v1722, 4
      %v1725 = vor.u32 %v1724, %v1720
      %v1726 = vrot.slane %v1725, 4
      %v1728 = vshll.u32 %v1491, 16
      %v1730 = vrot.slane %v1728, 5
      %v1731 = vsel %vm1515, %v1726, %v1730
      %v1733 = vshrl.u32 %v1492, 16
      %v1735 = vrot.slane %v1733, 4
      %v1736 = vshll.u32 %v1492, 16
      %v1738 = vrot.slane %v1736, 5
      %v1739 = vor.u32 %v1735, %v1738
      %v1740 = vrot.slane %v1739, 4
      %v1742 = vshll.u32 %v1493, 16
      %v1744 = vrot.slane %v1742, 5
      %v1745 = vsel %vm1515, %v1740, %v1744
      %v1746 = vshrl.u32 %v1493, 16
      %v1748 = vrot.slane %v1746, 4
      %v1749 = vor.u32 %v1748, %v1744
      %v1750 = vrot.slane %v1749, 4
      %v1752 = vshll.u32 %v1494, 16
      %v1754 = vrot.slane %v1752, 5
      %v1755 = vsel %vm1515, %v1750, %v1754
      %v1757 = vshrl.u32 %v1495, 16
      %v1759 = vrot.slane %v1757, 4
      %v1760 = vshll.u32 %v1495, 16
      %v1762 = vrot.slane %v1760, 5
      %v1763 = vor.u32 %v1759, %v1762
      %v1764 = vrot.slane %v1763, 4
      %v1766 = vshll.u32 %v1496, 16
      %v1768 = vrot.slane %v1766, 5
      %v1769 = vsel %vm1515, %v1764, %v1768
      %v1770 = vshrl.u32 %v1496, 16
      %v1772 = vrot.slane %v1770, 4
      %v1773 = vor.u32 %v1772, %v1768
      %v1774 = vrot.slane %v1773, 4
      %v1776 = vshll.u32 %v1497, 16
      %v1778 = vrot.slane %v1776, 5
      %v1779 = vsel %vm1515, %v1774, %v1778
      %v1781 = vshrl.u32 %v1498, 16
      %v1783 = vrot.slane %v1781, 4
      %v1784 = vshll.u32 %v1498, 16
      %v1786 = vrot.slane %v1784, 5
      %v1787 = vor.u32 %v1783, %v1786
      %v1788 = vrot.slane %v1787, 4
      %v1790 = vshll.u32 %v1499, 16
      %v1792 = vrot.slane %v1790, 5
      %v1793 = vsel %vm1515, %v1788, %v1792
      %v1794 = vshrl.u32 %v1499, 16
      %v1796 = vrot.slane %v1794, 4
      %v1797 = vor.u32 %v1796, %v1792
      %v1798 = vrot.slane %v1797, 4
      %v1800 = vshll.u32 %v1500, 16
      %v1802 = vrot.slane %v1800, 5
      %v1803 = vsel %vm1515, %v1798, %v1802
      %v1805 = vshrl.u32 %v1501, 16
      %v1807 = vrot.slane %v1805, 4
      %v1808 = vshll.u32 %v1501, 16
      %v1810 = vrot.slane %v1808, 5
      %v1811 = vor.u32 %v1807, %v1810
      %v1812 = vrot.slane %v1811, 4
      %v1814 = vshll.u32 %v1502, 16
      %v1816 = vrot.slane %v1814, 5
      %v1817 = vsel %vm1515, %v1812, %v1816
      %v1818 = vshrl.u32 %v1502, 16
      %v1820 = vrot.slane %v1818, 4
      %v1821 = vor.u32 %v1820, %v1816
      %v1822 = vrot.slane %v1821, 4
      %v1824 = vshll.u32 %v1503, 16
      %v1826 = vrot.slane %v1824, 5
      %v1827 = vsel %vm1515, %v1822, %v1826
      %v1829 = vshrl.u32 %v1504, 16
      %v1831 = vrot.slane %v1829, 4
      %v1832 = vshll.u32 %v1504, 16
      %v1834 = vrot.slane %v1832, 5
      %v1835 = vor.u32 %v1831, %v1834
      %v1836 = vrot.slane %v1835, 4
      %v1838 = vshll.u32 %v1505, 16
      %v1840 = vrot.slane %v1838, 5
      %v1841 = vsel %vm1515, %v1836, %v1840
      %v1842 = vshrl.u32 %v1505, 16
      %v1844 = vrot.slane %v1842, 4
      %v1845 = vor.u32 %v1844, %v1840
      %v1846 = vrot.slane %v1845, 4
      %v1848 = vshll.u32 %v1506, 16
      %v1850 = vrot.slane %v1848, 5
      %v1851 = vsel %vm1515, %v1846, %v1850
      %v1853 = vshrl.u32 %v1507, 16
      %v1855 = vrot.slane %v1853, 4
      %v1856 = vshll.u32 %v1507, 16
      %v1858 = vrot.slane %v1856, 5
      %v1859 = vor.u32 %v1855, %v1858
      %v1860 = vrot.slane %v1859, 4
      %v1862 = vshll.u32 %v1508, 16
      %v1864 = vrot.slane %v1862, 5
      %v1865 = vsel %vm1515, %v1860, %v1864
      %v1866 = vshrl.u32 %v1508, 16
      %v1868 = vrot.slane %v1866, 4
      %v1869 = vor.u32 %v1868, %v1864
      %v1870 = vrot.slane %v1869, 4
      %v1872 = vshll.u32 %v1509, 16
      %v1874 = vrot.slane %v1872, 5
      %v1875 = vsel %vm1515, %v1870, %v1874
      %v1877 = vshrl.u32 %v1510, 16
      %v1879 = vrot.slane %v1877, 4
      %v1880 = vshll.u32 %v1510, 16
      %v1882 = vrot.slane %v1880, 5
      %v1883 = vor.u32 %v1879, %v1882
      %v1884 = vrot.slane %v1883, 4
      %v1886 = vshll.u32 %v1511, 16
      %v1888 = vrot.slane %v1886, 5
      %v1889 = vsel %vm1515, %v1884, %v1888
      %v1890 = vshrl.u32 %v1511, 16
      %v1892 = vrot.slane %v1890, 4
      %v1893 = vor.u32 %v1892, %v1888
      %v1894 = vrot.slane %v1893, 4
      %v1896 = vshll.u32 %v1512, 16
      %v1898 = vrot.slane %v1896, 5
      %v1899 = vsel %vm1515, %v1894, %v1898
      %s1900 = scalar_lea.vmem %s1, 8
      %v1901 = vld [vmem:[%s1900] sm:$0xf]
      %v1902 = vunpack.c.l.b16 %v1529
      %v1903 = vunpack.c.l.b16 %v1539
      %v1904 = vunpack.c.l.b16 %v1553
      %v1905 = vunpack.c.l.b16 %v1563
      %v1906 = vunpack.c.l.b16 %v1577
      %v1907 = vunpack.c.l.b16 %v1587
      %v1908 = vunpack.c.l.b16 %v1601
      %v1909 = vunpack.c.l.b16 %v1611
      %v1910 = vunpack.c.l.b16 %v1625
      %v1911 = vunpack.c.l.b16 %v1635
      %v1912 = vunpack.c.l.b16 %v1649
      %v1913 = vunpack.c.l.b16 %v1659
      %v1914 = vunpack.c.l.b16 %v1673
      %v1915 = vunpack.c.l.b16 %v1683
      %v1916 = vunpack.c.l.b16 %v1697
      %v1917 = vunpack.c.l.b16 %v1707
      %v1918 = vunpack.c.l.b16 %v1721
      %v1919 = vunpack.c.l.b16 %v1731
      %v1920 = vunpack.c.l.b16 %v1745
      %v1921 = vunpack.c.l.b16 %v1755
      %v1922 = vunpack.c.l.b16 %v1769
      %v1923 = vunpack.c.l.b16 %v1779
      %v1924 = vunpack.c.l.b16 %v1793
      %v1925 = vunpack.c.l.b16 %v1803
      %v1926 = vunpack.c.l.b16 %v1817
      %v1927 = vunpack.c.l.b16 %v1827
      %v1928 = vunpack.c.l.b16 %v1841
      %v1929 = vunpack.c.l.b16 %v1851
      %v1930 = vunpack.c.l.b16 %v1865
      %v1931 = vunpack.c.l.b16 %v1875
      %v1932 = vunpack.c.l.b16 %v1889
      %v1933 = vunpack.c.l.b16 %v1899
      %v1934 = vpack.c.b16 %v1903, %v1902
      %v1935 = vpack.c.b16 %v1905, %v1904
      %v1936 = vpack.c.b16 %v1907, %v1906
      %v1937 = vpack.c.b16 %v1909, %v1908
      %v1938 = vpack.c.b16 %v1911, %v1910
      %v1939 = vpack.c.b16 %v1913, %v1912
      %v1940 = vpack.c.b16 %v1915, %v1914
      %v1941 = vpack.c.b16 %v1917, %v1916
      %v1942 = vpack.c.b16 %v1919, %v1918
      %v1943 = vpack.c.b16 %v1921, %v1920
      %v1944 = vpack.c.b16 %v1923, %v1922
      %v1945 = vpack.c.b16 %v1925, %v1924
      %v1946 = vpack.c.b16 %v1927, %v1926
      %v1947 = vpack.c.b16 %v1929, %v1928
      %v1948 = vpack.c.b16 %v1931, %v1930
      %v1949 = vpack.c.b16 %v1933, %v1932
      %v1951 = vsel %vm991, %v1934, 0
      %v1954 = vsel %vm991, %v1935, 0
      %v1957 = vsel %vm991, %v1936, 0
      %v1960 = vsel %vm991, %v1937, 0
      %v1963 = vsel %vm991, %v1938, 0
      %v1966 = vsel %vm991, %v1939, 0
      %v1969 = vsel %vm991, %v1940, 0
      %v1972 = vsel %vm991, %v1941, 0
      %v1975 = vsel %vm991, %v1942, 0
      %v1978 = vsel %vm991, %v1943, 0
      %v1981 = vsel %vm991, %v1944, 0
      %v1984 = vsel %vm991, %v1945, 0
      %v1987 = vsel %vm991, %v1946, 0
      %v1990 = vsel %vm991, %v1947, 0
      %v1993 = vsel %vm991, %v1948, 0
      %v1996 = vsel %vm991, %v1949, 0
      %v1999 = vsel %vm1040, %v1901, 0
      %2001 = vmatprep.subr.bf16.mxu0 0
      %2002 = vmatpush1.bf16.msra.mxu0 %v1999
      %2003 = vmatprep.subr.bf16.mxu0 0
      %2004 = vmatpush1.bf16.msra.mxu0 0
      %2005 = vmatprep.subr.bf16.mxu0 0
      %2006 = vmatpush1.bf16.msra.mxu0 0
      %2007 = vmatprep.subr.bf16.mxu0 0
      %2008 = vmatpush1.bf16.msra.mxu0 0
      %2009 = vmatprep.subr.bf16.mxu0 0
      %2010 = vmatpush1.bf16.msra.mxu0 0
      %2011 = vmatprep.subr.bf16.mxu0 0
      %2012 = vmatpush1.bf16.msra.mxu0 0
      %2013 = vmatprep.subr.bf16.mxu0 0
      %2014 = vmatpush1.bf16.msra.mxu0 0
      %2015 = vmatprep.subr.bf16.mxu0 0
      %2016 = vmatpush1.bf16.msra.mxu0 0
      %2017 = vmatprep.subr.bf16.mxu0 0
      %2018 = vmatpush1.bf16.msra.mxu0 0
      %2019 = vmatprep.subr.bf16.mxu0 0
      %2020 = vmatpush1.bf16.msra.mxu0 0
      %2021 = vmatprep.subr.bf16.mxu0 0
      %2022 = vmatpush1.bf16.msra.mxu0 0
      %2023 = vmatprep.subr.bf16.mxu0 0
      %2024 = vmatpush1.bf16.msra.mxu0 0
      %2025 = vmatprep.subr.bf16.mxu0 0
      %2026 = vmatpush1.bf16.msra.mxu0 0
      %2027 = vmatprep.subr.bf16.mxu0 0
      %2028 = vmatpush1.bf16.msra.mxu0 0
      %2029 = vmatprep.subr.bf16.mxu0 0
      %2030 = vmatpush1.bf16.msra.mxu0 0
      %2031 = vmatprep.subr.bf16.mxu0 0
      %2032 = vmatpush1.bf16.msra.mxu0 0
      %2033 = vmatprep.mubr.bf16.mxu0 0
      %2034 = vmatmul.mubr.bf16.gmra.mrb[0].mxu0 %v1951
      %v2035 = vpop.f32.mrb[0].mxu0
      %v2036 = vadd.f32 0.0, %v2035
      %v2037 = vpop.f32.mrb[0].mxu0
      %v2038 = vpop.f32.mrb[0].mxu0
      %v2039 = vadd.f32 0.0, %v2038
      %v2040 = vpop.f32.mrb[0].mxu0
      %2041 = vmatprep.mubr.bf16.mxu0 0
      %2042 = vmatmul.mubr.bf16.gmra.mrb[0].mxu0 %v1954
      %v2043 = vpop.f32.mrb[0].mxu0
      %v2044 = vadd.f32 0.0, %v2043
      %v2045 = vpop.f32.mrb[0].mxu0
      %v2046 = vpop.f32.mrb[0].mxu0
      %v2047 = vadd.f32 0.0, %v2046
      %v2048 = vpop.f32.mrb[0].mxu0
      %2049 = vmatprep.mubr.bf16.mxu0 0
      %2050 = vmatmul.mubr.bf16.gmra.mrb[0].mxu0 %v1957
      %v2051 = vpop.f32.mrb[0].mxu0
      %v2052 = vadd.f32 0.0, %v2051
      %v2053 = vpop.f32.mrb[0].mxu0
      %v2054 = vpop.f32.mrb[0].mxu0
      %v2055 = vadd.f32 0.0, %v2054
      %v2056 = vpop.f32.mrb[0].mxu0
      %2057 = vmatprep.mubr.bf16.mxu0 0
      %2058 = vmatmul.mubr.bf16.gmra.mrb[0].mxu0 %v1960
      %v2059 = vpop.f32.mrb[0].mxu0
      %v2060 = vadd.f32 0.0, %v2059
      %v2061 = vpop.f32.mrb[0].mxu0
      %v2062 = vpop.f32.mrb[0].mxu0
      %v2063 = vadd.f32 0.0, %v2062
      %v2064 = vpop.f32.mrb[0].mxu0
      %2065 = vmatprep.mubr.bf16.mxu0 0
      %2066 = vmatmul.mubr.bf16.gmra.mrb[0].mxu0 %v1963
      %v2067 = vpop.f32.mrb[0].mxu0
      %v2068 = vadd.f32 0.0, %v2067
      %v2069 = vpop.f32.mrb[0].mxu0
      %v2070 = vpop.f32.mrb[0].mxu0
      %v2071 = vadd.f32 0.0, %v2070
      %v2072 = vpop.f32.mrb[0].mxu0
      %2073 = vmatprep.mubr.bf16.mxu0 0
      %2074 = vmatmul.mubr.bf16.gmra.mrb[0].mxu0 %v1966
      %v2075 = vpop.f32.mrb[0].mxu0
      %v2076 = vadd.f32 0.0, %v2075
      %v2077 = vpop.f32.mrb[0].mxu0
      %v2078 = vpop.f32.mrb[0].mxu0
      %v2079 = vadd.f32 0.0, %v2078
      %v2080 = vpop.f32.mrb[0].mxu0
      %2081 = vmatprep.mubr.bf16.mxu0 0
      %2082 = vmatmul.mubr.bf16.gmra.mrb[0].mxu0 %v1969
      %v2083 = vpop.f32.mrb[0].mxu0
      %v2084 = vadd.f32 0.0, %v2083
      %v2085 = vpop.f32.mrb[0].mxu0
      %v2086 = vpop.f32.mrb[0].mxu0
      %v2087 = vadd.f32 0.0, %v2086
      %v2088 = vpop.f32.mrb[0].mxu0
      %2089 = vmatprep.mubr.bf16.mxu0 0
      %2090 = vmatmul.mubr.bf16.gmra.mrb[0].mxu0 %v1972
      %v2091 = vpop.f32.mrb[0].mxu0
      %v2092 = vadd.f32 0.0, %v2091
      %v2093 = vpop.f32.mrb[0].mxu0
      %v2094 = vpop.f32.mrb[0].mxu0
      %v2095 = vadd.f32 0.0, %v2094
      %v2096 = vpop.f32.mrb[0].mxu0
      %2097 = vmatprep.mubr.bf16.mxu0 0
      %2098 = vmatmul.mubr.bf16.gmra.mrb[0].mxu0 %v1975
      %v2099 = vpop.f32.mrb[0].mxu0
      %v2100 = vadd.f32 0.0, %v2099
      %v2101 = vpop.f32.mrb[0].mxu0
      %v2102 = vpop.f32.mrb[0].mxu0
      %v2103 = vadd.f32 0.0, %v2102
      %v2104 = vpop.f32.mrb[0].mxu0
      %2105 = vmatprep.mubr.bf16.mxu0 0
      %2106 = vmatmul.mubr.bf16.gmra.mrb[0].mxu0 %v1978
      %v2107 = vpop.f32.mrb[0].mxu0
      %v2108 = vadd.f32 0.0, %v2107
      %v2109 = vpop.f32.mrb[0].mxu0
      %v2110 = vpop.f32.mrb[0].mxu0
      %v2111 = vadd.f32 0.0, %v2110
      %v2112 = vpop.f32.mrb[0].mxu0
      %2113 = vmatprep.mubr.bf16.mxu0 0
      %2114 = vmatmul.mubr.bf16.gmra.mrb[0].mxu0 %v1981
      %v2115 = vpop.f32.mrb[0].mxu0
      %v2116 = vadd.f32 0.0, %v2115
      %v2117 = vpop.f32.mrb[0].mxu0
      %v2118 = vpop.f32.mrb[0].mxu0
      %v2119 = vadd.f32 0.0, %v2118
      %v2120 = vpop.f32.mrb[0].mxu0
      %2121 = vmatprep.mubr.bf16.mxu0 0
      %2122 = vmatmul.mubr.bf16.gmra.mrb[0].mxu0 %v1984
      %v2123 = vpop.f32.mrb[0].mxu0
      %v2124 = vadd.f32 0.0, %v2123
      %v2125 = vpop.f32.mrb[0].mxu0
      %v2126 = vpop.f32.mrb[0].mxu0
      %v2127 = vadd.f32 0.0, %v2126
      %v2128 = vpop.f32.mrb[0].mxu0
      %2129 = vmatprep.mubr.bf16.mxu0 0
      %2130 = vmatmul.mubr.bf16.gmra.mrb[0].mxu0 %v1987
      %v2131 = vpop.f32.mrb[0].mxu0
      %v2132 = vadd.f32 0.0, %v2131
      %v2133 = vpop.f32.mrb[0].mxu0
      %v2134 = vpop.f32.mrb[0].mxu0
      %v2135 = vadd.f32 0.0, %v2134
      %v2136 = vpop.f32.mrb[0].mxu0
      %2137 = vmatprep.mubr.bf16.mxu0 0
      %2138 = vmatmul.mubr.bf16.gmra.mrb[0].mxu0 %v1990
      %v2139 = vpop.f32.mrb[0].mxu0
      %v2140 = vadd.f32 0.0, %v2139
      %v2141 = vpop.f32.mrb[0].mxu0
      %v2142 = vpop.f32.mrb[0].mxu0
      %v2143 = vadd.f32 0.0, %v2142
      %v2144 = vpop.f32.mrb[0].mxu0
      %2145 = vmatprep.mubr.bf16.mxu0 0
      %2146 = vmatmul.mubr.bf16.gmra.mrb[0].mxu0 %v1993
      %v2147 = vpop.f32.mrb[0].mxu0
      %v2148 = vadd.f32 0.0, %v2147
      %v2149 = vpop.f32.mrb[0].mxu0
      %v2150 = vpop.f32.mrb[0].mxu0
      %v2151 = vadd.f32 0.0, %v2150
      %v2152 = vpop.f32.mrb[0].mxu0
      %2153 = vmatprep.mubr.bf16.mxu0 0
      %2154 = vmatmul.mubr.bf16.gmra.mrb[0].mxu0 %v1996
      %v2155 = vpop.f32.mrb[0].mxu0
      %v2156 = vadd.f32 0.0, %v2155
      %v2157 = vpop.f32.mrb[0].mxu0
      %v2158 = vpop.f32.mrb[0].mxu0
      %v2159 = vadd.f32 0.0, %v2158
      %v2160 = vpop.f32.mrb[0].mxu0
      %2161 = vdwg.mxu0
      %v2162 = vadd.f32 %v1339, %v2036
      %v2163 = vadd.f32 %v1342, %v2039
      %v2164 = vadd.f32 %v1347, %v2044
      %v2165 = vadd.f32 %v1350, %v2047
      %v2166 = vadd.f32 %v1355, %v2052
      %v2167 = vadd.f32 %v1358, %v2055
      %v2168 = vadd.f32 %v1363, %v2060
      %v2169 = vadd.f32 %v1366, %v2063
      %v2170 = vadd.f32 %v1371, %v2068
      %v2171 = vadd.f32 %v1374, %v2071
      %v2172 = vadd.f32 %v1379, %v2076
      %v2173 = vadd.f32 %v1382, %v2079
      %v2174 = vadd.f32 %v1387, %v2084
      %v2175 = vadd.f32 %v1390, %v2087
      %v2176 = vadd.f32 %v1395, %v2092
      %v2177 = vadd.f32 %v1398, %v2095
      %v2178 = vadd.f32 %v1403, %v2100
      %v2179 = vadd.f32 %v1406, %v2103
      %v2180 = vadd.f32 %v1411, %v2108
      %v2181 = vadd.f32 %v1414, %v2111
      %v2182 = vadd.f32 %v1419, %v2116
      %v2183 = vadd.f32 %v1422, %v2119
      %v2184 = vadd.f32 %v1427, %v2124
      %v2185 = vadd.f32 %v1430, %v2127
      %v2186 = vadd.f32 %v1435, %v2132
      %v2187 = vadd.f32 %v1438, %v2135
      %v2188 = vadd.f32 %v1443, %v2140
      %v2189 = vadd.f32 %v1446, %v2143
      %v2190 = vadd.f32 %v1451, %v2148
      %v2191 = vadd.f32 %v1454, %v2151
      %v2192 = vadd.f32 %v1459, %v2156
      %v2193 = vadd.f32 %v1462, %v2159
      %v2194 = vld [vmem:[%s473 + $0x4] sm:$0x8]
      %v2195 = vld [vmem:[%s473 + $0x8] sm:$0xf]
      %v2196 = vld [vmem:[%s473 + $0xc] sm:$0xf]
      %v2197 = vld [vmem:[%s473 + $0x18] sm:$0x8]
      %v2198 = vld [vmem:[%s473 + $0x1c] sm:$0xf]
      %v2199 = vld [vmem:[%s473 + $0x20] sm:$0xf]
      %v2200 = vld [vmem:[%s473 + $0x2c] sm:$0x8]
      %v2201 = vld [vmem:[%s473 + $0x30] sm:$0xf]
      %v2202 = vld [vmem:[%s473 + $0x34] sm:$0xf]
      %v2203 = vld [vmem:[%s473 + $0x40] sm:$0x8]
      %v2204 = vld [vmem:[%s473 + $0x44] sm:$0xf]
      %v2205 = vld [vmem:[%s473 + $0x48] sm:$0xf]
      %v2206 = vld [vmem:[%s473 + $0x54] sm:$0x8]
      %v2207 = vld [vmem:[%s473 + $0x58] sm:$0xf]
      %v2208 = vld [vmem:[%s473 + $0x5c] sm:$0xf]
      %v2209 = vld [vmem:[%s473 + $0x68] sm:$0x8]
      %v2210 = vld [vmem:[%s473 + $0x6c] sm:$0xf]
      %v2211 = vld [vmem:[%s473 + $0x70] sm:$0xf]
      %v2212 = vld [vmem:[%s473 + $0x7c] sm:$0x8]
      %v2213 = vld [vmem:[%s473 + $0x80] sm:$0xf]
      %v2214 = vld [vmem:[%s473 + $0x84] sm:$0xf]
      %v2215 = vld [vmem:[%s473 + $0x90] sm:$0x8]
      %v2216 = vld [vmem:[%s473 + $0x94] sm:$0xf]
      %v2217 = vld [vmem:[%s473 + $0x98] sm:$0xf]
      %v2218 = vld [vmem:[%s473 + $0xa4] sm:$0x8]
      %v2219 = vld [vmem:[%s473 + $0xa8] sm:$0xf]
      %v2220 = vld [vmem:[%s473 + $0xac] sm:$0xf]
      %v2221 = vld [vmem:[%s473 + $0xb8] sm:$0x8]
      %v2222 = vld [vmem:[%s473 + $0xbc] sm:$0xf]
      %v2223 = vld [vmem:[%s473 + $0xc0] sm:$0xf]
      %v2224 = vld [vmem:[%s473 + $0xcc] sm:$0x8]
      %v2225 = vld [vmem:[%s473 + $0xd0] sm:$0xf]
      %v2226 = vld [vmem:[%s473 + $0xd4] sm:$0xf]
      %v2227 = vld [vmem:[%s473 + $0xe0] sm:$0x8]
      %v2228 = vld [vmem:[%s473 + $0xe4] sm:$0xf]
      %v2229 = vld [vmem:[%s473 + $0xe8] sm:$0xf]
      %v2230 = vld [vmem:[%s473 + $0xf4] sm:$0x8]
      %v2231 = vld [vmem:[%s473 + $0xf8] sm:$0xf]
      %v2232 = vld [vmem:[%s473 + $0xfc] sm:$0xf]
      %v2233 = vld [vmem:[%s473 + $0x108] sm:$0x8]
      %v2234 = vld [vmem:[%s473 + $0x10c] sm:$0xf]
      %v2235 = vld [vmem:[%s473 + $0x110] sm:$0xf]
      %v2236 = vld [vmem:[%s473 + $0x11c] sm:$0x8]
      %v2237 = vld [vmem:[%s473 + $0x120] sm:$0xf]
      %v2238 = vld [vmem:[%s473 + $0x124] sm:$0xf]
      %v2239 = vld [vmem:[%s473 + $0x130] sm:$0x8]
      %v2240 = vld [vmem:[%s473 + $0x134] sm:$0xf]
      %v2241 = vld [vmem:[%s473 + $0x138] sm:$0xf]
      %v2243 = vshrl.u32 %v2194, 16
      %v2245 = vrot.slane %v2243, 7
      %v2246 = vrot.slane %v2245, 4
      %v2248 = vshrl.u32 %v2195, 16
      %v2250 = vrot.slane %v2248, 7
      %v2251 = vshll.u32 %v2195, 16
      %v2253 = vor.u32 %v2250, %v2251
      %v2254 = vsel %vm555, %v2246, %v2253
      %v2255 = vrot.slane %v2250, 4
      %v2257 = vshrl.u32 %v2196, 16
      %v2259 = vrot.slane %v2257, 7
      %v2260 = vshll.u32 %v2196, 16
      %v2262 = vor.u32 %v2259, %v2260
      %v2263 = vsel %vm555, %v2255, %v2262
      %v2265 = vshrl.u32 %v2197, 16
      %v2267 = vrot.slane %v2265, 7
      %v2268 = vrot.slane %v2267, 4
      %v2270 = vshrl.u32 %v2198, 16
      %v2272 = vrot.slane %v2270, 7
      %v2273 = vshll.u32 %v2198, 16
      %v2275 = vor.u32 %v2272, %v2273
      %v2276 = vsel %vm555, %v2268, %v2275
      %v2277 = vrot.slane %v2272, 4
      %v2279 = vshrl.u32 %v2199, 16
      %v2281 = vrot.slane %v2279, 7
      %v2282 = vshll.u32 %v2199, 16
      %v2284 = vor.u32 %v2281, %v2282
      %v2285 = vsel %vm555, %v2277, %v2284
      %v2287 = vshrl.u32 %v2200, 16
      %v2289 = vrot.slane %v2287, 7
      %v2290 = vrot.slane %v2289, 4
      %v2292 = vshrl.u32 %v2201, 16
      %v2294 = vrot.slane %v2292, 7
      %v2295 = vshll.u32 %v2201, 16
      %v2297 = vor.u32 %v2294, %v2295
      %v2298 = vsel %vm555, %v2290, %v2297
      %v2299 = vrot.slane %v2294, 4
      %v2301 = vshrl.u32 %v2202, 16
      %v2303 = vrot.slane %v2301, 7
      %v2304 = vshll.u32 %v2202, 16
      %v2306 = vor.u32 %v2303, %v2304
      %v2307 = vsel %vm555, %v2299, %v2306
      %v2309 = vshrl.u32 %v2203, 16
      %v2311 = vrot.slane %v2309, 7
      %v2312 = vrot.slane %v2311, 4
      %v2314 = vshrl.u32 %v2204, 16
      %v2316 = vrot.slane %v2314, 7
      %v2317 = vshll.u32 %v2204, 16
      %v2319 = vor.u32 %v2316, %v2317
      %v2320 = vsel %vm555, %v2312, %v2319
      %v2321 = vrot.slane %v2316, 4
      %v2323 = vshrl.u32 %v2205, 16
      %v2325 = vrot.slane %v2323, 7
      %v2326 = vshll.u32 %v2205, 16
      %v2328 = vor.u32 %v2325, %v2326
      %v2329 = vsel %vm555, %v2321, %v2328
      %v2331 = vshrl.u32 %v2206, 16
      %v2333 = vrot.slane %v2331, 7
      %v2334 = vrot.slane %v2333, 4
      %v2336 = vshrl.u32 %v2207, 16
      %v2338 = vrot.slane %v2336, 7
      %v2339 = vshll.u32 %v2207, 16
      %v2341 = vor.u32 %v2338, %v2339
      %v2342 = vsel %vm555, %v2334, %v2341
      %v2343 = vrot.slane %v2338, 4
      %v2345 = vshrl.u32 %v2208, 16
      %v2347 = vrot.slane %v2345, 7
      %v2348 = vshll.u32 %v2208, 16
      %v2350 = vor.u32 %v2347, %v2348
      %v2351 = vsel %vm555, %v2343, %v2350
      %v2353 = vshrl.u32 %v2209, 16
      %v2355 = vrot.slane %v2353, 7
      %v2356 = vrot.slane %v2355, 4
      %v2358 = vshrl.u32 %v2210, 16
      %v2360 = vrot.slane %v2358, 7
      %v2361 = vshll.u32 %v2210, 16
      %v2363 = vor.u32 %v2360, %v2361
      %v2364 = vsel %vm555, %v2356, %v2363
      %v2365 = vrot.slane %v2360, 4
      %v2367 = vshrl.u32 %v2211, 16
      %v2369 = vrot.slane %v2367, 7
      %v2370 = vshll.u32 %v2211, 16
      %v2372 = vor.u32 %v2369, %v2370
      %v2373 = vsel %vm555, %v2365, %v2372
      %v2375 = vshrl.u32 %v2212, 16
      %v2377 = vrot.slane %v2375, 7
      %v2378 = vrot.slane %v2377, 4
      %v2380 = vshrl.u32 %v2213, 16
      %v2382 = vrot.slane %v2380, 7
      %v2383 = vshll.u32 %v2213, 16
      %v2385 = vor.u32 %v2382, %v2383
      %v2386 = vsel %vm555, %v2378, %v2385
      %v2387 = vrot.slane %v2382, 4
      %v2389 = vshrl.u32 %v2214, 16
      %v2391 = vrot.slane %v2389, 7
      %v2392 = vshll.u32 %v2214, 16
      %v2394 = vor.u32 %v2391, %v2392
      %v2395 = vsel %vm555, %v2387, %v2394
      %v2397 = vshrl.u32 %v2215, 16
      %v2399 = vrot.slane %v2397, 7
      %v2400 = vrot.slane %v2399, 4
      %v2402 = vshrl.u32 %v2216, 16
      %v2404 = vrot.slane %v2402, 7
      %v2405 = vshll.u32 %v2216, 16
      %v2407 = vor.u32 %v2404, %v2405
      %v2408 = vsel %vm555, %v2400, %v2407
      %v2409 = vrot.slane %v2404, 4
      %v2411 = vshrl.u32 %v2217, 16
      %v2413 = vrot.slane %v2411, 7
      %v2414 = vshll.u32 %v2217, 16
      %v2416 = vor.u32 %v2413, %v2414
      %v2417 = vsel %vm555, %v2409, %v2416
      %v2419 = vshrl.u32 %v2218, 16
      %v2421 = vrot.slane %v2419, 7
      %v2422 = vrot.slane %v2421, 4
      %v2424 = vshrl.u32 %v2219, 16
      %v2426 = vrot.slane %v2424, 7
      %v2427 = vshll.u32 %v2219, 16
      %v2429 = vor.u32 %v2426, %v2427
      %v2430 = vsel %vm555, %v2422, %v2429
      %v2431 = vrot.slane %v2426, 4
      %v2433 = vshrl.u32 %v2220, 16
      %v2435 = vrot.slane %v2433, 7
      %v2436 = vshll.u32 %v2220, 16
      %v2438 = vor.u32 %v2435, %v2436
      %v2439 = vsel %vm555, %v2431, %v2438
      %v2441 = vshrl.u32 %v2221, 16
      %v2443 = vrot.slane %v2441, 7
      %v2444 = vrot.slane %v2443, 4
      %v2446 = vshrl.u32 %v2222, 16
      %v2448 = vrot.slane %v2446, 7
      %v2449 = vshll.u32 %v2222, 16
      %v2451 = vor.u32 %v2448, %v2449
      %v2452 = vsel %vm555, %v2444, %v2451
      %v2453 = vrot.slane %v2448, 4
      %v2455 = vshrl.u32 %v2223, 16
      %v2457 = vrot.slane %v2455, 7
      %v2458 = vshll.u32 %v2223, 16
      %v2460 = vor.u32 %v2457, %v2458
      %v2461 = vsel %vm555, %v2453, %v2460
      %v2463 = vshrl.u32 %v2224, 16
      %v2465 = vrot.slane %v2463, 7
      %v2466 = vrot.slane %v2465, 4
      %v2468 = vshrl.u32 %v2225, 16
      %v2470 = vrot.slane %v2468, 7
      %v2471 = vshll.u32 %v2225, 16
      %v2473 = vor.u32 %v2470, %v2471
      %v2474 = vsel %vm555, %v2466, %v2473
      %v2475 = vrot.slane %v2470, 4
      %v2477 = vshrl.u32 %v2226, 16
      %v2479 = vrot.slane %v2477, 7
      %v2480 = vshll.u32 %v2226, 16
      %v2482 = vor.u32 %v2479, %v2480
      %v2483 = vsel %vm555, %v2475, %v2482
      %v2485 = vshrl.u32 %v2227, 16
      %v2487 = vrot.slane %v2485, 7
      %v2488 = vrot.slane %v2487, 4
      %v2490 = vshrl.u32 %v2228, 16
      %v2492 = vrot.slane %v2490, 7
      %v2493 = vshll.u32 %v2228, 16
      %v2495 = vor.u32 %v2492, %v2493
      %v2496 = vsel %vm555, %v2488, %v2495
      %v2497 = vrot.slane %v2492, 4
      %v2499 = vshrl.u32 %v2229, 16
      %v2501 = vrot.slane %v2499, 7
      %v2502 = vshll.u32 %v2229, 16
      %v2504 = vor.u32 %v2501, %v2502
      %v2505 = vsel %vm555, %v2497, %v2504
      %v2507 = vshrl.u32 %v2230, 16
      %v2509 = vrot.slane %v2507, 7
      %v2510 = vrot.slane %v2509, 4
      %v2512 = vshrl.u32 %v2231, 16
      %v2514 = vrot.slane %v2512, 7
      %v2515 = vshll.u32 %v2231, 16
      %v2517 = vor.u32 %v2514, %v2515
      %v2518 = vsel %vm555, %v2510, %v2517
      %v2519 = vrot.slane %v2514, 4
      %v2521 = vshrl.u32 %v2232, 16
      %v2523 = vrot.slane %v2521, 7
      %v2524 = vshll.u32 %v2232, 16
      %v2526 = vor.u32 %v2523, %v2524
      %v2527 = vsel %vm555, %v2519, %v2526
      %v2529 = vshrl.u32 %v2233, 16
      %v2531 = vrot.slane %v2529, 7
      %v2532 = vrot.slane %v2531, 4
      %v2534 = vshrl.u32 %v2234, 16
      %v2536 = vrot.slane %v2534, 7
      %v2537 = vshll.u32 %v2234, 16
      %v2539 = vor.u32 %v2536, %v2537
      %v2540 = vsel %vm555, %v2532, %v2539
      %v2541 = vrot.slane %v2536, 4
      %v2543 = vshrl.u32 %v2235, 16
      %v2545 = vrot.slane %v2543, 7
      %v2546 = vshll.u32 %v2235, 16
      %v2548 = vor.u32 %v2545, %v2546
      %v2549 = vsel %vm555, %v2541, %v2548
      %v2551 = vshrl.u32 %v2236, 16
      %v2553 = vrot.slane %v2551, 7
      %v2554 = vrot.slane %v2553, 4
      %v2556 = vshrl.u32 %v2237, 16
      %v2558 = vrot.slane %v2556, 7
      %v2559 = vshll.u32 %v2237, 16
      %v2561 = vor.u32 %v2558, %v2559
      %v2562 = vsel %vm555, %v2554, %v2561
      %v2563 = vrot.slane %v2558, 4
      %v2565 = vshrl.u32 %v2238, 16
      %v2567 = vrot.slane %v2565, 7
      %v2568 = vshll.u32 %v2238, 16
      %v2570 = vor.u32 %v2567, %v2568
      %v2571 = vsel %vm555, %v2563, %v2570
      %v2573 = vshrl.u32 %v2239, 16
      %v2575 = vrot.slane %v2573, 7
      %v2576 = vrot.slane %v2575, 4
      %v2578 = vshrl.u32 %v2240, 16
      %v2580 = vrot.slane %v2578, 7
      %v2581 = vshll.u32 %v2240, 16
      %v2583 = vor.u32 %v2580, %v2581
      %v2584 = vsel %vm555, %v2576, %v2583
      %v2585 = vrot.slane %v2580, 4
      %v2587 = vshrl.u32 %v2241, 16
      %v2589 = vrot.slane %v2587, 7
      %v2590 = vshll.u32 %v2241, 16
      %v2592 = vor.u32 %v2589, %v2590
      %v2593 = vsel %vm555, %v2585, %v2592
      %s2594 = scalar_lea.vmem %s1, 12
      %v2595 = vld [vmem:[%s2594] sm:$0xf]
      %v2596 = vunpack.c.l.b16 %v2254
      %v2597 = vunpack.c.l.b16 %v2263
      %v2598 = vunpack.c.l.b16 %v2276
      %v2599 = vunpack.c.l.b16 %v2285
      %v2600 = vunpack.c.l.b16 %v2298
      %v2601 = vunpack.c.l.b16 %v2307
      %v2602 = vunpack.c.l.b16 %v2320
      %v2603 = vunpack.c.l.b16 %v2329
      %v2604 = vunpack.c.l.b16 %v2342
      %v2605 = vunpack.c.l.b16 %v2351
      %v2606 = vunpack.c.l.b16 %v2364
      %v2607 = vunpack.c.l.b16 %v2373
      %v2608 = vunpack.c.l.b16 %v2386
      %v2609 = vunpack.c.l.b16 %v2395
      %v2610 = vunpack.c.l.b16 %v2408
      %v2611 = vunpack.c.l.b16 %v2417
      %v2612 = vunpack.c.l.b16 %v2430
      %v2613 = vunpack.c.l.b16 %v2439
      %v2614 = vunpack.c.l.b16 %v2452
      %v2615 = vunpack.c.l.b16 %v2461
      %v2616 = vunpack.c.l.b16 %v2474
      %v2617 = vunpack.c.l.b16 %v2483
      %v2618 = vunpack.c.l.b16 %v2496
      %v2619 = vunpack.c.l.b16 %v2505
      %v2620 = vunpack.c.l.b16 %v2518
      %v2621 = vunpack.c.l.b16 %v2527
      %v2622 = vunpack.c.l.b16 %v2540
      %v2623 = vunpack.c.l.b16 %v2549
      %v2624 = vunpack.c.l.b16 %v2562
      %v2625 = vunpack.c.l.b16 %v2571
      %v2626 = vunpack.c.l.b16 %v2584
      %v2627 = vunpack.c.l.b16 %v2593
      %v2628 = vpack.c.b16 %v2597, %v2596
      %v2629 = vpack.c.b16 %v2599, %v2598
      %v2630 = vpack.c.b16 %v2601, %v2600
      %v2631 = vpack.c.b16 %v2603, %v2602
      %v2632 = vpack.c.b16 %v2605, %v2604
      %v2633 = vpack.c.b16 %v2607, %v2606
      %v2634 = vpack.c.b16 %v2609, %v2608
      %v2635 = vpack.c.b16 %v2611, %v2610
      %v2636 = vpack.c.b16 %v2613, %v2612
      %v2637 = vpack.c.b16 %v2615, %v2614
      %v2638 = vpack.c.b16 %v2617, %v2616
      %v2639 = vpack.c.b16 %v2619, %v2618
      %v2640 = vpack.c.b16 %v2621, %v2620
      %v2641 = vpack.c.b16 %v2623, %v2622
      %v2642 = vpack.c.b16 %v2625, %v2624
      %v2643 = vpack.c.b16 %v2627, %v2626
      %v2645 = vsel %vm991, %v2628, 0
      %v2648 = vsel %vm991, %v2629, 0
      %v2651 = vsel %vm991, %v2630, 0
      %v2654 = vsel %vm991, %v2631, 0
      %v2657 = vsel %vm991, %v2632, 0
      %v2660 = vsel %vm991, %v2633, 0
      %v2663 = vsel %vm991, %v2634, 0
      %v2666 = vsel %vm991, %v2635, 0
      %v2669 = vsel %vm991, %v2636, 0
      %v2672 = vsel %vm991, %v2637, 0
      %v2675 = vsel %vm991, %v2638, 0
      %v2678 = vsel %vm991, %v2639, 0
      %v2681 = vsel %vm991, %v2640, 0
      %v2684 = vsel %vm991, %v2641, 0
      %v2687 = vsel %vm991, %v2642, 0
      %v2690 = vsel %vm991, %v2643, 0
      %v2693 = vsel %vm1040, %v2595, 0
      %2695 = vmatprep.subr.bf16.mxu0 0
      %2696 = vmatpush1.bf16.msra.mxu0 %v2693
      %2697 = vmatprep.subr.bf16.mxu0 0
      %2698 = vmatpush1.bf16.msra.mxu0 0
      %2699 = vmatprep.subr.bf16.mxu0 0
      %2700 = vmatpush1.bf16.msra.mxu0 0
      %2701 = vmatprep.subr.bf16.mxu0 0
      %2702 = vmatpush1.bf16.msra.mxu0 0
      %2703 = vmatprep.subr.bf16.mxu0 0
      %2704 = vmatpush1.bf16.msra.mxu0 0
      %2705 = vmatprep.subr.bf16.mxu0 0
      %2706 = vmatpush1.bf16.msra.mxu0 0
      %2707 = vmatprep.subr.bf16.mxu0 0
      %2708 = vmatpush1.bf16.msra.mxu0 0
      %2709 = vmatprep.subr.bf16.mxu0 0
      %2710 = vmatpush1.bf16.msra.mxu0 0
      %2711 = vmatprep.subr.bf16.mxu0 0
      %2712 = vmatpush1.bf16.msra.mxu0 0
      %2713 = vmatprep.subr.bf16.mxu0 0
      %2714 = vmatpush1.bf16.msra.mxu0 0
      %2715 = vmatprep.subr.bf16.mxu0 0
      %2716 = vmatpush1.bf16.msra.mxu0 0
      %2717 = vmatprep.subr.bf16.mxu0 0
      %2718 = vmatpush1.bf16.msra.mxu0 0
      %2719 = vmatprep.subr.bf16.mxu0 0
      %2720 = vmatpush1.bf16.msra.mxu0 0
      %2721 = vmatprep.subr.bf16.mxu0 0
      %2722 = vmatpush1.bf16.msra.mxu0 0
      %2723 = vmatprep.subr.bf16.mxu0 0
      %2724 = vmatpush1.bf16.msra.mxu0 0
      %2725 = vmatprep.subr.bf16.mxu0 0
      %2726 = vmatpush1.bf16.msra.mxu0 0
      %2727 = vmatprep.mubr.bf16.mxu0 0
      %2728 = vmatmul.mubr.bf16.gmra.mrb[0].mxu0 %v2645
      %v2729 = vpop.f32.mrb[0].mxu0
      %v2730 = vadd.f32 0.0, %v2729
      %v2731 = vpop.f32.mrb[0].mxu0
      %v2732 = vpop.f32.mrb[0].mxu0
      %v2733 = vadd.f32 0.0, %v2732
      %v2734 = vpop.f32.mrb[0].mxu0
      %2735 = vmatprep.mubr.bf16.mxu0 0
      %2736 = vmatmul.mubr.bf16.gmra.mrb[0].mxu0 %v2648
      %v2737 = vpop.f32.mrb[0].mxu0
      %v2738 = vadd.f32 0.0, %v2737
      %v2739 = vpop.f32.mrb[0].mxu0
      %v2740 = vpop.f32.mrb[0].mxu0
      %v2741 = vadd.f32 0.0, %v2740
      %v2742 = vpop.f32.mrb[0].mxu0
      %2743 = vmatprep.mubr.bf16.mxu0 0
      %2744 = vmatmul.mubr.bf16.gmra.mrb[0].mxu0 %v2651
      %v2745 = vpop.f32.mrb[0].mxu0
      %v2746 = vadd.f32 0.0, %v2745
      %v2747 = vpop.f32.mrb[0].mxu0
      %v2748 = vpop.f32.mrb[0].mxu0
      %v2749 = vadd.f32 0.0, %v2748
      %v2750 = vpop.f32.mrb[0].mxu0
      %2751 = vmatprep.mubr.bf16.mxu0 0
      %2752 = vmatmul.mubr.bf16.gmra.mrb[0].mxu0 %v2654
      %v2753 = vpop.f32.mrb[0].mxu0
      %v2754 = vadd.f32 0.0, %v2753
      %v2755 = vpop.f32.mrb[0].mxu0
      %v2756 = vpop.f32.mrb[0].mxu0
      %v2757 = vadd.f32 0.0, %v2756
      %v2758 = vpop.f32.mrb[0].mxu0
      %2759 = vmatprep.mubr.bf16.mxu0 0
      %2760 = vmatmul.mubr.bf16.gmra.mrb[0].mxu0 %v2657
      %v2761 = vpop.f32.mrb[0].mxu0
      %v2762 = vadd.f32 0.0, %v2761
      %v2763 = vpop.f32.mrb[0].mxu0
      %v2764 = vpop.f32.mrb[0].mxu0
      %v2765 = vadd.f32 0.0, %v2764
      %v2766 = vpop.f32.mrb[0].mxu0
      %2767 = vmatprep.mubr.bf16.mxu0 0
      %2768 = vmatmul.mubr.bf16.gmra.mrb[0].mxu0 %v2660
      %v2769 = vpop.f32.mrb[0].mxu0
      %v2770 = vadd.f32 0.0, %v2769
      %v2771 = vpop.f32.mrb[0].mxu0
      %v2772 = vpop.f32.mrb[0].mxu0
      %v2773 = vadd.f32 0.0, %v2772
      %v2774 = vpop.f32.mrb[0].mxu0
      %2775 = vmatprep.mubr.bf16.mxu0 0
      %2776 = vmatmul.mubr.bf16.gmra.mrb[0].mxu0 %v2663
      %v2777 = vpop.f32.mrb[0].mxu0
      %v2778 = vadd.f32 0.0, %v2777
      %v2779 = vpop.f32.mrb[0].mxu0
      %v2780 = vpop.f32.mrb[0].mxu0
      %v2781 = vadd.f32 0.0, %v2780
      %v2782 = vpop.f32.mrb[0].mxu0
      %2783 = vmatprep.mubr.bf16.mxu0 0
      %2784 = vmatmul.mubr.bf16.gmra.mrb[0].mxu0 %v2666
      %v2785 = vpop.f32.mrb[0].mxu0
      %v2786 = vadd.f32 0.0, %v2785
      %v2787 = vpop.f32.mrb[0].mxu0
      %v2788 = vpop.f32.mrb[0].mxu0
      %v2789 = vadd.f32 0.0, %v2788
      %v2790 = vpop.f32.mrb[0].mxu0
      %2791 = vmatprep.mubr.bf16.mxu0 0
      %2792 = vmatmul.mubr.bf16.gmra.mrb[0].mxu0 %v2669
      %v2793 = vpop.f32.mrb[0].mxu0
      %v2794 = vadd.f32 0.0, %v2793
      %v2795 = vpop.f32.mrb[0].mxu0
      %v2796 = vpop.f32.mrb[0].mxu0
      %v2797 = vadd.f32 0.0, %v2796
      %v2798 = vpop.f32.mrb[0].mxu0
      %2799 = vmatprep.mubr.bf16.mxu0 0
      %2800 = vmatmul.mubr.bf16.gmra.mrb[0].mxu0 %v2672
      %v2801 = vpop.f32.mrb[0].mxu0
      %v2802 = vadd.f32 0.0, %v2801
      %v2803 = vpop.f32.mrb[0].mxu0
      %v2804 = vpop.f32.mrb[0].mxu0
      %v2805 = vadd.f32 0.0, %v2804
      %v2806 = vpop.f32.mrb[0].mxu0
      %2807 = vmatprep.mubr.bf16.mxu0 0
      %2808 = vmatmul.mubr.bf16.gmra.mrb[0].mxu0 %v2675
      %v2809 = vpop.f32.mrb[0].mxu0
      %v2810 = vadd.f32 0.0, %v2809
      %v2811 = vpop.f32.mrb[0].mxu0
      %v2812 = vpop.f32.mrb[0].mxu0
      %v2813 = vadd.f32 0.0, %v2812
      %v2814 = vpop.f32.mrb[0].mxu0
      %2815 = vmatprep.mubr.bf16.mxu0 0
      %2816 = vmatmul.mubr.bf16.gmra.mrb[0].mxu0 %v2678
      %v2817 = vpop.f32.mrb[0].mxu0
      %v2818 = vadd.f32 0.0, %v2817
      %v2819 = vpop.f32.mrb[0].mxu0
      %v2820 = vpop.f32.mrb[0].mxu0
      %v2821 = vadd.f32 0.0, %v2820
      %v2822 = vpop.f32.mrb[0].mxu0
      %2823 = vmatprep.mubr.bf16.mxu0 0
      %2824 = vmatmul.mubr.bf16.gmra.mrb[0].mxu0 %v2681
      %v2825 = vpop.f32.mrb[0].mxu0
      %v2826 = vadd.f32 0.0, %v2825
      %v2827 = vpop.f32.mrb[0].mxu0
      %v2828 = vpop.f32.mrb[0].mxu0
      %v2829 = vadd.f32 0.0, %v2828
      %v2830 = vpop.f32.mrb[0].mxu0
      %2831 = vmatprep.mubr.bf16.mxu0 0
      %2832 = vmatmul.mubr.bf16.gmra.mrb[0].mxu0 %v2684
      %v2833 = vpop.f32.mrb[0].mxu0
      %v2834 = vadd.f32 0.0, %v2833
      %v2835 = vpop.f32.mrb[0].mxu0
      %v2836 = vpop.f32.mrb[0].mxu0
      %v2837 = vadd.f32 0.0, %v2836
      %v2838 = vpop.f32.mrb[0].mxu0
      %2839 = vmatprep.mubr.bf16.mxu0 0
      %2840 = vmatmul.mubr.bf16.gmra.mrb[0].mxu0 %v2687
      %v2841 = vpop.f32.mrb[0].mxu0
      %v2842 = vadd.f32 0.0, %v2841
      %v2843 = vpop.f32.mrb[0].mxu0
      %v2844 = vpop.f32.mrb[0].mxu0
      %v2845 = vadd.f32 0.0, %v2844
      %v2846 = vpop.f32.mrb[0].mxu0
      %2847 = vmatprep.mubr.bf16.mxu0 0
      %2848 = vmatmul.mubr.bf16.gmra.mrb[0].mxu0 %v2690
      %v2849 = vpop.f32.mrb[0].mxu0
      %v2850 = vadd.f32 0.0, %v2849
      %v2851 = vpop.f32.mrb[0].mxu0
      %v2852 = vpop.f32.mrb[0].mxu0
      %v2853 = vadd.f32 0.0, %v2852
      %v2854 = vpop.f32.mrb[0].mxu0
      %2855 = vdwg.mxu0
      %v2856 = vadd.f32 %v2162, %v2730
      %v2857 = vadd.f32 %v2163, %v2733
      %v2858 = vadd.f32 %v2164, %v2738
      %v2859 = vadd.f32 %v2165, %v2741
      %v2860 = vadd.f32 %v2166, %v2746
      %v2861 = vadd.f32 %v2167, %v2749
      %v2862 = vadd.f32 %v2168, %v2754
      %v2863 = vadd.f32 %v2169, %v2757
      %v2864 = vadd.f32 %v2170, %v2762
      %v2865 = vadd.f32 %v2171, %v2765
      %v2866 = vadd.f32 %v2172, %v2770
      %v2867 = vadd.f32 %v2173, %v2773
      %v2868 = vadd.f32 %v2174, %v2778
      %v2869 = vadd.f32 %v2175, %v2781
      %v2870 = vadd.f32 %v2176, %v2786
      %v2871 = vadd.f32 %v2177, %v2789
      %v2872 = vadd.f32 %v2178, %v2794
      %v2873 = vadd.f32 %v2179, %v2797
      %v2874 = vadd.f32 %v2180, %v2802
      %v2875 = vadd.f32 %v2181, %v2805
      %v2876 = vadd.f32 %v2182, %v2810
      %v2877 = vadd.f32 %v2183, %v2813
      %v2878 = vadd.f32 %v2184, %v2818
      %v2879 = vadd.f32 %v2185, %v2821
      %v2880 = vadd.f32 %v2186, %v2826
      %v2881 = vadd.f32 %v2187, %v2829
      %v2882 = vadd.f32 %v2188, %v2834
      %v2883 = vadd.f32 %v2189, %v2837
      %v2884 = vadd.f32 %v2190, %v2842
      %v2885 = vadd.f32 %v2191, %v2845
      %v2886 = vadd.f32 %v2192, %v2850
      %v2887 = vadd.f32 %v2193, %v2853
      %s2888 = scalar_lea.vmem %s1, 16
      %v2889 = vld [vmem:[%s2888] sm:$0xf]
      %v2922 = vunpack.c.l.b16 %v2195
      %v2923 = vunpack.c.l.b16 %v2196
      %v2924 = vunpack.c.l.b16 %v2198
      %v2925 = vunpack.c.l.b16 %v2199
      %v2926 = vunpack.c.l.b16 %v2201
      %v2927 = vunpack.c.l.b16 %v2202
      %v2928 = vunpack.c.l.b16 %v2204
      %v2929 = vunpack.c.l.b16 %v2205
      %v2930 = vunpack.c.l.b16 %v2207
      %v2931 = vunpack.c.l.b16 %v2208
      %v2932 = vunpack.c.l.b16 %v2210
      %v2933 = vunpack.c.l.b16 %v2211
      %v2934 = vunpack.c.l.b16 %v2213
      %v2935 = vunpack.c.l.b16 %v2214
      %v2936 = vunpack.c.l.b16 %v2216
      %v2937 = vunpack.c.l.b16 %v2217
      %v2938 = vunpack.c.l.b16 %v2219
      %v2939 = vunpack.c.l.b16 %v2220
      %v2940 = vunpack.c.l.b16 %v2222
      %v2941 = vunpack.c.l.b16 %v2223
      %v2942 = vunpack.c.l.b16 %v2225
      %v2943 = vunpack.c.l.b16 %v2226
      %v2944 = vunpack.c.l.b16 %v2228
      %v2945 = vunpack.c.l.b16 %v2229
      %v2946 = vunpack.c.l.b16 %v2231
      %v2947 = vunpack.c.l.b16 %v2232
      %v2948 = vunpack.c.l.b16 %v2234
      %v2949 = vunpack.c.l.b16 %v2235
      %v2950 = vunpack.c.l.b16 %v2237
      %v2951 = vunpack.c.l.b16 %v2238
      %v2952 = vunpack.c.l.b16 %v2240
      %v2953 = vunpack.c.l.b16 %v2241
      %v2954 = vpack.c.b16 %v2923, %v2922
      %v2955 = vpack.c.b16 %v2925, %v2924
      %v2956 = vpack.c.b16 %v2927, %v2926
      %v2957 = vpack.c.b16 %v2929, %v2928
      %v2958 = vpack.c.b16 %v2931, %v2930
      %v2959 = vpack.c.b16 %v2933, %v2932
      %v2960 = vpack.c.b16 %v2935, %v2934
      %v2961 = vpack.c.b16 %v2937, %v2936
      %v2962 = vpack.c.b16 %v2939, %v2938
      %v2963 = vpack.c.b16 %v2941, %v2940
      %v2964 = vpack.c.b16 %v2943, %v2942
      %v2965 = vpack.c.b16 %v2945, %v2944
      %v2966 = vpack.c.b16 %v2947, %v2946
      %v2967 = vpack.c.b16 %v2949, %v2948
      %v2968 = vpack.c.b16 %v2951, %v2950
      %v2969 = vpack.c.b16 %v2953, %v2952
      %v2971 = vsel %vm991, %v2954, 0
      %v2974 = vsel %vm991, %v2955, 0
      %v2977 = vsel %vm991, %v2956, 0
      %v2980 = vsel %vm991, %v2957, 0
      %v2983 = vsel %vm991, %v2958, 0
      %v2986 = vsel %vm991, %v2959, 0
      %v2989 = vsel %vm991, %v2960, 0
      %v2992 = vsel %vm991, %v2961, 0
      %v2995 = vsel %vm991, %v2962, 0
      %v2998 = vsel %vm991, %v2963, 0
      %v3001 = vsel %vm991, %v2964, 0
      %v3004 = vsel %vm991, %v2965, 0
      %v3007 = vsel %vm991, %v2966, 0
      %v3010 = vsel %vm991, %v2967, 0
      %v3013 = vsel %vm991, %v2968, 0
      %v3016 = vsel %vm991, %v2969, 0
      %v3019 = vsel %vm1040, %v2889, 0
      %3021 = vmatprep.subr.bf16.mxu0 0
      %3022 = vmatpush1.bf16.msra.mxu0 %v3019
      %3023 = vmatprep.subr.bf16.mxu0 0
      %3024 = vmatpush1.bf16.msra.mxu0 0
      %3025 = vmatprep.subr.bf16.mxu0 0
      %3026 = vmatpush1.bf16.msra.mxu0 0
      %3027 = vmatprep.subr.bf16.mxu0 0
      %3028 = vmatpush1.bf16.msra.mxu0 0
      %3029 = vmatprep.subr.bf16.mxu0 0
      %3030 = vmatpush1.bf16.msra.mxu0 0
      %3031 = vmatprep.subr.bf16.mxu0 0
      %3032 = vmatpush1.bf16.msra.mxu0 0
      %3033 = vmatprep.subr.bf16.mxu0 0
      %3034 = vmatpush1.bf16.msra.mxu0 0
      %3035 = vmatprep.subr.bf16.mxu0 0
      %3036 = vmatpush1.bf16.msra.mxu0 0
      %3037 = vmatprep.subr.bf16.mxu0 0
      %3038 = vmatpush1.bf16.msra.mxu0 0
      %3039 = vmatprep.subr.bf16.mxu0 0
      %3040 = vmatpush1.bf16.msra.mxu0 0
      %3041 = vmatprep.subr.bf16.mxu0 0
      %3042 = vmatpush1.bf16.msra.mxu0 0
      %3043 = vmatprep.subr.bf16.mxu0 0
      %3044 = vmatpush1.bf16.msra.mxu0 0
      %3045 = vmatprep.subr.bf16.mxu0 0
      %3046 = vmatpush1.bf16.msra.mxu0 0
      %3047 = vmatprep.subr.bf16.mxu0 0
      %3048 = vmatpush1.bf16.msra.mxu0 0
      %3049 = vmatprep.subr.bf16.mxu0 0
      %3050 = vmatpush1.bf16.msra.mxu0 0
      %3051 = vmatprep.subr.bf16.mxu0 0
      %3052 = vmatpush1.bf16.msra.mxu0 0
      %3053 = vmatprep.mubr.bf16.mxu0 0
      %3054 = vmatmul.mubr.bf16.gmra.mrb[0].mxu0 %v2971
      %v3055 = vpop.f32.mrb[0].mxu0
      %v3056 = vadd.f32 0.0, %v3055
      %v3057 = vpop.f32.mrb[0].mxu0
      %v3058 = vpop.f32.mrb[0].mxu0
      %v3059 = vadd.f32 0.0, %v3058
      %v3060 = vpop.f32.mrb[0].mxu0
      %3061 = vmatprep.mubr.bf16.mxu0 0
      %3062 = vmatmul.mubr.bf16.gmra.mrb[0].mxu0 %v2974
      %v3063 = vpop.f32.mrb[0].mxu0
      %v3064 = vadd.f32 0.0, %v3063
      %v3065 = vpop.f32.mrb[0].mxu0
      %v3066 = vpop.f32.mrb[0].mxu0
      %v3067 = vadd.f32 0.0, %v3066
      %v3068 = vpop.f32.mrb[0].mxu0
      %3069 = vmatprep.mubr.bf16.mxu0 0
      %3070 = vmatmul.mubr.bf16.gmra.mrb[0].mxu0 %v2977
      %v3071 = vpop.f32.mrb[0].mxu0
      %v3072 = vadd.f32 0.0, %v3071
      %v3073 = vpop.f32.mrb[0].mxu0
      %v3074 = vpop.f32.mrb[0].mxu0
      %v3075 = vadd.f32 0.0, %v3074
      %v3076 = vpop.f32.mrb[0].mxu0
      %3077 = vmatprep.mubr.bf16.mxu0 0
      %3078 = vmatmul.mubr.bf16.gmra.mrb[0].mxu0 %v2980
      %v3079 = vpop.f32.mrb[0].mxu0
      %v3080 = vadd.f32 0.0, %v3079
      %v3081 = vpop.f32.mrb[0].mxu0
      %v3082 = vpop.f32.mrb[0].mxu0
      %v3083 = vadd.f32 0.0, %v3082
      %v3084 = vpop.f32.mrb[0].mxu0
      %3085 = vmatprep.mubr.bf16.mxu0 0
      %3086 = vmatmul.mubr.bf16.gmra.mrb[0].mxu0 %v2983
      %v3087 = vpop.f32.mrb[0].mxu0
      %v3088 = vadd.f32 0.0, %v3087
      %v3089 = vpop.f32.mrb[0].mxu0
      %v3090 = vpop.f32.mrb[0].mxu0
      %v3091 = vadd.f32 0.0, %v3090
      %v3092 = vpop.f32.mrb[0].mxu0
      %3093 = vmatprep.mubr.bf16.mxu0 0
      %3094 = vmatmul.mubr.bf16.gmra.mrb[0].mxu0 %v2986
      %v3095 = vpop.f32.mrb[0].mxu0
      %v3096 = vadd.f32 0.0, %v3095
      %v3097 = vpop.f32.mrb[0].mxu0
      %v3098 = vpop.f32.mrb[0].mxu0
      %v3099 = vadd.f32 0.0, %v3098
      %v3100 = vpop.f32.mrb[0].mxu0
      %3101 = vmatprep.mubr.bf16.mxu0 0
      %3102 = vmatmul.mubr.bf16.gmra.mrb[0].mxu0 %v2989
      %v3103 = vpop.f32.mrb[0].mxu0
      %v3104 = vadd.f32 0.0, %v3103
      %v3105 = vpop.f32.mrb[0].mxu0
      %v3106 = vpop.f32.mrb[0].mxu0
      %v3107 = vadd.f32 0.0, %v3106
      %v3108 = vpop.f32.mrb[0].mxu0
      %3109 = vmatprep.mubr.bf16.mxu0 0
      %3110 = vmatmul.mubr.bf16.gmra.mrb[0].mxu0 %v2992
      %v3111 = vpop.f32.mrb[0].mxu0
      %v3112 = vadd.f32 0.0, %v3111
      %v3113 = vpop.f32.mrb[0].mxu0
      %v3114 = vpop.f32.mrb[0].mxu0
      %v3115 = vadd.f32 0.0, %v3114
      %v3116 = vpop.f32.mrb[0].mxu0
      %3117 = vmatprep.mubr.bf16.mxu0 0
      %3118 = vmatmul.mubr.bf16.gmra.mrb[0].mxu0 %v2995
      %v3119 = vpop.f32.mrb[0].mxu0
      %v3120 = vadd.f32 0.0, %v3119
      %v3121 = vpop.f32.mrb[0].mxu0
      %v3122 = vpop.f32.mrb[0].mxu0
      %v3123 = vadd.f32 0.0, %v3122
      %v3124 = vpop.f32.mrb[0].mxu0
      %3125 = vmatprep.mubr.bf16.mxu0 0
      %3126 = vmatmul.mubr.bf16.gmra.mrb[0].mxu0 %v2998
      %v3127 = vpop.f32.mrb[0].mxu0
      %v3128 = vadd.f32 0.0, %v3127
      %v3129 = vpop.f32.mrb[0].mxu0
      %v3130 = vpop.f32.mrb[0].mxu0
      %v3131 = vadd.f32 0.0, %v3130
      %v3132 = vpop.f32.mrb[0].mxu0
      %3133 = vmatprep.mubr.bf16.mxu0 0
      %3134 = vmatmul.mubr.bf16.gmra.mrb[0].mxu0 %v3001
      %v3135 = vpop.f32.mrb[0].mxu0
      %v3136 = vadd.f32 0.0, %v3135
      %v3137 = vpop.f32.mrb[0].mxu0
      %v3138 = vpop.f32.mrb[0].mxu0
      %v3139 = vadd.f32 0.0, %v3138
      %v3140 = vpop.f32.mrb[0].mxu0
      %3141 = vmatprep.mubr.bf16.mxu0 0
      %3142 = vmatmul.mubr.bf16.gmra.mrb[0].mxu0 %v3004
      %v3143 = vpop.f32.mrb[0].mxu0
      %v3144 = vadd.f32 0.0, %v3143
      %v3145 = vpop.f32.mrb[0].mxu0
      %v3146 = vpop.f32.mrb[0].mxu0
      %v3147 = vadd.f32 0.0, %v3146
      %v3148 = vpop.f32.mrb[0].mxu0
      %3149 = vmatprep.mubr.bf16.mxu0 0
      %3150 = vmatmul.mubr.bf16.gmra.mrb[0].mxu0 %v3007
      %v3151 = vpop.f32.mrb[0].mxu0
      %v3152 = vadd.f32 0.0, %v3151
      %v3153 = vpop.f32.mrb[0].mxu0
      %v3154 = vpop.f32.mrb[0].mxu0
      %v3155 = vadd.f32 0.0, %v3154
      %v3156 = vpop.f32.mrb[0].mxu0
      %3157 = vmatprep.mubr.bf16.mxu0 0
      %3158 = vmatmul.mubr.bf16.gmra.mrb[0].mxu0 %v3010
      %v3159 = vpop.f32.mrb[0].mxu0
      %v3160 = vadd.f32 0.0, %v3159
      %v3161 = vpop.f32.mrb[0].mxu0
      %v3162 = vpop.f32.mrb[0].mxu0
      %v3163 = vadd.f32 0.0, %v3162
      %v3164 = vpop.f32.mrb[0].mxu0
      %3165 = vmatprep.mubr.bf16.mxu0 0
      %3166 = vmatmul.mubr.bf16.gmra.mrb[0].mxu0 %v3013
      %v3167 = vpop.f32.mrb[0].mxu0
      %v3168 = vadd.f32 0.0, %v3167
      %v3169 = vpop.f32.mrb[0].mxu0
      %v3170 = vpop.f32.mrb[0].mxu0
      %v3171 = vadd.f32 0.0, %v3170
      %v3172 = vpop.f32.mrb[0].mxu0
      %3173 = vmatprep.mubr.bf16.mxu0 0
      %3174 = vmatmul.mubr.bf16.gmra.mrb[0].mxu0 %v3016
      %v3175 = vpop.f32.mrb[0].mxu0
      %v3176 = vadd.f32 0.0, %v3175
      %v3177 = vpop.f32.mrb[0].mxu0
      %v3178 = vpop.f32.mrb[0].mxu0
      %v3179 = vadd.f32 0.0, %v3178
      %v3180 = vpop.f32.mrb[0].mxu0
      %3181 = vdwg.mxu0
      %v3182 = vadd.f32 %v2856, %v3056
      %v3183 = vadd.f32 %v2857, %v3059
      %v3184 = vadd.f32 %v2858, %v3064
      %v3185 = vadd.f32 %v2859, %v3067
      %v3186 = vadd.f32 %v2860, %v3072
      %v3187 = vadd.f32 %v2861, %v3075
      %v3188 = vadd.f32 %v2862, %v3080
      %v3189 = vadd.f32 %v2863, %v3083
      %v3190 = vadd.f32 %v2864, %v3088
      %v3191 = vadd.f32 %v2865, %v3091
      %v3192 = vadd.f32 %v2866, %v3096
      %v3193 = vadd.f32 %v2867, %v3099
      %v3194 = vadd.f32 %v2868, %v3104
      %v3195 = vadd.f32 %v2869, %v3107
      %v3196 = vadd.f32 %v2870, %v3112
      %v3197 = vadd.f32 %v2871, %v3115
      %v3198 = vadd.f32 %v2872, %v3120
      %v3199 = vadd.f32 %v2873, %v3123
      %v3200 = vadd.f32 %v2874, %v3128
      %v3201 = vadd.f32 %v2875, %v3131
      %v3202 = vadd.f32 %v2876, %v3136
      %v3203 = vadd.f32 %v2877, %v3139
      %v3204 = vadd.f32 %v2878, %v3144
      %v3205 = vadd.f32 %v2879, %v3147
      %v3206 = vadd.f32 %v2880, %v3152
      %v3207 = vadd.f32 %v2881, %v3155
      %v3208 = vadd.f32 %v2882, %v3160
      %v3209 = vadd.f32 %v2883, %v3163
      %v3210 = vadd.f32 %v2884, %v3168
      %v3211 = vadd.f32 %v2885, %v3171
      %v3212 = vadd.f32 %v2886, %v3176
      %v3213 = vadd.f32 %v2887, %v3179
      %v3214 = vld [vmem:[%s473 + $0x8] sm:$0xf]
      %v3215 = vld [vmem:[%s473 + $0xc] sm:$0xf]
      %v3216 = vld [vmem:[%s473 + $0x10] sm:$0x1]
      %v3217 = vld [vmem:[%s473 + $0x1c] sm:$0xf]
      %v3218 = vld [vmem:[%s473 + $0x20] sm:$0xf]
      %v3219 = vld [vmem:[%s473 + $0x24] sm:$0x1]
      %v3220 = vld [vmem:[%s473 + $0x30] sm:$0xf]
      %v3221 = vld [vmem:[%s473 + $0x34] sm:$0xf]
      %v3222 = vld [vmem:[%s473 + $0x38] sm:$0x1]
      %v3223 = vld [vmem:[%s473 + $0x44] sm:$0xf]
      %v3224 = vld [vmem:[%s473 + $0x48] sm:$0xf]
      %v3225 = vld [vmem:[%s473 + $0x4c] sm:$0x1]
      %v3226 = vld [vmem:[%s473 + $0x58] sm:$0xf]
      %v3227 = vld [vmem:[%s473 + $0x5c] sm:$0xf]
      %v3228 = vld [vmem:[%s473 + $0x60] sm:$0x1]
      %v3229 = vld [vmem:[%s473 + $0x6c] sm:$0xf]
      %v3230 = vld [vmem:[%s473 + $0x70] sm:$0xf]
      %v3231 = vld [vmem:[%s473 + $0x74] sm:$0x1]
      %v3232 = vld [vmem:[%s473 + $0x80] sm:$0xf]
      %v3233 = vld [vmem:[%s473 + $0x84] sm:$0xf]
      %v3234 = vld [vmem:[%s473 + $0x88] sm:$0x1]
      %v3235 = vld [vmem:[%s473 + $0x94] sm:$0xf]
      %v3236 = vld [vmem:[%s473 + $0x98] sm:$0xf]
      %v3237 = vld [vmem:[%s473 + $0x9c] sm:$0x1]
      %v3238 = vld [vmem:[%s473 + $0xa8] sm:$0xf]
      %v3239 = vld [vmem:[%s473 + $0xac] sm:$0xf]
      %v3240 = vld [vmem:[%s473 + $0xb0] sm:$0x1]
      %v3241 = vld [vmem:[%s473 + $0xbc] sm:$0xf]
      %v3242 = vld [vmem:[%s473 + $0xc0] sm:$0xf]
      %v3243 = vld [vmem:[%s473 + $0xc4] sm:$0x1]
      %v3244 = vld [vmem:[%s473 + $0xd0] sm:$0xf]
      %v3245 = vld [vmem:[%s473 + $0xd4] sm:$0xf]
      %v3246 = vld [vmem:[%s473 + $0xd8] sm:$0x1]
      %v3247 = vld [vmem:[%s473 + $0xe4] sm:$0xf]
      %v3248 = vld [vmem:[%s473 + $0xe8] sm:$0xf]
      %v3249 = vld [vmem:[%s473 + $0xec] sm:$0x1]
      %v3250 = vld [vmem:[%s473 + $0xf8] sm:$0xf]
      %v3251 = vld [vmem:[%s473 + $0xfc] sm:$0xf]
      %v3252 = vld [vmem:[%s473 + $0x100] sm:$0x1]
      %v3253 = vld [vmem:[%s473 + $0x10c] sm:$0xf]
      %v3254 = vld [vmem:[%s473 + $0x110] sm:$0xf]
      %v3255 = vld [vmem:[%s473 + $0x114] sm:$0x1]
      %v3256 = vld [vmem:[%s473 + $0x120] sm:$0xf]
      %v3257 = vld [vmem:[%s473 + $0x124] sm:$0xf]
      %v3258 = vld [vmem:[%s473 + $0x128] sm:$0x1]
      %v3259 = vld [vmem:[%s473 + $0x134] sm:$0xf]
      %v3260 = vld [vmem:[%s473 + $0x138] sm:$0xf]
      %v3261 = vld [vmem:[%s473 + $0x13c] sm:$0x1]
      %v3263 = vshrl.u32 %v3214, 16
      %v3265 = vrot.slane %v3263, 4
      %v3266 = vshll.u32 %v3214, 16
      %v3268 = vrot.slane %v3266, 5
      %v3269 = vor.u32 %v3265, %v3268
      %v3270 = vrot.slane %v3269, 4
      %v3272 = vshll.u32 %v3215, 16
      %v3274 = vrot.slane %v3272, 5
      %v3275 = vsel %vm1515, %v3270, %v3274
      %v3276 = vshrl.u32 %v3215, 16
      %v3278 = vrot.slane %v3276, 4
      %v3279 = vor.u32 %v3278, %v3274
      %v3280 = vrot.slane %v3279, 4
      %v3282 = vshll.u32 %v3216, 16
      %v3284 = vrot.slane %v3282, 5
      %v3285 = vsel %vm1515, %v3280, %v3284
      %v3287 = vshrl.u32 %v3217, 16
      %v3289 = vrot.slane %v3287, 4
      %v3290 = vshll.u32 %v3217, 16
      %v3292 = vrot.slane %v3290, 5
      %v3293 = vor.u32 %v3289, %v3292
      %v3294 = vrot.slane %v3293, 4
      %v3296 = vshll.u32 %v3218, 16
      %v3298 = vrot.slane %v3296, 5
      %v3299 = vsel %vm1515, %v3294, %v3298
      %v3300 = vshrl.u32 %v3218, 16
      %v3302 = vrot.slane %v3300, 4
      %v3303 = vor.u32 %v3302, %v3298
      %v3304 = vrot.slane %v3303, 4
      %v3306 = vshll.u32 %v3219, 16
      %v3308 = vrot.slane %v3306, 5
      %v3309 = vsel %vm1515, %v3304, %v3308
      %v3311 = vshrl.u32 %v3220, 16
      %v3313 = vrot.slane %v3311, 4
      %v3314 = vshll.u32 %v3220, 16
      %v3316 = vrot.slane %v3314, 5
      %v3317 = vor.u32 %v3313, %v3316
      %v3318 = vrot.slane %v3317, 4
      %v3320 = vshll.u32 %v3221, 16
      %v3322 = vrot.slane %v3320, 5
      %v3323 = vsel %vm1515, %v3318, %v3322
      %v3324 = vshrl.u32 %v3221, 16
      %v3326 = vrot.slane %v3324, 4
      %v3327 = vor.u32 %v3326, %v3322
      %v3328 = vrot.slane %v3327, 4
      %v3330 = vshll.u32 %v3222, 16
      %v3332 = vrot.slane %v3330, 5
      %v3333 = vsel %vm1515, %v3328, %v3332
      %v3335 = vshrl.u32 %v3223, 16
      %v3337 = vrot.slane %v3335, 4
      %v3338 = vshll.u32 %v3223, 16
      %v3340 = vrot.slane %v3338, 5
      %v3341 = vor.u32 %v3337, %v3340
      %v3342 = vrot.slane %v3341, 4
      %v3344 = vshll.u32 %v3224, 16
      %v3346 = vrot.slane %v3344, 5
      %v3347 = vsel %vm1515, %v3342, %v3346
      %v3348 = vshrl.u32 %v3224, 16
      %v3350 = vrot.slane %v3348, 4
      %v3351 = vor.u32 %v3350, %v3346
      %v3352 = vrot.slane %v3351, 4
      %v3354 = vshll.u32 %v3225, 16
      %v3356 = vrot.slane %v3354, 5
      %v3357 = vsel %vm1515, %v3352, %v3356
      %v3359 = vshrl.u32 %v3226, 16
      %v3361 = vrot.slane %v3359, 4
      %v3362 = vshll.u32 %v3226, 16
      %v3364 = vrot.slane %v3362, 5
      %v3365 = vor.u32 %v3361, %v3364
      %v3366 = vrot.slane %v3365, 4
      %v3368 = vshll.u32 %v3227, 16
      %v3370 = vrot.slane %v3368, 5
      %v3371 = vsel %vm1515, %v3366, %v3370
      %v3372 = vshrl.u32 %v3227, 16
      %v3374 = vrot.slane %v3372, 4
      %v3375 = vor.u32 %v3374, %v3370
      %v3376 = vrot.slane %v3375, 4
      %v3378 = vshll.u32 %v3228, 16
      %v3380 = vrot.slane %v3378, 5
      %v3381 = vsel %vm1515, %v3376, %v3380
      %v3383 = vshrl.u32 %v3229, 16
      %v3385 = vrot.slane %v3383, 4
      %v3386 = vshll.u32 %v3229, 16
      %v3388 = vrot.slane %v3386, 5
      %v3389 = vor.u32 %v3385, %v3388
      %v3390 = vrot.slane %v3389, 4
      %v3392 = vshll.u32 %v3230, 16
      %v3394 = vrot.slane %v3392, 5
      %v3395 = vsel %vm1515, %v3390, %v3394
      %v3396 = vshrl.u32 %v3230, 16
      %v3398 = vrot.slane %v3396, 4
      %v3399 = vor.u32 %v3398, %v3394
      %v3400 = vrot.slane %v3399, 4
      %v3402 = vshll.u32 %v3231, 16
      %v3404 = vrot.slane %v3402, 5
      %v3405 = vsel %vm1515, %v3400, %v3404
      %v3407 = vshrl.u32 %v3232, 16
      %v3409 = vrot.slane %v3407, 4
      %v3410 = vshll.u32 %v3232, 16
      %v3412 = vrot.slane %v3410, 5
      %v3413 = vor.u32 %v3409, %v3412
      %v3414 = vrot.slane %v3413, 4
      %v3416 = vshll.u32 %v3233, 16
      %v3418 = vrot.slane %v3416, 5
      %v3419 = vsel %vm1515, %v3414, %v3418
      %v3420 = vshrl.u32 %v3233, 16
      %v3422 = vrot.slane %v3420, 4
      %v3423 = vor.u32 %v3422, %v3418
      %v3424 = vrot.slane %v3423, 4
      %v3426 = vshll.u32 %v3234, 16
      %v3428 = vrot.slane %v3426, 5
      %v3429 = vsel %vm1515, %v3424, %v3428
      %v3431 = vshrl.u32 %v3235, 16
      %v3433 = vrot.slane %v3431, 4
      %v3434 = vshll.u32 %v3235, 16
      %v3436 = vrot.slane %v3434, 5
      %v3437 = vor.u32 %v3433, %v3436
      %v3438 = vrot.slane %v3437, 4
      %v3440 = vshll.u32 %v3236, 16
      %v3442 = vrot.slane %v3440, 5
      %v3443 = vsel %vm1515, %v3438, %v3442
      %v3444 = vshrl.u32 %v3236, 16
      %v3446 = vrot.slane %v3444, 4
      %v3447 = vor.u32 %v3446, %v3442
      %v3448 = vrot.slane %v3447, 4
      %v3450 = vshll.u32 %v3237, 16
      %v3452 = vrot.slane %v3450, 5
      %v3453 = vsel %vm1515, %v3448, %v3452
      %v3455 = vshrl.u32 %v3238, 16
      %v3457 = vrot.slane %v3455, 4
      %v3458 = vshll.u32 %v3238, 16
      %v3460 = vrot.slane %v3458, 5
      %v3461 = vor.u32 %v3457, %v3460
      %v3462 = vrot.slane %v3461, 4
      %v3464 = vshll.u32 %v3239, 16
      %v3466 = vrot.slane %v3464, 5
      %v3467 = vsel %vm1515, %v3462, %v3466
      %v3468 = vshrl.u32 %v3239, 16
      %v3470 = vrot.slane %v3468, 4
      %v3471 = vor.u32 %v3470, %v3466
      %v3472 = vrot.slane %v3471, 4
      %v3474 = vshll.u32 %v3240, 16
      %v3476 = vrot.slane %v3474, 5
      %v3477 = vsel %vm1515, %v3472, %v3476
      %v3479 = vshrl.u32 %v3241, 16
      %v3481 = vrot.slane %v3479, 4
      %v3482 = vshll.u32 %v3241, 16
      %v3484 = vrot.slane %v3482, 5
      %v3485 = vor.u32 %v3481, %v3484
      %v3486 = vrot.slane %v3485, 4
      %v3488 = vshll.u32 %v3242, 16
      %v3490 = vrot.slane %v3488, 5
      %v3491 = vsel %vm1515, %v3486, %v3490
      %v3492 = vshrl.u32 %v3242, 16
      %v3494 = vrot.slane %v3492, 4
      %v3495 = vor.u32 %v3494, %v3490
      %v3496 = vrot.slane %v3495, 4
      %v3498 = vshll.u32 %v3243, 16
      %v3500 = vrot.slane %v3498, 5
      %v3501 = vsel %vm1515, %v3496, %v3500
      %v3503 = vshrl.u32 %v3244, 16
      %v3505 = vrot.slane %v3503, 4
      %v3506 = vshll.u32 %v3244, 16
      %v3508 = vrot.slane %v3506, 5
      %v3509 = vor.u32 %v3505, %v3508
      %v3510 = vrot.slane %v3509, 4
      %v3512 = vshll.u32 %v3245, 16
      %v3514 = vrot.slane %v3512, 5
      %v3515 = vsel %vm1515, %v3510, %v3514
      %v3516 = vshrl.u32 %v3245, 16
      %v3518 = vrot.slane %v3516, 4
      %v3519 = vor.u32 %v3518, %v3514
      %v3520 = vrot.slane %v3519, 4
      %v3522 = vshll.u32 %v3246, 16
      %v3524 = vrot.slane %v3522, 5
      %v3525 = vsel %vm1515, %v3520, %v3524
      %v3527 = vshrl.u32 %v3247, 16
      %v3529 = vrot.slane %v3527, 4
      %v3530 = vshll.u32 %v3247, 16
      %v3532 = vrot.slane %v3530, 5
      %v3533 = vor.u32 %v3529, %v3532
      %v3534 = vrot.slane %v3533, 4
      %v3536 = vshll.u32 %v3248, 16
      %v3538 = vrot.slane %v3536, 5
      %v3539 = vsel %vm1515, %v3534, %v3538
      %v3540 = vshrl.u32 %v3248, 16
      %v3542 = vrot.slane %v3540, 4
      %v3543 = vor.u32 %v3542, %v3538
      %v3544 = vrot.slane %v3543, 4
      %v3546 = vshll.u32 %v3249, 16
      %v3548 = vrot.slane %v3546, 5
      %v3549 = vsel %vm1515, %v3544, %v3548
      %v3551 = vshrl.u32 %v3250, 16
      %v3553 = vrot.slane %v3551, 4
      %v3554 = vshll.u32 %v3250, 16
      %v3556 = vrot.slane %v3554, 5
      %v3557 = vor.u32 %v3553, %v3556
      %v3558 = vrot.slane %v3557, 4
      %v3560 = vshll.u32 %v3251, 16
      %v3562 = vrot.slane %v3560, 5
      %v3563 = vsel %vm1515, %v3558, %v3562
      %v3564 = vshrl.u32 %v3251, 16
      %v3566 = vrot.slane %v3564, 4
      %v3567 = vor.u32 %v3566, %v3562
      %v3568 = vrot.slane %v3567, 4
      %v3570 = vshll.u32 %v3252, 16
      %v3572 = vrot.slane %v3570, 5
      %v3573 = vsel %vm1515, %v3568, %v3572
      %v3575 = vshrl.u32 %v3253, 16
      %v3577 = vrot.slane %v3575, 4
      %v3578 = vshll.u32 %v3253, 16
      %v3580 = vrot.slane %v3578, 5
      %v3581 = vor.u32 %v3577, %v3580
      %v3582 = vrot.slane %v3581, 4
      %v3584 = vshll.u32 %v3254, 16
      %v3586 = vrot.slane %v3584, 5
      %v3587 = vsel %vm1515, %v3582, %v3586
      %v3588 = vshrl.u32 %v3254, 16
      %v3590 = vrot.slane %v3588, 4
      %v3591 = vor.u32 %v3590, %v3586
      %v3592 = vrot.slane %v3591, 4
      %v3594 = vshll.u32 %v3255, 16
      %v3596 = vrot.slane %v3594, 5
      %v3597 = vsel %vm1515, %v3592, %v3596
      %v3599 = vshrl.u32 %v3256, 16
      %v3601 = vrot.slane %v3599, 4
      %v3602 = vshll.u32 %v3256, 16
      %v3604 = vrot.slane %v3602, 5
      %v3605 = vor.u32 %v3601, %v3604
      %v3606 = vrot.slane %v3605, 4
      %v3608 = vshll.u32 %v3257, 16
      %v3610 = vrot.slane %v3608, 5
      %v3611 = vsel %vm1515, %v3606, %v3610
      %v3612 = vshrl.u32 %v3257, 16
      %v3614 = vrot.slane %v3612, 4
      %v3615 = vor.u32 %v3614, %v3610
      %v3616 = vrot.slane %v3615, 4
      %v3618 = vshll.u32 %v3258, 16
      %v3620 = vrot.slane %v3618, 5
      %v3621 = vsel %vm1515, %v3616, %v3620
      %v3623 = vshrl.u32 %v3259, 16
      %v3625 = vrot.slane %v3623, 4
      %v3626 = vshll.u32 %v3259, 16
      %v3628 = vrot.slane %v3626, 5
      %v3629 = vor.u32 %v3625, %v3628
      %v3630 = vrot.slane %v3629, 4
      %v3632 = vshll.u32 %v3260, 16
      %v3634 = vrot.slane %v3632, 5
      %v3635 = vsel %vm1515, %v3630, %v3634
      %v3636 = vshrl.u32 %v3260, 16
      %v3638 = vrot.slane %v3636, 4
      %v3639 = vor.u32 %v3638, %v3634
      %v3640 = vrot.slane %v3639, 4
      %v3642 = vshll.u32 %v3261, 16
      %v3644 = vrot.slane %v3642, 5
      %v3645 = vsel %vm1515, %v3640, %v3644
      %s3646 = scalar_lea.vmem %s1, 20
      %v3647 = vld [vmem:[%s3646] sm:$0xf]
      %v3648 = vunpack.c.l.b16 %v3275
      %v3649 = vunpack.c.l.b16 %v3285
      %v3650 = vunpack.c.l.b16 %v3299
      %v3651 = vunpack.c.l.b16 %v3309
      %v3652 = vunpack.c.l.b16 %v3323
      %v3653 = vunpack.c.l.b16 %v3333
      %v3654 = vunpack.c.l.b16 %v3347
      %v3655 = vunpack.c.l.b16 %v3357
      %v3656 = vunpack.c.l.b16 %v3371
      %v3657 = vunpack.c.l.b16 %v3381
      %v3658 = vunpack.c.l.b16 %v3395
      %v3659 = vunpack.c.l.b16 %v3405
      %v3660 = vunpack.c.l.b16 %v3419
      %v3661 = vunpack.c.l.b16 %v3429
      %v3662 = vunpack.c.l.b16 %v3443
      %v3663 = vunpack.c.l.b16 %v3453
      %v3664 = vunpack.c.l.b16 %v3467
      %v3665 = vunpack.c.l.b16 %v3477
      %v3666 = vunpack.c.l.b16 %v3491
      %v3667 = vunpack.c.l.b16 %v3501
      %v3668 = vunpack.c.l.b16 %v3515
      %v3669 = vunpack.c.l.b16 %v3525
      %v3670 = vunpack.c.l.b16 %v3539
      %v3671 = vunpack.c.l.b16 %v3549
      %v3672 = vunpack.c.l.b16 %v3563
      %v3673 = vunpack.c.l.b16 %v3573
      %v3674 = vunpack.c.l.b16 %v3587
      %v3675 = vunpack.c.l.b16 %v3597
      %v3676 = vunpack.c.l.b16 %v3611
      %v3677 = vunpack.c.l.b16 %v3621
      %v3678 = vunpack.c.l.b16 %v3635
      %v3679 = vunpack.c.l.b16 %v3645
      %v3680 = vpack.c.b16 %v3649, %v3648
      %v3681 = vpack.c.b16 %v3651, %v3650
      %v3682 = vpack.c.b16 %v3653, %v3652
      %v3683 = vpack.c.b16 %v3655, %v3654
      %v3684 = vpack.c.b16 %v3657, %v3656
      %v3685 = vpack.c.b16 %v3659, %v3658
      %v3686 = vpack.c.b16 %v3661, %v3660
      %v3687 = vpack.c.b16 %v3663, %v3662
      %v3688 = vpack.c.b16 %v3665, %v3664
      %v3689 = vpack.c.b16 %v3667, %v3666
      %v3690 = vpack.c.b16 %v3669, %v3668
      %v3691 = vpack.c.b16 %v3671, %v3670
      %v3692 = vpack.c.b16 %v3673, %v3672
      %v3693 = vpack.c.b16 %v3675, %v3674
      %v3694 = vpack.c.b16 %v3677, %v3676
      %v3695 = vpack.c.b16 %v3679, %v3678
      %v3697 = vsel %vm991, %v3680, 0
      %v3700 = vsel %vm991, %v3681, 0
      %v3703 = vsel %vm991, %v3682, 0
      %v3706 = vsel %vm991, %v3683, 0
      %v3709 = vsel %vm991, %v3684, 0
      %v3712 = vsel %vm991, %v3685, 0
      %v3715 = vsel %vm991, %v3686, 0
      %v3718 = vsel %vm991, %v3687, 0
      %v3721 = vsel %vm991, %v3688, 0
      %v3724 = vsel %vm991, %v3689, 0
      %v3727 = vsel %vm991, %v3690, 0
      %v3730 = vsel %vm991, %v3691, 0
      %v3733 = vsel %vm991, %v3692, 0
      %v3736 = vsel %vm991, %v3693, 0
      %v3739 = vsel %vm991, %v3694, 0
      %v3742 = vsel %vm991, %v3695, 0
      %v3745 = vsel %vm1040, %v3647, 0
      %3747 = vmatprep.subr.bf16.mxu0 0
      %3748 = vmatpush1.bf16.msra.mxu0 %v3745
      %3749 = vmatprep.subr.bf16.mxu0 0
      %3750 = vmatpush1.bf16.msra.mxu0 0
      %3751 = vmatprep.subr.bf16.mxu0 0
      %3752 = vmatpush1.bf16.msra.mxu0 0
      %3753 = vmatprep.subr.bf16.mxu0 0
      %3754 = vmatpush1.bf16.msra.mxu0 0
      %3755 = vmatprep.subr.bf16.mxu0 0
      %3756 = vmatpush1.bf16.msra.mxu0 0
      %3757 = vmatprep.subr.bf16.mxu0 0
      %3758 = vmatpush1.bf16.msra.mxu0 0
      %3759 = vmatprep.subr.bf16.mxu0 0
      %3760 = vmatpush1.bf16.msra.mxu0 0
      %3761 = vmatprep.subr.bf16.mxu0 0
      %3762 = vmatpush1.bf16.msra.mxu0 0
      %3763 = vmatprep.subr.bf16.mxu0 0
      %3764 = vmatpush1.bf16.msra.mxu0 0
      %3765 = vmatprep.subr.bf16.mxu0 0
      %3766 = vmatpush1.bf16.msra.mxu0 0
      %3767 = vmatprep.subr.bf16.mxu0 0
      %3768 = vmatpush1.bf16.msra.mxu0 0
      %3769 = vmatprep.subr.bf16.mxu0 0
      %3770 = vmatpush1.bf16.msra.mxu0 0
      %3771 = vmatprep.subr.bf16.mxu0 0
      %3772 = vmatpush1.bf16.msra.mxu0 0
      %3773 = vmatprep.subr.bf16.mxu0 0
      %3774 = vmatpush1.bf16.msra.mxu0 0
      %3775 = vmatprep.subr.bf16.mxu0 0
      %3776 = vmatpush1.bf16.msra.mxu0 0
      %3777 = vmatprep.subr.bf16.mxu0 0
      %3778 = vmatpush1.bf16.msra.mxu0 0
      %3779 = vmatprep.mubr.bf16.mxu0 0
      %3780 = vmatmul.mubr.bf16.gmra.mrb[0].mxu0 %v3697
      %v3781 = vpop.f32.mrb[0].mxu0
      %v3782 = vadd.f32 0.0, %v3781
      %v3783 = vpop.f32.mrb[0].mxu0
      %v3784 = vpop.f32.mrb[0].mxu0
      %v3785 = vadd.f32 0.0, %v3784
      %v3786 = vpop.f32.mrb[0].mxu0
      %3787 = vmatprep.mubr.bf16.mxu0 0
      %3788 = vmatmul.mubr.bf16.gmra.mrb[0].mxu0 %v3700
      %v3789 = vpop.f32.mrb[0].mxu0
      %v3790 = vadd.f32 0.0, %v3789
      %v3791 = vpop.f32.mrb[0].mxu0
      %v3792 = vpop.f32.mrb[0].mxu0
      %v3793 = vadd.f32 0.0, %v3792
      %v3794 = vpop.f32.mrb[0].mxu0
      %3795 = vmatprep.mubr.bf16.mxu0 0
      %3796 = vmatmul.mubr.bf16.gmra.mrb[0].mxu0 %v3703
      %v3797 = vpop.f32.mrb[0].mxu0
      %v3798 = vadd.f32 0.0, %v3797
      %v3799 = vpop.f32.mrb[0].mxu0
      %v3800 = vpop.f32.mrb[0].mxu0
      %v3801 = vadd.f32 0.0, %v3800
      %v3802 = vpop.f32.mrb[0].mxu0
      %3803 = vmatprep.mubr.bf16.mxu0 0
      %3804 = vmatmul.mubr.bf16.gmra.mrb[0].mxu0 %v3706
      %v3805 = vpop.f32.mrb[0].mxu0
      %v3806 = vadd.f32 0.0, %v3805
      %v3807 = vpop.f32.mrb[0].mxu0
      %v3808 = vpop.f32.mrb[0].mxu0
      %v3809 = vadd.f32 0.0, %v3808
      %v3810 = vpop.f32.mrb[0].mxu0
      %3811 = vmatprep.mubr.bf16.mxu0 0
      %3812 = vmatmul.mubr.bf16.gmra.mrb[0].mxu0 %v3709
      %v3813 = vpop.f32.mrb[0].mxu0
      %v3814 = vadd.f32 0.0, %v3813
      %v3815 = vpop.f32.mrb[0].mxu0
      %v3816 = vpop.f32.mrb[0].mxu0
      %v3817 = vadd.f32 0.0, %v3816
      %v3818 = vpop.f32.mrb[0].mxu0
      %3819 = vmatprep.mubr.bf16.mxu0 0
      %3820 = vmatmul.mubr.bf16.gmra.mrb[0].mxu0 %v3712
      %v3821 = vpop.f32.mrb[0].mxu0
      %v3822 = vadd.f32 0.0, %v3821
      %v3823 = vpop.f32.mrb[0].mxu0
      %v3824 = vpop.f32.mrb[0].mxu0
      %v3825 = vadd.f32 0.0, %v3824
      %v3826 = vpop.f32.mrb[0].mxu0
      %3827 = vmatprep.mubr.bf16.mxu0 0
      %3828 = vmatmul.mubr.bf16.gmra.mrb[0].mxu0 %v3715
      %v3829 = vpop.f32.mrb[0].mxu0
      %v3830 = vadd.f32 0.0, %v3829
      %v3831 = vpop.f32.mrb[0].mxu0
      %v3832 = vpop.f32.mrb[0].mxu0
      %v3833 = vadd.f32 0.0, %v3832
      %v3834 = vpop.f32.mrb[0].mxu0
      %3835 = vmatprep.mubr.bf16.mxu0 0
      %3836 = vmatmul.mubr.bf16.gmra.mrb[0].mxu0 %v3718
      %v3837 = vpop.f32.mrb[0].mxu0
      %v3838 = vadd.f32 0.0, %v3837
      %v3839 = vpop.f32.mrb[0].mxu0
      %v3840 = vpop.f32.mrb[0].mxu0
      %v3841 = vadd.f32 0.0, %v3840
      %v3842 = vpop.f32.mrb[0].mxu0
      %3843 = vmatprep.mubr.bf16.mxu0 0
      %3844 = vmatmul.mubr.bf16.gmra.mrb[0].mxu0 %v3721
      %v3845 = vpop.f32.mrb[0].mxu0
      %v3846 = vadd.f32 0.0, %v3845
      %v3847 = vpop.f32.mrb[0].mxu0
      %v3848 = vpop.f32.mrb[0].mxu0
      %v3849 = vadd.f32 0.0, %v3848
      %v3850 = vpop.f32.mrb[0].mxu0
      %3851 = vmatprep.mubr.bf16.mxu0 0
      %3852 = vmatmul.mubr.bf16.gmra.mrb[0].mxu0 %v3724
      %v3853 = vpop.f32.mrb[0].mxu0
      %v3854 = vadd.f32 0.0, %v3853
      %v3855 = vpop.f32.mrb[0].mxu0
      %v3856 = vpop.f32.mrb[0].mxu0
      %v3857 = vadd.f32 0.0, %v3856
      %v3858 = vpop.f32.mrb[0].mxu0
      %3859 = vmatprep.mubr.bf16.mxu0 0
      %3860 = vmatmul.mubr.bf16.gmra.mrb[0].mxu0 %v3727
      %v3861 = vpop.f32.mrb[0].mxu0
      %v3862 = vadd.f32 0.0, %v3861
      %v3863 = vpop.f32.mrb[0].mxu0
      %v3864 = vpop.f32.mrb[0].mxu0
      %v3865 = vadd.f32 0.0, %v3864
      %v3866 = vpop.f32.mrb[0].mxu0
      %3867 = vmatprep.mubr.bf16.mxu0 0
      %3868 = vmatmul.mubr.bf16.gmra.mrb[0].mxu0 %v3730
      %v3869 = vpop.f32.mrb[0].mxu0
      %v3870 = vadd.f32 0.0, %v3869
      %v3871 = vpop.f32.mrb[0].mxu0
      %v3872 = vpop.f32.mrb[0].mxu0
      %v3873 = vadd.f32 0.0, %v3872
      %v3874 = vpop.f32.mrb[0].mxu0
      %3875 = vmatprep.mubr.bf16.mxu0 0
      %3876 = vmatmul.mubr.bf16.gmra.mrb[0].mxu0 %v3733
      %v3877 = vpop.f32.mrb[0].mxu0
      %v3878 = vadd.f32 0.0, %v3877
      %v3879 = vpop.f32.mrb[0].mxu0
      %v3880 = vpop.f32.mrb[0].mxu0
      %v3881 = vadd.f32 0.0, %v3880
      %v3882 = vpop.f32.mrb[0].mxu0
      %3883 = vmatprep.mubr.bf16.mxu0 0
      %3884 = vmatmul.mubr.bf16.gmra.mrb[0].mxu0 %v3736
      %v3885 = vpop.f32.mrb[0].mxu0
      %v3886 = vadd.f32 0.0, %v3885
      %v3887 = vpop.f32.mrb[0].mxu0
      %v3888 = vpop.f32.mrb[0].mxu0
      %v3889 = vadd.f32 0.0, %v3888
      %v3890 = vpop.f32.mrb[0].mxu0
      %3891 = vmatprep.mubr.bf16.mxu0 0
      %3892 = vmatmul.mubr.bf16.gmra.mrb[0].mxu0 %v3739
      %v3893 = vpop.f32.mrb[0].mxu0
      %v3894 = vadd.f32 0.0, %v3893
      %v3895 = vpop.f32.mrb[0].mxu0
      %v3896 = vpop.f32.mrb[0].mxu0
      %v3897 = vadd.f32 0.0, %v3896
      %v3898 = vpop.f32.mrb[0].mxu0
      %3899 = vmatprep.mubr.bf16.mxu0 0
      %3900 = vmatmul.mubr.bf16.gmra.mrb[0].mxu0 %v3742
      %v3901 = vpop.f32.mrb[0].mxu0
      %v3902 = vadd.f32 0.0, %v3901
      %v3903 = vpop.f32.mrb[0].mxu0
      %v3904 = vpop.f32.mrb[0].mxu0
      %v3905 = vadd.f32 0.0, %v3904
      %v3906 = vpop.f32.mrb[0].mxu0
      %3907 = vdwg.mxu0
      %v3908 = vadd.f32 %v3182, %v3782
      %v3909 = vadd.f32 %v3183, %v3785
      %v3910 = vadd.f32 %v3184, %v3790
      %v3911 = vadd.f32 %v3185, %v3793
      %v3912 = vadd.f32 %v3186, %v3798
      %v3913 = vadd.f32 %v3187, %v3801
      %v3914 = vadd.f32 %v3188, %v3806
      %v3915 = vadd.f32 %v3189, %v3809
      %v3916 = vadd.f32 %v3190, %v3814
      %v3917 = vadd.f32 %v3191, %v3817
      %v3918 = vadd.f32 %v3192, %v3822
      %v3919 = vadd.f32 %v3193, %v3825
      %v3920 = vadd.f32 %v3194, %v3830
      %v3921 = vadd.f32 %v3195, %v3833
      %v3922 = vadd.f32 %v3196, %v3838
      %v3923 = vadd.f32 %v3197, %v3841
      %v3924 = vadd.f32 %v3198, %v3846
      %v3925 = vadd.f32 %v3199, %v3849
      %v3926 = vadd.f32 %v3200, %v3854
      %v3927 = vadd.f32 %v3201, %v3857
      %v3928 = vadd.f32 %v3202, %v3862
      %v3929 = vadd.f32 %v3203, %v3865
      %v3930 = vadd.f32 %v3204, %v3870
      %v3931 = vadd.f32 %v3205, %v3873
      %v3932 = vadd.f32 %v3206, %v3878
      %v3933 = vadd.f32 %v3207, %v3881
      %v3934 = vadd.f32 %v3208, %v3886
      %v3935 = vadd.f32 %v3209, %v3889
      %v3936 = vadd.f32 %v3210, %v3894
      %v3937 = vadd.f32 %v3211, %v3897
      %v3938 = vadd.f32 %v3212, %v3902
      %v3939 = vadd.f32 %v3213, %v3905
      %s3940 = scalar_lea.vmem [#allocation2], 40
      %v3941 = vld [vmem:[%s3940 + $0x4] sm:$0x8]
      %v3942 = vld [vmem:[%s3940 + $0x8] sm:$0xf]
      %v3943 = vld [vmem:[%s3940 + $0xc] sm:$0xf]
      %v3944 = vld [vmem:[%s3940 + $0x18] sm:$0x8]
      %v3945 = vld [vmem:[%s3940 + $0x1c] sm:$0xf]
      %v3946 = vld [vmem:[%s3940 + $0x20] sm:$0xf]
      %v3947 = vld [vmem:[%s3940 + $0x2c] sm:$0x8]
      %v3948 = vld [vmem:[%s3940 + $0x30] sm:$0xf]
      %v3949 = vld [vmem:[%s3940 + $0x34] sm:$0xf]
      %v3950 = vld [vmem:[%s3940 + $0x40] sm:$0x8]
      %v3951 = vld [vmem:[%s3940 + $0x44] sm:$0xf]
      %v3952 = vld [vmem:[%s3940 + $0x48] sm:$0xf]
      %v3953 = vld [vmem:[%s3940 + $0x54] sm:$0x8]
      %v3954 = vld [vmem:[%s3940 + $0x58] sm:$0xf]
      %v3955 = vld [vmem:[%s3940 + $0x5c] sm:$0xf]
      %v3956 = vld [vmem:[%s3940 + $0x68] sm:$0x8]
      %v3957 = vld [vmem:[%s3940 + $0x6c] sm:$0xf]
      %v3958 = vld [vmem:[%s3940 + $0x70] sm:$0xf]
      %v3959 = vld [vmem:[%s3940 + $0x7c] sm:$0x8]
      %v3960 = vld [vmem:[%s3940 + $0x80] sm:$0xf]
      %v3961 = vld [vmem:[%s3940 + $0x84] sm:$0xf]
      %v3962 = vld [vmem:[%s3940 + $0x90] sm:$0x8]
      %v3963 = vld [vmem:[%s3940 + $0x94] sm:$0xf]
      %v3964 = vld [vmem:[%s3940 + $0x98] sm:$0xf]
      %v3965 = vld [vmem:[%s3940 + $0xa4] sm:$0x8]
      %v3966 = vld [vmem:[%s3940 + $0xa8] sm:$0xf]
      %v3967 = vld [vmem:[%s3940 + $0xac] sm:$0xf]
      %v3968 = vld [vmem:[%s3940 + $0xb8] sm:$0x8]
      %v3969 = vld [vmem:[%s3940 + $0xbc] sm:$0xf]
      %v3970 = vld [vmem:[%s3940 + $0xc0] sm:$0xf]
      %v3971 = vld [vmem:[%s3940 + $0xcc] sm:$0x8]
      %v3972 = vld [vmem:[%s3940 + $0xd0] sm:$0xf]
      %v3973 = vld [vmem:[%s3940 + $0xd4] sm:$0xf]
      %v3974 = vld [vmem:[%s3940 + $0xe0] sm:$0x8]
      %v3975 = vld [vmem:[%s3940 + $0xe4] sm:$0xf]
      %v3976 = vld [vmem:[%s3940 + $0xe8] sm:$0xf]
      %v3977 = vld [vmem:[%s3940 + $0xf4] sm:$0x8]
      %v3978 = vld [vmem:[%s3940 + $0xf8] sm:$0xf]
      %v3979 = vld [vmem:[%s3940 + $0xfc] sm:$0xf]
      %v3980 = vld [vmem:[%s3940 + $0x108] sm:$0x8]
      %v3981 = vld [vmem:[%s3940 + $0x10c] sm:$0xf]
      %v3982 = vld [vmem:[%s3940 + $0x110] sm:$0xf]
      %v3983 = vld [vmem:[%s3940 + $0x11c] sm:$0x8]
      %v3984 = vld [vmem:[%s3940 + $0x120] sm:$0xf]
      %v3985 = vld [vmem:[%s3940 + $0x124] sm:$0xf]
      %v3986 = vld [vmem:[%s3940 + $0x130] sm:$0x8]
      %v3987 = vld [vmem:[%s3940 + $0x134] sm:$0xf]
      %v3988 = vld [vmem:[%s3940 + $0x138] sm:$0xf]
      %v3990 = vshrl.u32 %v3941, 16
      %v3992 = vrot.slane %v3990, 7
      %v3993 = vrot.slane %v3992, 4
      %v3995 = vshrl.u32 %v3942, 16
      %v3997 = vrot.slane %v3995, 7
      %v3998 = vshll.u32 %v3942, 16
      %v4000 = vor.u32 %v3997, %v3998
      %v4001 = vsel %vm555, %v3993, %v4000
      %v4002 = vrot.slane %v3997, 4
      %v4004 = vshrl.u32 %v3943, 16
      %v4006 = vrot.slane %v4004, 7
      %v4007 = vshll.u32 %v3943, 16
      %v4009 = vor.u32 %v4006, %v4007
      %v4010 = vsel %vm555, %v4002, %v4009
      %v4012 = vshrl.u32 %v3944, 16
      %v4014 = vrot.slane %v4012, 7
      %v4015 = vrot.slane %v4014, 4
      %v4017 = vshrl.u32 %v3945, 16
      %v4019 = vrot.slane %v4017, 7
      %v4020 = vshll.u32 %v3945, 16
      %v4022 = vor.u32 %v4019, %v4020
      %v4023 = vsel %vm555, %v4015, %v4022
      %v4024 = vrot.slane %v4019, 4
      %v4026 = vshrl.u32 %v3946, 16
      %v4028 = vrot.slane %v4026, 7
      %v4029 = vshll.u32 %v3946, 16
      %v4031 = vor.u32 %v4028, %v4029
      %v4032 = vsel %vm555, %v4024, %v4031
      %v4034 = vshrl.u32 %v3947, 16
      %v4036 = vrot.slane %v4034, 7
      %v4037 = vrot.slane %v4036, 4
      %v4039 = vshrl.u32 %v3948, 16
      %v4041 = vrot.slane %v4039, 7
      %v4042 = vshll.u32 %v3948, 16
      %v4044 = vor.u32 %v4041, %v4042
      %v4045 = vsel %vm555, %v4037, %v4044
      %v4046 = vrot.slane %v4041, 4
      %v4048 = vshrl.u32 %v3949, 16
      %v4050 = vrot.slane %v4048, 7
      %v4051 = vshll.u32 %v3949, 16
      %v4053 = vor.u32 %v4050, %v4051
      %v4054 = vsel %vm555, %v4046, %v4053
      %v4056 = vshrl.u32 %v3950, 16
      %v4058 = vrot.slane %v4056, 7
      %v4059 = vrot.slane %v4058, 4
      %v4061 = vshrl.u32 %v3951, 16
      %v4063 = vrot.slane %v4061, 7
      %v4064 = vshll.u32 %v3951, 16
      %v4066 = vor.u32 %v4063, %v4064
      %v4067 = vsel %vm555, %v4059, %v4066
      %v4068 = vrot.slane %v4063, 4
      %v4070 = vshrl.u32 %v3952, 16
      %v4072 = vrot.slane %v4070, 7
      %v4073 = vshll.u32 %v3952, 16
      %v4075 = vor.u32 %v4072, %v4073
      %v4076 = vsel %vm555, %v4068, %v4075
      %v4078 = vshrl.u32 %v3953, 16
      %v4080 = vrot.slane %v4078, 7
      %v4081 = vrot.slane %v4080, 4
      %v4083 = vshrl.u32 %v3954, 16
      %v4085 = vrot.slane %v4083, 7
      %v4086 = vshll.u32 %v3954, 16
      %v4088 = vor.u32 %v4085, %v4086
      %v4089 = vsel %vm555, %v4081, %v4088
      %v4090 = vrot.slane %v4085, 4
      %v4092 = vshrl.u32 %v3955, 16
      %v4094 = vrot.slane %v4092, 7
      %v4095 = vshll.u32 %v3955, 16
      %v4097 = vor.u32 %v4094, %v4095
      %v4098 = vsel %vm555, %v4090, %v4097
      %v4100 = vshrl.u32 %v3956, 16
      %v4102 = vrot.slane %v4100, 7
      %v4103 = vrot.slane %v4102, 4
      %v4105 = vshrl.u32 %v3957, 16
      %v4107 = vrot.slane %v4105, 7
      %v4108 = vshll.u32 %v3957, 16
      %v4110 = vor.u32 %v4107, %v4108
      %v4111 = vsel %vm555, %v4103, %v4110
      %v4112 = vrot.slane %v4107, 4
      %v4114 = vshrl.u32 %v3958, 16
      %v4116 = vrot.slane %v4114, 7
      %v4117 = vshll.u32 %v3958, 16
      %v4119 = vor.u32 %v4116, %v4117
      %v4120 = vsel %vm555, %v4112, %v4119
      %v4122 = vshrl.u32 %v3959, 16
      %v4124 = vrot.slane %v4122, 7
      %v4125 = vrot.slane %v4124, 4
      %v4127 = vshrl.u32 %v3960, 16
      %v4129 = vrot.slane %v4127, 7
      %v4130 = vshll.u32 %v3960, 16
      %v4132 = vor.u32 %v4129, %v4130
      %v4133 = vsel %vm555, %v4125, %v4132
      %v4134 = vrot.slane %v4129, 4
      %v4136 = vshrl.u32 %v3961, 16
      %v4138 = vrot.slane %v4136, 7
      %v4139 = vshll.u32 %v3961, 16
      %v4141 = vor.u32 %v4138, %v4139
      %v4142 = vsel %vm555, %v4134, %v4141
      %v4144 = vshrl.u32 %v3962, 16
      %v4146 = vrot.slane %v4144, 7
      %v4147 = vrot.slane %v4146, 4
      %v4149 = vshrl.u32 %v3963, 16
      %v4151 = vrot.slane %v4149, 7
      %v4152 = vshll.u32 %v3963, 16
      %v4154 = vor.u32 %v4151, %v4152
      %v4155 = vsel %vm555, %v4147, %v4154
      %v4156 = vrot.slane %v4151, 4
      %v4158 = vshrl.u32 %v3964, 16
      %v4160 = vrot.slane %v4158, 7
      %v4161 = vshll.u32 %v3964, 16
      %v4163 = vor.u32 %v4160, %v4161
      %v4164 = vsel %vm555, %v4156, %v4163
      %v4166 = vshrl.u32 %v3965, 16
      %v4168 = vrot.slane %v4166, 7
      %v4169 = vrot.slane %v4168, 4
      %v4171 = vshrl.u32 %v3966, 16
      %v4173 = vrot.slane %v4171, 7
      %v4174 = vshll.u32 %v3966, 16
      %v4176 = vor.u32 %v4173, %v4174
      %v4177 = vsel %vm555, %v4169, %v4176
      %v4178 = vrot.slane %v4173, 4
      %v4180 = vshrl.u32 %v3967, 16
      %v4182 = vrot.slane %v4180, 7
      %v4183 = vshll.u32 %v3967, 16
      %v4185 = vor.u32 %v4182, %v4183
      %v4186 = vsel %vm555, %v4178, %v4185
      %v4188 = vshrl.u32 %v3968, 16
      %v4190 = vrot.slane %v4188, 7
      %v4191 = vrot.slane %v4190, 4
      %v4193 = vshrl.u32 %v3969, 16
      %v4195 = vrot.slane %v4193, 7
      %v4196 = vshll.u32 %v3969, 16
      %v4198 = vor.u32 %v4195, %v4196
      %v4199 = vsel %vm555, %v4191, %v4198
      %v4200 = vrot.slane %v4195, 4
      %v4202 = vshrl.u32 %v3970, 16
      %v4204 = vrot.slane %v4202, 7
      %v4205 = vshll.u32 %v3970, 16
      %v4207 = vor.u32 %v4204, %v4205
      %v4208 = vsel %vm555, %v4200, %v4207
      %v4210 = vshrl.u32 %v3971, 16
      %v4212 = vrot.slane %v4210, 7
      %v4213 = vrot.slane %v4212, 4
      %v4215 = vshrl.u32 %v3972, 16
      %v4217 = vrot.slane %v4215, 7
      %v4218 = vshll.u32 %v3972, 16
      %v4220 = vor.u32 %v4217, %v4218
      %v4221 = vsel %vm555, %v4213, %v4220
      %v4222 = vrot.slane %v4217, 4
      %v4224 = vshrl.u32 %v3973, 16
      %v4226 = vrot.slane %v4224, 7
      %v4227 = vshll.u32 %v3973, 16
      %v4229 = vor.u32 %v4226, %v4227
      %v4230 = vsel %vm555, %v4222, %v4229
      %v4232 = vshrl.u32 %v3974, 16
      %v4234 = vrot.slane %v4232, 7
      %v4235 = vrot.slane %v4234, 4
      %v4237 = vshrl.u32 %v3975, 16
      %v4239 = vrot.slane %v4237, 7
      %v4240 = vshll.u32 %v3975, 16
      %v4242 = vor.u32 %v4239, %v4240
      %v4243 = vsel %vm555, %v4235, %v4242
      %v4244 = vrot.slane %v4239, 4
      %v4246 = vshrl.u32 %v3976, 16
      %v4248 = vrot.slane %v4246, 7
      %v4249 = vshll.u32 %v3976, 16
      %v4251 = vor.u32 %v4248, %v4249
      %v4252 = vsel %vm555, %v4244, %v4251
      %v4254 = vshrl.u32 %v3977, 16
      %v4256 = vrot.slane %v4254, 7
      %v4257 = vrot.slane %v4256, 4
      %v4259 = vshrl.u32 %v3978, 16
      %v4261 = vrot.slane %v4259, 7
      %v4262 = vshll.u32 %v3978, 16
      %v4264 = vor.u32 %v4261, %v4262
      %v4265 = vsel %vm555, %v4257, %v4264
      %v4266 = vrot.slane %v4261, 4
      %v4268 = vshrl.u32 %v3979, 16
      %v4270 = vrot.slane %v4268, 7
      %v4271 = vshll.u32 %v3979, 16
      %v4273 = vor.u32 %v4270, %v4271
      %v4274 = vsel %vm555, %v4266, %v4273
      %v4276 = vshrl.u32 %v3980, 16
      %v4278 = vrot.slane %v4276, 7
      %v4279 = vrot.slane %v4278, 4
      %v4281 = vshrl.u32 %v3981, 16
      %v4283 = vrot.slane %v4281, 7
      %v4284 = vshll.u32 %v3981, 16
      %v4286 = vor.u32 %v4283, %v4284
      %v4287 = vsel %vm555, %v4279, %v4286
      %v4288 = vrot.slane %v4283, 4
      %v4290 = vshrl.u32 %v3982, 16
      %v4292 = vrot.slane %v4290, 7
      %v4293 = vshll.u32 %v3982, 16
      %v4295 = vor.u32 %v4292, %v4293
      %v4296 = vsel %vm555, %v4288, %v4295
      %v4298 = vshrl.u32 %v3983, 16
      %v4300 = vrot.slane %v4298, 7
      %v4301 = vrot.slane %v4300, 4
      %v4303 = vshrl.u32 %v3984, 16
      %v4305 = vrot.slane %v4303, 7
      %v4306 = vshll.u32 %v3984, 16
      %v4308 = vor.u32 %v4305, %v4306
      %v4309 = vsel %vm555, %v4301, %v4308
      %v4310 = vrot.slane %v4305, 4
      %v4312 = vshrl.u32 %v3985, 16
      %v4314 = vrot.slane %v4312, 7
      %v4315 = vshll.u32 %v3985, 16
      %v4317 = vor.u32 %v4314, %v4315
      %v4318 = vsel %vm555, %v4310, %v4317
      %v4320 = vshrl.u32 %v3986, 16
      %v4322 = vrot.slane %v4320, 7
      %v4323 = vrot.slane %v4322, 4
      %v4325 = vshrl.u32 %v3987, 16
      %v4327 = vrot.slane %v4325, 7
      %v4328 = vshll.u32 %v3987, 16
      %v4330 = vor.u32 %v4327, %v4328
      %v4331 = vsel %vm555, %v4323, %v4330
      %v4332 = vrot.slane %v4327, 4
      %v4334 = vshrl.u32 %v3988, 16
      %v4336 = vrot.slane %v4334, 7
      %v4337 = vshll.u32 %v3988, 16
      %v4339 = vor.u32 %v4336, %v4337
      %v4340 = vsel %vm555, %v4332, %v4339
      %s4341 = scalar_lea.vmem %s1, 24
      %v4342 = vld [vmem:[%s4341] sm:$0xf]
      %v4343 = vunpack.c.l.b16 %v4001
      %v4344 = vunpack.c.l.b16 %v4010
      %v4345 = vunpack.c.l.b16 %v4023
      %v4346 = vunpack.c.l.b16 %v4032
      %v4347 = vunpack.c.l.b16 %v4045
      %v4348 = vunpack.c.l.b16 %v4054
      %v4349 = vunpack.c.l.b16 %v4067
      %v4350 = vunpack.c.l.b16 %v4076
      %v4351 = vunpack.c.l.b16 %v4089
      %v4352 = vunpack.c.l.b16 %v4098
      %v4353 = vunpack.c.l.b16 %v4111
      %v4354 = vunpack.c.l.b16 %v4120
      %v4355 = vunpack.c.l.b16 %v4133
      %v4356 = vunpack.c.l.b16 %v4142
      %v4357 = vunpack.c.l.b16 %v4155
      %v4358 = vunpack.c.l.b16 %v4164
      %v4359 = vunpack.c.l.b16 %v4177
      %v4360 = vunpack.c.l.b16 %v4186
      %v4361 = vunpack.c.l.b16 %v4199
      %v4362 = vunpack.c.l.b16 %v4208
      %v4363 = vunpack.c.l.b16 %v4221
      %v4364 = vunpack.c.l.b16 %v4230
      %v4365 = vunpack.c.l.b16 %v4243
      %v4366 = vunpack.c.l.b16 %v4252
      %v4367 = vunpack.c.l.b16 %v4265
      %v4368 = vunpack.c.l.b16 %v4274
      %v4369 = vunpack.c.l.b16 %v4287
      %v4370 = vunpack.c.l.b16 %v4296
      %v4371 = vunpack.c.l.b16 %v4309
      %v4372 = vunpack.c.l.b16 %v4318
      %v4373 = vunpack.c.l.b16 %v4331
      %v4374 = vunpack.c.l.b16 %v4340
      %v4375 = vpack.c.b16 %v4344, %v4343
      %v4376 = vpack.c.b16 %v4346, %v4345
      %v4377 = vpack.c.b16 %v4348, %v4347
      %v4378 = vpack.c.b16 %v4350, %v4349
      %v4379 = vpack.c.b16 %v4352, %v4351
      %v4380 = vpack.c.b16 %v4354, %v4353
      %v4381 = vpack.c.b16 %v4356, %v4355
      %v4382 = vpack.c.b16 %v4358, %v4357
      %v4383 = vpack.c.b16 %v4360, %v4359
      %v4384 = vpack.c.b16 %v4362, %v4361
      %v4385 = vpack.c.b16 %v4364, %v4363
      %v4386 = vpack.c.b16 %v4366, %v4365
      %v4387 = vpack.c.b16 %v4368, %v4367
      %v4388 = vpack.c.b16 %v4370, %v4369
      %v4389 = vpack.c.b16 %v4372, %v4371
      %v4390 = vpack.c.b16 %v4374, %v4373
      %v4392 = vsel %vm991, %v4375, 0
      %v4395 = vsel %vm991, %v4376, 0
      %v4398 = vsel %vm991, %v4377, 0
      %v4401 = vsel %vm991, %v4378, 0
      %v4404 = vsel %vm991, %v4379, 0
      %v4407 = vsel %vm991, %v4380, 0
      %v4410 = vsel %vm991, %v4381, 0
      %v4413 = vsel %vm991, %v4382, 0
      %v4416 = vsel %vm991, %v4383, 0
      %v4419 = vsel %vm991, %v4384, 0
      %v4422 = vsel %vm991, %v4385, 0
      %v4425 = vsel %vm991, %v4386, 0
      %v4428 = vsel %vm991, %v4387, 0
      %v4431 = vsel %vm991, %v4388, 0
      %v4434 = vsel %vm991, %v4389, 0
      %v4437 = vsel %vm991, %v4390, 0
      %v4440 = vsel %vm1040, %v4342, 0
      %4442 = vmatprep.subr.bf16.mxu0 0
      %4443 = vmatpush1.bf16.msra.mxu0 %v4440
      %4444 = vmatprep.subr.bf16.mxu0 0
      %4445 = vmatpush1.bf16.msra.mxu0 0
      %4446 = vmatprep.subr.bf16.mxu0 0
      %4447 = vmatpush1.bf16.msra.mxu0 0
      %4448 = vmatprep.subr.bf16.mxu0 0
      %4449 = vmatpush1.bf16.msra.mxu0 0
      %4450 = vmatprep.subr.bf16.mxu0 0
      %4451 = vmatpush1.bf16.msra.mxu0 0
      %4452 = vmatprep.subr.bf16.mxu0 0
      %4453 = vmatpush1.bf16.msra.mxu0 0
      %4454 = vmatprep.subr.bf16.mxu0 0
      %4455 = vmatpush1.bf16.msra.mxu0 0
      %4456 = vmatprep.subr.bf16.mxu0 0
      %4457 = vmatpush1.bf16.msra.mxu0 0
      %4458 = vmatprep.subr.bf16.mxu0 0
      %4459 = vmatpush1.bf16.msra.mxu0 0
      %4460 = vmatprep.subr.bf16.mxu0 0
      %4461 = vmatpush1.bf16.msra.mxu0 0
      %4462 = vmatprep.subr.bf16.mxu0 0
      %4463 = vmatpush1.bf16.msra.mxu0 0
      %4464 = vmatprep.subr.bf16.mxu0 0
      %4465 = vmatpush1.bf16.msra.mxu0 0
      %4466 = vmatprep.subr.bf16.mxu0 0
      %4467 = vmatpush1.bf16.msra.mxu0 0
      %4468 = vmatprep.subr.bf16.mxu0 0
      %4469 = vmatpush1.bf16.msra.mxu0 0
      %4470 = vmatprep.subr.bf16.mxu0 0
      %4471 = vmatpush1.bf16.msra.mxu0 0
      %4472 = vmatprep.subr.bf16.mxu0 0
      %4473 = vmatpush1.bf16.msra.mxu0 0
      %4474 = vmatprep.mubr.bf16.mxu0 0
      %4475 = vmatmul.mubr.bf16.gmra.mrb[0].mxu0 %v4392
      %v4476 = vpop.f32.mrb[0].mxu0
      %v4477 = vadd.f32 0.0, %v4476
      %v4478 = vpop.f32.mrb[0].mxu0
      %v4479 = vpop.f32.mrb[0].mxu0
      %v4480 = vadd.f32 0.0, %v4479
      %v4481 = vpop.f32.mrb[0].mxu0
      %4482 = vmatprep.mubr.bf16.mxu0 0
      %4483 = vmatmul.mubr.bf16.gmra.mrb[0].mxu0 %v4395
      %v4484 = vpop.f32.mrb[0].mxu0
      %v4485 = vadd.f32 0.0, %v4484
      %v4486 = vpop.f32.mrb[0].mxu0
      %v4487 = vpop.f32.mrb[0].mxu0
      %v4488 = vadd.f32 0.0, %v4487
      %v4489 = vpop.f32.mrb[0].mxu0
      %4490 = vmatprep.mubr.bf16.mxu0 0
      %4491 = vmatmul.mubr.bf16.gmra.mrb[0].mxu0 %v4398
      %v4492 = vpop.f32.mrb[0].mxu0
      %v4493 = vadd.f32 0.0, %v4492
      %v4494 = vpop.f32.mrb[0].mxu0
      %v4495 = vpop.f32.mrb[0].mxu0
      %v4496 = vadd.f32 0.0, %v4495
      %v4497 = vpop.f32.mrb[0].mxu0
      %4498 = vmatprep.mubr.bf16.mxu0 0
      %4499 = vmatmul.mubr.bf16.gmra.mrb[0].mxu0 %v4401
      %v4500 = vpop.f32.mrb[0].mxu0
      %v4501 = vadd.f32 0.0, %v4500
      %v4502 = vpop.f32.mrb[0].mxu0
      %v4503 = vpop.f32.mrb[0].mxu0
      %v4504 = vadd.f32 0.0, %v4503
      %v4505 = vpop.f32.mrb[0].mxu0
      %4506 = vmatprep.mubr.bf16.mxu0 0
      %4507 = vmatmul.mubr.bf16.gmra.mrb[0].mxu0 %v4404
      %v4508 = vpop.f32.mrb[0].mxu0
      %v4509 = vadd.f32 0.0, %v4508
      %v4510 = vpop.f32.mrb[0].mxu0
      %v4511 = vpop.f32.mrb[0].mxu0
      %v4512 = vadd.f32 0.0, %v4511
      %v4513 = vpop.f32.mrb[0].mxu0
      %4514 = vmatprep.mubr.bf16.mxu0 0
      %4515 = vmatmul.mubr.bf16.gmra.mrb[0].mxu0 %v4407
      %v4516 = vpop.f32.mrb[0].mxu0
      %v4517 = vadd.f32 0.0, %v4516
      %v4518 = vpop.f32.mrb[0].mxu0
      %v4519 = vpop.f32.mrb[0].mxu0
      %v4520 = vadd.f32 0.0, %v4519
      %v4521 = vpop.f32.mrb[0].mxu0
      %4522 = vmatprep.mubr.bf16.mxu0 0
      %4523 = vmatmul.mubr.bf16.gmra.mrb[0].mxu0 %v4410
      %v4524 = vpop.f32.mrb[0].mxu0
      %v4525 = vadd.f32 0.0, %v4524
      %v4526 = vpop.f32.mrb[0].mxu0
      %v4527 = vpop.f32.mrb[0].mxu0
      %v4528 = vadd.f32 0.0, %v4527
      %v4529 = vpop.f32.mrb[0].mxu0
      %4530 = vmatprep.mubr.bf16.mxu0 0
      %4531 = vmatmul.mubr.bf16.gmra.mrb[0].mxu0 %v4413
      %v4532 = vpop.f32.mrb[0].mxu0
      %v4533 = vadd.f32 0.0, %v4532
      %v4534 = vpop.f32.mrb[0].mxu0
      %v4535 = vpop.f32.mrb[0].mxu0
      %v4536 = vadd.f32 0.0, %v4535
      %v4537 = vpop.f32.mrb[0].mxu0
      %4538 = vmatprep.mubr.bf16.mxu0 0
      %4539 = vmatmul.mubr.bf16.gmra.mrb[0].mxu0 %v4416
      %v4540 = vpop.f32.mrb[0].mxu0
      %v4541 = vadd.f32 0.0, %v4540
      %v4542 = vpop.f32.mrb[0].mxu0
      %v4543 = vpop.f32.mrb[0].mxu0
      %v4544 = vadd.f32 0.0, %v4543
      %v4545 = vpop.f32.mrb[0].mxu0
      %4546 = vmatprep.mubr.bf16.mxu0 0
      %4547 = vmatmul.mubr.bf16.gmra.mrb[0].mxu0 %v4419
      %v4548 = vpop.f32.mrb[0].mxu0
      %v4549 = vadd.f32 0.0, %v4548
      %v4550 = vpop.f32.mrb[0].mxu0
      %v4551 = vpop.f32.mrb[0].mxu0
      %v4552 = vadd.f32 0.0, %v4551
      %v4553 = vpop.f32.mrb[0].mxu0
      %4554 = vmatprep.mubr.bf16.mxu0 0
      %4555 = vmatmul.mubr.bf16.gmra.mrb[0].mxu0 %v4422
      %v4556 = vpop.f32.mrb[0].mxu0
      %v4557 = vadd.f32 0.0, %v4556
      %v4558 = vpop.f32.mrb[0].mxu0
      %v4559 = vpop.f32.mrb[0].mxu0
      %v4560 = vadd.f32 0.0, %v4559
      %v4561 = vpop.f32.mrb[0].mxu0
      %4562 = vmatprep.mubr.bf16.mxu0 0
      %4563 = vmatmul.mubr.bf16.gmra.mrb[0].mxu0 %v4425
      %v4564 = vpop.f32.mrb[0].mxu0
      %v4565 = vadd.f32 0.0, %v4564
      %v4566 = vpop.f32.mrb[0].mxu0
      %v4567 = vpop.f32.mrb[0].mxu0
      %v4568 = vadd.f32 0.0, %v4567
      %v4569 = vpop.f32.mrb[0].mxu0
      %4570 = vmatprep.mubr.bf16.mxu0 0
      %4571 = vmatmul.mubr.bf16.gmra.mrb[0].mxu0 %v4428
      %v4572 = vpop.f32.mrb[0].mxu0
      %v4573 = vadd.f32 0.0, %v4572
      %v4574 = vpop.f32.mrb[0].mxu0
      %v4575 = vpop.f32.mrb[0].mxu0
      %v4576 = vadd.f32 0.0, %v4575
      %v4577 = vpop.f32.mrb[0].mxu0
      %4578 = vmatprep.mubr.bf16.mxu0 0
      %4579 = vmatmul.mubr.bf16.gmra.mrb[0].mxu0 %v4431
      %v4580 = vpop.f32.mrb[0].mxu0
      %v4581 = vadd.f32 0.0, %v4580
      %v4582 = vpop.f32.mrb[0].mxu0
      %v4583 = vpop.f32.mrb[0].mxu0
      %v4584 = vadd.f32 0.0, %v4583
      %v4585 = vpop.f32.mrb[0].mxu0
      %4586 = vmatprep.mubr.bf16.mxu0 0
      %4587 = vmatmul.mubr.bf16.gmra.mrb[0].mxu0 %v4434
      %v4588 = vpop.f32.mrb[0].mxu0
      %v4589 = vadd.f32 0.0, %v4588
      %v4590 = vpop.f32.mrb[0].mxu0
      %v4591 = vpop.f32.mrb[0].mxu0
      %v4592 = vadd.f32 0.0, %v4591
      %v4593 = vpop.f32.mrb[0].mxu0
      %4594 = vmatprep.mubr.bf16.mxu0 0
      %4595 = vmatmul.mubr.bf16.gmra.mrb[0].mxu0 %v4437
      %v4596 = vpop.f32.mrb[0].mxu0
      %v4597 = vadd.f32 0.0, %v4596
      %v4598 = vpop.f32.mrb[0].mxu0
      %v4599 = vpop.f32.mrb[0].mxu0
      %v4600 = vadd.f32 0.0, %v4599
      %v4601 = vpop.f32.mrb[0].mxu0
      %4602 = vdwg.mxu0
      %v4603 = vadd.f32 %v3908, %v4477
      %v4604 = vadd.f32 %v3909, %v4480
      %v4605 = vadd.f32 %v3910, %v4485
      %v4606 = vadd.f32 %v3911, %v4488
      %v4607 = vadd.f32 %v3912, %v4493
      %v4608 = vadd.f32 %v3913, %v4496
      %v4609 = vadd.f32 %v3914, %v4501
      %v4610 = vadd.f32 %v3915, %v4504
      %v4611 = vadd.f32 %v3916, %v4509
      %v4612 = vadd.f32 %v3917, %v4512
      %v4613 = vadd.f32 %v3918, %v4517
      %v4614 = vadd.f32 %v3919, %v4520
      %v4615 = vadd.f32 %v3920, %v4525
      %v4616 = vadd.f32 %v3921, %v4528
      %v4617 = vadd.f32 %v3922, %v4533
      %v4618 = vadd.f32 %v3923, %v4536
      %v4619 = vadd.f32 %v3924, %v4541
      %v4620 = vadd.f32 %v3925, %v4544
      %v4621 = vadd.f32 %v3926, %v4549
      %v4622 = vadd.f32 %v3927, %v4552
      %v4623 = vadd.f32 %v3928, %v4557
      %v4624 = vadd.f32 %v3929, %v4560
      %v4625 = vadd.f32 %v3930, %v4565
      %v4626 = vadd.f32 %v3931, %v4568
      %v4627 = vadd.f32 %v3932, %v4573
      %v4628 = vadd.f32 %v3933, %v4576
      %v4629 = vadd.f32 %v3934, %v4581
      %v4630 = vadd.f32 %v3935, %v4584
      %v4631 = vadd.f32 %v3936, %v4589
      %v4632 = vadd.f32 %v3937, %v4592
      %v4633 = vadd.f32 %v3938, %v4597
      %v4634 = vadd.f32 %v3939, %v4600
      %s4635 = scalar_lea.vmem %s1, 28
      %v4636 = vld [vmem:[%s4635] sm:$0xf]
      %v4669 = vunpack.c.l.b16 %v3942
      %v4670 = vunpack.c.l.b16 %v3943
      %v4671 = vunpack.c.l.b16 %v3945
      %v4672 = vunpack.c.l.b16 %v3946
      %v4673 = vunpack.c.l.b16 %v3948
      %v4674 = vunpack.c.l.b16 %v3949
      %v4675 = vunpack.c.l.b16 %v3951
      %v4676 = vunpack.c.l.b16 %v3952
      %v4677 = vunpack.c.l.b16 %v3954
      %v4678 = vunpack.c.l.b16 %v3955
      %v4679 = vunpack.c.l.b16 %v3957
      %v4680 = vunpack.c.l.b16 %v3958
      %v4681 = vunpack.c.l.b16 %v3960
      %v4682 = vunpack.c.l.b16 %v3961
      %v4683 = vunpack.c.l.b16 %v3963
      %v4684 = vunpack.c.l.b16 %v3964
      %v4685 = vunpack.c.l.b16 %v3966
      %v4686 = vunpack.c.l.b16 %v3967
      %v4687 = vunpack.c.l.b16 %v3969
      %v4688 = vunpack.c.l.b16 %v3970
      %v4689 = vunpack.c.l.b16 %v3972
      %v4690 = vunpack.c.l.b16 %v3973
      %v4691 = vunpack.c.l.b16 %v3975
      %v4692 = vunpack.c.l.b16 %v3976
      %v4693 = vunpack.c.l.b16 %v3978
      %v4694 = vunpack.c.l.b16 %v3979
      %v4695 = vunpack.c.l.b16 %v3981
      %v4696 = vunpack.c.l.b16 %v3982
      %v4697 = vunpack.c.l.b16 %v3984
      %v4698 = vunpack.c.l.b16 %v3985
      %v4699 = vunpack.c.l.b16 %v3987
      %v4700 = vunpack.c.l.b16 %v3988
      %v4701 = vpack.c.b16 %v4670, %v4669
      %v4702 = vpack.c.b16 %v4672, %v4671
      %v4703 = vpack.c.b16 %v4674, %v4673
      %v4704 = vpack.c.b16 %v4676, %v4675
      %v4705 = vpack.c.b16 %v4678, %v4677
      %v4706 = vpack.c.b16 %v4680, %v4679
      %v4707 = vpack.c.b16 %v4682, %v4681
      %v4708 = vpack.c.b16 %v4684, %v4683
      %v4709 = vpack.c.b16 %v4686, %v4685
      %v4710 = vpack.c.b16 %v4688, %v4687
      %v4711 = vpack.c.b16 %v4690, %v4689
      %v4712 = vpack.c.b16 %v4692, %v4691
      %v4713 = vpack.c.b16 %v4694, %v4693
      %v4714 = vpack.c.b16 %v4696, %v4695
      %v4715 = vpack.c.b16 %v4698, %v4697
      %v4716 = vpack.c.b16 %v4700, %v4699
      %v4718 = vsel %vm991, %v4701, 0
      %v4721 = vsel %vm991, %v4702, 0
      %v4724 = vsel %vm991, %v4703, 0
      %v4727 = vsel %vm991, %v4704, 0
      %v4730 = vsel %vm991, %v4705, 0
      %v4733 = vsel %vm991, %v4706, 0
      %v4736 = vsel %vm991, %v4707, 0
      %v4739 = vsel %vm991, %v4708, 0
      %v4742 = vsel %vm991, %v4709, 0
      %v4745 = vsel %vm991, %v4710, 0
      %v4748 = vsel %vm991, %v4711, 0
      %v4751 = vsel %vm991, %v4712, 0
      %v4754 = vsel %vm991, %v4713, 0
      %v4757 = vsel %vm991, %v4714, 0
      %v4760 = vsel %vm991, %v4715, 0
      %v4763 = vsel %vm991, %v4716, 0
      %v4766 = vsel %vm1040, %v4636, 0
      %4768 = vmatprep.subr.bf16.mxu0 0
      %4769 = vmatpush1.bf16.msra.mxu0 %v4766
      %4770 = vmatprep.subr.bf16.mxu0 0
      %4771 = vmatpush1.bf16.msra.mxu0 0
      %4772 = vmatprep.subr.bf16.mxu0 0
      %4773 = vmatpush1.bf16.msra.mxu0 0
      %4774 = vmatprep.subr.bf16.mxu0 0
      %4775 = vmatpush1.bf16.msra.mxu0 0
      %4776 = vmatprep.subr.bf16.mxu0 0
      %4777 = vmatpush1.bf16.msra.mxu0 0
      %4778 = vmatprep.subr.bf16.mxu0 0
      %4779 = vmatpush1.bf16.msra.mxu0 0
      %4780 = vmatprep.subr.bf16.mxu0 0
      %4781 = vmatpush1.bf16.msra.mxu0 0
      %4782 = vmatprep.subr.bf16.mxu0 0
      %4783 = vmatpush1.bf16.msra.mxu0 0
      %4784 = vmatprep.subr.bf16.mxu0 0
      %4785 = vmatpush1.bf16.msra.mxu0 0
      %4786 = vmatprep.subr.bf16.mxu0 0
      %4787 = vmatpush1.bf16.msra.mxu0 0
      %4788 = vmatprep.subr.bf16.mxu0 0
      %4789 = vmatpush1.bf16.msra.mxu0 0
      %4790 = vmatprep.subr.bf16.mxu0 0
      %4791 = vmatpush1.bf16.msra.mxu0 0
      %4792 = vmatprep.subr.bf16.mxu0 0
      %4793 = vmatpush1.bf16.msra.mxu0 0
      %4794 = vmatprep.subr.bf16.mxu0 0
      %4795 = vmatpush1.bf16.msra.mxu0 0
      %4796 = vmatprep.subr.bf16.mxu0 0
      %4797 = vmatpush1.bf16.msra.mxu0 0
      %4798 = vmatprep.subr.bf16.mxu0 0
      %4799 = vmatpush1.bf16.msra.mxu0 0
      %4800 = vmatprep.mubr.bf16.mxu0 0
      %4801 = vmatmul.mubr.bf16.gmra.mrb[0].mxu0 %v4718
      %v4802 = vpop.f32.mrb[0].mxu0
      %v4803 = vadd.f32 0.0, %v4802
      %v4804 = vpop.f32.mrb[0].mxu0
      %v4805 = vpop.f32.mrb[0].mxu0
      %v4806 = vadd.f32 0.0, %v4805
      %v4807 = vpop.f32.mrb[0].mxu0
      %4808 = vmatprep.mubr.bf16.mxu0 0
      %4809 = vmatmul.mubr.bf16.gmra.mrb[0].mxu0 %v4721
      %v4810 = vpop.f32.mrb[0].mxu0
      %v4811 = vadd.f32 0.0, %v4810
      %v4812 = vpop.f32.mrb[0].mxu0
      %v4813 = vpop.f32.mrb[0].mxu0
      %v4814 = vadd.f32 0.0, %v4813
      %v4815 = vpop.f32.mrb[0].mxu0
      %4816 = vmatprep.mubr.bf16.mxu0 0
      %4817 = vmatmul.mubr.bf16.gmra.mrb[0].mxu0 %v4724
      %v4818 = vpop.f32.mrb[0].mxu0
      %v4819 = vadd.f32 0.0, %v4818
      %v4820 = vpop.f32.mrb[0].mxu0
      %v4821 = vpop.f32.mrb[0].mxu0
      %v4822 = vadd.f32 0.0, %v4821
      %v4823 = vpop.f32.mrb[0].mxu0
      %4824 = vmatprep.mubr.bf16.mxu0 0
      %4825 = vmatmul.mubr.bf16.gmra.mrb[0].mxu0 %v4727
      %v4826 = vpop.f32.mrb[0].mxu0
      %v4827 = vadd.f32 0.0, %v4826
      %v4828 = vpop.f32.mrb[0].mxu0
      %v4829 = vpop.f32.mrb[0].mxu0
      %v4830 = vadd.f32 0.0, %v4829
      %v4831 = vpop.f32.mrb[0].mxu0
      %4832 = vmatprep.mubr.bf16.mxu0 0
      %4833 = vmatmul.mubr.bf16.gmra.mrb[0].mxu0 %v4730
      %v4834 = vpop.f32.mrb[0].mxu0
      %v4835 = vadd.f32 0.0, %v4834
      %v4836 = vpop.f32.mrb[0].mxu0
      %v4837 = vpop.f32.mrb[0].mxu0
      %v4838 = vadd.f32 0.0, %v4837
      %v4839 = vpop.f32.mrb[0].mxu0
      %4840 = vmatprep.mubr.bf16.mxu0 0
      %4841 = vmatmul.mubr.bf16.gmra.mrb[0].mxu0 %v4733
      %v4842 = vpop.f32.mrb[0].mxu0
      %v4843 = vadd.f32 0.0, %v4842
      %v4844 = vpop.f32.mrb[0].mxu0
      %v4845 = vpop.f32.mrb[0].mxu0
      %v4846 = vadd.f32 0.0, %v4845
      %v4847 = vpop.f32.mrb[0].mxu0
      %4848 = vmatprep.mubr.bf16.mxu0 0
      %4849 = vmatmul.mubr.bf16.gmra.mrb[0].mxu0 %v4736
      %v4850 = vpop.f32.mrb[0].mxu0
      %v4851 = vadd.f32 0.0, %v4850
      %v4852 = vpop.f32.mrb[0].mxu0
      %v4853 = vpop.f32.mrb[0].mxu0
      %v4854 = vadd.f32 0.0, %v4853
      %v4855 = vpop.f32.mrb[0].mxu0
      %4856 = vmatprep.mubr.bf16.mxu0 0
      %4857 = vmatmul.mubr.bf16.gmra.mrb[0].mxu0 %v4739
      %v4858 = vpop.f32.mrb[0].mxu0
      %v4859 = vadd.f32 0.0, %v4858
      %v4860 = vpop.f32.mrb[0].mxu0
      %v4861 = vpop.f32.mrb[0].mxu0
      %v4862 = vadd.f32 0.0, %v4861
      %v4863 = vpop.f32.mrb[0].mxu0
      %4864 = vmatprep.mubr.bf16.mxu0 0
      %4865 = vmatmul.mubr.bf16.gmra.mrb[0].mxu0 %v4742
      %v4866 = vpop.f32.mrb[0].mxu0
      %v4867 = vadd.f32 0.0, %v4866
      %v4868 = vpop.f32.mrb[0].mxu0
      %v4869 = vpop.f32.mrb[0].mxu0
      %v4870 = vadd.f32 0.0, %v4869
      %v4871 = vpop.f32.mrb[0].mxu0
      %4872 = vmatprep.mubr.bf16.mxu0 0
      %4873 = vmatmul.mubr.bf16.gmra.mrb[0].mxu0 %v4745
      %v4874 = vpop.f32.mrb[0].mxu0
      %v4875 = vadd.f32 0.0, %v4874
      %v4876 = vpop.f32.mrb[0].mxu0
      %v4877 = vpop.f32.mrb[0].mxu0
      %v4878 = vadd.f32 0.0, %v4877
      %v4879 = vpop.f32.mrb[0].mxu0
      %4880 = vmatprep.mubr.bf16.mxu0 0
      %4881 = vmatmul.mubr.bf16.gmra.mrb[0].mxu0 %v4748
      %v4882 = vpop.f32.mrb[0].mxu0
      %v4883 = vadd.f32 0.0, %v4882
      %v4884 = vpop.f32.mrb[0].mxu0
      %v4885 = vpop.f32.mrb[0].mxu0
      %v4886 = vadd.f32 0.0, %v4885
      %v4887 = vpop.f32.mrb[0].mxu0
      %4888 = vmatprep.mubr.bf16.mxu0 0
      %4889 = vmatmul.mubr.bf16.gmra.mrb[0].mxu0 %v4751
      %v4890 = vpop.f32.mrb[0].mxu0
      %v4891 = vadd.f32 0.0, %v4890
      %v4892 = vpop.f32.mrb[0].mxu0
      %v4893 = vpop.f32.mrb[0].mxu0
      %v4894 = vadd.f32 0.0, %v4893
      %v4895 = vpop.f32.mrb[0].mxu0
      %4896 = vmatprep.mubr.bf16.mxu0 0
      %4897 = vmatmul.mubr.bf16.gmra.mrb[0].mxu0 %v4754
      %v4898 = vpop.f32.mrb[0].mxu0
      %v4899 = vadd.f32 0.0, %v4898
      %v4900 = vpop.f32.mrb[0].mxu0
      %v4901 = vpop.f32.mrb[0].mxu0
      %v4902 = vadd.f32 0.0, %v4901
      %v4903 = vpop.f32.mrb[0].mxu0
      %4904 = vmatprep.mubr.bf16.mxu0 0
      %4905 = vmatmul.mubr.bf16.gmra.mrb[0].mxu0 %v4757
      %v4906 = vpop.f32.mrb[0].mxu0
      %v4907 = vadd.f32 0.0, %v4906
      %v4908 = vpop.f32.mrb[0].mxu0
      %v4909 = vpop.f32.mrb[0].mxu0
      %v4910 = vadd.f32 0.0, %v4909
      %v4911 = vpop.f32.mrb[0].mxu0
      %4912 = vmatprep.mubr.bf16.mxu0 0
      %4913 = vmatmul.mubr.bf16.gmra.mrb[0].mxu0 %v4760
      %v4914 = vpop.f32.mrb[0].mxu0
      %v4915 = vadd.f32 0.0, %v4914
      %v4916 = vpop.f32.mrb[0].mxu0
      %v4917 = vpop.f32.mrb[0].mxu0
      %v4918 = vadd.f32 0.0, %v4917
      %v4919 = vpop.f32.mrb[0].mxu0
      %4920 = vmatprep.mubr.bf16.mxu0 0
      %4921 = vmatmul.mubr.bf16.gmra.mrb[0].mxu0 %v4763
      %v4922 = vpop.f32.mrb[0].mxu0
      %v4923 = vadd.f32 0.0, %v4922
      %v4924 = vpop.f32.mrb[0].mxu0
      %v4925 = vpop.f32.mrb[0].mxu0
      %v4926 = vadd.f32 0.0, %v4925
      %v4927 = vpop.f32.mrb[0].mxu0
      %4928 = vdwg.mxu0
      %v4929 = vadd.f32 %v4603, %v4803
      %v4930 = vadd.f32 %v4604, %v4806
      %v4931 = vadd.f32 %v4605, %v4811
      %v4932 = vadd.f32 %v4606, %v4814
      %v4933 = vadd.f32 %v4607, %v4819
      %v4934 = vadd.f32 %v4608, %v4822
      %v4935 = vadd.f32 %v4609, %v4827
      %v4936 = vadd.f32 %v4610, %v4830
      %v4937 = vadd.f32 %v4611, %v4835
      %v4938 = vadd.f32 %v4612, %v4838
      %v4939 = vadd.f32 %v4613, %v4843
      %v4940 = vadd.f32 %v4614, %v4846
      %v4941 = vadd.f32 %v4615, %v4851
      %v4942 = vadd.f32 %v4616, %v4854
      %v4943 = vadd.f32 %v4617, %v4859
      %v4944 = vadd.f32 %v4618, %v4862
      %v4945 = vadd.f32 %v4619, %v4867
      %v4946 = vadd.f32 %v4620, %v4870
      %v4947 = vadd.f32 %v4621, %v4875
      %v4948 = vadd.f32 %v4622, %v4878
      %v4949 = vadd.f32 %v4623, %v4883
      %v4950 = vadd.f32 %v4624, %v4886
      %v4951 = vadd.f32 %v4625, %v4891
      %v4952 = vadd.f32 %v4626, %v4894
      %v4953 = vadd.f32 %v4627, %v4899
      %v4954 = vadd.f32 %v4628, %v4902
      %v4955 = vadd.f32 %v4629, %v4907
      %v4956 = vadd.f32 %v4630, %v4910
      %v4957 = vadd.f32 %v4631, %v4915
      %v4958 = vadd.f32 %v4632, %v4918
      %v4959 = vadd.f32 %v4633, %v4923
      %v4960 = vadd.f32 %v4634, %v4926
      %v4961 = vld [vmem:[%s3940 + $0x8] sm:$0xf]
      %v4962 = vld [vmem:[%s3940 + $0xc] sm:$0xf]
      %v4963 = vld [vmem:[%s3940 + $0x10] sm:$0x1]
      %v4964 = vld [vmem:[%s3940 + $0x1c] sm:$0xf]
      %v4965 = vld [vmem:[%s3940 + $0x20] sm:$0xf]
      %v4966 = vld [vmem:[%s3940 + $0x24] sm:$0x1]
      %v4967 = vld [vmem:[%s3940 + $0x30] sm:$0xf]
      %v4968 = vld [vmem:[%s3940 + $0x34] sm:$0xf]
      %v4969 = vld [vmem:[%s3940 + $0x38] sm:$0x1]
      %v4970 = vld [vmem:[%s3940 + $0x44] sm:$0xf]
      %v4971 = vld [vmem:[%s3940 + $0x48] sm:$0xf]
      %v4972 = vld [vmem:[%s3940 + $0x4c] sm:$0x1]
      %v4973 = vld [vmem:[%s3940 + $0x58] sm:$0xf]
      %v4974 = vld [vmem:[%s3940 + $0x5c] sm:$0xf]
      %v4975 = vld [vmem:[%s3940 + $0x60] sm:$0x1]
      %v4976 = vld [vmem:[%s3940 + $0x6c] sm:$0xf]
      %v4977 = vld [vmem:[%s3940 + $0x70] sm:$0xf]
      %v4978 = vld [vmem:[%s3940 + $0x74] sm:$0x1]
      %v4979 = vld [vmem:[%s3940 + $0x80] sm:$0xf]
      %v4980 = vld [vmem:[%s3940 + $0x84] sm:$0xf]
      %v4981 = vld [vmem:[%s3940 + $0x88] sm:$0x1]
      %v4982 = vld [vmem:[%s3940 + $0x94] sm:$0xf]
      %v4983 = vld [vmem:[%s3940 + $0x98] sm:$0xf]
      %v4984 = vld [vmem:[%s3940 + $0x9c] sm:$0x1]
      %v4985 = vld [vmem:[%s3940 + $0xa8] sm:$0xf]
      %v4986 = vld [vmem:[%s3940 + $0xac] sm:$0xf]
      %v4987 = vld [vmem:[%s3940 + $0xb0] sm:$0x1]
      %v4988 = vld [vmem:[%s3940 + $0xbc] sm:$0xf]
      %v4989 = vld [vmem:[%s3940 + $0xc0] sm:$0xf]
      %v4990 = vld [vmem:[%s3940 + $0xc4] sm:$0x1]
      %v4991 = vld [vmem:[%s3940 + $0xd0] sm:$0xf]
      %v4992 = vld [vmem:[%s3940 + $0xd4] sm:$0xf]
      %v4993 = vld [vmem:[%s3940 + $0xd8] sm:$0x1]
      %v4994 = vld [vmem:[%s3940 + $0xe4] sm:$0xf]
      %v4995 = vld [vmem:[%s3940 + $0xe8] sm:$0xf]
      %v4996 = vld [vmem:[%s3940 + $0xec] sm:$0x1]
      %v4997 = vld [vmem:[%s3940 + $0xf8] sm:$0xf]
      %v4998 = vld [vmem:[%s3940 + $0xfc] sm:$0xf]
      %v4999 = vld [vmem:[%s3940 + $0x100] sm:$0x1]
      %v5000 = vld [vmem:[%s3940 + $0x10c] sm:$0xf]
      %v5001 = vld [vmem:[%s3940 + $0x110] sm:$0xf]
      %v5002 = vld [vmem:[%s3940 + $0x114] sm:$0x1]
      %v5003 = vld [vmem:[%s3940 + $0x120] sm:$0xf]
      %v5004 = vld [vmem:[%s3940 + $0x124] sm:$0xf]
      %v5005 = vld [vmem:[%s3940 + $0x128] sm:$0x1]
      %v5006 = vld [vmem:[%s3940 + $0x134] sm:$0xf]
      %v5007 = vld [vmem:[%s3940 + $0x138] sm:$0xf]
      %v5008 = vld [vmem:[%s3940 + $0x13c] sm:$0x1]
      %v5010 = vshrl.u32 %v4961, 16
      %v5012 = vrot.slane %v5010, 4
      %v5013 = vshll.u32 %v4961, 16
      %v5015 = vrot.slane %v5013, 5
      %v5016 = vor.u32 %v5012, %v5015
      %v5017 = vrot.slane %v5016, 4
      %v5019 = vshll.u32 %v4962, 16
      %v5021 = vrot.slane %v5019, 5
      %v5022 = vsel %vm1515, %v5017, %v5021
      %v5023 = vshrl.u32 %v4962, 16
      %v5025 = vrot.slane %v5023, 4
      %v5026 = vor.u32 %v5025, %v5021
      %v5027 = vrot.slane %v5026, 4
      %v5029 = vshll.u32 %v4963, 16
      %v5031 = vrot.slane %v5029, 5
      %v5032 = vsel %vm1515, %v5027, %v5031
      %v5034 = vshrl.u32 %v4964, 16
      %v5036 = vrot.slane %v5034, 4
      %v5037 = vshll.u32 %v4964, 16
      %v5039 = vrot.slane %v5037, 5
      %v5040 = vor.u32 %v5036, %v5039
      %v5041 = vrot.slane %v5040, 4
      %v5043 = vshll.u32 %v4965, 16
      %v5045 = vrot.slane %v5043, 5
      %v5046 = vsel %vm1515, %v5041, %v5045
      %v5047 = vshrl.u32 %v4965, 16
      %v5049 = vrot.slane %v5047, 4
      %v5050 = vor.u32 %v5049, %v5045
      %v5051 = vrot.slane %v5050, 4
      %v5053 = vshll.u32 %v4966, 16
      %v5055 = vrot.slane %v5053, 5
      %v5056 = vsel %vm1515, %v5051, %v5055
      %v5058 = vshrl.u32 %v4967, 16
      %v5060 = vrot.slane %v5058, 4
      %v5061 = vshll.u32 %v4967, 16
      %v5063 = vrot.slane %v5061, 5
      %v5064 = vor.u32 %v5060, %v5063
      %v5065 = vrot.slane %v5064, 4
      %v5067 = vshll.u32 %v4968, 16
      %v5069 = vrot.slane %v5067, 5
      %v5070 = vsel %vm1515, %v5065, %v5069
      %v5071 = vshrl.u32 %v4968, 16
      %v5073 = vrot.slane %v5071, 4
      %v5074 = vor.u32 %v5073, %v5069
      %v5075 = vrot.slane %v5074, 4
      %v5077 = vshll.u32 %v4969, 16
      %v5079 = vrot.slane %v5077, 5
      %v5080 = vsel %vm1515, %v5075, %v5079
      %v5082 = vshrl.u32 %v4970, 16
      %v5084 = vrot.slane %v5082, 4
      %v5085 = vshll.u32 %v4970, 16
      %v5087 = vrot.slane %v5085, 5
      %v5088 = vor.u32 %v5084, %v5087
      %v5089 = vrot.slane %v5088, 4
      %v5091 = vshll.u32 %v4971, 16
      %v5093 = vrot.slane %v5091, 5
      %v5094 = vsel %vm1515, %v5089, %v5093
      %v5095 = vshrl.u32 %v4971, 16
      %v5097 = vrot.slane %v5095, 4
      %v5098 = vor.u32 %v5097, %v5093
      %v5099 = vrot.slane %v5098, 4
      %v5101 = vshll.u32 %v4972, 16
      %v5103 = vrot.slane %v5101, 5
      %v5104 = vsel %vm1515, %v5099, %v5103
      %v5106 = vshrl.u32 %v4973, 16
      %v5108 = vrot.slane %v5106, 4
      %v5109 = vshll.u32 %v4973, 16
      %v5111 = vrot.slane %v5109, 5
      %v5112 = vor.u32 %v5108, %v5111
      %v5113 = vrot.slane %v5112, 4
      %v5115 = vshll.u32 %v4974, 16
      %v5117 = vrot.slane %v5115, 5
      %v5118 = vsel %vm1515, %v5113, %v5117
      %v5119 = vshrl.u32 %v4974, 16
      %v5121 = vrot.slane %v5119, 4
      %v5122 = vor.u32 %v5121, %v5117
      %v5123 = vrot.slane %v5122, 4
      %v5125 = vshll.u32 %v4975, 16
      %v5127 = vrot.slane %v5125, 5
      %v5128 = vsel %vm1515, %v5123, %v5127
      %v5130 = vshrl.u32 %v4976, 16
      %v5132 = vrot.slane %v5130, 4
      %v5133 = vshll.u32 %v4976, 16
      %v5135 = vrot.slane %v5133, 5
      %v5136 = vor.u32 %v5132, %v5135
      %v5137 = vrot.slane %v5136, 4
      %v5139 = vshll.u32 %v4977, 16
      %v5141 = vrot.slane %v5139, 5
      %v5142 = vsel %vm1515, %v5137, %v5141
      %v5143 = vshrl.u32 %v4977, 16
      %v5145 = vrot.slane %v5143, 4
      %v5146 = vor.u32 %v5145, %v5141
      %v5147 = vrot.slane %v5146, 4
      %v5149 = vshll.u32 %v4978, 16
      %v5151 = vrot.slane %v5149, 5
      %v5152 = vsel %vm1515, %v5147, %v5151
      %v5154 = vshrl.u32 %v4979, 16
      %v5156 = vrot.slane %v5154, 4
      %v5157 = vshll.u32 %v4979, 16
      %v5159 = vrot.slane %v5157, 5
      %v5160 = vor.u32 %v5156, %v5159
      %v5161 = vrot.slane %v5160, 4
      %v5163 = vshll.u32 %v4980, 16
      %v5165 = vrot.slane %v5163, 5
      %v5166 = vsel %vm1515, %v5161, %v5165
      %v5167 = vshrl.u32 %v4980, 16
      %v5169 = vrot.slane %v5167, 4
      %v5170 = vor.u32 %v5169, %v5165
      %v5171 = vrot.slane %v5170, 4
      %v5173 = vshll.u32 %v4981, 16
      %v5175 = vrot.slane %v5173, 5
      %v5176 = vsel %vm1515, %v5171, %v5175
      %v5178 = vshrl.u32 %v4982, 16
      %v5180 = vrot.slane %v5178, 4
      %v5181 = vshll.u32 %v4982, 16
      %v5183 = vrot.slane %v5181, 5
      %v5184 = vor.u32 %v5180, %v5183
      %v5185 = vrot.slane %v5184, 4
      %v5187 = vshll.u32 %v4983, 16
      %v5189 = vrot.slane %v5187, 5
      %v5190 = vsel %vm1515, %v5185, %v5189
      %v5191 = vshrl.u32 %v4983, 16
      %v5193 = vrot.slane %v5191, 4
      %v5194 = vor.u32 %v5193, %v5189
      %v5195 = vrot.slane %v5194, 4
      %v5197 = vshll.u32 %v4984, 16
      %v5199 = vrot.slane %v5197, 5
      %v5200 = vsel %vm1515, %v5195, %v5199
      %v5202 = vshrl.u32 %v4985, 16
      %v5204 = vrot.slane %v5202, 4
      %v5205 = vshll.u32 %v4985, 16
      %v5207 = vrot.slane %v5205, 5
      %v5208 = vor.u32 %v5204, %v5207
      %v5209 = vrot.slane %v5208, 4
      %v5211 = vshll.u32 %v4986, 16
      %v5213 = vrot.slane %v5211, 5
      %v5214 = vsel %vm1515, %v5209, %v5213
      %v5215 = vshrl.u32 %v4986, 16
      %v5217 = vrot.slane %v5215, 4
      %v5218 = vor.u32 %v5217, %v5213
      %v5219 = vrot.slane %v5218, 4
      %v5221 = vshll.u32 %v4987, 16
      %v5223 = vrot.slane %v5221, 5
      %v5224 = vsel %vm1515, %v5219, %v5223
      %v5226 = vshrl.u32 %v4988, 16
      %v5228 = vrot.slane %v5226, 4
      %v5229 = vshll.u32 %v4988, 16
      %v5231 = vrot.slane %v5229, 5
      %v5232 = vor.u32 %v5228, %v5231
      %v5233 = vrot.slane %v5232, 4
      %v5235 = vshll.u32 %v4989, 16
      %v5237 = vrot.slane %v5235, 5
      %v5238 = vsel %vm1515, %v5233, %v5237
      %v5239 = vshrl.u32 %v4989, 16
      %v5241 = vrot.slane %v5239, 4
      %v5242 = vor.u32 %v5241, %v5237
      %v5243 = vrot.slane %v5242, 4
      %v5245 = vshll.u32 %v4990, 16
      %v5247 = vrot.slane %v5245, 5
      %v5248 = vsel %vm1515, %v5243, %v5247
      %v5250 = vshrl.u32 %v4991, 16
      %v5252 = vrot.slane %v5250, 4
      %v5253 = vshll.u32 %v4991, 16
      %v5255 = vrot.slane %v5253, 5
      %v5256 = vor.u32 %v5252, %v5255
      %v5257 = vrot.slane %v5256, 4
      %v5259 = vshll.u32 %v4992, 16
      %v5261 = vrot.slane %v5259, 5
      %v5262 = vsel %vm1515, %v5257, %v5261
      %v5263 = vshrl.u32 %v4992, 16
      %v5265 = vrot.slane %v5263, 4
      %v5266 = vor.u32 %v5265, %v5261
      %v5267 = vrot.slane %v5266, 4
      %v5269 = vshll.u32 %v4993, 16
      %v5271 = vrot.slane %v5269, 5
      %v5272 = vsel %vm1515, %v5267, %v5271
      %v5274 = vshrl.u32 %v4994, 16
      %v5276 = vrot.slane %v5274, 4
      %v5277 = vshll.u32 %v4994, 16
      %v5279 = vrot.slane %v5277, 5
      %v5280 = vor.u32 %v5276, %v5279
      %v5281 = vrot.slane %v5280, 4
      %v5283 = vshll.u32 %v4995, 16
      %v5285 = vrot.slane %v5283, 5
      %v5286 = vsel %vm1515, %v5281, %v5285
      %v5287 = vshrl.u32 %v4995, 16
      %v5289 = vrot.slane %v5287, 4
      %v5290 = vor.u32 %v5289, %v5285
      %v5291 = vrot.slane %v5290, 4
      %v5293 = vshll.u32 %v4996, 16
      %v5295 = vrot.slane %v5293, 5
      %v5296 = vsel %vm1515, %v5291, %v5295
      %v5298 = vshrl.u32 %v4997, 16
      %v5300 = vrot.slane %v5298, 4
      %v5301 = vshll.u32 %v4997, 16
      %v5303 = vrot.slane %v5301, 5
      %v5304 = vor.u32 %v5300, %v5303
      %v5305 = vrot.slane %v5304, 4
      %v5307 = vshll.u32 %v4998, 16
      %v5309 = vrot.slane %v5307, 5
      %v5310 = vsel %vm1515, %v5305, %v5309
      %v5311 = vshrl.u32 %v4998, 16
      %v5313 = vrot.slane %v5311, 4
      %v5314 = vor.u32 %v5313, %v5309
      %v5315 = vrot.slane %v5314, 4
      %v5317 = vshll.u32 %v4999, 16
      %v5319 = vrot.slane %v5317, 5
      %v5320 = vsel %vm1515, %v5315, %v5319
      %v5322 = vshrl.u32 %v5000, 16
      %v5324 = vrot.slane %v5322, 4
      %v5325 = vshll.u32 %v5000, 16
      %v5327 = vrot.slane %v5325, 5
      %v5328 = vor.u32 %v5324, %v5327
      %v5329 = vrot.slane %v5328, 4
      %v5331 = vshll.u32 %v5001, 16
      %v5333 = vrot.slane %v5331, 5
      %v5334 = vsel %vm1515, %v5329, %v5333
      %v5335 = vshrl.u32 %v5001, 16
      %v5337 = vrot.slane %v5335, 4
      %v5338 = vor.u32 %v5337, %v5333
      %v5339 = vrot.slane %v5338, 4
      %v5341 = vshll.u32 %v5002, 16
      %v5343 = vrot.slane %v5341, 5
      %v5344 = vsel %vm1515, %v5339, %v5343
      %v5346 = vshrl.u32 %v5003, 16
      %v5348 = vrot.slane %v5346, 4
      %v5349 = vshll.u32 %v5003, 16
      %v5351 = vrot.slane %v5349, 5
      %v5352 = vor.u32 %v5348, %v5351
      %v5353 = vrot.slane %v5352, 4
      %v5355 = vshll.u32 %v5004, 16
      %v5357 = vrot.slane %v5355, 5
      %v5358 = vsel %vm1515, %v5353, %v5357
      %v5359 = vshrl.u32 %v5004, 16
      %v5361 = vrot.slane %v5359, 4
      %v5362 = vor.u32 %v5361, %v5357
      %v5363 = vrot.slane %v5362, 4
      %v5365 = vshll.u32 %v5005, 16
      %v5367 = vrot.slane %v5365, 5
      %v5368 = vsel %vm1515, %v5363, %v5367
      %v5370 = vshrl.u32 %v5006, 16
      %v5372 = vrot.slane %v5370, 4
      %v5373 = vshll.u32 %v5006, 16
      %v5375 = vrot.slane %v5373, 5
      %v5376 = vor.u32 %v5372, %v5375
      %v5377 = vrot.slane %v5376, 4
      %v5379 = vshll.u32 %v5007, 16
      %v5381 = vrot.slane %v5379, 5
      %v5382 = vsel %vm1515, %v5377, %v5381
      %v5383 = vshrl.u32 %v5007, 16
      %v5385 = vrot.slane %v5383, 4
      %v5386 = vor.u32 %v5385, %v5381
      %v5387 = vrot.slane %v5386, 4
      %v5389 = vshll.u32 %v5008, 16
      %v5391 = vrot.slane %v5389, 5
      %v5392 = vsel %vm1515, %v5387, %v5391
      %s5393 = scalar_lea.vmem %s1, 32
      %v5394 = vld [vmem:[%s5393] sm:$0xf]
      %v5395 = vunpack.c.l.b16 %v5022
      %v5396 = vunpack.c.l.b16 %v5032
      %v5397 = vunpack.c.l.b16 %v5046
      %v5398 = vunpack.c.l.b16 %v5056
      %v5399 = vunpack.c.l.b16 %v5070
      %v5400 = vunpack.c.l.b16 %v5080
      %v5401 = vunpack.c.l.b16 %v5094
      %v5402 = vunpack.c.l.b16 %v5104
      %v5403 = vunpack.c.l.b16 %v5118
      %v5404 = vunpack.c.l.b16 %v5128
      %v5405 = vunpack.c.l.b16 %v5142
      %v5406 = vunpack.c.l.b16 %v5152
      %v5407 = vunpack.c.l.b16 %v5166
      %v5408 = vunpack.c.l.b16 %v5176
      %v5409 = vunpack.c.l.b16 %v5190
      %v5410 = vunpack.c.l.b16 %v5200
      %v5411 = vunpack.c.l.b16 %v5214
      %v5412 = vunpack.c.l.b16 %v5224
      %v5413 = vunpack.c.l.b16 %v5238
      %v5414 = vunpack.c.l.b16 %v5248
      %v5415 = vunpack.c.l.b16 %v5262
      %v5416 = vunpack.c.l.b16 %v5272
      %v5417 = vunpack.c.l.b16 %v5286
      %v5418 = vunpack.c.l.b16 %v5296
      %v5419 = vunpack.c.l.b16 %v5310
      %v5420 = vunpack.c.l.b16 %v5320
      %v5421 = vunpack.c.l.b16 %v5334
      %v5422 = vunpack.c.l.b16 %v5344
      %v5423 = vunpack.c.l.b16 %v5358
      %v5424 = vunpack.c.l.b16 %v5368
      %v5425 = vunpack.c.l.b16 %v5382
      %v5426 = vunpack.c.l.b16 %v5392
      %v5427 = vpack.c.b16 %v5396, %v5395
      %v5428 = vpack.c.b16 %v5398, %v5397
      %v5429 = vpack.c.b16 %v5400, %v5399
      %v5430 = vpack.c.b16 %v5402, %v5401
      %v5431 = vpack.c.b16 %v5404, %v5403
      %v5432 = vpack.c.b16 %v5406, %v5405
      %v5433 = vpack.c.b16 %v5408, %v5407
      %v5434 = vpack.c.b16 %v5410, %v5409
      %v5435 = vpack.c.b16 %v5412, %v5411
      %v5436 = vpack.c.b16 %v5414, %v5413
      %v5437 = vpack.c.b16 %v5416, %v5415
      %v5438 = vpack.c.b16 %v5418, %v5417
      %v5439 = vpack.c.b16 %v5420, %v5419
      %v5440 = vpack.c.b16 %v5422, %v5421
      %v5441 = vpack.c.b16 %v5424, %v5423
      %v5442 = vpack.c.b16 %v5426, %v5425
      %v5444 = vsel %vm991, %v5427, 0
      %v5447 = vsel %vm991, %v5428, 0
      %v5450 = vsel %vm991, %v5429, 0
      %v5453 = vsel %vm991, %v5430, 0
      %v5456 = vsel %vm991, %v5431, 0
      %v5459 = vsel %vm991, %v5432, 0
      %v5462 = vsel %vm991, %v5433, 0
      %v5465 = vsel %vm991, %v5434, 0
      %v5468 = vsel %vm991, %v5435, 0
      %v5471 = vsel %vm991, %v5436, 0
      %v5474 = vsel %vm991, %v5437, 0
      %v5477 = vsel %vm991, %v5438, 0
      %v5480 = vsel %vm991, %v5439, 0
      %v5483 = vsel %vm991, %v5440, 0
      %v5486 = vsel %vm991, %v5441, 0
      %v5489 = vsel %vm991, %v5442, 0
      %v5492 = vsel %vm1040, %v5394, 0
      %5494 = vmatprep.subr.bf16.mxu0 0
      %5495 = vmatpush1.bf16.msra.mxu0 %v5492
      %5496 = vmatprep.subr.bf16.mxu0 0
      %5497 = vmatpush1.bf16.msra.mxu0 0
      %5498 = vmatprep.subr.bf16.mxu0 0
      %5499 = vmatpush1.bf16.msra.mxu0 0
      %5500 = vmatprep.subr.bf16.mxu0 0
      %5501 = vmatpush1.bf16.msra.mxu0 0
      %5502 = vmatprep.subr.bf16.mxu0 0
      %5503 = vmatpush1.bf16.msra.mxu0 0
      %5504 = vmatprep.subr.bf16.mxu0 0
      %5505 = vmatpush1.bf16.msra.mxu0 0
      %5506 = vmatprep.subr.bf16.mxu0 0
      %5507 = vmatpush1.bf16.msra.mxu0 0
      %5508 = vmatprep.subr.bf16.mxu0 0
      %5509 = vmatpush1.bf16.msra.mxu0 0
      %5510 = vmatprep.subr.bf16.mxu0 0
      %5511 = vmatpush1.bf16.msra.mxu0 0
      %5512 = vmatprep.subr.bf16.mxu0 0
      %5513 = vmatpush1.bf16.msra.mxu0 0
      %5514 = vmatprep.subr.bf16.mxu0 0
      %5515 = vmatpush1.bf16.msra.mxu0 0
      %5516 = vmatprep.subr.bf16.mxu0 0
      %5517 = vmatpush1.bf16.msra.mxu0 0
      %5518 = vmatprep.subr.bf16.mxu0 0
      %5519 = vmatpush1.bf16.msra.mxu0 0
      %5520 = vmatprep.subr.bf16.mxu0 0
      %5521 = vmatpush1.bf16.msra.mxu0 0
      %5522 = vmatprep.subr.bf16.mxu0 0
      %5523 = vmatpush1.bf16.msra.mxu0 0
      %5524 = vmatprep.subr.bf16.mxu0 0
      %5525 = vmatpush1.bf16.msra.mxu0 0
      %5526 = vmatprep.mubr.bf16.mxu0 0
      %5527 = vmatmul.mubr.bf16.gmra.mrb[0].mxu0 %v5444
      %v5528 = vpop.f32.mrb[0].mxu0
      %v5529 = vadd.f32 0.0, %v5528
      %v5530 = vpop.f32.mrb[0].mxu0
      %v5531 = vpop.f32.mrb[0].mxu0
      %v5532 = vadd.f32 0.0, %v5531
      %v5533 = vpop.f32.mrb[0].mxu0
      %5534 = vmatprep.mubr.bf16.mxu0 0
      %5535 = vmatmul.mubr.bf16.gmra.mrb[0].mxu0 %v5447
      %v5536 = vpop.f32.mrb[0].mxu0
      %v5537 = vadd.f32 0.0, %v5536
      %v5538 = vpop.f32.mrb[0].mxu0
      %v5539 = vpop.f32.mrb[0].mxu0
      %v5540 = vadd.f32 0.0, %v5539
      %v5541 = vpop.f32.mrb[0].mxu0
      %5542 = vmatprep.mubr.bf16.mxu0 0
      %5543 = vmatmul.mubr.bf16.gmra.mrb[0].mxu0 %v5450
      %v5544 = vpop.f32.mrb[0].mxu0
      %v5545 = vadd.f32 0.0, %v5544
      %v5546 = vpop.f32.mrb[0].mxu0
      %v5547 = vpop.f32.mrb[0].mxu0
      %v5548 = vadd.f32 0.0, %v5547
      %v5549 = vpop.f32.mrb[0].mxu0
      %5550 = vmatprep.mubr.bf16.mxu0 0
      %5551 = vmatmul.mubr.bf16.gmra.mrb[0].mxu0 %v5453
      %v5552 = vpop.f32.mrb[0].mxu0
      %v5553 = vadd.f32 0.0, %v5552
      %v5554 = vpop.f32.mrb[0].mxu0
      %v5555 = vpop.f32.mrb[0].mxu0
      %v5556 = vadd.f32 0.0, %v5555
      %v5557 = vpop.f32.mrb[0].mxu0
      %5558 = vmatprep.mubr.bf16.mxu0 0
      %5559 = vmatmul.mubr.bf16.gmra.mrb[0].mxu0 %v5456
      %v5560 = vpop.f32.mrb[0].mxu0
      %v5561 = vadd.f32 0.0, %v5560
      %v5562 = vpop.f32.mrb[0].mxu0
      %v5563 = vpop.f32.mrb[0].mxu0
      %v5564 = vadd.f32 0.0, %v5563
      %v5565 = vpop.f32.mrb[0].mxu0
      %5566 = vmatprep.mubr.bf16.mxu0 0
      %5567 = vmatmul.mubr.bf16.gmra.mrb[0].mxu0 %v5459
      %v5568 = vpop.f32.mrb[0].mxu0
      %v5569 = vadd.f32 0.0, %v5568
      %v5570 = vpop.f32.mrb[0].mxu0
      %v5571 = vpop.f32.mrb[0].mxu0
      %v5572 = vadd.f32 0.0, %v5571
      %v5573 = vpop.f32.mrb[0].mxu0
      %5574 = vmatprep.mubr.bf16.mxu0 0
      %5575 = vmatmul.mubr.bf16.gmra.mrb[0].mxu0 %v5462
      %v5576 = vpop.f32.mrb[0].mxu0
      %v5577 = vadd.f32 0.0, %v5576
      %v5578 = vpop.f32.mrb[0].mxu0
      %v5579 = vpop.f32.mrb[0].mxu0
      %v5580 = vadd.f32 0.0, %v5579
      %v5581 = vpop.f32.mrb[0].mxu0
      %5582 = vmatprep.mubr.bf16.mxu0 0
      %5583 = vmatmul.mubr.bf16.gmra.mrb[0].mxu0 %v5465
      %v5584 = vpop.f32.mrb[0].mxu0
      %v5585 = vadd.f32 0.0, %v5584
      %v5586 = vpop.f32.mrb[0].mxu0
      %v5587 = vpop.f32.mrb[0].mxu0
      %v5588 = vadd.f32 0.0, %v5587
      %v5589 = vpop.f32.mrb[0].mxu0
      %5590 = vmatprep.mubr.bf16.mxu0 0
      %5591 = vmatmul.mubr.bf16.gmra.mrb[0].mxu0 %v5468
      %v5592 = vpop.f32.mrb[0].mxu0
      %v5593 = vadd.f32 0.0, %v5592
      %v5594 = vpop.f32.mrb[0].mxu0
      %v5595 = vpop.f32.mrb[0].mxu0
      %v5596 = vadd.f32 0.0, %v5595
      %v5597 = vpop.f32.mrb[0].mxu0
      %5598 = vmatprep.mubr.bf16.mxu0 0
      %5599 = vmatmul.mubr.bf16.gmra.mrb[0].mxu0 %v5471
      %v5600 = vpop.f32.mrb[0].mxu0
      %v5601 = vadd.f32 0.0, %v5600
      %v5602 = vpop.f32.mrb[0].mxu0
      %v5603 = vpop.f32.mrb[0].mxu0
      %v5604 = vadd.f32 0.0, %v5603
      %v5605 = vpop.f32.mrb[0].mxu0
      %5606 = vmatprep.mubr.bf16.mxu0 0
      %5607 = vmatmul.mubr.bf16.gmra.mrb[0].mxu0 %v5474
      %v5608 = vpop.f32.mrb[0].mxu0
      %v5609 = vadd.f32 0.0, %v5608
      %v5610 = vpop.f32.mrb[0].mxu0
      %v5611 = vpop.f32.mrb[0].mxu0
      %v5612 = vadd.f32 0.0, %v5611
      %v5613 = vpop.f32.mrb[0].mxu0
      %5614 = vmatprep.mubr.bf16.mxu0 0
      %5615 = vmatmul.mubr.bf16.gmra.mrb[0].mxu0 %v5477
      %v5616 = vpop.f32.mrb[0].mxu0
      %v5617 = vadd.f32 0.0, %v5616
      %v5618 = vpop.f32.mrb[0].mxu0
      %v5619 = vpop.f32.mrb[0].mxu0
      %v5620 = vadd.f32 0.0, %v5619
      %v5621 = vpop.f32.mrb[0].mxu0
      %5622 = vmatprep.mubr.bf16.mxu0 0
      %5623 = vmatmul.mubr.bf16.gmra.mrb[0].mxu0 %v5480
      %v5624 = vpop.f32.mrb[0].mxu0
      %v5625 = vadd.f32 0.0, %v5624
      %v5626 = vpop.f32.mrb[0].mxu0
      %v5627 = vpop.f32.mrb[0].mxu0
      %v5628 = vadd.f32 0.0, %v5627
      %v5629 = vpop.f32.mrb[0].mxu0
      %5630 = vmatprep.mubr.bf16.mxu0 0
      %5631 = vmatmul.mubr.bf16.gmra.mrb[0].mxu0 %v5483
      %v5632 = vpop.f32.mrb[0].mxu0
      %v5633 = vadd.f32 0.0, %v5632
      %v5634 = vpop.f32.mrb[0].mxu0
      %v5635 = vpop.f32.mrb[0].mxu0
      %v5636 = vadd.f32 0.0, %v5635
      %v5637 = vpop.f32.mrb[0].mxu0
      %5638 = vmatprep.mubr.bf16.mxu0 0
      %5639 = vmatmul.mubr.bf16.gmra.mrb[0].mxu0 %v5486
      %v5640 = vpop.f32.mrb[0].mxu0
      %v5641 = vadd.f32 0.0, %v5640
      %v5642 = vpop.f32.mrb[0].mxu0
      %v5643 = vpop.f32.mrb[0].mxu0
      %v5644 = vadd.f32 0.0, %v5643
      %v5645 = vpop.f32.mrb[0].mxu0
      %5646 = vmatprep.mubr.bf16.mxu0 0
      %5647 = vmatmul.mubr.bf16.gmra.mrb[0].mxu0 %v5489
      %v5648 = vpop.f32.mrb[0].mxu0
      %v5649 = vadd.f32 0.0, %v5648
      %v5650 = vpop.f32.mrb[0].mxu0
      %v5651 = vpop.f32.mrb[0].mxu0
      %v5652 = vadd.f32 0.0, %v5651
      %v5653 = vpop.f32.mrb[0].mxu0
      %5654 = vdwg.mxu0
      %v5655 = vadd.f32 %v4929, %v5529
      %v5656 = vadd.f32 %v4930, %v5532
      %v5657 = vadd.f32 %v4931, %v5537
      %v5658 = vadd.f32 %v4932, %v5540
      %v5659 = vadd.f32 %v4933, %v5545
      %v5660 = vadd.f32 %v4934, %v5548
      %v5661 = vadd.f32 %v4935, %v5553
      %v5662 = vadd.f32 %v4936, %v5556
      %v5663 = vadd.f32 %v4937, %v5561
      %v5664 = vadd.f32 %v4938, %v5564
      %v5665 = vadd.f32 %v4939, %v5569
      %v5666 = vadd.f32 %v4940, %v5572
      %v5667 = vadd.f32 %v4941, %v5577
      %v5668 = vadd.f32 %v4942, %v5580
      %v5669 = vadd.f32 %v4943, %v5585
      %v5670 = vadd.f32 %v4944, %v5588
      %v5671 = vadd.f32 %v4945, %v5593
      %v5672 = vadd.f32 %v4946, %v5596
      %v5673 = vadd.f32 %v4947, %v5601
      %v5674 = vadd.f32 %v4948, %v5604
      %v5675 = vadd.f32 %v4949, %v5609
      %v5676 = vadd.f32 %v4950, %v5612
      %v5677 = vadd.f32 %v4951, %v5617
      %v5678 = vadd.f32 %v4952, %v5620
      %v5679 = vadd.f32 %v4953, %v5625
      %v5680 = vadd.f32 %v4954, %v5628
      %v5681 = vadd.f32 %v4955, %v5633
      %v5682 = vadd.f32 %v4956, %v5636
      %v5683 = vadd.f32 %v4957, %v5641
      %v5684 = vadd.f32 %v4958, %v5644
      %v5685 = vadd.f32 %v4959, %v5649
      %v5686 = vadd.f32 %v4960, %v5652
      %5687 = vst.msk [vmem:[%s177] sm:$0xff] %vm991, %v5655
      %5688 = vst.msk [vmem:[%s177 + $0x8] sm:$0xff] %vm991, %v5656
      %5689 = vst.msk [vmem:[%s177 + $0x10] sm:$0xff] %vm991, %v5657
      %5690 = vst.msk [vmem:[%s177 + $0x18] sm:$0xff] %vm991, %v5658
      %5691 = vst.msk [vmem:[%s177 + $0x20] sm:$0xff] %vm991, %v5659
      %5692 = vst.msk [vmem:[%s177 + $0x28] sm:$0xff] %vm991, %v5660
      %5693 = vst.msk [vmem:[%s177 + $0x30] sm:$0xff] %vm991, %v5661
      %5694 = vst.msk [vmem:[%s177 + $0x38] sm:$0xff] %vm991, %v5662
      %5695 = vst.msk [vmem:[%s177 + $0x40] sm:$0xff] %vm991, %v5663
      %5696 = vst.msk [vmem:[%s177 + $0x48] sm:$0xff] %vm991, %v5664
      %5697 = vst.msk [vmem:[%s177 + $0x50] sm:$0xff] %vm991, %v5665
      %5698 = vst.msk [vmem:[%s177 + $0x58] sm:$0xff] %vm991, %v5666
      %5699 = vst.msk [vmem:[%s177 + $0x60] sm:$0xff] %vm991, %v5667
      %5700 = vst.msk [vmem:[%s177 + $0x68] sm:$0xff] %vm991, %v5668
      %5701 = vst.msk [vmem:[%s177 + $0x70] sm:$0xff] %vm991, %v5669
      %5702 = vst.msk [vmem:[%s177 + $0x78] sm:$0xff] %vm991, %v5670
      %5703 = vst.msk [vmem:[%s177 + $0x80] sm:$0xff] %vm991, %v5671
      %5704 = vst.msk [vmem:[%s177 + $0x88] sm:$0xff] %vm991, %v5672
      %5705 = vst.msk [vmem:[%s177 + $0x90] sm:$0xff] %vm991, %v5673
      %5706 = vst.msk [vmem:[%s177 + $0x98] sm:$0xff] %vm991, %v5674
      %5707 = vst.msk [vmem:[%s177 + $0xa0] sm:$0xff] %vm991, %v5675
      %5708 = vst.msk [vmem:[%s177 + $0xa8] sm:$0xff] %vm991, %v5676
      %5709 = vst.msk [vmem:[%s177 + $0xb0] sm:$0xff] %vm991, %v5677
      %5710 = vst.msk [vmem:[%s177 + $0xb8] sm:$0xff] %vm991, %v5678
      %5711 = vst.msk [vmem:[%s177 + $0xc0] sm:$0xff] %vm991, %v5679
      %5712 = vst.msk [vmem:[%s177 + $0xc8] sm:$0xff] %vm991, %v5680
      %5713 = vst.msk [vmem:[%s177 + $0xd0] sm:$0xff] %vm991, %v5681
      %5714 = vst.msk [vmem:[%s177 + $0xd8] sm:$0xff] %vm991, %v5682
      %5715 = vst.msk [vmem:[%s177 + $0xe0] sm:$0xff] %vm991, %v5683
      %5716 = vst.msk [vmem:[%s177 + $0xe8] sm:$0xff] %vm991, %v5684
      %5717 = vst.msk [vmem:[%s177 + $0xf0] sm:$0xff] %vm991, %v5685
      %5718 = vst.msk [vmem:[%s177 + $0xf8] sm:$0xff] %vm991, %v5686
      %v5719 = vsel %vm991, %v5655, 0.0
      %v5720 = vsel %vm991, %v5656, 0.0
      %v5721 = vadd.f32 %v5719, %v5720
      %v5722 = vsel %vm991, %v5657, 0.0
      %v5723 = vadd.f32 %v5721, %v5722
      %v5724 = vsel %vm991, %v5658, 0.0
      %v5725 = vadd.f32 %v5723, %v5724
      %v5726 = vsel %vm991, %v5659, 0.0
      %v5727 = vadd.f32 %v5725, %v5726
      %v5728 = vsel %vm991, %v5660, 0.0
      %v5729 = vadd.f32 %v5727, %v5728
      %v5730 = vsel %vm991, %v5661, 0.0
      %v5731 = vadd.f32 %v5729, %v5730
      %v5732 = vsel %vm991, %v5662, 0.0
      %v5733 = vadd.f32 %v5731, %v5732
      %v5734 = vsel %vm991, %v5663, 0.0
      %v5735 = vadd.f32 %v5733, %v5734
      %v5736 = vsel %vm991, %v5664, 0.0
      %v5737 = vadd.f32 %v5735, %v5736
      %v5738 = vsel %vm991, %v5665, 0.0
      %v5739 = vadd.f32 %v5737, %v5738
      %v5740 = vsel %vm991, %v5666, 0.0
      %v5741 = vadd.f32 %v5739, %v5740
      %v5742 = vsel %vm991, %v5667, 0.0
      %v5743 = vadd.f32 %v5741, %v5742
      %v5744 = vsel %vm991, %v5668, 0.0
      %v5745 = vadd.f32 %v5743, %v5744
      %v5746 = vsel %vm991, %v5669, 0.0
      %v5747 = vadd.f32 %v5745, %v5746
      %v5748 = vsel %vm991, %v5670, 0.0
      %v5749 = vadd.f32 %v5747, %v5748
      %v5750 = vsel %vm991, %v5671, 0.0
      %v5751 = vadd.f32 %v5749, %v5750
      %v5752 = vsel %vm991, %v5672, 0.0
      %v5753 = vadd.f32 %v5751, %v5752
      %v5754 = vsel %vm991, %v5673, 0.0
      %v5755 = vadd.f32 %v5753, %v5754
      %v5756 = vsel %vm991, %v5674, 0.0
      %v5757 = vadd.f32 %v5755, %v5756
      %v5758 = vsel %vm991, %v5675, 0.0
      %v5759 = vadd.f32 %v5757, %v5758
      %v5760 = vsel %vm991, %v5676, 0.0
      %v5761 = vadd.f32 %v5759, %v5760
      %v5762 = vsel %vm991, %v5677, 0.0
      %v5763 = vadd.f32 %v5761, %v5762
      %v5764 = vsel %vm991, %v5678, 0.0
      %v5765 = vadd.f32 %v5763, %v5764
      %v5766 = vsel %vm991, %v5679, 0.0
      %v5767 = vadd.f32 %v5765, %v5766
      %v5768 = vsel %vm991, %v5680, 0.0
      %v5769 = vadd.f32 %v5767, %v5768
      %v5770 = vsel %vm991, %v5681, 0.0
      %v5771 = vadd.f32 %v5769, %v5770
      %v5772 = vsel %vm991, %v5682, 0.0
      %v5773 = vadd.f32 %v5771, %v5772
      %v5774 = vsel %vm991, %v5683, 0.0
      %v5775 = vadd.f32 %v5773, %v5774
      %v5776 = vsel %vm991, %v5684, 0.0
      %v5777 = vadd.f32 %v5775, %v5776
      %v5778 = vsel %vm991, %v5685, 0.0
      %v5779 = vadd.f32 %v5777, %v5778
      %v5780 = vsel %vm991, %v5686, 0.0
      %v5781 = vadd.f32 %v5779, %v5780
      %v5782 = vrot.slane %v5781, 4
      %v5783 = vadd.f32 %v5781, %v5782
      %v5784 = vrot.slane %v5783, 2
      %v5785 = vadd.f32 %v5783, %v5784
      %v5786 = vrot.slane %v5785, 1
      %v5787 = vadd.f32 %v5785, %v5786
      %v5788 = vmul.f32 %v5787, 0.00390625
      %v5789 = vsub.f32 %v5655, %v5788
      %v5790 = vsub.f32 %v5656, %v5788
      %v5791 = vsub.f32 %v5657, %v5788
      %v5792 = vsub.f32 %v5658, %v5788
      %v5793 = vsub.f32 %v5659, %v5788
      %v5794 = vsub.f32 %v5660, %v5788
      %v5795 = vsub.f32 %v5661, %v5788
      %v5796 = vsub.f32 %v5662, %v5788
      %v5797 = vsub.f32 %v5663, %v5788
      %v5798 = vsub.f32 %v5664, %v5788
      %v5799 = vsub.f32 %v5665, %v5788
      %v5800 = vsub.f32 %v5666, %v5788
      %v5801 = vsub.f32 %v5667, %v5788
      %v5802 = vsub.f32 %v5668, %v5788
      %v5803 = vsub.f32 %v5669, %v5788
      %v5804 = vsub.f32 %v5670, %v5788
      %v5805 = vsub.f32 %v5671, %v5788
      %v5806 = vsub.f32 %v5672, %v5788
      %v5807 = vsub.f32 %v5673, %v5788
      %v5808 = vsub.f32 %v5674, %v5788
      %v5809 = vsub.f32 %v5675, %v5788
      %v5810 = vsub.f32 %v5676, %v5788
      %v5811 = vsub.f32 %v5677, %v5788
      %v5812 = vsub.f32 %v5678, %v5788
      %v5813 = vsub.f32 %v5679, %v5788
      %v5814 = vsub.f32 %v5680, %v5788
      %v5815 = vsub.f32 %v5681, %v5788
      %v5816 = vsub.f32 %v5682, %v5788
      %v5817 = vsub.f32 %v5683, %v5788
      %v5818 = vsub.f32 %v5684, %v5788
      %v5819 = vsub.f32 %v5685, %v5788
      %v5820 = vsub.f32 %v5686, %v5788
      %v5821 = vmul.f32 %v5789, %v5789
      %v5822 = vmul.f32 %v5790, %v5790
      %v5823 = vmul.f32 %v5791, %v5791
      %v5824 = vmul.f32 %v5792, %v5792
      %v5825 = vmul.f32 %v5793, %v5793
      %v5826 = vmul.f32 %v5794, %v5794
      %v5827 = vmul.f32 %v5795, %v5795
      %v5828 = vmul.f32 %v5796, %v5796
      %v5829 = vmul.f32 %v5797, %v5797
      %v5830 = vmul.f32 %v5798, %v5798
      %v5831 = vmul.f32 %v5799, %v5799
      %v5832 = vmul.f32 %v5800, %v5800
      %v5833 = vmul.f32 %v5801, %v5801
      %v5834 = vmul.f32 %v5802, %v5802
      %v5835 = vmul.f32 %v5803, %v5803
      %v5836 = vmul.f32 %v5804, %v5804
      %v5837 = vmul.f32 %v5805, %v5805
      %v5838 = vmul.f32 %v5806, %v5806
      %v5839 = vmul.f32 %v5807, %v5807
      %v5840 = vmul.f32 %v5808, %v5808
      %v5841 = vmul.f32 %v5809, %v5809
      %v5842 = vmul.f32 %v5810, %v5810
      %v5843 = vmul.f32 %v5811, %v5811
      %v5844 = vmul.f32 %v5812, %v5812
      %v5845 = vmul.f32 %v5813, %v5813
      %v5846 = vmul.f32 %v5814, %v5814
      %v5847 = vmul.f32 %v5815, %v5815
      %v5848 = vmul.f32 %v5816, %v5816
      %v5849 = vmul.f32 %v5817, %v5817
      %v5850 = vmul.f32 %v5818, %v5818
      %v5851 = vmul.f32 %v5819, %v5819
      %v5852 = vmul.f32 %v5820, %v5820
      %v5853 = vsel %vm991, %v5821, 0.0
      %v5854 = vsel %vm991, %v5822, 0.0
      %v5855 = vadd.f32 %v5853, %v5854
      %v5856 = vsel %vm991, %v5823, 0.0
      %v5857 = vadd.f32 %v5855, %v5856
      %v5858 = vsel %vm991, %v5824, 0.0
      %v5859 = vadd.f32 %v5857, %v5858
      %v5860 = vsel %vm991, %v5825, 0.0
      %v5861 = vadd.f32 %v5859, %v5860
      %v5862 = vsel %vm991, %v5826, 0.0
      %v5863 = vadd.f32 %v5861, %v5862
      %v5864 = vsel %vm991, %v5827, 0.0
      %v5865 = vadd.f32 %v5863, %v5864
      %v5866 = vsel %vm991, %v5828, 0.0
      %v5867 = vadd.f32 %v5865, %v5866
      %v5868 = vsel %vm991, %v5829, 0.0
      %v5869 = vadd.f32 %v5867, %v5868
      %v5870 = vsel %vm991, %v5830, 0.0
      %v5871 = vadd.f32 %v5869, %v5870
      %v5872 = vsel %vm991, %v5831, 0.0
      %v5873 = vadd.f32 %v5871, %v5872
      %v5874 = vsel %vm991, %v5832, 0.0
      %v5875 = vadd.f32 %v5873, %v5874
      %v5876 = vsel %vm991, %v5833, 0.0
      %v5877 = vadd.f32 %v5875, %v5876
      %v5878 = vsel %vm991, %v5834, 0.0
      %v5879 = vadd.f32 %v5877, %v5878
      %v5880 = vsel %vm991, %v5835, 0.0
      %v5881 = vadd.f32 %v5879, %v5880
      %v5882 = vsel %vm991, %v5836, 0.0
      %v5883 = vadd.f32 %v5881, %v5882
      %v5884 = vsel %vm991, %v5837, 0.0
      %v5885 = vadd.f32 %v5883, %v5884
      %v5886 = vsel %vm991, %v5838, 0.0
      %v5887 = vadd.f32 %v5885, %v5886
      %v5888 = vsel %vm991, %v5839, 0.0
      %v5889 = vadd.f32 %v5887, %v5888
      %v5890 = vsel %vm991, %v5840, 0.0
      %v5891 = vadd.f32 %v5889, %v5890
      %v5892 = vsel %vm991, %v5841, 0.0
      %v5893 = vadd.f32 %v5891, %v5892
      %v5894 = vsel %vm991, %v5842, 0.0
      %v5895 = vadd.f32 %v5893, %v5894
      %v5896 = vsel %vm991, %v5843, 0.0
      %v5897 = vadd.f32 %v5895, %v5896
      %v5898 = vsel %vm991, %v5844, 0.0
      %v5899 = vadd.f32 %v5897, %v5898
      %v5900 = vsel %vm991, %v5845, 0.0
      %v5901 = vadd.f32 %v5899, %v5900
      %v5902 = vsel %vm991, %v5846, 0.0
      %v5903 = vadd.f32 %v5901, %v5902
      %v5904 = vsel %vm991, %v5847, 0.0
      %v5905 = vadd.f32 %v5903, %v5904
      %v5906 = vsel %vm991, %v5848, 0.0
      %v5907 = vadd.f32 %v5905, %v5906
      %v5908 = vsel %vm991, %v5849, 0.0
      %v5909 = vadd.f32 %v5907, %v5908
      %v5910 = vsel %vm991, %v5850, 0.0
      %v5911 = vadd.f32 %v5909, %v5910
      %v5912 = vsel %vm991, %v5851, 0.0
      %v5913 = vadd.f32 %v5911, %v5912
      %v5914 = vsel %vm991, %v5852, 0.0
      %v5915 = vadd.f32 %v5913, %v5914
      %v5916 = vrot.slane %v5915, 4
      %v5917 = vadd.f32 %v5915, %v5916
      %v5918 = vrot.slane %v5917, 2
      %v5919 = vadd.f32 %v5917, %v5918
      %v5920 = vrot.slane %v5919, 1
      %v5921 = vadd.f32 %v5919, %v5920
      %vm5922 = vcmask 57344
      %5923 = vst.msk [vmem:[%s181] sm:$0x1] %vm5922, %v5788
      %5924 = vst.msk [vmem:[%s181 + $0x1] sm:$0x1] %vm5922, %v5921
      %p5925 = scmp.lt.s32.totalorder %s15, 1
      %s5926 = scalar_select %p5925, %s15, 1
      %s5927 = smul.addr %s5926, 32
      %s5928 = smul.addr %s5927, 8
      %s5929 = scalar_lea.vmem %s2, %s5928
      %p5930 = scmp.lt.s32.totalorder %s15, 1
      %s5931 = scalar_select %p5930, %s15, 1
      %s5932 = smul.addr %s5931, 2
      %s5933 = scalar_lea.vmem %s3, %s5932
      // Predicated region
      $region29: #{rrcnn_block.14} parent=27 // pred_check
        %p5934 = pneg %p80
      $region30: #{rrcnn_block.14} parent=27 // pred_check_branch
        %5936 = sbr.rel (%p5934) target = $region32
      $region31: #{rrcnn_block.14} parent=27 // pred_region
        _
      $region32: #{rrcnn_block.14} parent=27 // pred_fallthru
        _
      // Predicated region
      $region33: #{rrcnn_block.14} parent=27 // pred_check
        %p5937 = pneg %p106
      $region34: #{rrcnn_block.14} parent=27 // pred_check_branch
        %5939 = sbr.rel (%p5937) target = $region36
      $region35: #{rrcnn_block.14} parent=27 // pred_region
        _
      $region36: #{rrcnn_block.14} parent=27 // pred_fallthru
        _
    $region28: #{rrcnn_block.14} parent=5 // pred_fallthru
      _
    %p5940 = scmp.le.s32.totalorder 2, %s10
    // Predicated region
    $region37: #{rrcnn_block.14} parent=5 // pred_check
      %p5941 = pneg %p5940
    $region38: #{rrcnn_block.14} parent=5 // pred_check_branch
      %5943 = sbr.rel (%p5941) target = $region40
    $region39: #{rrcnn_block.14} parent=5 // pred_region
      %s5944 = ssub.s32 %s10, 2
      // Predicated region
      $region41: #{rrcnn_block.14} parent=39 // pred_check
        %p5945 = pneg %p86
      $region42: #{rrcnn_block.14} parent=39 // pred_check_branch
        %5947 = sbr.rel (%p5945) target = $region44
      $region43: #{rrcnn_block.14} parent=39 // pred_region
        %p5948 = scmp.lt.s32.totalorder %s16, 1
        %s5949 = scalar_select %p5948, %s16, 1
        %s5950 = smul.addr %s5949, 32
        %s5951 = smul.addr %s5950, 8
        %s5952 = scalar_lea.vmem %s2, %s5951
      $region44: #{rrcnn_block.14} parent=39 // pred_fallthru
        _
      // Predicated region
      $region45: #{rrcnn_block.14} parent=39 // pred_check
        %p5953 = pneg %p112
      $region46: #{rrcnn_block.14} parent=39 // pred_check_branch
        %5955 = sbr.rel (%p5953) target = $region48
      $region47: #{rrcnn_block.14} parent=39 // pred_region
        %p5956 = scmp.lt.s32.totalorder %s16, 1
        %s5957 = scalar_select %p5956, %s16, 1
        %s5958 = smul.addr %s5957, 2
        %s5959 = scalar_lea.vmem %s3, %s5958
      $region48: #{rrcnn_block.14} parent=39 // pred_fallthru
        _
    $region40: #{rrcnn_block.14} parent=5 // pred_fallthru
      _
  $region6: #{rrcnn_block.14} parent=0 // loop_footer
    %s14 = sadd.s32 1, %s10
  $region7: #{rrcnn_block.14} parent=0 // loop_footer_branch
    %9 = sbr.rel target = $region3
  $region8: #{rrcnn_block.14} parent=0 // loop_exit
    _

</llo_original>
